<compile_context>
chip_gen: v6e
topology: v6e:2x2x1
jax: 0.10.0
libtpu: 0.0.40
codegen_flags: <defaults>
</compile_context>

<pallas_src>
import math

import jax
import jax.numpy as jnp
from jax.experimental import pallas as pl
from jax.experimental.pallas import tpu as pltpu

# ---------------------------------------------------------------------------
# Small configuration (scaled-down MedSAM-Lite)
# ---------------------------------------------------------------------------
B_IMG = 1          # image batch (matches reference: torch.rand(1, 3, 256, 256))
C_IN = 3
IMG_H = IMG_W = 16  # scaled down from 256
PATCH = 4
EMB_H = EMB_W = IMG_H // PATCH   # image-embedding spatial size (4x4)
EMBED = 32                       # transformer_dim / prompt embed dim
NUM_HEADS = 2
MLP_DIM = 64
NUM_MASK_TOKENS = 4              # num_multimask_outputs(3) + 1
ATTN_DOWNSAMPLE = 2              # SAM cross-attention downsample rate
C_UP1 = EMBED // 4               # 8   (channels after first up-conv)
C_UP2 = EMBED // 8               # 4   (channels after second up-conv)
UP_H = 4 * EMB_H                 # 16  (upscaled mask height)
UP_W = 4 * EMB_W                 # 16  (upscaled mask width)
N_TOK = EMB_H * EMB_W            # 16  image-embedding tokens

F32 = jnp.float32
SLAB_W = 256                     # lane width of the packed weight slab (>= widest param)
OUT_ROWS = 8                     # mask rows 0..3, IoU row 4, rows 5..7 zero pad


# ---------------------------------------------------------------------------
# In-kernel helpers (params are static Ref-views into the weight slab)
# ---------------------------------------------------------------------------
def _ln(x, g_ref, b_ref, eps=1e-5):
    mu = jnp.mean(x, axis=-1, keepdims=True)
    xc = x - mu
    var = jnp.mean(xc * xc, axis=-1, keepdims=True)
    return xc * jax.lax.rsqrt(var + eps) * g_ref[...] + b_ref[...]


def _dense(x, w_ref, b_ref, act=None):
    y = jnp.dot(x, w_ref[...], preferred_element_type=F32) + b_ref[...]
    if act == "relu":
        y = jnp.maximum(y, 0.0)
    elif act == "gelu":
        y = jax.nn.gelu(y, approximate=True)
    return y


def _attention(q_in, k_in, v_in, ap):
    """SAM attention; fused QKV weight, 1/sqrt(dh) pre-folded into the Q proj.

    Per-head outputs are lane-concatenated and projected with ONE output
    matmul (instead of one matmul+add per head).
    """
    qkv_w = ap["qkv_w"][...]
    qkv_b = ap["qkv_b"][...]
    internal = qkv_w.shape[1] // 3
    dh = internal // NUM_HEADS
    qp = jnp.dot(q_in, qkv_w[:, :internal], preferred_element_type=F32) + qkv_b[:, :internal]
    kp = (jnp.dot(k_in, qkv_w[:, internal:2 * internal], preferred_element_type=F32)
          + qkv_b[:, internal:2 * internal])
    vp = (jnp.dot(v_in, qkv_w[:, 2 * internal:], preferred_element_type=F32)
          + qkv_b[:, 2 * internal:])
    # NOTE: per-head lane slices are sub-128 and unaligned; lane-aligning each
    # head would 6x the MXU pushes at these widths, so we keep the XLU slices.
    ohs = []
    for h in range(NUM_HEADS):
        lo, hi = h * dh, (h + 1) * dh
        s = jnp.einsum("qd,kd->qk", qp[:, lo:hi], kp[:, lo:hi],
                       preferred_element_type=F32)
        m = jnp.max(s, axis=-1, keepdims=True)
        e = jnp.exp(s - m)
        p = e * pl.reciprocal(jnp.sum(e, axis=-1, keepdims=True), approx=True)
        ohs.append(jnp.dot(p, vp[:, lo:hi], preferred_element_type=F32))
    o = jnp.concatenate(ohs, axis=1)                                 # (T, internal)
    return jnp.dot(o, ap["out_w"][...], preferred_element_type=F32) + ap["out_b"][...]


def _two_way_block(lp, queries, keys, qpe, kpe, first):
    if first:
        queries = _attention(queries, queries, queries, lp["self_attn"])
    else:
        q = queries + qpe
        queries = queries + _attention(q, q, queries, lp["self_attn"])
    queries = _ln(queries, lp["n1_g"], lp["n1_b"])

    q = queries + qpe
    k = keys + kpe
    queries = queries + _attention(q, k, keys, lp["ca_t2i"])
    queries = _ln(queries, lp["n2_g"], lp["n2_b"])

    mlp = _dense(_dense(queries, lp["mlp1_w"], lp["mlp1_b"], act="relu"),
                 lp["mlp2_w"], lp["mlp2_b"])
    queries = _ln(queries + mlp, lp["n3_g"], lp["n3_b"])

    q = queries + qpe
    k = keys + kpe
    keys = keys + _attention(k, q, queries, lp["ca_i2t"])
    keys = _ln(keys, lp["n4_g"], lp["n4_b"])
    return queries, keys


def _make_kernel(treedef, offsets):
    """Fused kernel: (gated) encoder + two-way transformer + heads + masks.

    refs: slab_ref (R, 256) weights, patches_ref (16, 48), tokens_ref (7, 32),
          out_ref (8, 256), src_ref (16, 32) persistent scratch.
    """

    def kernel(slab_ref, patches_ref, tokens_ref, out_ref, src_ref):
        # Zero-cost static views into the packed weight slab.
        views = [slab_ref.at[r0:r0 + r, 0:c] for (r0, r, c) in offsets]
        p = jax.tree_util.tree_unflatten(treedef, views)
        enc, dec = p["enc"], p["dec"]

        b = pl.program_id(0)

        # ---------------- image encoder (box-independent: run once) --------
        @pl.when(b == 0)
        def _():
            patches = patches_ref[...]                               # (16, 48)
            tok = _dense(patches, enc["patch_w"], enc["patch_b"])    # patch-embed "conv"
            h = _ln(tok, enc["ln1_g"], enc["ln1_b"])
            h = _dense(h, enc["mlp1_w"], enc["mlp1_b"], act="gelu")
            h = _dense(h, enc["mlp2_w"], enc["mlp2_b"])
            tok = tok + h                                            # residual
            tok = _dense(tok, enc["neck_w"], enc["neck_b"])          # neck (1x1 conv)
            tok = _ln(tok, enc["ln2_g"], enc["ln2_b"])               # (16, 32)
            # src = image embedding + dense (no_mask) prompt embedding
            src_ref[...] = tok + dec["dense_row"][...]

        # ---------------- two-way transformer ------------------------------
        tokens0 = tokens_ref[...]                                    # (7, 32)
        pos = dec["pos"][...]                                        # (16, 32)
        keys = src_ref[...]
        queries = tokens0
        for li, lp in enumerate(dec["layers"]):
            queries, keys = _two_way_block(lp, queries, keys, tokens0, pos, li == 0)
        q = queries + tokens0
        k = keys + pos
        queries = queries + _attention(q, k, keys, dec["final_attn"])
        queries = _ln(queries, dec["nf_g"], dec["nf_b"])

        # ---------------- fused IoU + hypernetwork heads --------------------
        # 5 head MLPs (iou + 4 hypernets) as one block-diagonal 3-matmul stack;
        # the per-token diagonal block is extracted in registers with a 0/1 mask.
        tok5 = queries[0:NUM_MASK_TOKENS + 1, :]                     # (5, 32)
        hh = _dense(tok5, dec["head_w1"], dec["head_b1"], act="relu")   # (5, 192)
        hh = _dense(hh, dec["head_w2"], dec["head_b2"], act="relu")     # (5, 192)
        ho = _dense(hh, dec["head_w3"], dec["head_b3"])                 # (5, 20)
        iou = ho[0:1, 0:NUM_MASK_TOKENS]                             # (1, 4)
        hy = ho[1:NUM_MASK_TOKENS + 1,
                NUM_MASK_TOKENS:NUM_MASK_TOKENS + NUM_MASK_TOKENS * C_UP2]  # (4, 16)
        hym = hy * dec["hyp_mask"][...]                              # diag block mask
        hyper_in = (hym[:, 0 * C_UP2:1 * C_UP2] + hym[:, 1 * C_UP2:2 * C_UP2]
                    + hym[:, 2 * C_UP2:3 * C_UP2] + hym[:, 3 * C_UP2:4 * C_UP2])  # (4, 4)

        # ---------------- output upscaling + mask matmul ---------------------
        # ConvTranspose2d(k=2, s=2) x2 lowered to matmuls on the (16 tokens, C)
        # slab; the 16 (4,16) pieces are accumulated in registers and stored
        # with ONE lane-dense (8, 256) write (masks rows 0..3, IoU row 4).
        y1 = _dense(keys, dec["up1_w"], dec["up1_b"])                # (16, 4*C_UP1)
        pieces = []
        for dd in range(4):
            g = y1[:, dd * C_UP1:(dd + 1) * C_UP1]                   # (16, 8)
            g = _ln(g, dec["up_ln_g"], dec["up_ln_b"], eps=1e-6)     # LayerNorm2d
            g = jax.nn.gelu(g, approximate=True)
            y2 = _dense(g, dec["up2_w"], dec["up2_b"], act="gelu")   # (16, 4*C_UP2)
            for ee in range(4):
                blk = y2[:, ee * C_UP2:(ee + 1) * C_UP2]             # (16, 4)
                pieces.append(jnp.einsum("kc,tc->kt", hyper_in, blk,
                                         preferred_element_type=F32))  # (4, 16)
        masks = jnp.concatenate(pieces, axis=1)                      # (4, 256)
        iou_row = jnp.concatenate(
            [iou, jnp.zeros((1, UP_H * UP_W - NUM_MASK_TOKENS), F32)], axis=1)
        pad = jnp.zeros((OUT_ROWS - NUM_MASK_TOKENS - 1, UP_H * UP_W), F32)
        out_ref[...] = jnp.concatenate([masks, iou_row, pad], axis=0)  # (8, 256)

    return kernel


# ---------------------------------------------------------------------------
# Prompt encoder / dense PE (tiny K=2 contractions -> plain jnp, not Pallas)
# ---------------------------------------------------------------------------
def _pe_encode(coords01, gauss):
    c = 2.0 * coords01 - 1.0
    proj = (2.0 * jnp.pi) * jnp.matmul(c, gauss)
    return jnp.concatenate([jnp.sin(proj), jnp.cos(proj)], axis=-1)


def _dense_pe_seq(gauss):
    ys = (jnp.arange(EMB_H, dtype=F32) + 0.5) / EMB_H
    xs = (jnp.arange(EMB_W, dtype=F32) + 0.5) / EMB_W
    yy, xx = jnp.meshgrid(ys, xs, indexing="ij")
    coords = jnp.stack([xx, yy], axis=-1)                            # (H, W, 2)
    return _pe_encode(coords, gauss).reshape(N_TOK, EMBED)           # (16, 32)


def _prompt_encoder(wp, boxes):
    coords = boxes.reshape(-1, 2, 2).astype(F32) + 0.5
    coords = coords / jnp.array([IMG_W, IMG_H], F32)
    corner = _pe_encode(coords, wp["gauss"])                         # (Nb, 2, 32)
    corner = corner.at[:, 0, :].add(wp["point_emb"][2])
    corner = corner.at[:, 1, :].add(wp["point_emb"][3])
    return corner


def _patchify(image_nchw):
    B, C, H, W = image_nchw.shape
    nh, nw = H // PATCH, W // PATCH
    x = jnp.transpose(image_nchw, (0, 2, 3, 1))                      # NHWC
    patches = x.reshape(B, nh, PATCH, nw, PATCH, C).transpose(0, 1, 3, 2, 4, 5)
    return patches.reshape(B * nh * nw, PATCH * PATCH * C).astype(F32)
    # TODO(synk): assumes B == 1, matching the reference torch.rand(1, 3, H, W).


# ---------------------------------------------------------------------------
# MedSAM_Lite.forward (factory: the static slab layout is closed over)
# ---------------------------------------------------------------------------
def make_medsam_lite_forward(meta):
    treedef, offsets, slab_rows = meta
    kernel = _make_kernel(treedef, offsets)

    def forward(slab, wrapper, image_nchw, boxes, multimask_output=False):
        patches = _patchify(image_nchw)                              # (16, 48)
        sparse = _prompt_encoder(wrapper, boxes)                     # (Nb, 2, 32)
        n_boxes = sparse.shape[0]
        out_tok = jnp.broadcast_to(wrapper["output_tokens"][None],
                                   (n_boxes, NUM_MASK_TOKENS + 1, EMBED))
        tokens_all = jnp.concatenate([out_tok, sparse], axis=1)      # (Nb, 7, 32)

        out = pl.pallas_call(
            kernel,
            out_shape=jax.ShapeDtypeStruct((n_boxes, OUT_ROWS, UP_H * UP_W), F32),
            grid=(n_boxes,),
            in_specs=[
                # Weight slab + patches: constant block index -> resident, DMA'd once.
                pl.BlockSpec((slab_rows, SLAB_W), lambda b: (0, 0)),
                pl.BlockSpec((N_TOK, PATCH * PATCH * C_IN), lambda b: (0, 0)),
                # Per-box prompt tokens.
                pl.BlockSpec((None, NUM_MASK_TOKENS + 3, EMBED), lambda b: (b, 0, 0)),
            ],
            out_specs=pl.BlockSpec((None, OUT_ROWS, UP_H * UP_W), lambda b: (b, 0, 0)),
            scratch_shapes=[pltpu.VMEM((N_TOK, EMBED), F32)],        # encoder output
            compiler_params=pltpu.CompilerParams(
                # "arbitrary" so the pl.when-gated encoder + persistent scratch
                # is valid; switch to "parallel" (v7x megacore) only if the
                # encoder is hoisted to its own call.
                dimension_semantics=("arbitrary",)),
            cost_estimate=pl.CostEstimate(flops=2_500_000, transcendentals=8_000,
                                          bytes_accessed=2_000_000),
        )(slab, patches, tokens_all)

        masks_perm = out[:, 0:NUM_MASK_TOKENS, :]                    # (Nb, 4, 256)
        iou_pred = out[:, NUM_MASK_TOKENS, 0:NUM_MASK_TOKENS]        # (Nb, 4)
        # Pixel-shuffle the permuted (token, (di,dj,ei,ej,h,w)) slab to (H, W).
        m = masks_perm.reshape(n_boxes, NUM_MASK_TOKENS, 2, 2, 2, 2, EMB_H, EMB_W)
        m = m.transpose(0, 1, 6, 2, 4, 7, 3, 5).reshape(
            n_boxes, NUM_MASK_TOKENS, UP_H, UP_W)

        if multimask_output:
            return m[:, 1:, :, :], iou_pred[:, 1:]
        return m[:, 0:1, :, :], iou_pred[:, 0:1]

    return forward


# ---------------------------------------------------------------------------
# Deterministic parameter init (natural layout)
# ---------------------------------------------------------------------------
def init_params(key):
    ks = iter(jax.random.split(key, 256))

    def nk():
        return next(ks)

    def w(fi, fo, scale=0.02):
        return scale * jax.random.normal(nk(), (fi, fo), F32)

    def zeros(n):
        return jnp.zeros((n,), F32)

    def ones(n):
        return jnp.ones((n,), F32)

    def attn(E, internal):
        return {
            "q_w": w(E, internal), "q_b": zeros(internal),
            "k_w": w(E, internal), "k_b": zeros(internal),
            "v_w": w(E, internal), "v_b": zeros(internal),
            "out_w": w(internal, E), "out_b": zeros(E),
        }

    enc = {
        "patch_w": w(PATCH * PATCH * C_IN, EMBED), "patch_b": zeros(EMBED),
        "ln1_g": ones(EMBED), "ln1_b": zeros(EMBED),
        "mlp1_w": w(EMBED, MLP_DIM), "mlp1_b": zeros(MLP_DIM),
        "mlp2_w": w(MLP_DIM, EMBED), "mlp2_b": zeros(EMBED),
        "neck_w": w(EMBED, EMBED), "neck_b": zeros(EMBED),
        "ln2_g": ones(EMBED), "ln2_b": zeros(EMBED),
    }

    pe = {
        "gauss": jax.random.normal(nk(), (2, EMBED // 2), F32),
        "point_emb": 0.02 * jax.random.normal(nk(), (4, EMBED), F32),
        "no_mask_embed": 0.02 * jax.random.normal(nk(), (EMBED,), F32),
    }

    internal_ca = EMBED // ATTN_DOWNSAMPLE
    layers = []
    for _ in range(2):
        layers.append({
            "self_attn": attn(EMBED, EMBED),
            "n1_g": ones(EMBED), "n1_b": zeros(EMBED),
            "ca_t2i": attn(EMBED, internal_ca),
            "n2_g": ones(EMBED), "n2_b": zeros(EMBED),
            "mlp1_w": w(EMBED, MLP_DIM), "mlp1_b": zeros(MLP_DIM),
            "mlp2_w": w(MLP_DIM, EMBED), "mlp2_b": zeros(EMBED),
            "n3_g": ones(EMBED), "n3_b": zeros(EMBED),
            "ca_i2t": attn(EMBED, internal_ca),
            "n4_g": ones(EMBED), "n4_b": zeros(EMBED),
        })

    dec = {
        "iou_token": 0.02 * jax.random.normal(nk(), (1, EMBED), F32),
        "mask_tokens": 0.02 * jax.random.normal(nk(), (NUM_MASK_TOKENS, EMBED), F32),
        "tr": {
            "layers": layers,
            "final_attn": attn(EMBED, internal_ca),
            "norm_final_g": ones(EMBED), "norm_final_b": zeros(EMBED),
        },
        "up1_w": w(EMBED, 4 * C_UP1), "up1_b": zeros(C_UP1),
        "up_ln_g": ones(C_UP1), "up_ln_b": zeros(C_UP1),
        "up2_w": w(C_UP1, 4 * C_UP2), "up2_b": zeros(C_UP2),
        "hyper": [
            {"w1": w(EMBED, EMBED), "b1": zeros(EMBED),
             "w2": w(EMBED, EMBED), "b2": zeros(EMBED),
             "w3": w(EMBED, C_UP2), "b3": zeros(C_UP2)}
            for _ in range(NUM_MASK_TOKENS)
        ],
        "iou_w1": w(EMBED, MLP_DIM), "iou_b1": zeros(MLP_DIM),
        "iou_w2": w(MLP_DIM, MLP_DIM), "iou_b2": zeros(MLP_DIM),
        "iou_w3": w(MLP_DIM, NUM_MASK_TOKENS), "iou_b3": zeros(NUM_MASK_TOKENS),
    }

    return {"enc": enc, "pe": pe, "dec": dec}


# ---------------------------------------------------------------------------
# Parameter fusion + packing into one lane-dense VMEM slab
# ---------------------------------------------------------------------------
def _row(v):
    return v.reshape(1, -1).astype(F32)


def _prep_attn(ap):
    internal = ap["q_w"].shape[1]
    dh = internal // NUM_HEADS
    scale = 1.0 / math.sqrt(dh)
    qkv_w = jnp.concatenate([ap["q_w"] * scale, ap["k_w"], ap["v_w"]], axis=1)
    qkv_b = jnp.concatenate([ap["q_b"] * scale, ap["k_b"], ap["v_b"]], axis=0)
    return {"qkv_w": qkv_w.astype(F32), "qkv_b": _row(qkv_b),
            "out_w": ap["out_w"].astype(F32), "out_b": _row(ap["out_b"])}


def _block_diag(blocks):
    rows = sum(b.shape[0] for b in blocks)
    cols = sum(b.shape[1] for b in blocks)
    out = jnp.zeros((rows, cols), F32)
    r = c = 0
    for blk in blocks:
        out = out.at[r:r + blk.shape[0], c:c + blk.shape[1]].set(blk)
        r += blk.shape[0]
        c += blk.shape[1]
    return out


def _pack_slab(nested):
    """Pack every leaf into one (rows, SLAB_W) f32 slab; every entry starts on
    an 8-row (sublane) boundary and column 0, so in-kernel views are aligned
    static slices."""
    leaves, treedef = jax.tree_util.tree_flatten(nested)
    offsets, blocks, row = [], [], 0
    for leaf in leaves:
        a = jnp.asarray(leaf, F32)
        if a.ndim == 1:
            a = a.reshape(1, -1)
        assert a.ndim == 2 and a.shape[1] <= SLAB_W, a.shape
        r, c = int(a.shape[0]), int(a.shape[1])
        r_pad = ((r + 7) // 8) * 8
        blk = jnp.zeros((r_pad, SLAB_W), F32).at[:r, :c].set(a)
        blocks.append(blk)
        offsets.append((row, r, c))
        row += r_pad
    slab = jnp.concatenate(blocks, axis=0)
    return slab, treedef, tuple(offsets)


def prepare_params(params):
    enc, pe, dec = params["enc"], params["pe"], params["dec"]
    enc_k = {
        "patch_w": enc["patch_w"], "patch_b": _row(enc["patch_b"]),
        "ln1_g": _row(enc["ln1_g"]), "ln1_b": _row(enc["ln1_b"]),
        "mlp1_w": enc["mlp1_w"], "mlp1_b": _row(enc["mlp1_b"]),
        "mlp2_w": enc["mlp2_w"], "mlp2_b": _row(enc["mlp2_b"]),
        "neck_w": enc["neck_w"], "neck_b": _row(enc["neck_b"]),
        "ln2_g": _row(enc["ln2_g"]), "ln2_b": _row(enc["ln2_b"]),
    }
    layers_k = []
    for lp in dec["tr"]["layers"]:
        layers_k.append({
            "self_attn": _prep_attn(lp["self_attn"]),
            "n1_g": _row(lp["n1_g"]), "n1_b": _row(lp["n1_b"]),
            "ca_t2i": _prep_attn(lp["ca_t2i"]),
            "n2_g": _row(lp["n2_g"]), "n2_b": _row(lp["n2_b"]),
            "mlp1_w": lp["mlp1_w"], "mlp1_b": _row(lp["mlp1_b"]),
            "mlp2_w": lp["mlp2_w"], "mlp2_b": _row(lp["mlp2_b"]),
            "n3_g": _row(lp["n3_g"]), "n3_b": _row(lp["n3_b"]),
            "ca_i2t": _prep_attn(lp["ca_i2t"]),
            "n4_g": _row(lp["n4_g"]), "n4_b": _row(lp["n4_b"]),
        })
    # 0/1 mask selecting, for mask-token i, its own hypernet's C_UP2 output block.
    hyp_mask = (jnp.arange(NUM_MASK_TOKENS * C_UP2)[None, :] // C_UP2
                == jnp.arange(NUM_MASK_TOKENS)[:, None]).astype(F32)   # (4, 16)
    dec_k = {
        "layers": layers_k,
        "final_attn": _prep_attn(dec["tr"]["final_attn"]),
        "nf_g": _row(dec["tr"]["norm_final_g"]), "nf_b": _row(dec["tr"]["norm_final_b"]),
        "up1_w": dec["up1_w"], "up1_b": _row(jnp.tile(dec["up1_b"], 4)),
        "up_ln_g": _row(dec["up_ln_g"]), "up_ln_b": _row(dec["up_ln_b"]),
        "up2_w": dec["up2_w"], "up2_b": _row(jnp.tile(dec["up2_b"], 4)),
        # Fused IoU + hyper heads: [iou] + 4 hyper blocks (block-diagonal stack).
        "head_w1": jnp.concatenate([dec["iou_w1"]] + [h["w1"] for h in dec["hyper"]], axis=1),
        "head_b1": _row(jnp.concatenate([dec["iou_b1"]] + [h["b1"] for h in dec["hyper"]], axis=0)),
        "head_w2": _block_diag([dec["iou_w2"]] + [h["w2"] for h in dec["hyper"]]),
        "head_b2": _row(jnp.concatenate([dec["iou_b2"]] + [h["b2"] for h in dec["hyper"]], axis=0)),
        "head_w3": _block_diag([dec["iou_w3"]] + [h["w3"] for h in dec["hyper"]]),
        "head_b3": _row(jnp.concatenate([dec["iou_b3"]] + [h["b3"] for h in dec["hyper"]], axis=0)),
        # Constants baked into the slab (no per-call inputs needed for these).
        "pos": _dense_pe_seq(pe["gauss"]),                            # (16, 32) dense PE
        "dense_row": _row(pe["no_mask_embed"]),                       # (1, 32)
        "hyp_mask": hyp_mask,                                         # (4, 16)
    }
    slab, treedef, offsets = _pack_slab({"enc": enc_k, "dec": dec_k})
    wrapper = {
        "gauss": pe["gauss"],
        "point_emb": pe["point_emb"],
        "output_tokens": jnp.concatenate([dec["iou_token"], dec["mask_tokens"]], axis=0),
    }
    return {"slab": slab, "wrapper": wrapper,
            "meta": (treedef, offsets, int(slab.shape[0]))}


if __name__ == "__main__":
    key = jax.random.PRNGKey(0)
    pkey, ikey, bkey = jax.random.split(key, 3)

    params = init_params(pkey)
    prepared = prepare_params(params)
    image = jax.random.uniform(ikey, (B_IMG, C_IN, IMG_H, IMG_W), F32)  # like torch.rand(1,3,H,W)
    boxes = jax.random.randint(bkey, (1, 1, 4), 0, IMG_W)               # like torch.randint

    fwd = jax.jit(make_medsam_lite_forward(prepared["meta"]))
    masks, iou_pred = fwd(prepared["slab"], prepared["wrapper"], image, boxes)
    jax.block_until_ready((masks, iou_pred))

    assert masks.shape == (1, 1, IMG_H, IMG_W)
    assert iou_pred.shape == (1, 1)
    print("KERNEL_OK")
</pallas_src>

<mosaic_0001>
module attributes {stable_mosaic.version = 11 : i64} {
  func.func @kernel(%arg0: i32, %arg1: memref<1632x256xf32, #tpu.memory_space<vmem>>, %arg2: memref<16x48xf32, #tpu.memory_space<vmem>>, %arg3: memref<1x7x32xf32, #tpu.memory_space<vmem>>, %arg4: memref<1x8x256xf32, #tpu.memory_space<vmem>>, %arg5: memref<16x32xf32, #tpu.memory_space<vmem>>) attributes {dimension_semantics = [#tpu.dimension_semantics<arbitrary>], iteration_bounds = array<i64: 1>, scalar_prefetch = 0 : i64, scratch_operands = 1 : i64, tpu.core_type = #tpu.core_type<tc>, window_params = [{pipeline_mode = #tpu.pipeline_mode<synchronous>, transform_indices = @transform_0, window_bounds = array<i64: 1632, 256>}, {pipeline_mode = #tpu.pipeline_mode<synchronous>, transform_indices = @transform_1, window_bounds = array<i64: 16, 48>}, {transform_indices = @transform_2, window_bounds = array<i64: 1, 7, 32>}, {transform_indices = @transform_3, window_bounds = array<i64: 1, 8, 256>}]} {
    %c0_i32 = arith.constant 0 : i32
    %0 = arith.cmpi eq, %arg0, %c0_i32 : i32
    %1 = arith.extui %0 : i1 to i32
    %c0_i32_0 = arith.constant 0 : i32
    %2 = arith.cmpi ne, %1, %c0_i32_0 : i32
    scf.if %2 {
      %c0_314 = arith.constant 0 : index
      %c0_315 = arith.constant 0 : index
      %911 = vector.load %arg2[%c0_314, %c0_315] : memref<16x48xf32, #tpu.memory_space<vmem>>, vector<16x48xf32>
      %c1584 = arith.constant 1584 : index
      %c0_316 = arith.constant 0 : index
      %912 = vector.load %arg1[%c1584, %c0_316] : memref<1632x256xf32, #tpu.memory_space<vmem>>, vector<48x32xf32>
      %cst_317 = arith.constant dense<0.000000e+00> : vector<16x32xf32>
      %913 = tpu.matmul %911, %912, %cst_317 {dimension_numbers = #tpu.dot_dimension_numbers<[1], [0], [0], [1], [0, 0, 1, 1], [], []>} : vector<16x48xf32>, vector<48x32xf32>, vector<16x32xf32> -> vector<16x32xf32>
      %c1576 = arith.constant 1576 : index
      %c0_318 = arith.constant 0 : index
      %914 = vector.load %arg1[%c1576, %c0_318] : memref<1632x256xf32, #tpu.memory_space<vmem>>, vector<1x32xf32>
      %915 = vector.broadcast %914 : vector<1x32xf32> to vector<16x32xf32>
      %916 = arith.addf %913, %915 : vector<16x32xf32>
      %cst_319 = arith.constant dense<0.000000e+00> : vector<16xf32>
      %917 = vector.multi_reduction <add>, %916, %cst_319 [1] : vector<16x32xf32> to vector<16xf32>
      %918 = vector.shape_cast %917 : vector<16xf32> to vector<16x1xf32>
      %cst_320 = arith.constant 3.200000e+01 : f32
      %919 = vector.broadcast %cst_320 : f32 to vector<16x1xf32>
      %920 = arith.divf %918, %919 : vector<16x1xf32>
      %921 = vector.broadcast %920 : vector<16x1xf32> to vector<16x32xf32>
      %922 = arith.subf %916, %921 : vector<16x32xf32>
      %923 = arith.mulf %922, %922 : vector<16x32xf32>
      %cst_321 = arith.constant dense<0.000000e+00> : vector<16xf32>
      %924 = vector.multi_reduction <add>, %923, %cst_321 [1] : vector<16x32xf32> to vector<16xf32>
      %925 = vector.shape_cast %924 : vector<16xf32> to vector<16x1xf32>
      %cst_322 = arith.constant 3.200000e+01 : f32
      %926 = vector.broadcast %cst_322 : f32 to vector<16x1xf32>
      %927 = arith.divf %925, %926 : vector<16x1xf32>
      %cst_323 = arith.constant 9.99999974E-6 : f32
      %928 = vector.broadcast %cst_323 : f32 to vector<16x1xf32>
      %929 = arith.addf %927, %928 : vector<16x1xf32>
      %930 = math.rsqrt %929 : vector<16x1xf32>
      %931 = vector.broadcast %930 : vector<16x1xf32> to vector<16x32xf32>
      %932 = arith.mulf %922, %931 : vector<16x32xf32>
      %c1400 = arith.constant 1400 : index
      %c0_324 = arith.constant 0 : index
      %933 = vector.load %arg1[%c1400, %c0_324] : memref<1632x256xf32, #tpu.memory_space<vmem>>, vector<1x32xf32>
      %934 = vector.broadcast %933 : vector<1x32xf32> to vector<16x32xf32>
      %935 = arith.mulf %932, %934 : vector<16x32xf32>
      %c1392 = arith.constant 1392 : index
      %c0_325 = arith.constant 0 : index
      %936 = vector.load %arg1[%c1392, %c0_325] : memref<1632x256xf32, #tpu.memory_space<vmem>>, vector<1x32xf32>
      %937 = vector.broadcast %936 : vector<1x32xf32> to vector<16x32xf32>
      %938 = arith.addf %935, %937 : vector<16x32xf32>
      %c1432 = arith.constant 1432 : index
      %c0_326 = arith.constant 0 : index
      %939 = vector.load %arg1[%c1432, %c0_326] : memref<1632x256xf32, #tpu.memory_space<vmem>>, vector<32x64xf32>
      %cst_327 = arith.constant dense<0.000000e+00> : vector<16x64xf32>
      %940 = tpu.matmul %938, %939, %cst_327 {dimension_numbers = #tpu.dot_dimension_numbers<[1], [0], [0], [1], [0, 0, 1, 1], [], []>} : vector<16x32xf32>, vector<32x64xf32>, vector<16x64xf32> -> vector<16x64xf32>
      %c1424 = arith.constant 1424 : index
      %c0_328 = arith.constant 0 : index
      %941 = vector.load %arg1[%c1424, %c0_328] : memref<1632x256xf32, #tpu.memory_space<vmem>>, vector<1x64xf32>
      %942 = vector.broadcast %941 : vector<1x64xf32> to vector<16x64xf32>
      %943 = arith.addf %940, %942 : vector<16x64xf32>
      %944 = arith.mulf %943, %943 : vector<16x64xf32>
      %945 = arith.mulf %943, %944 : vector<16x64xf32>
      %cst_329 = arith.constant 4.471500e-02 : f32
      %946 = vector.broadcast %cst_329 : f32 to vector<16x64xf32>
      %947 = arith.mulf %946, %945 : vector<16x64xf32>
      %948 = arith.addf %943, %947 : vector<16x64xf32>
      %cst_330 = arith.constant 0.797884583 : f32
      %949 = vector.broadcast %cst_330 : f32 to vector<16x64xf32>
      %950 = arith.mulf %949, %948 : vector<16x64xf32>
      %951 = math.tanh %950 : vector<16x64xf32>
      %cst_331 = arith.constant 1.000000e+00 : f32
      %952 = vector.broadcast %cst_331 : f32 to vector<16x64xf32>
      %953 = arith.addf %952, %951 : vector<16x64xf32>
      %cst_332 = arith.constant 5.000000e-01 : f32
      %954 = vector.broadcast %cst_332 : f32 to vector<16x64xf32>
      %955 = arith.mulf %954, %953 : vector<16x64xf32>
      %956 = arith.mulf %943, %955 : vector<16x64xf32>
      %c1472 = arith.constant 1472 : index
      %c0_333 = arith.constant 0 : index
      %957 = vector.load %arg1[%c1472, %c0_333] : memref<1632x256xf32, #tpu.memory_space<vmem>>, vector<64x32xf32>
      %cst_334 = arith.constant dense<0.000000e+00> : vector<16x32xf32>
      %958 = tpu.matmul %956, %957, %cst_334 {dimension_numbers = #tpu.dot_dimension_numbers<[1], [0], [0], [1], [0, 0, 1, 1], [], []>} : vector<16x64xf32>, vector<64x32xf32>, vector<16x32xf32> -> vector<16x32xf32>
      %c1464 = arith.constant 1464 : index
      %c0_335 = arith.constant 0 : index
      %959 = vector.load %arg1[%c1464, %c0_335] : memref<1632x256xf32, #tpu.memory_space<vmem>>, vector<1x32xf32>
      %960 = vector.broadcast %959 : vector<1x32xf32> to vector<16x32xf32>
      %961 = arith.addf %958, %960 : vector<16x32xf32>
      %962 = arith.addf %916, %961 : vector<16x32xf32>
      %c1544 = arith.constant 1544 : index
      %c0_336 = arith.constant 0 : index
      %963 = vector.load %arg1[%c1544, %c0_336] : memref<1632x256xf32, #tpu.memory_space<vmem>>, vector<32x32xf32>
      %cst_337 = arith.constant dense<0.000000e+00> : vector<16x32xf32>
      %964 = tpu.matmul %962, %963, %cst_337 {dimension_numbers = #tpu.dot_dimension_numbers<[1], [0], [0], [1], [0, 0, 1, 1], [], []>} : vector<16x32xf32>, vector<32x32xf32>, vector<16x32xf32> -> vector<16x32xf32>
      %c1536 = arith.constant 1536 : index
      %c0_338 = arith.constant 0 : index
      %965 = vector.load %arg1[%c1536, %c0_338] : memref<1632x256xf32, #tpu.memory_space<vmem>>, vector<1x32xf32>
      %966 = vector.broadcast %965 : vector<1x32xf32> to vector<16x32xf32>
      %967 = arith.addf %964, %966 : vector<16x32xf32>
      %cst_339 = arith.constant dense<0.000000e+00> : vector<16xf32>
      %968 = vector.multi_reduction <add>, %967, %cst_339 [1] : vector<16x32xf32> to vector<16xf32>
      %969 = vector.shape_cast %968 : vector<16xf32> to vector<16x1xf32>
      %cst_340 = arith.constant 3.200000e+01 : f32
      %970 = vector.broadcast %cst_340 : f32 to vector<16x1xf32>
      %971 = arith.divf %969, %970 : vector<16x1xf32>
      %972 = vector.broadcast %971 : vector<16x1xf32> to vector<16x32xf32>
      %973 = arith.subf %967, %972 : vector<16x32xf32>
      %974 = arith.mulf %973, %973 : vector<16x32xf32>
      %cst_341 = arith.constant dense<0.000000e+00> : vector<16xf32>
      %975 = vector.multi_reduction <add>, %974, %cst_341 [1] : vector<16x32xf32> to vector<16xf32>
      %976 = vector.shape_cast %975 : vector<16xf32> to vector<16x1xf32>
      %cst_342 = arith.constant 3.200000e+01 : f32
      %977 = vector.broadcast %cst_342 : f32 to vector<16x1xf32>
      %978 = arith.divf %976, %977 : vector<16x1xf32>
      %cst_343 = arith.constant 9.99999974E-6 : f32
      %979 = vector.broadcast %cst_343 : f32 to vector<16x1xf32>
      %980 = arith.addf %978, %979 : vector<16x1xf32>
      %981 = math.rsqrt %980 : vector<16x1xf32>
      %982 = vector.broadcast %981 : vector<16x1xf32> to vector<16x32xf32>
      %983 = arith.mulf %973, %982 : vector<16x32xf32>
      %c1416 = arith.constant 1416 : index
      %c0_344 = arith.constant 0 : index
      %984 = vector.load %arg1[%c1416, %c0_344] : memref<1632x256xf32, #tpu.memory_space<vmem>>, vector<1x32xf32>
      %985 = vector.broadcast %984 : vector<1x32xf32> to vector<16x32xf32>
      %986 = arith.mulf %983, %985 : vector<16x32xf32>
      %c1408 = arith.constant 1408 : index
      %c0_345 = arith.constant 0 : index
      %987 = vector.load %arg1[%c1408, %c0_345] : memref<1632x256xf32, #tpu.memory_space<vmem>>, vector<1x32xf32>
      %988 = vector.broadcast %987 : vector<1x32xf32> to vector<16x32xf32>
      %989 = arith.addf %986, %988 : vector<16x32xf32>
      %c0_346 = arith.constant 0 : index
      %c0_347 = arith.constant 0 : index
      %990 = vector.load %arg1[%c0_346, %c0_347] : memref<1632x256xf32, #tpu.memory_space<vmem>>, vector<1x32xf32>
      %991 = vector.broadcast %990 : vector<1x32xf32> to vector<16x32xf32>
      %992 = arith.addf %989, %991 : vector<16x32xf32>
      %c0_348 = arith.constant 0 : index
      %c0_349 = arith.constant 0 : index
      %993 = vector.load %arg5[%c0_348, %c0_349] : memref<16x32xf32, #tpu.memory_space<vmem>>, vector<16x32xf32>
      tpu.vector_store %arg5[%c0_348, %c0_349], %992 {strides = array<i32>} : memref<16x32xf32, #tpu.memory_space<vmem>>, vector<16x32xf32>,
    } else {
    }
    %c0 = arith.constant 0 : index
    %c0_1 = arith.constant 0 : index
    %c0_2 = arith.constant 0 : index
    %3 = vector.load %arg3[%c0, %c0_1, %c0_2] : memref<1x7x32xf32, #tpu.memory_space<vmem>>, vector<1x7x32xf32>
    %4 = vector.shape_cast %3 : vector<1x7x32xf32> to vector<7x32xf32>
    %c1304 = arith.constant 1304 : index
    %c0_3 = arith.constant 0 : index
    %5 = vector.load %arg1[%c1304, %c0_3] : memref<1632x256xf32, #tpu.memory_space<vmem>>, vector<16x32xf32>
    %c0_4 = arith.constant 0 : index
    %c0_5 = arith.constant 0 : index
    %6 = vector.load %arg5[%c0_4, %c0_5] : memref<16x32xf32, #tpu.memory_space<vmem>>, vector<16x32xf32>
    %c872 = arith.constant 872 : index
    %c0_6 = arith.constant 0 : index
    %7 = vector.load %arg1[%c872, %c0_6] : memref<1632x256xf32, #tpu.memory_space<vmem>>, vector<32x96xf32>
    %c864 = arith.constant 864 : index
    %c0_7 = arith.constant 0 : index
    %8 = vector.load %arg1[%c864, %c0_7] : memref<1632x256xf32, #tpu.memory_space<vmem>>, vector<1x96xf32>
    %9 = vector.extract_strided_slice %7 {offsets = [0, 0], sizes = [32, 32], strides = [1, 1]} : vector<32x96xf32> to vector<32x32xf32>
    %cst = arith.constant dense<0.000000e+00> : vector<7x32xf32>
    %10 = tpu.matmul %4, %9, %cst {dimension_numbers = #tpu.dot_dimension_numbers<[1], [0], [0], [1], [0, 0, 1, 1], [], []>} : vector<7x32xf32>, vector<32x32xf32>, vector<7x32xf32> -> vector<7x32xf32>
    %11 = vector.extract_strided_slice %8 {offsets = [0, 0], sizes = [1, 32], strides = [1, 1]} : vector<1x96xf32> to vector<1x32xf32>
    %12 = vector.broadcast %11 : vector<1x32xf32> to vector<7x32xf32>
    %13 = arith.addf %10, %12 : vector<7x32xf32>
    %14 = vector.extract_strided_slice %7 {offsets = [0, 32], sizes = [32, 32], strides = [1, 1]} : vector<32x96xf32> to vector<32x32xf32>
    %cst_8 = arith.constant dense<0.000000e+00> : vector<7x32xf32>
    %15 = tpu.matmul %4, %14, %cst_8 {dimension_numbers = #tpu.dot_dimension_numbers<[1], [0], [0], [1], [0, 0, 1, 1], [], []>} : vector<7x32xf32>, vector<32x32xf32>, vector<7x32xf32> -> vector<7x32xf32>
    %16 = vector.extract_strided_slice %8 {offsets = [0, 32], sizes = [1, 32], strides = [1, 1]} : vector<1x96xf32> to vector<1x32xf32>
    %17 = vector.broadcast %16 : vector<1x32xf32> to vector<7x32xf32>
    %18 = arith.addf %15, %17 : vector<7x32xf32>
    %19 = vector.extract_strided_slice %7 {offsets = [0, 64], sizes = [32, 32], strides = [1, 1]} : vector<32x96xf32> to vector<32x32xf32>
    %cst_9 = arith.constant dense<0.000000e+00> : vector<7x32xf32>
    %20 = tpu.matmul %4, %19, %cst_9 {dimension_numbers = #tpu.dot_dimension_numbers<[1], [0], [0], [1], [0, 0, 1, 1], [], []>} : vector<7x32xf32>, vector<32x32xf32>, vector<7x32xf32> -> vector<7x32xf32>
    %21 = vector.extract_strided_slice %8 {offsets = [0, 64], sizes = [1, 32], strides = [1, 1]} : vector<1x96xf32> to vector<1x32xf32>
    %22 = vector.broadcast %21 : vector<1x32xf32> to vector<7x32xf32>
    %23 = arith.addf %20, %22 : vector<7x32xf32>
    %24 = vector.extract_strided_slice %13 {offsets = [0, 0], sizes = [7, 16], strides = [1, 1]} : vector<7x32xf32> to vector<7x16xf32>
    %25 = vector.extract_strided_slice %18 {offsets = [0, 0], sizes = [7, 16], strides = [1, 1]} : vector<7x32xf32> to vector<7x16xf32>
    "tpu.trace_start"() <{level = 10 : i32, message = "qd,kd->qk"}> : () -> ()
    %cst_10 = arith.constant dense<0.000000e+00> : vector<7x7xf32>
    %26 = tpu.matmul %24, %25, %cst_10 {dimension_numbers = #tpu.dot_dimension_numbers<[1], [1], [0], [0], [0, 0, 1, 0], [], []>} : vector<7x16xf32>, vector<7x16xf32>, vector<7x7xf32> -> vector<7x7xf32>
    "tpu.trace_stop"() : () -> ()
    %cst_11 = arith.constant dense<0xFF800000> : vector<7xf32>
    %27 = vector.multi_reduction <maximumf>, %26, %cst_11 [1] : vector<7x7xf32> to vector<7xf32>
    %28 = vector.shape_cast %27 : vector<7xf32> to vector<7x1xf32>
    %29 = vector.broadcast %28 : vector<7x1xf32> to vector<7x7xf32>
    %30 = arith.subf %26, %29 : vector<7x7xf32>
    %31 = math.exp %30 : vector<7x7xf32>
    %cst_12 = arith.constant dense<0.000000e+00> : vector<7xf32>
    %32 = vector.multi_reduction <add>, %31, %cst_12 [1] : vector<7x7xf32> to vector<7xf32>
    %33 = vector.shape_cast %32 : vector<7xf32> to vector<7x1xf32>
    %34 = tpu.reciprocal %33 {approx = true} : vector<7x1xf32> -> vector<7x1xf32>
    %35 = vector.broadcast %34 : vector<7x1xf32> to vector<7x7xf32>
    %36 = arith.mulf %31, %35 : vector<7x7xf32>
    %37 = vector.extract_strided_slice %23 {offsets = [0, 0], sizes = [7, 16], strides = [1, 1]} : vector<7x32xf32> to vector<7x16xf32>
    %cst_13 = arith.constant dense<0.000000e+00> : vector<7x16xf32>
    %38 = tpu.matmul %36, %37, %cst_13 {dimension_numbers = #tpu.dot_dimension_numbers<[1], [0], [0], [1], [0, 0, 1, 1], [], []>} : vector<7x7xf32>, vector<7x16xf32>, vector<7x16xf32> -> vector<7x16xf32>
    %39 = vector.extract_strided_slice %13 {offsets = [0, 16], sizes = [7, 16], strides = [1, 1]} : vector<7x32xf32> to vector<7x16xf32>
    %40 = vector.extract_strided_slice %18 {offsets = [0, 16], sizes = [7, 16], strides = [1, 1]} : vector<7x32xf32> to vector<7x16xf32>
    "tpu.trace_start"() <{level = 10 : i32, message = "qd,kd->qk"}> : () -> ()
    %cst_14 = arith.constant dense<0.000000e+00> : vector<7x7xf32>
    %41 = tpu.matmul %39, %40, %cst_14 {dimension_numbers = #tpu.dot_dimension_numbers<[1], [1], [0], [0], [0, 0, 1, 0], [], []>} : vector<7x16xf32>, vector<7x16xf32>, vector<7x7xf32> -> vector<7x7xf32>
    "tpu.trace_stop"() : () -> ()
    %cst_15 = arith.constant dense<0xFF800000> : vector<7xf32>
    %42 = vector.multi_reduction <maximumf>, %41, %cst_15 [1] : vector<7x7xf32> to vector<7xf32>
    %43 = vector.shape_cast %42 : vector<7xf32> to vector<7x1xf32>
    %44 = vector.broadcast %43 : vector<7x1xf32> to vector<7x7xf32>
    %45 = arith.subf %41, %44 : vector<7x7xf32>
    %46 = math.exp %45 : vector<7x7xf32>
    %cst_16 = arith.constant dense<0.000000e+00> : vector<7xf32>
    %47 = vector.multi_reduction <add>, %46, %cst_16 [1] : vector<7x7xf32> to vector<7xf32>
    %48 = vector.shape_cast %47 : vector<7xf32> to vector<7x1xf32>
    %49 = tpu.reciprocal %48 {approx = true} : vector<7x1xf32> -> vector<7x1xf32>
    %50 = vector.broadcast %49 : vector<7x1xf32> to vector<7x7xf32>
    %51 = arith.mulf %46, %50 : vector<7x7xf32>
    %52 = vector.extract_strided_slice %23 {offsets = [0, 16], sizes = [7, 16], strides = [1, 1]} : vector<7x32xf32> to vector<7x16xf32>
    %cst_17 = arith.constant dense<0.000000e+00> : vector<7x16xf32>
    %53 = tpu.matmul %51, %52, %cst_17 {dimension_numbers = #tpu.dot_dimension_numbers<[1], [0], [0], [1], [0, 0, 1, 1], [], []>} : vector<7x7xf32>, vector<7x16xf32>, vector<7x16xf32> -> vector<7x16xf32>
    %54 = tpu.concatenate %38, %53 in 1 : vector<7x16xf32>, vector<7x16xf32> -> vector<7x32xf32>
    %c832 = arith.constant 832 : index
    %c0_18 = arith.constant 0 : index
    %55 = vector.load %arg1[%c832, %c0_18] : memref<1632x256xf32, #tpu.memory_space<vmem>>, vector<32x32xf32>
    %cst_19 = arith.constant dense<0.000000e+00> : vector<7x32xf32>
    %56 = tpu.matmul %54, %55, %cst_19 {dimension_numbers = #tpu.dot_dimension_numbers<[1], [0], [0], [1], [0, 0, 1, 1], [], []>} : vector<7x32xf32>, vector<32x32xf32>, vector<7x32xf32> -> vector<7x32xf32>
    %c824 = arith.constant 824 : index
    %c0_20 = arith.constant 0 : index
    %57 = vector.load %arg1[%c824, %c0_20] : memref<1632x256xf32, #tpu.memory_space<vmem>>, vector<1x32xf32>
    %58 = vector.broadcast %57 : vector<1x32xf32> to vector<7x32xf32>
    %59 = arith.addf %56, %58 : vector<7x32xf32>
    %cst_21 = arith.constant dense<0.000000e+00> : vector<7xf32>
    %60 = vector.multi_reduction <add>, %59, %cst_21 [1] : vector<7x32xf32> to vector<7xf32>
    %61 = vector.shape_cast %60 : vector<7xf32> to vector<7x1xf32>
    %cst_22 = arith.constant 3.200000e+01 : f32
    %62 = vector.broadcast %cst_22 : f32 to vector<7x1xf32>
    %63 = arith.divf %61, %62 : vector<7x1xf32>
    %64 = vector.broadcast %63 : vector<7x1xf32> to vector<7x32xf32>
    %65 = arith.subf %59, %64 : vector<7x32xf32>
    %66 = arith.mulf %65, %65 : vector<7x32xf32>
    %cst_23 = arith.constant dense<0.000000e+00> : vector<7xf32>
    %67 = vector.multi_reduction <add>, %66, %cst_23 [1] : vector<7x32xf32> to vector<7xf32>
    %68 = vector.shape_cast %67 : vector<7xf32> to vector<7x1xf32>
    %cst_24 = arith.constant 3.200000e+01 : f32
    %69 = vector.broadcast %cst_24 : f32 to vector<7x1xf32>
    %70 = arith.divf %68, %69 : vector<7x1xf32>
    %cst_25 = arith.constant 9.99999974E-6 : f32
    %71 = vector.broadcast %cst_25 : f32 to vector<7x1xf32>
    %72 = arith.addf %70, %71 : vector<7x1xf32>
    %73 = math.rsqrt %72 : vector<7x1xf32>
    %74 = vector.broadcast %73 : vector<7x1xf32> to vector<7x32xf32>
    %75 = arith.mulf %65, %74 : vector<7x32xf32>
    %c768 = arith.constant 768 : index
    %c0_26 = arith.constant 0 : index
    %76 = vector.load %arg1[%c768, %c0_26] : memref<1632x256xf32, #tpu.memory_space<vmem>>, vector<1x32xf32>
    %77 = vector.broadcast %76 : vector<1x32xf32> to vector<7x32xf32>
    %78 = arith.mulf %75, %77 : vector<7x32xf32>
    %c760 = arith.constant 760 : index
    %c0_27 = arith.constant 0 : index
    %79 = vector.load %arg1[%c760, %c0_27] : memref<1632x256xf32, #tpu.memory_space<vmem>>, vector<1x32xf32>
    %80 = vector.broadcast %79 : vector<1x32xf32> to vector<7x32xf32>
    %81 = arith.addf %78, %80 : vector<7x32xf32>
    %82 = arith.addf %81, %4 : vector<7x32xf32>
    %83 = arith.addf %6, %5 : vector<16x32xf32>
    %c616 = arith.constant 616 : index
    %c0_28 = arith.constant 0 : index
    %84 = vector.load %arg1[%c616, %c0_28] : memref<1632x256xf32, #tpu.memory_space<vmem>>, vector<32x48xf32>
    %c608 = arith.constant 608 : index
    %c0_29 = arith.constant 0 : index
    %85 = vector.load %arg1[%c608, %c0_29] : memref<1632x256xf32, #tpu.memory_space<vmem>>, vector<1x48xf32>
    %86 = vector.extract_strided_slice %84 {offsets = [0, 0], sizes = [32, 16], strides = [1, 1]} : vector<32x48xf32> to vector<32x16xf32>
    %cst_30 = arith.constant dense<0.000000e+00> : vector<7x16xf32>
    %87 = tpu.matmul %82, %86, %cst_30 {dimension_numbers = #tpu.dot_dimension_numbers<[1], [0], [0], [1], [0, 0, 1, 1], [], []>} : vector<7x32xf32>, vector<32x16xf32>, vector<7x16xf32> -> vector<7x16xf32>
    %88 = vector.extract_strided_slice %85 {offsets = [0, 0], sizes = [1, 16], strides = [1, 1]} : vector<1x48xf32> to vector<1x16xf32>
    %89 = vector.broadcast %88 : vector<1x16xf32> to vector<7x16xf32>
    %90 = arith.addf %87, %89 : vector<7x16xf32>
    %91 = vector.extract_strided_slice %84 {offsets = [0, 16], sizes = [32, 16], strides = [1, 1]} : vector<32x48xf32> to vector<32x16xf32>
    %cst_31 = arith.constant dense<0.000000e+00> : vector<16x16xf32>
    %92 = tpu.matmul %83, %91, %cst_31 {dimension_numbers = #tpu.dot_dimension_numbers<[1], [0], [0], [1], [0, 0, 1, 1], [], []>} : vector<16x32xf32>, vector<32x16xf32>, vector<16x16xf32> -> vector<16x16xf32>
    %93 = vector.extract_strided_slice %85 {offsets = [0, 16], sizes = [1, 16], strides = [1, 1]} : vector<1x48xf32> to vector<1x16xf32>
    %94 = vector.broadcast %93 : vector<1x16xf32> to vector<16x16xf32>
    %95 = arith.addf %92, %94 : vector<16x16xf32>
    %96 = vector.extract_strided_slice %84 {offsets = [0, 32], sizes = [32, 16], strides = [1, 1]} : vector<32x48xf32> to vector<32x16xf32>
    %cst_32 = arith.constant dense<0.000000e+00> : vector<16x16xf32>
    %97 = tpu.matmul %6, %96, %cst_32 {dimension_numbers = #tpu.dot_dimension_numbers<[1], [0], [0], [1], [0, 0, 1, 1], [], []>} : vector<16x32xf32>, vector<32x16xf32>, vector<16x16xf32> -> vector<16x16xf32>
    %98 = vector.extract_strided_slice %85 {offsets = [0, 32], sizes = [1, 16], strides = [1, 1]} : vector<1x48xf32> to vector<1x16xf32>
    %99 = vector.broadcast %98 : vector<1x16xf32> to vector<16x16xf32>
    %100 = arith.addf %97, %99 : vector<16x16xf32>
    %101 = vector.extract_strided_slice %90 {offsets = [0, 0], sizes = [7, 8], strides = [1, 1]} : vector<7x16xf32> to vector<7x8xf32>
    %102 = vector.extract_strided_slice %95 {offsets = [0, 0], sizes = [16, 8], strides = [1, 1]} : vector<16x16xf32> to vector<16x8xf32>
    "tpu.trace_start"() <{level = 10 : i32, message = "qd,kd->qk"}> : () -> ()
    %cst_33 = arith.constant dense<0.000000e+00> : vector<7x16xf32>
    %103 = tpu.matmul %101, %102, %cst_33 {dimension_numbers = #tpu.dot_dimension_numbers<[1], [1], [0], [0], [0, 0, 1, 0], [], []>} : vector<7x8xf32>, vector<16x8xf32>, vector<7x16xf32> -> vector<7x16xf32>
    "tpu.trace_stop"() : () -> ()
    %cst_34 = arith.constant dense<0xFF800000> : vector<7xf32>
    %104 = vector.multi_reduction <maximumf>, %103, %cst_34 [1] : vector<7x16xf32> to vector<7xf32>
    %105 = vector.shape_cast %104 : vector<7xf32> to vector<7x1xf32>
    %106 = vector.broadcast %105 : vector<7x1xf32> to vector<7x16xf32>
    %107 = arith.subf %103, %106 : vector<7x16xf32>
    %108 = math.exp %107 : vector<7x16xf32>
    %cst_35 = arith.constant dense<0.000000e+00> : vector<7xf32>
    %109 = vector.multi_reduction <add>, %108, %cst_35 [1] : vector<7x16xf32> to vector<7xf32>
    %110 = vector.shape_cast %109 : vector<7xf32> to vector<7x1xf32>
    %111 = tpu.reciprocal %110 {approx = true} : vector<7x1xf32> -> vector<7x1xf32>
    %112 = vector.broadcast %111 : vector<7x1xf32> to vector<7x16xf32>
    %113 = arith.mulf %108, %112 : vector<7x16xf32>
    %114 = vector.extract_strided_slice %100 {offsets = [0, 0], sizes = [16, 8], strides = [1, 1]} : vector<16x16xf32> to vector<16x8xf32>
    %cst_36 = arith.constant dense<0.000000e+00> : vector<7x8xf32>
    %115 = tpu.matmul %113, %114, %cst_36 {dimension_numbers = #tpu.dot_dimension_numbers<[1], [0], [0], [1], [0, 0, 1, 1], [], []>} : vector<7x16xf32>, vector<16x8xf32>, vector<7x8xf32> -> vector<7x8xf32>
    %116 = vector.extract_strided_slice %90 {offsets = [0, 8], sizes = [7, 8], strides = [1, 1]} : vector<7x16xf32> to vector<7x8xf32>
    %117 = vector.extract_strided_slice %95 {offsets = [0, 8], sizes = [16, 8], strides = [1, 1]} : vector<16x16xf32> to vector<16x8xf32>
    "tpu.trace_start"() <{level = 10 : i32, message = "qd,kd->qk"}> : () -> ()
    %cst_37 = arith.constant dense<0.000000e+00> : vector<7x16xf32>
    %118 = tpu.matmul %116, %117, %cst_37 {dimension_numbers = #tpu.dot_dimension_numbers<[1], [1], [0], [0], [0, 0, 1, 0], [], []>} : vector<7x8xf32>, vector<16x8xf32>, vector<7x16xf32> -> vector<7x16xf32>
    "tpu.trace_stop"() : () -> ()
    %cst_38 = arith.constant dense<0xFF800000> : vector<7xf32>
    %119 = vector.multi_reduction <maximumf>, %118, %cst_38 [1] : vector<7x16xf32> to vector<7xf32>
    %120 = vector.shape_cast %119 : vector<7xf32> to vector<7x1xf32>
    %121 = vector.broadcast %120 : vector<7x1xf32> to vector<7x16xf32>
    %122 = arith.subf %118, %121 : vector<7x16xf32>
    %123 = math.exp %122 : vector<7x16xf32>
    %cst_39 = arith.constant dense<0.000000e+00> : vector<7xf32>
    %124 = vector.multi_reduction <add>, %123, %cst_39 [1] : vector<7x16xf32> to vector<7xf32>
    %125 = vector.shape_cast %124 : vector<7xf32> to vector<7x1xf32>
    %126 = tpu.reciprocal %125 {approx = true} : vector<7x1xf32> -> vector<7x1xf32>
    %127 = vector.broadcast %126 : vector<7x1xf32> to vector<7x16xf32>
    %128 = arith.mulf %123, %127 : vector<7x16xf32>
    %129 = vector.extract_strided_slice %100 {offsets = [0, 8], sizes = [16, 8], strides = [1, 1]} : vector<16x16xf32> to vector<16x8xf32>
    %cst_40 = arith.constant dense<0.000000e+00> : vector<7x8xf32>
    %130 = tpu.matmul %128, %129, %cst_40 {dimension_numbers = #tpu.dot_dimension_numbers<[1], [0], [0], [1], [0, 0, 1, 1], [], []>} : vector<7x16xf32>, vector<16x8xf32>, vector<7x8xf32> -> vector<7x8xf32>
    %131 = tpu.concatenate %115, %130 in 1 : vector<7x8xf32>, vector<7x8xf32> -> vector<7x16xf32>
    %c592 = arith.constant 592 : index
    %c0_41 = arith.constant 0 : index
    %132 = vector.load %arg1[%c592, %c0_41] : memref<1632x256xf32, #tpu.memory_space<vmem>>, vector<16x32xf32>
    %cst_42 = arith.constant dense<0.000000e+00> : vector<7x32xf32>
    %133 = tpu.matmul %131, %132, %cst_42 {dimension_numbers = #tpu.dot_dimension_numbers<[1], [0], [0], [1], [0, 0, 1, 1], [], []>} : vector<7x16xf32>, vector<16x32xf32>, vector<7x32xf32> -> vector<7x32xf32>
    %c584 = arith.constant 584 : index
    %c0_43 = arith.constant 0 : index
    %134 = vector.load %arg1[%c584, %c0_43] : memref<1632x256xf32, #tpu.memory_space<vmem>>, vector<1x32xf32>
    %135 = vector.broadcast %134 : vector<1x32xf32> to vector<7x32xf32>
    %136 = arith.addf %133, %135 : vector<7x32xf32>
    %137 = arith.addf %81, %136 : vector<7x32xf32>
    %cst_44 = arith.constant dense<0.000000e+00> : vector<7xf32>
    %138 = vector.multi_reduction <add>, %137, %cst_44 [1] : vector<7x32xf32> to vector<7xf32>
    %139 = vector.shape_cast %138 : vector<7xf32> to vector<7x1xf32>
    %cst_45 = arith.constant 3.200000e+01 : f32
    %140 = vector.broadcast %cst_45 : f32 to vector<7x1xf32>
    %141 = arith.divf %139, %140 : vector<7x1xf32>
    %142 = vector.broadcast %141 : vector<7x1xf32> to vector<7x32xf32>
    %143 = arith.subf %137, %142 : vector<7x32xf32>
    %144 = arith.mulf %143, %143 : vector<7x32xf32>
    %cst_46 = arith.constant dense<0.000000e+00> : vector<7xf32>
    %145 = vector.multi_reduction <add>, %144, %cst_46 [1] : vector<7x32xf32> to vector<7xf32>
    %146 = vector.shape_cast %145 : vector<7xf32> to vector<7x1xf32>
    %cst_47 = arith.constant 3.200000e+01 : f32
    %147 = vector.broadcast %cst_47 : f32 to vector<7x1xf32>
    %148 = arith.divf %146, %147 : vector<7x1xf32>
    %cst_48 = arith.constant 9.99999974E-6 : f32
    %149 = vector.broadcast %cst_48 : f32 to vector<7x1xf32>
    %150 = arith.addf %148, %149 : vector<7x1xf32>
    %151 = math.rsqrt %150 : vector<7x1xf32>
    %152 = vector.broadcast %151 : vector<7x1xf32> to vector<7x32xf32>
    %153 = arith.mulf %143, %152 : vector<7x32xf32>
    %c784 = arith.constant 784 : index
    %c0_49 = arith.constant 0 : index
    %154 = vector.load %arg1[%c784, %c0_49] : memref<1632x256xf32, #tpu.memory_space<vmem>>, vector<1x32xf32>
    %155 = vector.broadcast %154 : vector<1x32xf32> to vector<7x32xf32>
    %156 = arith.mulf %153, %155 : vector<7x32xf32>
    %c776 = arith.constant 776 : index
    %c0_50 = arith.constant 0 : index
    %157 = vector.load %arg1[%c776, %c0_50] : memref<1632x256xf32, #tpu.memory_space<vmem>>, vector<1x32xf32>
    %158 = vector.broadcast %157 : vector<1x32xf32> to vector<7x32xf32>
    %159 = arith.addf %156, %158 : vector<7x32xf32>
    %c656 = arith.constant 656 : index
    %c0_51 = arith.constant 0 : index
    %160 = vector.load %arg1[%c656, %c0_51] : memref<1632x256xf32, #tpu.memory_space<vmem>>, vector<32x64xf32>
    %cst_52 = arith.constant dense<0.000000e+00> : vector<7x64xf32>
    %161 = tpu.matmul %159, %160, %cst_52 {dimension_numbers = #tpu.dot_dimension_numbers<[1], [0], [0], [1], [0, 0, 1, 1], [], []>} : vector<7x32xf32>, vector<32x64xf32>, vector<7x64xf32> -> vector<7x64xf32>
    %c648 = arith.constant 648 : index
    %c0_53 = arith.constant 0 : index
    %162 = vector.load %arg1[%c648, %c0_53] : memref<1632x256xf32, #tpu.memory_space<vmem>>, vector<1x64xf32>
    %163 = vector.broadcast %162 : vector<1x64xf32> to vector<7x64xf32>
    %164 = arith.addf %161, %163 : vector<7x64xf32>
    %cst_54 = arith.constant 0.000000e+00 : f32
    %165 = vector.broadcast %cst_54 : f32 to vector<7x64xf32>
    %166 = arith.maximumf %164, %165 : vector<7x64xf32>
    %c696 = arith.constant 696 : index
    %c0_55 = arith.constant 0 : index
    %167 = vector.load %arg1[%c696, %c0_55] : memref<1632x256xf32, #tpu.memory_space<vmem>>, vector<64x32xf32>
    %cst_56 = arith.constant dense<0.000000e+00> : vector<7x32xf32>
    %168 = tpu.matmul %166, %167, %cst_56 {dimension_numbers = #tpu.dot_dimension_numbers<[1], [0], [0], [1], [0, 0, 1, 1], [], []>} : vector<7x64xf32>, vector<64x32xf32>, vector<7x32xf32> -> vector<7x32xf32>
    %c688 = arith.constant 688 : index
    %c0_57 = arith.constant 0 : index
    %169 = vector.load %arg1[%c688, %c0_57] : memref<1632x256xf32, #tpu.memory_space<vmem>>, vector<1x32xf32>
    %170 = vector.broadcast %169 : vector<1x32xf32> to vector<7x32xf32>
    %171 = arith.addf %168, %170 : vector<7x32xf32>
    %172 = arith.addf %159, %171 : vector<7x32xf32>
    %cst_58 = arith.constant dense<0.000000e+00> : vector<7xf32>
    %173 = vector.multi_reduction <add>, %172, %cst_58 [1] : vector<7x32xf32> to vector<7xf32>
    %174 = vector.shape_cast %173 : vector<7xf32> to vector<7x1xf32>
    %cst_59 = arith.constant 3.200000e+01 : f32
    %175 = vector.broadcast %cst_59 : f32 to vector<7x1xf32>
    %176 = arith.divf %174, %175 : vector<7x1xf32>
    %177 = vector.broadcast %176 : vector<7x1xf32> to vector<7x32xf32>
    %178 = arith.subf %172, %177 : vector<7x32xf32>
    %179 = arith.mulf %178, %178 : vector<7x32xf32>
    %cst_60 = arith.constant dense<0.000000e+00> : vector<7xf32>
    %180 = vector.multi_reduction <add>, %179, %cst_60 [1] : vector<7x32xf32> to vector<7xf32>
    %181 = vector.shape_cast %180 : vector<7xf32> to vector<7x1xf32>
    %cst_61 = arith.constant 3.200000e+01 : f32
    %182 = vector.broadcast %cst_61 : f32 to vector<7x1xf32>
    %183 = arith.divf %181, %182 : vector<7x1xf32>
    %cst_62 = arith.constant 9.99999974E-6 : f32
    %184 = vector.broadcast %cst_62 : f32 to vector<7x1xf32>
    %185 = arith.addf %183, %184 : vector<7x1xf32>
    %186 = math.rsqrt %185 : vector<7x1xf32>
    %187 = vector.broadcast %186 : vector<7x1xf32> to vector<7x32xf32>
    %188 = arith.mulf %178, %187 : vector<7x32xf32>
    %c800 = arith.constant 800 : index
    %c0_63 = arith.constant 0 : index
    %189 = vector.load %arg1[%c800, %c0_63] : memref<1632x256xf32, #tpu.memory_space<vmem>>, vector<1x32xf32>
    %190 = vector.broadcast %189 : vector<1x32xf32> to vector<7x32xf32>
    %191 = arith.mulf %188, %190 : vector<7x32xf32>
    %c792 = arith.constant 792 : index
    %c0_64 = arith.constant 0 : index
    %192 = vector.load %arg1[%c792, %c0_64] : memref<1632x256xf32, #tpu.memory_space<vmem>>, vector<1x32xf32>
    %193 = vector.broadcast %192 : vector<1x32xf32> to vector<7x32xf32>
    %194 = arith.addf %191, %193 : vector<7x32xf32>
    %195 = arith.addf %194, %4 : vector<7x32xf32>
    %196 = arith.addf %6, %5 : vector<16x32xf32>
    %c552 = arith.constant 552 : index
    %c0_65 = arith.constant 0 : index
    %197 = vector.load %arg1[%c552, %c0_65] : memref<1632x256xf32, #tpu.memory_space<vmem>>, vector<32x48xf32>
    %c544 = arith.constant 544 : index
    %c0_66 = arith.constant 0 : index
    %198 = vector.load %arg1[%c544, %c0_66] : memref<1632x256xf32, #tpu.memory_space<vmem>>, vector<1x48xf32>
    %199 = vector.extract_strided_slice %197 {offsets = [0, 0], sizes = [32, 16], strides = [1, 1]} : vector<32x48xf32> to vector<32x16xf32>
    %cst_67 = arith.constant dense<0.000000e+00> : vector<16x16xf32>
    %200 = tpu.matmul %196, %199, %cst_67 {dimension_numbers = #tpu.dot_dimension_numbers<[1], [0], [0], [1], [0, 0, 1, 1], [], []>} : vector<16x32xf32>, vector<32x16xf32>, vector<16x16xf32> -> vector<16x16xf32>
    %201 = vector.extract_strided_slice %198 {offsets = [0, 0], sizes = [1, 16], strides = [1, 1]} : vector<1x48xf32> to vector<1x16xf32>
    %202 = vector.broadcast %201 : vector<1x16xf32> to vector<16x16xf32>
    %203 = arith.addf %200, %202 : vector<16x16xf32>
    %204 = vector.extract_strided_slice %197 {offsets = [0, 16], sizes = [32, 16], strides = [1, 1]} : vector<32x48xf32> to vector<32x16xf32>
    %cst_68 = arith.constant dense<0.000000e+00> : vector<7x16xf32>
    %205 = tpu.matmul %195, %204, %cst_68 {dimension_numbers = #tpu.dot_dimension_numbers<[1], [0], [0], [1], [0, 0, 1, 1], [], []>} : vector<7x32xf32>, vector<32x16xf32>, vector<7x16xf32> -> vector<7x16xf32>
    %206 = vector.extract_strided_slice %198 {offsets = [0, 16], sizes = [1, 16], strides = [1, 1]} : vector<1x48xf32> to vector<1x16xf32>
    %207 = vector.broadcast %206 : vector<1x16xf32> to vector<7x16xf32>
    %208 = arith.addf %205, %207 : vector<7x16xf32>
    %209 = vector.extract_strided_slice %197 {offsets = [0, 32], sizes = [32, 16], strides = [1, 1]} : vector<32x48xf32> to vector<32x16xf32>
    %cst_69 = arith.constant dense<0.000000e+00> : vector<7x16xf32>
    %210 = tpu.matmul %194, %209, %cst_69 {dimension_numbers = #tpu.dot_dimension_numbers<[1], [0], [0], [1], [0, 0, 1, 1], [], []>} : vector<7x32xf32>, vector<32x16xf32>, vector<7x16xf32> -> vector<7x16xf32>
    %211 = vector.extract_strided_slice %198 {offsets = [0, 32], sizes = [1, 16], strides = [1, 1]} : vector<1x48xf32> to vector<1x16xf32>
    %212 = vector.broadcast %211 : vector<1x16xf32> to vector<7x16xf32>
    %213 = arith.addf %210, %212 : vector<7x16xf32>
    %214 = vector.extract_strided_slice %203 {offsets = [0, 0], sizes = [16, 8], strides = [1, 1]} : vector<16x16xf32> to vector<16x8xf32>
    %215 = vector.extract_strided_slice %208 {offsets = [0, 0], sizes = [7, 8], strides = [1, 1]} : vector<7x16xf32> to vector<7x8xf32>
    "tpu.trace_start"() <{level = 10 : i32, message = "qd,kd->qk"}> : () -> ()
    %cst_70 = arith.constant dense<0.000000e+00> : vector<16x7xf32>
    %216 = tpu.matmul %214, %215, %cst_70 {dimension_numbers = #tpu.dot_dimension_numbers<[1], [1], [0], [0], [0, 0, 1, 0], [], []>} : vector<16x8xf32>, vector<7x8xf32>, vector<16x7xf32> -> vector<16x7xf32>
    "tpu.trace_stop"() : () -> ()
    %cst_71 = arith.constant dense<0xFF800000> : vector<16xf32>
    %217 = vector.multi_reduction <maximumf>, %216, %cst_71 [1] : vector<16x7xf32> to vector<16xf32>
    %218 = vector.shape_cast %217 : vector<16xf32> to vector<16x1xf32>
    %219 = vector.broadcast %218 : vector<16x1xf32> to vector<16x7xf32>
    %220 = arith.subf %216, %219 : vector<16x7xf32>
    %221 = math.exp %220 : vector<16x7xf32>
    %cst_72 = arith.constant dense<0.000000e+00> : vector<16xf32>
    %222 = vector.multi_reduction <add>, %221, %cst_72 [1] : vector<16x7xf32> to vector<16xf32>
    %223 = vector.shape_cast %222 : vector<16xf32> to vector<16x1xf32>
    %224 = tpu.reciprocal %223 {approx = true} : vector<16x1xf32> -> vector<16x1xf32>
    %225 = vector.broadcast %224 : vector<16x1xf32> to vector<16x7xf32>
    %226 = arith.mulf %221, %225 : vector<16x7xf32>
    %227 = vector.extract_strided_slice %213 {offsets = [0, 0], sizes = [7, 8], strides = [1, 1]} : vector<7x16xf32> to vector<7x8xf32>
    %cst_73 = arith.constant dense<0.000000e+00> : vector<16x8xf32>
    %228 = tpu.matmul %226, %227, %cst_73 {dimension_numbers = #tpu.dot_dimension_numbers<[1], [0], [0], [1], [0, 0, 1, 1], [], []>} : vector<16x7xf32>, vector<7x8xf32>, vector<16x8xf32> -> vector<16x8xf32>
    %229 = vector.extract_strided_slice %203 {offsets = [0, 8], sizes = [16, 8], strides = [1, 1]} : vector<16x16xf32> to vector<16x8xf32>
    %230 = vector.extract_strided_slice %208 {offsets = [0, 8], sizes = [7, 8], strides = [1, 1]} : vector<7x16xf32> to vector<7x8xf32>
    "tpu.trace_start"() <{level = 10 : i32, message = "qd,kd->qk"}> : () -> ()
    %cst_74 = arith.constant dense<0.000000e+00> : vector<16x7xf32>
    %231 = tpu.matmul %229, %230, %cst_74 {dimension_numbers = #tpu.dot_dimension_numbers<[1], [1], [0], [0], [0, 0, 1, 0], [], []>} : vector<16x8xf32>, vector<7x8xf32>, vector<16x7xf32> -> vector<16x7xf32>
    "tpu.trace_stop"() : () -> ()
    %cst_75 = arith.constant dense<0xFF800000> : vector<16xf32>
    %232 = vector.multi_reduction <maximumf>, %231, %cst_75 [1] : vector<16x7xf32> to vector<16xf32>
    %233 = vector.shape_cast %232 : vector<16xf32> to vector<16x1xf32>
    %234 = vector.broadcast %233 : vector<16x1xf32> to vector<16x7xf32>
    %235 = arith.subf %231, %234 : vector<16x7xf32>
    %236 = math.exp %235 : vector<16x7xf32>
    %cst_76 = arith.constant dense<0.000000e+00> : vector<16xf32>
    %237 = vector.multi_reduction <add>, %236, %cst_76 [1] : vector<16x7xf32> to vector<16xf32>
    %238 = vector.shape_cast %237 : vector<16xf32> to vector<16x1xf32>
    %239 = tpu.reciprocal %238 {approx = true} : vector<16x1xf32> -> vector<16x1xf32>
    %240 = vector.broadcast %239 : vector<16x1xf32> to vector<16x7xf32>
    %241 = arith.mulf %236, %240 : vector<16x7xf32>
    %242 = vector.extract_strided_slice %213 {offsets = [0, 8], sizes = [7, 8], strides = [1, 1]} : vector<7x16xf32> to vector<7x8xf32>
    %cst_77 = arith.constant dense<0.000000e+00> : vector<16x8xf32>
    %243 = tpu.matmul %241, %242, %cst_77 {dimension_numbers = #tpu.dot_dimension_numbers<[1], [0], [0], [1], [0, 0, 1, 1], [], []>} : vector<16x7xf32>, vector<7x8xf32>, vector<16x8xf32> -> vector<16x8xf32>
    %244 = tpu.concatenate %228, %243 in 1 : vector<16x8xf32>, vector<16x8xf32> -> vector<16x16xf32>
    %c528 = arith.constant 528 : index
    %c0_78 = arith.constant 0 : index
    %245 = vector.load %arg1[%c528, %c0_78] : memref<1632x256xf32, #tpu.memory_space<vmem>>, vector<16x32xf32>
    %cst_79 = arith.constant dense<0.000000e+00> : vector<16x32xf32>
    %246 = tpu.matmul %244, %245, %cst_79 {dimension_numbers = #tpu.dot_dimension_numbers<[1], [0], [0], [1], [0, 0, 1, 1], [], []>} : vector<16x16xf32>, vector<16x32xf32>, vector<16x32xf32> -> vector<16x32xf32>
    %c520 = arith.constant 520 : index
    %c0_80 = arith.constant 0 : index
    %247 = vector.load %arg1[%c520, %c0_80] : memref<1632x256xf32, #tpu.memory_space<vmem>>, vector<1x32xf32>
    %248 = vector.broadcast %247 : vector<1x32xf32> to vector<16x32xf32>
    %249 = arith.addf %246, %248 : vector<16x32xf32>
    %250 = arith.addf %6, %249 : vector<16x32xf32>
    %cst_81 = arith.constant dense<0.000000e+00> : vector<16xf32>
    %251 = vector.multi_reduction <add>, %250, %cst_81 [1] : vector<16x32xf32> to vector<16xf32>
    %252 = vector.shape_cast %251 : vector<16xf32> to vector<16x1xf32>
    %cst_82 = arith.constant 3.200000e+01 : f32
    %253 = vector.broadcast %cst_82 : f32 to vector<16x1xf32>
    %254 = arith.divf %252, %253 : vector<16x1xf32>
    %255 = vector.broadcast %254 : vector<16x1xf32> to vector<16x32xf32>
    %256 = arith.subf %250, %255 : vector<16x32xf32>
    %257 = arith.mulf %256, %256 : vector<16x32xf32>
    %cst_83 = arith.constant dense<0.000000e+00> : vector<16xf32>
    %258 = vector.multi_reduction <add>, %257, %cst_83 [1] : vector<16x32xf32> to vector<16xf32>
    %259 = vector.shape_cast %258 : vector<16xf32> to vector<16x1xf32>
    %cst_84 = arith.constant 3.200000e+01 : f32
    %260 = vector.broadcast %cst_84 : f32 to vector<16x1xf32>
    %261 = arith.divf %259, %260 : vector<16x1xf32>
    %cst_85 = arith.constant 9.99999974E-6 : f32
    %262 = vector.broadcast %cst_85 : f32 to vector<16x1xf32>
    %263 = arith.addf %261, %262 : vector<16x1xf32>
    %264 = math.rsqrt %263 : vector<16x1xf32>
    %265 = vector.broadcast %264 : vector<16x1xf32> to vector<16x32xf32>
    %266 = arith.mulf %256, %265 : vector<16x32xf32>
    %c816 = arith.constant 816 : index
    %c0_86 = arith.constant 0 : index
    %267 = vector.load %arg1[%c816, %c0_86] : memref<1632x256xf32, #tpu.memory_space<vmem>>, vector<1x32xf32>
    %268 = vector.broadcast %267 : vector<1x32xf32> to vector<16x32xf32>
    %269 = arith.mulf %266, %268 : vector<16x32xf32>
    %c808 = arith.constant 808 : index
    %c0_87 = arith.constant 0 : index
    %270 = vector.load %arg1[%c808, %c0_87] : memref<1632x256xf32, #tpu.memory_space<vmem>>, vector<1x32xf32>
    %271 = vector.broadcast %270 : vector<1x32xf32> to vector<16x32xf32>
    %272 = arith.addf %269, %271 : vector<16x32xf32>
    %273 = arith.addf %194, %4 : vector<7x32xf32>
    %c1256 = arith.constant 1256 : index
    %c0_88 = arith.constant 0 : index
    %274 = vector.load %arg1[%c1256, %c0_88] : memref<1632x256xf32, #tpu.memory_space<vmem>>, vector<32x96xf32>
    %c1248 = arith.constant 1248 : index
    %c0_89 = arith.constant 0 : index
    %275 = vector.load %arg1[%c1248, %c0_89] : memref<1632x256xf32, #tpu.memory_space<vmem>>, vector<1x96xf32>
    %276 = vector.extract_strided_slice %274 {offsets = [0, 0], sizes = [32, 32], strides = [1, 1]} : vector<32x96xf32> to vector<32x32xf32>
    %cst_90 = arith.constant dense<0.000000e+00> : vector<7x32xf32>
    %277 = tpu.matmul %273, %276, %cst_90 {dimension_numbers = #tpu.dot_dimension_numbers<[1], [0], [0], [1], [0, 0, 1, 1], [], []>} : vector<7x32xf32>, vector<32x32xf32>, vector<7x32xf32> -> vector<7x32xf32>
    %278 = vector.extract_strided_slice %275 {offsets = [0, 0], sizes = [1, 32], strides = [1, 1]} : vector<1x96xf32> to vector<1x32xf32>
    %279 = vector.broadcast %278 : vector<1x32xf32> to vector<7x32xf32>
    %280 = arith.addf %277, %279 : vector<7x32xf32>
    %281 = vector.extract_strided_slice %274 {offsets = [0, 32], sizes = [32, 32], strides = [1, 1]} : vector<32x96xf32> to vector<32x32xf32>
    %cst_91 = arith.constant dense<0.000000e+00> : vector<7x32xf32>
    %282 = tpu.matmul %273, %281, %cst_91 {dimension_numbers = #tpu.dot_dimension_numbers<[1], [0], [0], [1], [0, 0, 1, 1], [], []>} : vector<7x32xf32>, vector<32x32xf32>, vector<7x32xf32> -> vector<7x32xf32>
    %283 = vector.extract_strided_slice %275 {offsets = [0, 32], sizes = [1, 32], strides = [1, 1]} : vector<1x96xf32> to vector<1x32xf32>
    %284 = vector.broadcast %283 : vector<1x32xf32> to vector<7x32xf32>
    %285 = arith.addf %282, %284 : vector<7x32xf32>
    %286 = vector.extract_strided_slice %274 {offsets = [0, 64], sizes = [32, 32], strides = [1, 1]} : vector<32x96xf32> to vector<32x32xf32>
    %cst_92 = arith.constant dense<0.000000e+00> : vector<7x32xf32>
    %287 = tpu.matmul %194, %286, %cst_92 {dimension_numbers = #tpu.dot_dimension_numbers<[1], [0], [0], [1], [0, 0, 1, 1], [], []>} : vector<7x32xf32>, vector<32x32xf32>, vector<7x32xf32> -> vector<7x32xf32>
    %288 = vector.extract_strided_slice %275 {offsets = [0, 64], sizes = [1, 32], strides = [1, 1]} : vector<1x96xf32> to vector<1x32xf32>
    %289 = vector.broadcast %288 : vector<1x32xf32> to vector<7x32xf32>
    %290 = arith.addf %287, %289 : vector<7x32xf32>
    %291 = vector.extract_strided_slice %280 {offsets = [0, 0], sizes = [7, 16], strides = [1, 1]} : vector<7x32xf32> to vector<7x16xf32>
    %292 = vector.extract_strided_slice %285 {offsets = [0, 0], sizes = [7, 16], strides = [1, 1]} : vector<7x32xf32> to vector<7x16xf32>
    "tpu.trace_start"() <{level = 10 : i32, message = "qd,kd->qk"}> : () -> ()
    %cst_93 = arith.constant dense<0.000000e+00> : vector<7x7xf32>
    %293 = tpu.matmul %291, %292, %cst_93 {dimension_numbers = #tpu.dot_dimension_numbers<[1], [1], [0], [0], [0, 0, 1, 0], [], []>} : vector<7x16xf32>, vector<7x16xf32>, vector<7x7xf32> -> vector<7x7xf32>
    "tpu.trace_stop"() : () -> ()
    %cst_94 = arith.constant dense<0xFF800000> : vector<7xf32>
    %294 = vector.multi_reduction <maximumf>, %293, %cst_94 [1] : vector<7x7xf32> to vector<7xf32>
    %295 = vector.shape_cast %294 : vector<7xf32> to vector<7x1xf32>
    %296 = vector.broadcast %295 : vector<7x1xf32> to vector<7x7xf32>
    %297 = arith.subf %293, %296 : vector<7x7xf32>
    %298 = math.exp %297 : vector<7x7xf32>
    %cst_95 = arith.constant dense<0.000000e+00> : vector<7xf32>
    %299 = vector.multi_reduction <add>, %298, %cst_95 [1] : vector<7x7xf32> to vector<7xf32>
    %300 = vector.shape_cast %299 : vector<7xf32> to vector<7x1xf32>
    %301 = tpu.reciprocal %300 {approx = true} : vector<7x1xf32> -> vector<7x1xf32>
    %302 = vector.broadcast %301 : vector<7x1xf32> to vector<7x7xf32>
    %303 = arith.mulf %298, %302 : vector<7x7xf32>
    %304 = vector.extract_strided_slice %290 {offsets = [0, 0], sizes = [7, 16], strides = [1, 1]} : vector<7x32xf32> to vector<7x16xf32>
    %cst_96 = arith.constant dense<0.000000e+00> : vector<7x16xf32>
    %305 = tpu.matmul %303, %304, %cst_96 {dimension_numbers = #tpu.dot_dimension_numbers<[1], [0], [0], [1], [0, 0, 1, 1], [], []>} : vector<7x7xf32>, vector<7x16xf32>, vector<7x16xf32> -> vector<7x16xf32>
    %306 = vector.extract_strided_slice %280 {offsets = [0, 16], sizes = [7, 16], strides = [1, 1]} : vector<7x32xf32> to vector<7x16xf32>
    %307 = vector.extract_strided_slice %285 {offsets = [0, 16], sizes = [7, 16], strides = [1, 1]} : vector<7x32xf32> to vector<7x16xf32>
    "tpu.trace_start"() <{level = 10 : i32, message = "qd,kd->qk"}> : () -> ()
    %cst_97 = arith.constant dense<0.000000e+00> : vector<7x7xf32>
    %308 = tpu.matmul %306, %307, %cst_97 {dimension_numbers = #tpu.dot_dimension_numbers<[1], [1], [0], [0], [0, 0, 1, 0], [], []>} : vector<7x16xf32>, vector<7x16xf32>, vector<7x7xf32> -> vector<7x7xf32>
    "tpu.trace_stop"() : () -> ()
    %cst_98 = arith.constant dense<0xFF800000> : vector<7xf32>
    %309 = vector.multi_reduction <maximumf>, %308, %cst_98 [1] : vector<7x7xf32> to vector<7xf32>
    %310 = vector.shape_cast %309 : vector<7xf32> to vector<7x1xf32>
    %311 = vector.broadcast %310 : vector<7x1xf32> to vector<7x7xf32>
    %312 = arith.subf %308, %311 : vector<7x7xf32>
    %313 = math.exp %312 : vector<7x7xf32>
    %cst_99 = arith.constant dense<0.000000e+00> : vector<7xf32>
    %314 = vector.multi_reduction <add>, %313, %cst_99 [1] : vector<7x7xf32> to vector<7xf32>
    %315 = vector.shape_cast %314 : vector<7xf32> to vector<7x1xf32>
    %316 = tpu.reciprocal %315 {approx = true} : vector<7x1xf32> -> vector<7x1xf32>
    %317 = vector.broadcast %316 : vector<7x1xf32> to vector<7x7xf32>
    %318 = arith.mulf %313, %317 : vector<7x7xf32>
    %319 = vector.extract_strided_slice %290 {offsets = [0, 16], sizes = [7, 16], strides = [1, 1]} : vector<7x32xf32> to vector<7x16xf32>
    %cst_100 = arith.constant dense<0.000000e+00> : vector<7x16xf32>
    %320 = tpu.matmul %318, %319, %cst_100 {dimension_numbers = #tpu.dot_dimension_numbers<[1], [0], [0], [1], [0, 0, 1, 1], [], []>} : vector<7x7xf32>, vector<7x16xf32>, vector<7x16xf32> -> vector<7x16xf32>
    %321 = tpu.concatenate %305, %320 in 1 : vector<7x16xf32>, vector<7x16xf32> -> vector<7x32xf32>
    %c1216 = arith.constant 1216 : index
    %c0_101 = arith.constant 0 : index
    %322 = vector.load %arg1[%c1216, %c0_101] : memref<1632x256xf32, #tpu.memory_space<vmem>>, vector<32x32xf32>
    %cst_102 = arith.constant dense<0.000000e+00> : vector<7x32xf32>
    %323 = tpu.matmul %321, %322, %cst_102 {dimension_numbers = #tpu.dot_dimension_numbers<[1], [0], [0], [1], [0, 0, 1, 1], [], []>} : vector<7x32xf32>, vector<32x32xf32>, vector<7x32xf32> -> vector<7x32xf32>
    %c1208 = arith.constant 1208 : index
    %c0_103 = arith.constant 0 : index
    %324 = vector.load %arg1[%c1208, %c0_103] : memref<1632x256xf32, #tpu.memory_space<vmem>>, vector<1x32xf32>
    %325 = vector.broadcast %324 : vector<1x32xf32> to vector<7x32xf32>
    %326 = arith.addf %323, %325 : vector<7x32xf32>
    %327 = arith.addf %194, %326 : vector<7x32xf32>
    %cst_104 = arith.constant dense<0.000000e+00> : vector<7xf32>
    %328 = vector.multi_reduction <add>, %327, %cst_104 [1] : vector<7x32xf32> to vector<7xf32>
    %329 = vector.shape_cast %328 : vector<7xf32> to vector<7x1xf32>
    %cst_105 = arith.constant 3.200000e+01 : f32
    %330 = vector.broadcast %cst_105 : f32 to vector<7x1xf32>
    %331 = arith.divf %329, %330 : vector<7x1xf32>
    %332 = vector.broadcast %331 : vector<7x1xf32> to vector<7x32xf32>
    %333 = arith.subf %327, %332 : vector<7x32xf32>
    %334 = arith.mulf %333, %333 : vector<7x32xf32>
    %cst_106 = arith.constant dense<0.000000e+00> : vector<7xf32>
    %335 = vector.multi_reduction <add>, %334, %cst_106 [1] : vector<7x32xf32> to vector<7xf32>
    %336 = vector.shape_cast %335 : vector<7xf32> to vector<7x1xf32>
    %cst_107 = arith.constant 3.200000e+01 : f32
    %337 = vector.broadcast %cst_107 : f32 to vector<7x1xf32>
    %338 = arith.divf %336, %337 : vector<7x1xf32>
    %cst_108 = arith.constant 9.99999974E-6 : f32
    %339 = vector.broadcast %cst_108 : f32 to vector<7x1xf32>
    %340 = arith.addf %338, %339 : vector<7x1xf32>
    %341 = math.rsqrt %340 : vector<7x1xf32>
    %342 = vector.broadcast %341 : vector<7x1xf32> to vector<7x32xf32>
    %343 = arith.mulf %333, %342 : vector<7x32xf32>
    %c1152 = arith.constant 1152 : index
    %c0_109 = arith.constant 0 : index
    %344 = vector.load %arg1[%c1152, %c0_109] : memref<1632x256xf32, #tpu.memory_space<vmem>>, vector<1x32xf32>
    %345 = vector.broadcast %344 : vector<1x32xf32> to vector<7x32xf32>
    %346 = arith.mulf %343, %345 : vector<7x32xf32>
    %c1144 = arith.constant 1144 : index
    %c0_110 = arith.constant 0 : index
    %347 = vector.load %arg1[%c1144, %c0_110] : memref<1632x256xf32, #tpu.memory_space<vmem>>, vector<1x32xf32>
    %348 = vector.broadcast %347 : vector<1x32xf32> to vector<7x32xf32>
    %349 = arith.addf %346, %348 : vector<7x32xf32>
    %350 = arith.addf %349, %4 : vector<7x32xf32>
    %351 = arith.addf %272, %5 : vector<16x32xf32>
    %c1000 = arith.constant 1000 : index
    %c0_111 = arith.constant 0 : index
    %352 = vector.load %arg1[%c1000, %c0_111] : memref<1632x256xf32, #tpu.memory_space<vmem>>, vector<32x48xf32>
    %c992 = arith.constant 992 : index
    %c0_112 = arith.constant 0 : index
    %353 = vector.load %arg1[%c992, %c0_112] : memref<1632x256xf32, #tpu.memory_space<vmem>>, vector<1x48xf32>
    %354 = vector.extract_strided_slice %352 {offsets = [0, 0], sizes = [32, 16], strides = [1, 1]} : vector<32x48xf32> to vector<32x16xf32>
    %cst_113 = arith.constant dense<0.000000e+00> : vector<7x16xf32>
    %355 = tpu.matmul %350, %354, %cst_113 {dimension_numbers = #tpu.dot_dimension_numbers<[1], [0], [0], [1], [0, 0, 1, 1], [], []>} : vector<7x32xf32>, vector<32x16xf32>, vector<7x16xf32> -> vector<7x16xf32>
    %356 = vector.extract_strided_slice %353 {offsets = [0, 0], sizes = [1, 16], strides = [1, 1]} : vector<1x48xf32> to vector<1x16xf32>
    %357 = vector.broadcast %356 : vector<1x16xf32> to vector<7x16xf32>
    %358 = arith.addf %355, %357 : vector<7x16xf32>
    %359 = vector.extract_strided_slice %352 {offsets = [0, 16], sizes = [32, 16], strides = [1, 1]} : vector<32x48xf32> to vector<32x16xf32>
    %cst_114 = arith.constant dense<0.000000e+00> : vector<16x16xf32>
    %360 = tpu.matmul %351, %359, %cst_114 {dimension_numbers = #tpu.dot_dimension_numbers<[1], [0], [0], [1], [0, 0, 1, 1], [], []>} : vector<16x32xf32>, vector<32x16xf32>, vector<16x16xf32> -> vector<16x16xf32>
    %361 = vector.extract_strided_slice %353 {offsets = [0, 16], sizes = [1, 16], strides = [1, 1]} : vector<1x48xf32> to vector<1x16xf32>
    %362 = vector.broadcast %361 : vector<1x16xf32> to vector<16x16xf32>
    %363 = arith.addf %360, %362 : vector<16x16xf32>
    %364 = vector.extract_strided_slice %352 {offsets = [0, 32], sizes = [32, 16], strides = [1, 1]} : vector<32x48xf32> to vector<32x16xf32>
    %cst_115 = arith.constant dense<0.000000e+00> : vector<16x16xf32>
    %365 = tpu.matmul %272, %364, %cst_115 {dimension_numbers = #tpu.dot_dimension_numbers<[1], [0], [0], [1], [0, 0, 1, 1], [], []>} : vector<16x32xf32>, vector<32x16xf32>, vector<16x16xf32> -> vector<16x16xf32>
    %366 = vector.extract_strided_slice %353 {offsets = [0, 32], sizes = [1, 16], strides = [1, 1]} : vector<1x48xf32> to vector<1x16xf32>
    %367 = vector.broadcast %366 : vector<1x16xf32> to vector<16x16xf32>
    %368 = arith.addf %365, %367 : vector<16x16xf32>
    %369 = vector.extract_strided_slice %358 {offsets = [0, 0], sizes = [7, 8], strides = [1, 1]} : vector<7x16xf32> to vector<7x8xf32>
    %370 = vector.extract_strided_slice %363 {offsets = [0, 0], sizes = [16, 8], strides = [1, 1]} : vector<16x16xf32> to vector<16x8xf32>
    "tpu.trace_start"() <{level = 10 : i32, message = "qd,kd->qk"}> : () -> ()
    %cst_116 = arith.constant dense<0.000000e+00> : vector<7x16xf32>
    %371 = tpu.matmul %369, %370, %cst_116 {dimension_numbers = #tpu.dot_dimension_numbers<[1], [1], [0], [0], [0, 0, 1, 0], [], []>} : vector<7x8xf32>, vector<16x8xf32>, vector<7x16xf32> -> vector<7x16xf32>
    "tpu.trace_stop"() : () -> ()
    %cst_117 = arith.constant dense<0xFF800000> : vector<7xf32>
    %372 = vector.multi_reduction <maximumf>, %371, %cst_117 [1] : vector<7x16xf32> to vector<7xf32>
    %373 = vector.shape_cast %372 : vector<7xf32> to vector<7x1xf32>
    %374 = vector.broadcast %373 : vector<7x1xf32> to vector<7x16xf32>
    %375 = arith.subf %371, %374 : vector<7x16xf32>
    %376 = math.exp %375 : vector<7x16xf32>
    %cst_118 = arith.constant dense<0.000000e+00> : vector<7xf32>
    %377 = vector.multi_reduction <add>, %376, %cst_118 [1] : vector<7x16xf32> to vector<7xf32>
    %378 = vector.shape_cast %377 : vector<7xf32> to vector<7x1xf32>
    %379 = tpu.reciprocal %378 {approx = true} : vector<7x1xf32> -> vector<7x1xf32>
    %380 = vector.broadcast %379 : vector<7x1xf32> to vector<7x16xf32>
    %381 = arith.mulf %376, %380 : vector<7x16xf32>
    %382 = vector.extract_strided_slice %368 {offsets = [0, 0], sizes = [16, 8], strides = [1, 1]} : vector<16x16xf32> to vector<16x8xf32>
    %cst_119 = arith.constant dense<0.000000e+00> : vector<7x8xf32>
    %383 = tpu.matmul %381, %382, %cst_119 {dimension_numbers = #tpu.dot_dimension_numbers<[1], [0], [0], [1], [0, 0, 1, 1], [], []>} : vector<7x16xf32>, vector<16x8xf32>, vector<7x8xf32> -> vector<7x8xf32>
    %384 = vector.extract_strided_slice %358 {offsets = [0, 8], sizes = [7, 8], strides = [1, 1]} : vector<7x16xf32> to vector<7x8xf32>
    %385 = vector.extract_strided_slice %363 {offsets = [0, 8], sizes = [16, 8], strides = [1, 1]} : vector<16x16xf32> to vector<16x8xf32>
    "tpu.trace_start"() <{level = 10 : i32, message = "qd,kd->qk"}> : () -> ()
    %cst_120 = arith.constant dense<0.000000e+00> : vector<7x16xf32>
    %386 = tpu.matmul %384, %385, %cst_120 {dimension_numbers = #tpu.dot_dimension_numbers<[1], [1], [0], [0], [0, 0, 1, 0], [], []>} : vector<7x8xf32>, vector<16x8xf32>, vector<7x16xf32> -> vector<7x16xf32>
    "tpu.trace_stop"() : () -> ()
    %cst_121 = arith.constant dense<0xFF800000> : vector<7xf32>
    %387 = vector.multi_reduction <maximumf>, %386, %cst_121 [1] : vector<7x16xf32> to vector<7xf32>
    %388 = vector.shape_cast %387 : vector<7xf32> to vector<7x1xf32>
    %389 = vector.broadcast %388 : vector<7x1xf32> to vector<7x16xf32>
    %390 = arith.subf %386, %389 : vector<7x16xf32>
    %391 = math.exp %390 : vector<7x16xf32>
    %cst_122 = arith.constant dense<0.000000e+00> : vector<7xf32>
    %392 = vector.multi_reduction <add>, %391, %cst_122 [1] : vector<7x16xf32> to vector<7xf32>
    %393 = vector.shape_cast %392 : vector<7xf32> to vector<7x1xf32>
    %394 = tpu.reciprocal %393 {approx = true} : vector<7x1xf32> -> vector<7x1xf32>
    %395 = vector.broadcast %394 : vector<7x1xf32> to vector<7x16xf32>
    %396 = arith.mulf %391, %395 : vector<7x16xf32>
    %397 = vector.extract_strided_slice %368 {offsets = [0, 8], sizes = [16, 8], strides = [1, 1]} : vector<16x16xf32> to vector<16x8xf32>
    %cst_123 = arith.constant dense<0.000000e+00> : vector<7x8xf32>
    %398 = tpu.matmul %396, %397, %cst_123 {dimension_numbers = #tpu.dot_dimension_numbers<[1], [0], [0], [1], [0, 0, 1, 1], [], []>} : vector<7x16xf32>, vector<16x8xf32>, vector<7x8xf32> -> vector<7x8xf32>
    %399 = tpu.concatenate %383, %398 in 1 : vector<7x8xf32>, vector<7x8xf32> -> vector<7x16xf32>
    %c976 = arith.constant 976 : index
    %c0_124 = arith.constant 0 : index
    %400 = vector.load %arg1[%c976, %c0_124] : memref<1632x256xf32, #tpu.memory_space<vmem>>, vector<16x32xf32>
    %cst_125 = arith.constant dense<0.000000e+00> : vector<7x32xf32>
    %401 = tpu.matmul %399, %400, %cst_125 {dimension_numbers = #tpu.dot_dimension_numbers<[1], [0], [0], [1], [0, 0, 1, 1], [], []>} : vector<7x16xf32>, vector<16x32xf32>, vector<7x32xf32> -> vector<7x32xf32>
    %c968 = arith.constant 968 : index
    %c0_126 = arith.constant 0 : index
    %402 = vector.load %arg1[%c968, %c0_126] : memref<1632x256xf32, #tpu.memory_space<vmem>>, vector<1x32xf32>
    %403 = vector.broadcast %402 : vector<1x32xf32> to vector<7x32xf32>
    %404 = arith.addf %401, %403 : vector<7x32xf32>
    %405 = arith.addf %349, %404 : vector<7x32xf32>
    %cst_127 = arith.constant dense<0.000000e+00> : vector<7xf32>
    %406 = vector.multi_reduction <add>, %405, %cst_127 [1] : vector<7x32xf32> to vector<7xf32>
    %407 = vector.shape_cast %406 : vector<7xf32> to vector<7x1xf32>
    %cst_128 = arith.constant 3.200000e+01 : f32
    %408 = vector.broadcast %cst_128 : f32 to vector<7x1xf32>
    %409 = arith.divf %407, %408 : vector<7x1xf32>
    %410 = vector.broadcast %409 : vector<7x1xf32> to vector<7x32xf32>
    %411 = arith.subf %405, %410 : vector<7x32xf32>
    %412 = arith.mulf %411, %411 : vector<7x32xf32>
    %cst_129 = arith.constant dense<0.000000e+00> : vector<7xf32>
    %413 = vector.multi_reduction <add>, %412, %cst_129 [1] : vector<7x32xf32> to vector<7xf32>
    %414 = vector.shape_cast %413 : vector<7xf32> to vector<7x1xf32>
    %cst_130 = arith.constant 3.200000e+01 : f32
    %415 = vector.broadcast %cst_130 : f32 to vector<7x1xf32>
    %416 = arith.divf %414, %415 : vector<7x1xf32>
    %cst_131 = arith.constant 9.99999974E-6 : f32
    %417 = vector.broadcast %cst_131 : f32 to vector<7x1xf32>
    %418 = arith.addf %416, %417 : vector<7x1xf32>
    %419 = math.rsqrt %418 : vector<7x1xf32>
    %420 = vector.broadcast %419 : vector<7x1xf32> to vector<7x32xf32>
    %421 = arith.mulf %411, %420 : vector<7x32xf32>
    %c1168 = arith.constant 1168 : index
    %c0_132 = arith.constant 0 : index
    %422 = vector.load %arg1[%c1168, %c0_132] : memref<1632x256xf32, #tpu.memory_space<vmem>>, vector<1x32xf32>
    %423 = vector.broadcast %422 : vector<1x32xf32> to vector<7x32xf32>
    %424 = arith.mulf %421, %423 : vector<7x32xf32>
    %c1160 = arith.constant 1160 : index
    %c0_133 = arith.constant 0 : index
    %425 = vector.load %arg1[%c1160, %c0_133] : memref<1632x256xf32, #tpu.memory_space<vmem>>, vector<1x32xf32>
    %426 = vector.broadcast %425 : vector<1x32xf32> to vector<7x32xf32>
    %427 = arith.addf %424, %426 : vector<7x32xf32>
    %c1040 = arith.constant 1040 : index
    %c0_134 = arith.constant 0 : index
    %428 = vector.load %arg1[%c1040, %c0_134] : memref<1632x256xf32, #tpu.memory_space<vmem>>, vector<32x64xf32>
    %cst_135 = arith.constant dense<0.000000e+00> : vector<7x64xf32>
    %429 = tpu.matmul %427, %428, %cst_135 {dimension_numbers = #tpu.dot_dimension_numbers<[1], [0], [0], [1], [0, 0, 1, 1], [], []>} : vector<7x32xf32>, vector<32x64xf32>, vector<7x64xf32> -> vector<7x64xf32>
    %c1032 = arith.constant 1032 : index
    %c0_136 = arith.constant 0 : index
    %430 = vector.load %arg1[%c1032, %c0_136] : memref<1632x256xf32, #tpu.memory_space<vmem>>, vector<1x64xf32>
    %431 = vector.broadcast %430 : vector<1x64xf32> to vector<7x64xf32>
    %432 = arith.addf %429, %431 : vector<7x64xf32>
    %cst_137 = arith.constant 0.000000e+00 : f32
    %433 = vector.broadcast %cst_137 : f32 to vector<7x64xf32>
    %434 = arith.maximumf %432, %433 : vector<7x64xf32>
    %c1080 = arith.constant 1080 : index
    %c0_138 = arith.constant 0 : index
    %435 = vector.load %arg1[%c1080, %c0_138] : memref<1632x256xf32, #tpu.memory_space<vmem>>, vector<64x32xf32>
    %cst_139 = arith.constant dense<0.000000e+00> : vector<7x32xf32>
    %436 = tpu.matmul %434, %435, %cst_139 {dimension_numbers = #tpu.dot_dimension_numbers<[1], [0], [0], [1], [0, 0, 1, 1], [], []>} : vector<7x64xf32>, vector<64x32xf32>, vector<7x32xf32> -> vector<7x32xf32>
    %c1072 = arith.constant 1072 : index
    %c0_140 = arith.constant 0 : index
    %437 = vector.load %arg1[%c1072, %c0_140] : memref<1632x256xf32, #tpu.memory_space<vmem>>, vector<1x32xf32>
    %438 = vector.broadcast %437 : vector<1x32xf32> to vector<7x32xf32>
    %439 = arith.addf %436, %438 : vector<7x32xf32>
    %440 = arith.addf %427, %439 : vector<7x32xf32>
    %cst_141 = arith.constant dense<0.000000e+00> : vector<7xf32>
    %441 = vector.multi_reduction <add>, %440, %cst_141 [1] : vector<7x32xf32> to vector<7xf32>
    %442 = vector.shape_cast %441 : vector<7xf32> to vector<7x1xf32>
    %cst_142 = arith.constant 3.200000e+01 : f32
    %443 = vector.broadcast %cst_142 : f32 to vector<7x1xf32>
    %444 = arith.divf %442, %443 : vector<7x1xf32>
    %445 = vector.broadcast %444 : vector<7x1xf32> to vector<7x32xf32>
    %446 = arith.subf %440, %445 : vector<7x32xf32>
    %447 = arith.mulf %446, %446 : vector<7x32xf32>
    %cst_143 = arith.constant dense<0.000000e+00> : vector<7xf32>
    %448 = vector.multi_reduction <add>, %447, %cst_143 [1] : vector<7x32xf32> to vector<7xf32>
    %449 = vector.shape_cast %448 : vector<7xf32> to vector<7x1xf32>
    %cst_144 = arith.constant 3.200000e+01 : f32
    %450 = vector.broadcast %cst_144 : f32 to vector<7x1xf32>
    %451 = arith.divf %449, %450 : vector<7x1xf32>
    %cst_145 = arith.constant 9.99999974E-6 : f32
    %452 = vector.broadcast %cst_145 : f32 to vector<7x1xf32>
    %453 = arith.addf %451, %452 : vector<7x1xf32>
    %454 = math.rsqrt %453 : vector<7x1xf32>
    %455 = vector.broadcast %454 : vector<7x1xf32> to vector<7x32xf32>
    %456 = arith.mulf %446, %455 : vector<7x32xf32>
    %c1184 = arith.constant 1184 : index
    %c0_146 = arith.constant 0 : index
    %457 = vector.load %arg1[%c1184, %c0_146] : memref<1632x256xf32, #tpu.memory_space<vmem>>, vector<1x32xf32>
    %458 = vector.broadcast %457 : vector<1x32xf32> to vector<7x32xf32>
    %459 = arith.mulf %456, %458 : vector<7x32xf32>
    %c1176 = arith.constant 1176 : index
    %c0_147 = arith.constant 0 : index
    %460 = vector.load %arg1[%c1176, %c0_147] : memref<1632x256xf32, #tpu.memory_space<vmem>>, vector<1x32xf32>
    %461 = vector.broadcast %460 : vector<1x32xf32> to vector<7x32xf32>
    %462 = arith.addf %459, %461 : vector<7x32xf32>
    %463 = arith.addf %462, %4 : vector<7x32xf32>
    %464 = arith.addf %272, %5 : vector<16x32xf32>
    %c936 = arith.constant 936 : index
    %c0_148 = arith.constant 0 : index
    %465 = vector.load %arg1[%c936, %c0_148] : memref<1632x256xf32, #tpu.memory_space<vmem>>, vector<32x48xf32>
    %c928 = arith.constant 928 : index
    %c0_149 = arith.constant 0 : index
    %466 = vector.load %arg1[%c928, %c0_149] : memref<1632x256xf32, #tpu.memory_space<vmem>>, vector<1x48xf32>
    %467 = vector.extract_strided_slice %465 {offsets = [0, 0], sizes = [32, 16], strides = [1, 1]} : vector<32x48xf32> to vector<32x16xf32>
    %cst_150 = arith.constant dense<0.000000e+00> : vector<16x16xf32>
    %468 = tpu.matmul %464, %467, %cst_150 {dimension_numbers = #tpu.dot_dimension_numbers<[1], [0], [0], [1], [0, 0, 1, 1], [], []>} : vector<16x32xf32>, vector<32x16xf32>, vector<16x16xf32> -> vector<16x16xf32>
    %469 = vector.extract_strided_slice %466 {offsets = [0, 0], sizes = [1, 16], strides = [1, 1]} : vector<1x48xf32> to vector<1x16xf32>
    %470 = vector.broadcast %469 : vector<1x16xf32> to vector<16x16xf32>
    %471 = arith.addf %468, %470 : vector<16x16xf32>
    %472 = vector.extract_strided_slice %465 {offsets = [0, 16], sizes = [32, 16], strides = [1, 1]} : vector<32x48xf32> to vector<32x16xf32>
    %cst_151 = arith.constant dense<0.000000e+00> : vector<7x16xf32>
    %473 = tpu.matmul %463, %472, %cst_151 {dimension_numbers = #tpu.dot_dimension_numbers<[1], [0], [0], [1], [0, 0, 1, 1], [], []>} : vector<7x32xf32>, vector<32x16xf32>, vector<7x16xf32> -> vector<7x16xf32>
    %474 = vector.extract_strided_slice %466 {offsets = [0, 16], sizes = [1, 16], strides = [1, 1]} : vector<1x48xf32> to vector<1x16xf32>
    %475 = vector.broadcast %474 : vector<1x16xf32> to vector<7x16xf32>
    %476 = arith.addf %473, %475 : vector<7x16xf32>
    %477 = vector.extract_strided_slice %465 {offsets = [0, 32], sizes = [32, 16], strides = [1, 1]} : vector<32x48xf32> to vector<32x16xf32>
    %cst_152 = arith.constant dense<0.000000e+00> : vector<7x16xf32>
    %478 = tpu.matmul %462, %477, %cst_152 {dimension_numbers = #tpu.dot_dimension_numbers<[1], [0], [0], [1], [0, 0, 1, 1], [], []>} : vector<7x32xf32>, vector<32x16xf32>, vector<7x16xf32> -> vector<7x16xf32>
    %479 = vector.extract_strided_slice %466 {offsets = [0, 32], sizes = [1, 16], strides = [1, 1]} : vector<1x48xf32> to vector<1x16xf32>
    %480 = vector.broadcast %479 : vector<1x16xf32> to vector<7x16xf32>
    %481 = arith.addf %478, %480 : vector<7x16xf32>
    %482 = vector.extract_strided_slice %471 {offsets = [0, 0], sizes = [16, 8], strides = [1, 1]} : vector<16x16xf32> to vector<16x8xf32>
    %483 = vector.extract_strided_slice %476 {offsets = [0, 0], sizes = [7, 8], strides = [1, 1]} : vector<7x16xf32> to vector<7x8xf32>
    "tpu.trace_start"() <{level = 10 : i32, message = "qd,kd->qk"}> : () -> ()
    %cst_153 = arith.constant dense<0.000000e+00> : vector<16x7xf32>
    %484 = tpu.matmul %482, %483, %cst_153 {dimension_numbers = #tpu.dot_dimension_numbers<[1], [1], [0], [0], [0, 0, 1, 0], [], []>} : vector<16x8xf32>, vector<7x8xf32>, vector<16x7xf32> -> vector<16x7xf32>
    "tpu.trace_stop"() : () -> ()
    %cst_154 = arith.constant dense<0xFF800000> : vector<16xf32>
    %485 = vector.multi_reduction <maximumf>, %484, %cst_154 [1] : vector<16x7xf32> to vector<16xf32>
    %486 = vector.shape_cast %485 : vector<16xf32> to vector<16x1xf32>
    %487 = vector.broadcast %486 : vector<16x1xf32> to vector<16x7xf32>
    %488 = arith.subf %484, %487 : vector<16x7xf32>
    %489 = math.exp %488 : vector<16x7xf32>
    %cst_155 = arith.constant dense<0.000000e+00> : vector<16xf32>
    %490 = vector.multi_reduction <add>, %489, %cst_155 [1] : vector<16x7xf32> to vector<16xf32>
    %491 = vector.shape_cast %490 : vector<16xf32> to vector<16x1xf32>
    %492 = tpu.reciprocal %491 {approx = true} : vector<16x1xf32> -> vector<16x1xf32>
    %493 = vector.broadcast %492 : vector<16x1xf32> to vector<16x7xf32>
    %494 = arith.mulf %489, %493 : vector<16x7xf32>
    %495 = vector.extract_strided_slice %481 {offsets = [0, 0], sizes = [7, 8], strides = [1, 1]} : vector<7x16xf32> to vector<7x8xf32>
    %cst_156 = arith.constant dense<0.000000e+00> : vector<16x8xf32>
    %496 = tpu.matmul %494, %495, %cst_156 {dimension_numbers = #tpu.dot_dimension_numbers<[1], [0], [0], [1], [0, 0, 1, 1], [], []>} : vector<16x7xf32>, vector<7x8xf32>, vector<16x8xf32> -> vector<16x8xf32>
    %497 = vector.extract_strided_slice %471 {offsets = [0, 8], sizes = [16, 8], strides = [1, 1]} : vector<16x16xf32> to vector<16x8xf32>
    %498 = vector.extract_strided_slice %476 {offsets = [0, 8], sizes = [7, 8], strides = [1, 1]} : vector<7x16xf32> to vector<7x8xf32>
    "tpu.trace_start"() <{level = 10 : i32, message = "qd,kd->qk"}> : () -> ()
    %cst_157 = arith.constant dense<0.000000e+00> : vector<16x7xf32>
    %499 = tpu.matmul %497, %498, %cst_157 {dimension_numbers = #tpu.dot_dimension_numbers<[1], [1], [0], [0], [0, 0, 1, 0], [], []>} : vector<16x8xf32>, vector<7x8xf32>, vector<16x7xf32> -> vector<16x7xf32>
    "tpu.trace_stop"() : () -> ()
    %cst_158 = arith.constant dense<0xFF800000> : vector<16xf32>
    %500 = vector.multi_reduction <maximumf>, %499, %cst_158 [1] : vector<16x7xf32> to vector<16xf32>
    %501 = vector.shape_cast %500 : vector<16xf32> to vector<16x1xf32>
    %502 = vector.broadcast %501 : vector<16x1xf32> to vector<16x7xf32>
    %503 = arith.subf %499, %502 : vector<16x7xf32>
    %504 = math.exp %503 : vector<16x7xf32>
    %cst_159 = arith.constant dense<0.000000e+00> : vector<16xf32>
    %505 = vector.multi_reduction <add>, %504, %cst_159 [1] : vector<16x7xf32> to vector<16xf32>
    %506 = vector.shape_cast %505 : vector<16xf32> to vector<16x1xf32>
    %507 = tpu.reciprocal %506 {approx = true} : vector<16x1xf32> -> vector<16x1xf32>
    %508 = vector.broadcast %507 : vector<16x1xf32> to vector<16x7xf32>
    %509 = arith.mulf %504, %508 : vector<16x7xf32>
    %510 = vector.extract_strided_slice %481 {offsets = [0, 8], sizes = [7, 8], strides = [1, 1]} : vector<7x16xf32> to vector<7x8xf32>
    %cst_160 = arith.constant dense<0.000000e+00> : vector<16x8xf32>
    %511 = tpu.matmul %509, %510, %cst_160 {dimension_numbers = #tpu.dot_dimension_numbers<[1], [0], [0], [1], [0, 0, 1, 1], [], []>} : vector<16x7xf32>, vector<7x8xf32>, vector<16x8xf32> -> vector<16x8xf32>
    %512 = tpu.concatenate %496, %511 in 1 : vector<16x8xf32>, vector<16x8xf32> -> vector<16x16xf32>
    %c912 = arith.constant 912 : index
    %c0_161 = arith.constant 0 : index
    %513 = vector.load %arg1[%c912, %c0_161] : memref<1632x256xf32, #tpu.memory_space<vmem>>, vector<16x32xf32>
    %cst_162 = arith.constant dense<0.000000e+00> : vector<16x32xf32>
    %514 = tpu.matmul %512, %513, %cst_162 {dimension_numbers = #tpu.dot_dimension_numbers<[1], [0], [0], [1], [0, 0, 1, 1], [], []>} : vector<16x16xf32>, vector<16x32xf32>, vector<16x32xf32> -> vector<16x32xf32>
    %c904 = arith.constant 904 : index
    %c0_163 = arith.constant 0 : index
    %515 = vector.load %arg1[%c904, %c0_163] : memref<1632x256xf32, #tpu.memory_space<vmem>>, vector<1x32xf32>
    %516 = vector.broadcast %515 : vector<1x32xf32> to vector<16x32xf32>
    %517 = arith.addf %514, %516 : vector<16x32xf32>
    %518 = arith.addf %272, %517 : vector<16x32xf32>
    %cst_164 = arith.constant dense<0.000000e+00> : vector<16xf32>
    %519 = vector.multi_reduction <add>, %518, %cst_164 [1] : vector<16x32xf32> to vector<16xf32>
    %520 = vector.shape_cast %519 : vector<16xf32> to vector<16x1xf32>
    %cst_165 = arith.constant 3.200000e+01 : f32
    %521 = vector.broadcast %cst_165 : f32 to vector<16x1xf32>
    %522 = arith.divf %520, %521 : vector<16x1xf32>
    %523 = vector.broadcast %522 : vector<16x1xf32> to vector<16x32xf32>
    %524 = arith.subf %518, %523 : vector<16x32xf32>
    %525 = arith.mulf %524, %524 : vector<16x32xf32>
    %cst_166 = arith.constant dense<0.000000e+00> : vector<16xf32>
    %526 = vector.multi_reduction <add>, %525, %cst_166 [1] : vector<16x32xf32> to vector<16xf32>
    %527 = vector.shape_cast %526 : vector<16xf32> to vector<16x1xf32>
    %cst_167 = arith.constant 3.200000e+01 : f32
    %528 = vector.broadcast %cst_167 : f32 to vector<16x1xf32>
    %529 = arith.divf %527, %528 : vector<16x1xf32>
    %cst_168 = arith.constant 9.99999974E-6 : f32
    %530 = vector.broadcast %cst_168 : f32 to vector<16x1xf32>
    %531 = arith.addf %529, %530 : vector<16x1xf32>
    %532 = math.rsqrt %531 : vector<16x1xf32>
    %533 = vector.broadcast %532 : vector<16x1xf32> to vector<16x32xf32>
    %534 = arith.mulf %524, %533 : vector<16x32xf32>
    %c1200 = arith.constant 1200 : index
    %c0_169 = arith.constant 0 : index
    %535 = vector.load %arg1[%c1200, %c0_169] : memref<1632x256xf32, #tpu.memory_space<vmem>>, vector<1x32xf32>
    %536 = vector.broadcast %535 : vector<1x32xf32> to vector<16x32xf32>
    %537 = arith.mulf %534, %536 : vector<16x32xf32>
    %c1192 = arith.constant 1192 : index
    %c0_170 = arith.constant 0 : index
    %538 = vector.load %arg1[%c1192, %c0_170] : memref<1632x256xf32, #tpu.memory_space<vmem>>, vector<1x32xf32>
    %539 = vector.broadcast %538 : vector<1x32xf32> to vector<16x32xf32>
    %540 = arith.addf %537, %539 : vector<16x32xf32>
    %541 = arith.addf %462, %4 : vector<7x32xf32>
    %542 = arith.addf %540, %5 : vector<16x32xf32>
    %c40 = arith.constant 40 : index
    %c0_171 = arith.constant 0 : index
    %543 = vector.load %arg1[%c40, %c0_171] : memref<1632x256xf32, #tpu.memory_space<vmem>>, vector<32x48xf32>
    %c32 = arith.constant 32 : index
    %c0_172 = arith.constant 0 : index
    %544 = vector.load %arg1[%c32, %c0_172] : memref<1632x256xf32, #tpu.memory_space<vmem>>, vector<1x48xf32>
    %545 = vector.extract_strided_slice %543 {offsets = [0, 0], sizes = [32, 16], strides = [1, 1]} : vector<32x48xf32> to vector<32x16xf32>
    %cst_173 = arith.constant dense<0.000000e+00> : vector<7x16xf32>
    %546 = tpu.matmul %541, %545, %cst_173 {dimension_numbers = #tpu.dot_dimension_numbers<[1], [0], [0], [1], [0, 0, 1, 1], [], []>} : vector<7x32xf32>, vector<32x16xf32>, vector<7x16xf32> -> vector<7x16xf32>
    %547 = vector.extract_strided_slice %544 {offsets = [0, 0], sizes = [1, 16], strides = [1, 1]} : vector<1x48xf32> to vector<1x16xf32>
    %548 = vector.broadcast %547 : vector<1x16xf32> to vector<7x16xf32>
    %549 = arith.addf %546, %548 : vector<7x16xf32>
    %550 = vector.extract_strided_slice %543 {offsets = [0, 16], sizes = [32, 16], strides = [1, 1]} : vector<32x48xf32> to vector<32x16xf32>
    %cst_174 = arith.constant dense<0.000000e+00> : vector<16x16xf32>
    %551 = tpu.matmul %542, %550, %cst_174 {dimension_numbers = #tpu.dot_dimension_numbers<[1], [0], [0], [1], [0, 0, 1, 1], [], []>} : vector<16x32xf32>, vector<32x16xf32>, vector<16x16xf32> -> vector<16x16xf32>
    %552 = vector.extract_strided_slice %544 {offsets = [0, 16], sizes = [1, 16], strides = [1, 1]} : vector<1x48xf32> to vector<1x16xf32>
    %553 = vector.broadcast %552 : vector<1x16xf32> to vector<16x16xf32>
    %554 = arith.addf %551, %553 : vector<16x16xf32>
    %555 = vector.extract_strided_slice %543 {offsets = [0, 32], sizes = [32, 16], strides = [1, 1]} : vector<32x48xf32> to vector<32x16xf32>
    %cst_175 = arith.constant dense<0.000000e+00> : vector<16x16xf32>
    %556 = tpu.matmul %540, %555, %cst_175 {dimension_numbers = #tpu.dot_dimension_numbers<[1], [0], [0], [1], [0, 0, 1, 1], [], []>} : vector<16x32xf32>, vector<32x16xf32>, vector<16x16xf32> -> vector<16x16xf32>
    %557 = vector.extract_strided_slice %544 {offsets = [0, 32], sizes = [1, 16], strides = [1, 1]} : vector<1x48xf32> to vector<1x16xf32>
    %558 = vector.broadcast %557 : vector<1x16xf32> to vector<16x16xf32>
    %559 = arith.addf %556, %558 : vector<16x16xf32>
    %560 = vector.extract_strided_slice %549 {offsets = [0, 0], sizes = [7, 8], strides = [1, 1]} : vector<7x16xf32> to vector<7x8xf32>
    %561 = vector.extract_strided_slice %554 {offsets = [0, 0], sizes = [16, 8], strides = [1, 1]} : vector<16x16xf32> to vector<16x8xf32>
    "tpu.trace_start"() <{level = 10 : i32, message = "qd,kd->qk"}> : () -> ()
    %cst_176 = arith.constant dense<0.000000e+00> : vector<7x16xf32>
    %562 = tpu.matmul %560, %561, %cst_176 {dimension_numbers = #tpu.dot_dimension_numbers<[1], [1], [0], [0], [0, 0, 1, 0], [], []>} : vector<7x8xf32>, vector<16x8xf32>, vector<7x16xf32> -> vector<7x16xf32>
    "tpu.trace_stop"() : () -> ()
    %cst_177 = arith.constant dense<0xFF800000> : vector<7xf32>
    %563 = vector.multi_reduction <maximumf>, %562, %cst_177 [1] : vector<7x16xf32> to vector<7xf32>
    %564 = vector.shape_cast %563 : vector<7xf32> to vector<7x1xf32>
    %565 = vector.broadcast %564 : vector<7x1xf32> to vector<7x16xf32>
    %566 = arith.subf %562, %565 : vector<7x16xf32>
    %567 = math.exp %566 : vector<7x16xf32>
    %cst_178 = arith.constant dense<0.000000e+00> : vector<7xf32>
    %568 = vector.multi_reduction <add>, %567, %cst_178 [1] : vector<7x16xf32> to vector<7xf32>
    %569 = vector.shape_cast %568 : vector<7xf32> to vector<7x1xf32>
    %570 = tpu.reciprocal %569 {approx = true} : vector<7x1xf32> -> vector<7x1xf32>
    %571 = vector.broadcast %570 : vector<7x1xf32> to vector<7x16xf32>
    %572 = arith.mulf %567, %571 : vector<7x16xf32>
    %573 = vector.extract_strided_slice %559 {offsets = [0, 0], sizes = [16, 8], strides = [1, 1]} : vector<16x16xf32> to vector<16x8xf32>
    %cst_179 = arith.constant dense<0.000000e+00> : vector<7x8xf32>
    %574 = tpu.matmul %572, %573, %cst_179 {dimension_numbers = #tpu.dot_dimension_numbers<[1], [0], [0], [1], [0, 0, 1, 1], [], []>} : vector<7x16xf32>, vector<16x8xf32>, vector<7x8xf32> -> vector<7x8xf32>
    %575 = vector.extract_strided_slice %549 {offsets = [0, 8], sizes = [7, 8], strides = [1, 1]} : vector<7x16xf32> to vector<7x8xf32>
    %576 = vector.extract_strided_slice %554 {offsets = [0, 8], sizes = [16, 8], strides = [1, 1]} : vector<16x16xf32> to vector<16x8xf32>
    "tpu.trace_start"() <{level = 10 : i32, message = "qd,kd->qk"}> : () -> ()
    %cst_180 = arith.constant dense<0.000000e+00> : vector<7x16xf32>
    %577 = tpu.matmul %575, %576, %cst_180 {dimension_numbers = #tpu.dot_dimension_numbers<[1], [1], [0], [0], [0, 0, 1, 0], [], []>} : vector<7x8xf32>, vector<16x8xf32>, vector<7x16xf32> -> vector<7x16xf32>
    "tpu.trace_stop"() : () -> ()
    %cst_181 = arith.constant dense<0xFF800000> : vector<7xf32>
    %578 = vector.multi_reduction <maximumf>, %577, %cst_181 [1] : vector<7x16xf32> to vector<7xf32>
    %579 = vector.shape_cast %578 : vector<7xf32> to vector<7x1xf32>
    %580 = vector.broadcast %579 : vector<7x1xf32> to vector<7x16xf32>
    %581 = arith.subf %577, %580 : vector<7x16xf32>
    %582 = math.exp %581 : vector<7x16xf32>
    %cst_182 = arith.constant dense<0.000000e+00> : vector<7xf32>
    %583 = vector.multi_reduction <add>, %582, %cst_182 [1] : vector<7x16xf32> to vector<7xf32>
    %584 = vector.shape_cast %583 : vector<7xf32> to vector<7x1xf32>
    %585 = tpu.reciprocal %584 {approx = true} : vector<7x1xf32> -> vector<7x1xf32>
    %586 = vector.broadcast %585 : vector<7x1xf32> to vector<7x16xf32>
    %587 = arith.mulf %582, %586 : vector<7x16xf32>
    %588 = vector.extract_strided_slice %559 {offsets = [0, 8], sizes = [16, 8], strides = [1, 1]} : vector<16x16xf32> to vector<16x8xf32>
    %cst_183 = arith.constant dense<0.000000e+00> : vector<7x8xf32>
    %589 = tpu.matmul %587, %588, %cst_183 {dimension_numbers = #tpu.dot_dimension_numbers<[1], [0], [0], [1], [0, 0, 1, 1], [], []>} : vector<7x16xf32>, vector<16x8xf32>, vector<7x8xf32> -> vector<7x8xf32>
    %590 = tpu.concatenate %574, %589 in 1 : vector<7x8xf32>, vector<7x8xf32> -> vector<7x16xf32>
    %c16 = arith.constant 16 : index
    %c0_184 = arith.constant 0 : index
    %591 = vector.load %arg1[%c16, %c0_184] : memref<1632x256xf32, #tpu.memory_space<vmem>>, vector<16x32xf32>
    %cst_185 = arith.constant dense<0.000000e+00> : vector<7x32xf32>
    %592 = tpu.matmul %590, %591, %cst_185 {dimension_numbers = #tpu.dot_dimension_numbers<[1], [0], [0], [1], [0, 0, 1, 1], [], []>} : vector<7x16xf32>, vector<16x32xf32>, vector<7x32xf32> -> vector<7x32xf32>
    %c8 = arith.constant 8 : index
    %c0_186 = arith.constant 0 : index
    %593 = vector.load %arg1[%c8, %c0_186] : memref<1632x256xf32, #tpu.memory_space<vmem>>, vector<1x32xf32>
    %594 = vector.broadcast %593 : vector<1x32xf32> to vector<7x32xf32>
    %595 = arith.addf %592, %594 : vector<7x32xf32>
    %596 = arith.addf %462, %595 : vector<7x32xf32>
    %cst_187 = arith.constant dense<0.000000e+00> : vector<7xf32>
    %597 = vector.multi_reduction <add>, %596, %cst_187 [1] : vector<7x32xf32> to vector<7xf32>
    %598 = vector.shape_cast %597 : vector<7xf32> to vector<7x1xf32>
    %cst_188 = arith.constant 3.200000e+01 : f32
    %599 = vector.broadcast %cst_188 : f32 to vector<7x1xf32>
    %600 = arith.divf %598, %599 : vector<7x1xf32>
    %601 = vector.broadcast %600 : vector<7x1xf32> to vector<7x32xf32>
    %602 = arith.subf %596, %601 : vector<7x32xf32>
    %603 = arith.mulf %602, %602 : vector<7x32xf32>
    %cst_189 = arith.constant dense<0.000000e+00> : vector<7xf32>
    %604 = vector.multi_reduction <add>, %603, %cst_189 [1] : vector<7x32xf32> to vector<7xf32>
    %605 = vector.shape_cast %604 : vector<7xf32> to vector<7x1xf32>
    %cst_190 = arith.constant 3.200000e+01 : f32
    %606 = vector.broadcast %cst_190 : f32 to vector<7x1xf32>
    %607 = arith.divf %605, %606 : vector<7x1xf32>
    %cst_191 = arith.constant 9.99999974E-6 : f32
    %608 = vector.broadcast %cst_191 : f32 to vector<7x1xf32>
    %609 = arith.addf %607, %608 : vector<7x1xf32>
    %610 = math.rsqrt %609 : vector<7x1xf32>
    %611 = vector.broadcast %610 : vector<7x1xf32> to vector<7x32xf32>
    %612 = arith.mulf %602, %611 : vector<7x32xf32>
    %c1296 = arith.constant 1296 : index
    %c0_192 = arith.constant 0 : index
    %613 = vector.load %arg1[%c1296, %c0_192] : memref<1632x256xf32, #tpu.memory_space<vmem>>, vector<1x32xf32>
    %614 = vector.broadcast %613 : vector<1x32xf32> to vector<7x32xf32>
    %615 = arith.mulf %612, %614 : vector<7x32xf32>
    %c1288 = arith.constant 1288 : index
    %c0_193 = arith.constant 0 : index
    %616 = vector.load %arg1[%c1288, %c0_193] : memref<1632x256xf32, #tpu.memory_space<vmem>>, vector<1x32xf32>
    %617 = vector.broadcast %616 : vector<1x32xf32> to vector<7x32xf32>
    %618 = arith.addf %615, %617 : vector<7x32xf32>
    %619 = vector.extract_strided_slice %618 {offsets = [0, 0], sizes = [5, 32], strides = [1, 1]} : vector<7x32xf32> to vector<5x32xf32>
    %c96 = arith.constant 96 : index
    %c0_194 = arith.constant 0 : index
    %620 = vector.load %arg1[%c96, %c0_194] : memref<1632x256xf32, #tpu.memory_space<vmem>>, vector<32x192xf32>
    %cst_195 = arith.constant dense<0.000000e+00> : vector<5x192xf32>
    %621 = tpu.matmul %619, %620, %cst_195 {dimension_numbers = #tpu.dot_dimension_numbers<[1], [0], [0], [1], [0, 0, 1, 1], [], []>} : vector<5x32xf32>, vector<32x192xf32>, vector<5x192xf32> -> vector<5x192xf32>
    %c72 = arith.constant 72 : index
    %c0_196 = arith.constant 0 : index
    %622 = vector.load %arg1[%c72, %c0_196] : memref<1632x256xf32, #tpu.memory_space<vmem>>, vector<1x192xf32>
    %623 = vector.broadcast %622 : vector<1x192xf32> to vector<5x192xf32>
    %624 = arith.addf %621, %623 : vector<5x192xf32>
    %cst_197 = arith.constant 0.000000e+00 : f32
    %625 = vector.broadcast %cst_197 : f32 to vector<5x192xf32>
    %626 = arith.maximumf %624, %625 : vector<5x192xf32>
    %c128 = arith.constant 128 : index
    %c0_198 = arith.constant 0 : index
    %627 = vector.load %arg1[%c128, %c0_198] : memref<1632x256xf32, #tpu.memory_space<vmem>>, vector<192x192xf32>
    %cst_199 = arith.constant dense<0.000000e+00> : vector<5x192xf32>
    %628 = tpu.matmul %626, %627, %cst_199 {dimension_numbers = #tpu.dot_dimension_numbers<[1], [0], [0], [1], [0, 0, 1, 1], [], []>} : vector<5x192xf32>, vector<192x192xf32>, vector<5x192xf32> -> vector<5x192xf32>
    %c80 = arith.constant 80 : index
    %c0_200 = arith.constant 0 : index
    %629 = vector.load %arg1[%c80, %c0_200] : memref<1632x256xf32, #tpu.memory_space<vmem>>, vector<1x192xf32>
    %630 = vector.broadcast %629 : vector<1x192xf32> to vector<5x192xf32>
    %631 = arith.addf %628, %630 : vector<5x192xf32>
    %cst_201 = arith.constant 0.000000e+00 : f32
    %632 = vector.broadcast %cst_201 : f32 to vector<5x192xf32>
    %633 = arith.maximumf %631, %632 : vector<5x192xf32>
    %c320 = arith.constant 320 : index
    %c0_202 = arith.constant 0 : index
    %634 = vector.load %arg1[%c320, %c0_202] : memref<1632x256xf32, #tpu.memory_space<vmem>>, vector<192x20xf32>
    %cst_203 = arith.constant dense<0.000000e+00> : vector<5x20xf32>
    %635 = tpu.matmul %633, %634, %cst_203 {dimension_numbers = #tpu.dot_dimension_numbers<[1], [0], [0], [1], [0, 0, 1, 1], [], []>} : vector<5x192xf32>, vector<192x20xf32>, vector<5x20xf32> -> vector<5x20xf32>
    %c88 = arith.constant 88 : index
    %c0_204 = arith.constant 0 : index
    %636 = vector.load %arg1[%c88, %c0_204] : memref<1632x256xf32, #tpu.memory_space<vmem>>, vector<1x20xf32>
    %637 = vector.broadcast %636 : vector<1x20xf32> to vector<5x20xf32>
    %638 = arith.addf %635, %637 : vector<5x20xf32>
    %639 = vector.extract_strided_slice %638 {offsets = [0, 0], sizes = [1, 4], strides = [1, 1]} : vector<5x20xf32> to vector<1x4xf32>
    %640 = vector.extract_strided_slice %638 {offsets = [1, 4], sizes = [4, 16], strides = [1, 1]} : vector<5x20xf32> to vector<4x16xf32>
    %c512 = arith.constant 512 : index
    %c0_205 = arith.constant 0 : index
    %641 = vector.load %arg1[%c512, %c0_205] : memref<1632x256xf32, #tpu.memory_space<vmem>>, vector<4x16xf32>
    %642 = arith.mulf %640, %641 : vector<4x16xf32>
    %643 = vector.extract_strided_slice %642 {offsets = [0, 0], sizes = [4, 4], strides = [1, 1]} : vector<4x16xf32> to vector<4x4xf32>
    %644 = vector.extract_strided_slice %642 {offsets = [0, 4], sizes = [4, 4], strides = [1, 1]} : vector<4x16xf32> to vector<4x4xf32>
    %645 = arith.addf %643, %644 : vector<4x4xf32>
    %646 = vector.extract_strided_slice %642 {offsets = [0, 8], sizes = [4, 4], strides = [1, 1]} : vector<4x16xf32> to vector<4x4xf32>
    %647 = arith.addf %645, %646 : vector<4x4xf32>
    %648 = vector.extract_strided_slice %642 {offsets = [0, 12], sizes = [4, 4], strides = [1, 1]} : vector<4x16xf32> to vector<4x4xf32>
    %649 = arith.addf %647, %648 : vector<4x4xf32>
    %c1328 = arith.constant 1328 : index
    %c0_206 = arith.constant 0 : index
    %650 = vector.load %arg1[%c1328, %c0_206] : memref<1632x256xf32, #tpu.memory_space<vmem>>, vector<32x32xf32>
    %cst_207 = arith.constant dense<0.000000e+00> : vector<16x32xf32>
    %651 = tpu.matmul %540, %650, %cst_207 {dimension_numbers = #tpu.dot_dimension_numbers<[1], [0], [0], [1], [0, 0, 1, 1], [], []>} : vector<16x32xf32>, vector<32x32xf32>, vector<16x32xf32> -> vector<16x32xf32>
    %c1320 = arith.constant 1320 : index
    %c0_208 = arith.constant 0 : index
    %652 = vector.load %arg1[%c1320, %c0_208] : memref<1632x256xf32, #tpu.memory_space<vmem>>, vector<1x32xf32>
    %653 = vector.broadcast %652 : vector<1x32xf32> to vector<16x32xf32>
    %654 = arith.addf %651, %653 : vector<16x32xf32>
    %655 = vector.extract_strided_slice %654 {offsets = [0, 0], sizes = [16, 8], strides = [1, 1]} : vector<16x32xf32> to vector<16x8xf32>
    %cst_209 = arith.constant dense<0.000000e+00> : vector<16xf32>
    %656 = vector.multi_reduction <add>, %655, %cst_209 [1] : vector<16x8xf32> to vector<16xf32>
    %657 = vector.shape_cast %656 : vector<16xf32> to vector<16x1xf32>
    %cst_210 = arith.constant 8.000000e+00 : f32
    %658 = vector.broadcast %cst_210 : f32 to vector<16x1xf32>
    %659 = arith.divf %657, %658 : vector<16x1xf32>
    %660 = vector.broadcast %659 : vector<16x1xf32> to vector<16x8xf32>
    %661 = arith.subf %655, %660 : vector<16x8xf32>
    %662 = arith.mulf %661, %661 : vector<16x8xf32>
    %cst_211 = arith.constant dense<0.000000e+00> : vector<16xf32>
    %663 = vector.multi_reduction <add>, %662, %cst_211 [1] : vector<16x8xf32> to vector<16xf32>
    %664 = vector.shape_cast %663 : vector<16xf32> to vector<16x1xf32>
    %cst_212 = arith.constant 8.000000e+00 : f32
    %665 = vector.broadcast %cst_212 : f32 to vector<16x1xf32>
    %666 = arith.divf %664, %665 : vector<16x1xf32>
    %cst_213 = arith.constant 9.99999997E-7 : f32
    %667 = vector.broadcast %cst_213 : f32 to vector<16x1xf32>
    %668 = arith.addf %666, %667 : vector<16x1xf32>
    %669 = math.rsqrt %668 : vector<16x1xf32>
    %670 = vector.broadcast %669 : vector<16x1xf32> to vector<16x8xf32>
    %671 = arith.mulf %661, %670 : vector<16x8xf32>
    %c1384 = arith.constant 1384 : index
    %c0_214 = arith.constant 0 : index
    %672 = vector.load %arg1[%c1384, %c0_214] : memref<1632x256xf32, #tpu.memory_space<vmem>>, vector<1x8xf32>
    %673 = vector.broadcast %672 : vector<1x8xf32> to vector<16x8xf32>
    %674 = arith.mulf %671, %673 : vector<16x8xf32>
    %c1376 = arith.constant 1376 : index
    %c0_215 = arith.constant 0 : index
    %675 = vector.load %arg1[%c1376, %c0_215] : memref<1632x256xf32, #tpu.memory_space<vmem>>, vector<1x8xf32>
    %676 = vector.broadcast %675 : vector<1x8xf32> to vector<16x8xf32>
    %677 = arith.addf %674, %676 : vector<16x8xf32>
    %678 = arith.mulf %677, %677 : vector<16x8xf32>
    %679 = arith.mulf %677, %678 : vector<16x8xf32>
    %cst_216 = arith.constant 4.471500e-02 : f32
    %680 = vector.broadcast %cst_216 : f32 to vector<16x8xf32>
    %681 = arith.mulf %680, %679 : vector<16x8xf32>
    %682 = arith.addf %677, %681 : vector<16x8xf32>
    %cst_217 = arith.constant 0.797884583 : f32
    %683 = vector.broadcast %cst_217 : f32 to vector<16x8xf32>
    %684 = arith.mulf %683, %682 : vector<16x8xf32>
    %685 = math.tanh %684 : vector<16x8xf32>
    %cst_218 = arith.constant 1.000000e+00 : f32
    %686 = vector.broadcast %cst_218 : f32 to vector<16x8xf32>
    %687 = arith.addf %686, %685 : vector<16x8xf32>
    %cst_219 = arith.constant 5.000000e-01 : f32
    %688 = vector.broadcast %cst_219 : f32 to vector<16x8xf32>
    %689 = arith.mulf %688, %687 : vector<16x8xf32>
    %690 = arith.mulf %677, %689 : vector<16x8xf32>
    %c1368 = arith.constant 1368 : index
    %c0_220 = arith.constant 0 : index
    %691 = vector.load %arg1[%c1368, %c0_220] : memref<1632x256xf32, #tpu.memory_space<vmem>>, vector<8x16xf32>
    %cst_221 = arith.constant dense<0.000000e+00> : vector<16x16xf32>
    %692 = tpu.matmul %690, %691, %cst_221 {dimension_numbers = #tpu.dot_dimension_numbers<[1], [0], [0], [1], [0, 0, 1, 1], [], []>} : vector<16x8xf32>, vector<8x16xf32>, vector<16x16xf32> -> vector<16x16xf32>
    %c1360 = arith.constant 1360 : index
    %c0_222 = arith.constant 0 : index
    %693 = vector.load %arg1[%c1360, %c0_222] : memref<1632x256xf32, #tpu.memory_space<vmem>>, vector<1x16xf32>
    %694 = vector.broadcast %693 : vector<1x16xf32> to vector<16x16xf32>
    %695 = arith.addf %692, %694 : vector<16x16xf32>
    %696 = arith.mulf %695, %695 : vector<16x16xf32>
    %697 = arith.mulf %695, %696 : vector<16x16xf32>
    %cst_223 = arith.constant 4.471500e-02 : f32
    %698 = vector.broadcast %cst_223 : f32 to vector<16x16xf32>
    %699 = arith.mulf %698, %697 : vector<16x16xf32>
    %700 = arith.addf %695, %699 : vector<16x16xf32>
    %cst_224 = arith.constant 0.797884583 : f32
    %701 = vector.broadcast %cst_224 : f32 to vector<16x16xf32>
    %702 = arith.mulf %701, %700 : vector<16x16xf32>
    %703 = math.tanh %702 : vector<16x16xf32>
    %cst_225 = arith.constant 1.000000e+00 : f32
    %704 = vector.broadcast %cst_225 : f32 to vector<16x16xf32>
    %705 = arith.addf %704, %703 : vector<16x16xf32>
    %cst_226 = arith.constant 5.000000e-01 : f32
    %706 = vector.broadcast %cst_226 : f32 to vector<16x16xf32>
    %707 = arith.mulf %706, %705 : vector<16x16xf32>
    %708 = arith.mulf %695, %707 : vector<16x16xf32>
    %709 = vector.extract_strided_slice %708 {offsets = [0, 0], sizes = [16, 4], strides = [1, 1]} : vector<16x16xf32> to vector<16x4xf32>
    "tpu.trace_start"() <{level = 10 : i32, message = "kc,tc->kt"}> : () -> ()
    %cst_227 = arith.constant dense<0.000000e+00> : vector<4x16xf32>
    %710 = tpu.matmul %649, %709, %cst_227 {dimension_numbers = #tpu.dot_dimension_numbers<[1], [1], [0], [0], [0, 0, 1, 0], [], []>} : vector<4x4xf32>, vector<16x4xf32>, vector<4x16xf32> -> vector<4x16xf32>
    "tpu.trace_stop"() : () -> ()
    %711 = vector.extract_strided_slice %708 {offsets = [0, 4], sizes = [16, 4], strides = [1, 1]} : vector<16x16xf32> to vector<16x4xf32>
    "tpu.trace_start"() <{level = 10 : i32, message = "kc,tc->kt"}> : () -> ()
    %cst_228 = arith.constant dense<0.000000e+00> : vector<4x16xf32>
    %712 = tpu.matmul %649, %711, %cst_228 {dimension_numbers = #tpu.dot_dimension_numbers<[1], [1], [0], [0], [0, 0, 1, 0], [], []>} : vector<4x4xf32>, vector<16x4xf32>, vector<4x16xf32> -> vector<4x16xf32>
    "tpu.trace_stop"() : () -> ()
    %713 = vector.extract_strided_slice %708 {offsets = [0, 8], sizes = [16, 4], strides = [1, 1]} : vector<16x16xf32> to vector<16x4xf32>
    "tpu.trace_start"() <{level = 10 : i32, message = "kc,tc->kt"}> : () -> ()
    %cst_229 = arith.constant dense<0.000000e+00> : vector<4x16xf32>
    %714 = tpu.matmul %649, %713, %cst_229 {dimension_numbers = #tpu.dot_dimension_numbers<[1], [1], [0], [0], [0, 0, 1, 0], [], []>} : vector<4x4xf32>, vector<16x4xf32>, vector<4x16xf32> -> vector<4x16xf32>
    "tpu.trace_stop"() : () -> ()
    %715 = vector.extract_strided_slice %708 {offsets = [0, 12], sizes = [16, 4], strides = [1, 1]} : vector<16x16xf32> to vector<16x4xf32>
    "tpu.trace_start"() <{level = 10 : i32, message = "kc,tc->kt"}> : () -> ()
    %cst_230 = arith.constant dense<0.000000e+00> : vector<4x16xf32>
    %716 = tpu.matmul %649, %715, %cst_230 {dimension_numbers = #tpu.dot_dimension_numbers<[1], [1], [0], [0], [0, 0, 1, 0], [], []>} : vector<4x4xf32>, vector<16x4xf32>, vector<4x16xf32> -> vector<4x16xf32>
    "tpu.trace_stop"() : () -> ()
    %717 = vector.extract_strided_slice %654 {offsets = [0, 8], sizes = [16, 8], strides = [1, 1]} : vector<16x32xf32> to vector<16x8xf32>
    %cst_231 = arith.constant dense<0.000000e+00> : vector<16xf32>
    %718 = vector.multi_reduction <add>, %717, %cst_231 [1] : vector<16x8xf32> to vector<16xf32>
    %719 = vector.shape_cast %718 : vector<16xf32> to vector<16x1xf32>
    %cst_232 = arith.constant 8.000000e+00 : f32
    %720 = vector.broadcast %cst_232 : f32 to vector<16x1xf32>
    %721 = arith.divf %719, %720 : vector<16x1xf32>
    %722 = vector.broadcast %721 : vector<16x1xf32> to vector<16x8xf32>
    %723 = arith.subf %717, %722 : vector<16x8xf32>
    %724 = arith.mulf %723, %723 : vector<16x8xf32>
    %cst_233 = arith.constant dense<0.000000e+00> : vector<16xf32>
    %725 = vector.multi_reduction <add>, %724, %cst_233 [1] : vector<16x8xf32> to vector<16xf32>
    %726 = vector.shape_cast %725 : vector<16xf32> to vector<16x1xf32>
    %cst_234 = arith.constant 8.000000e+00 : f32
    %727 = vector.broadcast %cst_234 : f32 to vector<16x1xf32>
    %728 = arith.divf %726, %727 : vector<16x1xf32>
    %cst_235 = arith.constant 9.99999997E-7 : f32
    %729 = vector.broadcast %cst_235 : f32 to vector<16x1xf32>
    %730 = arith.addf %728, %729 : vector<16x1xf32>
    %731 = math.rsqrt %730 : vector<16x1xf32>
    %732 = vector.broadcast %731 : vector<16x1xf32> to vector<16x8xf32>
    %733 = arith.mulf %723, %732 : vector<16x8xf32>
    %c1384_236 = arith.constant 1384 : index
    %c0_237 = arith.constant 0 : index
    %734 = vector.load %arg1[%c1384_236, %c0_237] : memref<1632x256xf32, #tpu.memory_space<vmem>>, vector<1x8xf32>
    %735 = vector.broadcast %734 : vector<1x8xf32> to vector<16x8xf32>
    %736 = arith.mulf %733, %735 : vector<16x8xf32>
    %c1376_238 = arith.constant 1376 : index
    %c0_239 = arith.constant 0 : index
    %737 = vector.load %arg1[%c1376_238, %c0_239] : memref<1632x256xf32, #tpu.memory_space<vmem>>, vector<1x8xf32>
    %738 = vector.broadcast %737 : vector<1x8xf32> to vector<16x8xf32>
    %739 = arith.addf %736, %738 : vector<16x8xf32>
    %740 = arith.mulf %739, %739 : vector<16x8xf32>
    %741 = arith.mulf %739, %740 : vector<16x8xf32>
    %cst_240 = arith.constant 4.471500e-02 : f32
    %742 = vector.broadcast %cst_240 : f32 to vector<16x8xf32>
    %743 = arith.mulf %742, %741 : vector<16x8xf32>
    %744 = arith.addf %739, %743 : vector<16x8xf32>
    %cst_241 = arith.constant 0.797884583 : f32
    %745 = vector.broadcast %cst_241 : f32 to vector<16x8xf32>
    %746 = arith.mulf %745, %744 : vector<16x8xf32>
    %747 = math.tanh %746 : vector<16x8xf32>
    %cst_242 = arith.constant 1.000000e+00 : f32
    %748 = vector.broadcast %cst_242 : f32 to vector<16x8xf32>
    %749 = arith.addf %748, %747 : vector<16x8xf32>
    %cst_243 = arith.constant 5.000000e-01 : f32
    %750 = vector.broadcast %cst_243 : f32 to vector<16x8xf32>
    %751 = arith.mulf %750, %749 : vector<16x8xf32>
    %752 = arith.mulf %739, %751 : vector<16x8xf32>
    %c1368_244 = arith.constant 1368 : index
    %c0_245 = arith.constant 0 : index
    %753 = vector.load %arg1[%c1368_244, %c0_245] : memref<1632x256xf32, #tpu.memory_space<vmem>>, vector<8x16xf32>
    %cst_246 = arith.constant dense<0.000000e+00> : vector<16x16xf32>
    %754 = tpu.matmul %752, %753, %cst_246 {dimension_numbers = #tpu.dot_dimension_numbers<[1], [0], [0], [1], [0, 0, 1, 1], [], []>} : vector<16x8xf32>, vector<8x16xf32>, vector<16x16xf32> -> vector<16x16xf32>
    %c1360_247 = arith.constant 1360 : index
    %c0_248 = arith.constant 0 : index
    %755 = vector.load %arg1[%c1360_247, %c0_248] : memref<1632x256xf32, #tpu.memory_space<vmem>>, vector<1x16xf32>
    %756 = vector.broadcast %755 : vector<1x16xf32> to vector<16x16xf32>
    %757 = arith.addf %754, %756 : vector<16x16xf32>
    %758 = arith.mulf %757, %757 : vector<16x16xf32>
    %759 = arith.mulf %757, %758 : vector<16x16xf32>
    %cst_249 = arith.constant 4.471500e-02 : f32
    %760 = vector.broadcast %cst_249 : f32 to vector<16x16xf32>
    %761 = arith.mulf %760, %759 : vector<16x16xf32>
    %762 = arith.addf %757, %761 : vector<16x16xf32>
    %cst_250 = arith.constant 0.797884583 : f32
    %763 = vector.broadcast %cst_250 : f32 to vector<16x16xf32>
    %764 = arith.mulf %763, %762 : vector<16x16xf32>
    %765 = math.tanh %764 : vector<16x16xf32>
    %cst_251 = arith.constant 1.000000e+00 : f32
    %766 = vector.broadcast %cst_251 : f32 to vector<16x16xf32>
    %767 = arith.addf %766, %765 : vector<16x16xf32>
    %cst_252 = arith.constant 5.000000e-01 : f32
    %768 = vector.broadcast %cst_252 : f32 to vector<16x16xf32>
    %769 = arith.mulf %768, %767 : vector<16x16xf32>
    %770 = arith.mulf %757, %769 : vector<16x16xf32>
    %771 = vector.extract_strided_slice %770 {offsets = [0, 0], sizes = [16, 4], strides = [1, 1]} : vector<16x16xf32> to vector<16x4xf32>
    "tpu.trace_start"() <{level = 10 : i32, message = "kc,tc->kt"}> : () -> ()
    %cst_253 = arith.constant dense<0.000000e+00> : vector<4x16xf32>
    %772 = tpu.matmul %649, %771, %cst_253 {dimension_numbers = #tpu.dot_dimension_numbers<[1], [1], [0], [0], [0, 0, 1, 0], [], []>} : vector<4x4xf32>, vector<16x4xf32>, vector<4x16xf32> -> vector<4x16xf32>
    "tpu.trace_stop"() : () -> ()
    %773 = vector.extract_strided_slice %770 {offsets = [0, 4], sizes = [16, 4], strides = [1, 1]} : vector<16x16xf32> to vector<16x4xf32>
    "tpu.trace_start"() <{level = 10 : i32, message = "kc,tc->kt"}> : () -> ()
    %cst_254 = arith.constant dense<0.000000e+00> : vector<4x16xf32>
    %774 = tpu.matmul %649, %773, %cst_254 {dimension_numbers = #tpu.dot_dimension_numbers<[1], [1], [0], [0], [0, 0, 1, 0], [], []>} : vector<4x4xf32>, vector<16x4xf32>, vector<4x16xf32> -> vector<4x16xf32>
    "tpu.trace_stop"() : () -> ()
    %775 = vector.extract_strided_slice %770 {offsets = [0, 8], sizes = [16, 4], strides = [1, 1]} : vector<16x16xf32> to vector<16x4xf32>
    "tpu.trace_start"() <{level = 10 : i32, message = "kc,tc->kt"}> : () -> ()
    %cst_255 = arith.constant dense<0.000000e+00> : vector<4x16xf32>
    %776 = tpu.matmul %649, %775, %cst_255 {dimension_numbers = #tpu.dot_dimension_numbers<[1], [1], [0], [0], [0, 0, 1, 0], [], []>} : vector<4x4xf32>, vector<16x4xf32>, vector<4x16xf32> -> vector<4x16xf32>
    "tpu.trace_stop"() : () -> ()
    %777 = vector.extract_strided_slice %770 {offsets = [0, 12], sizes = [16, 4], strides = [1, 1]} : vector<16x16xf32> to vector<16x4xf32>
    "tpu.trace_start"() <{level = 10 : i32, message = "kc,tc->kt"}> : () -> ()
    %cst_256 = arith.constant dense<0.000000e+00> : vector<4x16xf32>
    %778 = tpu.matmul %649, %777, %cst_256 {dimension_numbers = #tpu.dot_dimension_numbers<[1], [1], [0], [0], [0, 0, 1, 0], [], []>} : vector<4x4xf32>, vector<16x4xf32>, vector<4x16xf32> -> vector<4x16xf32>
    "tpu.trace_stop"() : () -> ()
    %779 = vector.extract_strided_slice %654 {offsets = [0, 16], sizes = [16, 8], strides = [1, 1]} : vector<16x32xf32> to vector<16x8xf32>
    %cst_257 = arith.constant dense<0.000000e+00> : vector<16xf32>
    %780 = vector.multi_reduction <add>, %779, %cst_257 [1] : vector<16x8xf32> to vector<16xf32>
    %781 = vector.shape_cast %780 : vector<16xf32> to vector<16x1xf32>
    %cst_258 = arith.constant 8.000000e+00 : f32
    %782 = vector.broadcast %cst_258 : f32 to vector<16x1xf32>
    %783 = arith.divf %781, %782 : vector<16x1xf32>
    %784 = vector.broadcast %783 : vector<16x1xf32> to vector<16x8xf32>
    %785 = arith.subf %779, %784 : vector<16x8xf32>
    %786 = arith.mulf %785, %785 : vector<16x8xf32>
    %cst_259 = arith.constant dense<0.000000e+00> : vector<16xf32>
    %787 = vector.multi_reduction <add>, %786, %cst_259 [1] : vector<16x8xf32> to vector<16xf32>
    %788 = vector.shape_cast %787 : vector<16xf32> to vector<16x1xf32>
    %cst_260 = arith.constant 8.000000e+00 : f32
    %789 = vector.broadcast %cst_260 : f32 to vector<16x1xf32>
    %790 = arith.divf %788, %789 : vector<16x1xf32>
    %cst_261 = arith.constant 9.99999997E-7 : f32
    %791 = vector.broadcast %cst_261 : f32 to vector<16x1xf32>
    %792 = arith.addf %790, %791 : vector<16x1xf32>
    %793 = math.rsqrt %792 : vector<16x1xf32>
    %794 = vector.broadcast %793 : vector<16x1xf32> to vector<16x8xf32>
    %795 = arith.mulf %785, %794 : vector<16x8xf32>
    %c1384_262 = arith.constant 1384 : index
    %c0_263 = arith.constant 0 : index
    %796 = vector.load %arg1[%c1384_262, %c0_263] : memref<1632x256xf32, #tpu.memory_space<vmem>>, vector<1x8xf32>
    %797 = vector.broadcast %796 : vector<1x8xf32> to vector<16x8xf32>
    %798 = arith.mulf %795, %797 : vector<16x8xf32>
    %c1376_264 = arith.constant 1376 : index
    %c0_265 = arith.constant 0 : index
    %799 = vector.load %arg1[%c1376_264, %c0_265] : memref<1632x256xf32, #tpu.memory_space<vmem>>, vector<1x8xf32>
    %800 = vector.broadcast %799 : vector<1x8xf32> to vector<16x8xf32>
    %801 = arith.addf %798, %800 : vector<16x8xf32>
    %802 = arith.mulf %801, %801 : vector<16x8xf32>
    %803 = arith.mulf %801, %802 : vector<16x8xf32>
    %cst_266 = arith.constant 4.471500e-02 : f32
    %804 = vector.broadcast %cst_266 : f32 to vector<16x8xf32>
    %805 = arith.mulf %804, %803 : vector<16x8xf32>
    %806 = arith.addf %801, %805 : vector<16x8xf32>
    %cst_267 = arith.constant 0.797884583 : f32
    %807 = vector.broadcast %cst_267 : f32 to vector<16x8xf32>
    %808 = arith.mulf %807, %806 : vector<16x8xf32>
    %809 = math.tanh %808 : vector<16x8xf32>
    %cst_268 = arith.constant 1.000000e+00 : f32
    %810 = vector.broadcast %cst_268 : f32 to vector<16x8xf32>
    %811 = arith.addf %810, %809 : vector<16x8xf32>
    %cst_269 = arith.constant 5.000000e-01 : f32
    %812 = vector.broadcast %cst_269 : f32 to vector<16x8xf32>
    %813 = arith.mulf %812, %811 : vector<16x8xf32>
    %814 = arith.mulf %801, %813 : vector<16x8xf32>
    %c1368_270 = arith.constant 1368 : index
    %c0_271 = arith.constant 0 : index
    %815 = vector.load %arg1[%c1368_270, %c0_271] : memref<1632x256xf32, #tpu.memory_space<vmem>>, vector<8x16xf32>
    %cst_272 = arith.constant dense<0.000000e+00> : vector<16x16xf32>
    %816 = tpu.matmul %814, %815, %cst_272 {dimension_numbers = #tpu.dot_dimension_numbers<[1], [0], [0], [1], [0, 0, 1, 1], [], []>} : vector<16x8xf32>, vector<8x16xf32>, vector<16x16xf32> -> vector<16x16xf32>
    %c1360_273 = arith.constant 1360 : index
    %c0_274 = arith.constant 0 : index
    %817 = vector.load %arg1[%c1360_273, %c0_274] : memref<1632x256xf32, #tpu.memory_space<vmem>>, vector<1x16xf32>
    %818 = vector.broadcast %817 : vector<1x16xf32> to vector<16x16xf32>
    %819 = arith.addf %816, %818 : vector<16x16xf32>
    %820 = arith.mulf %819, %819 : vector<16x16xf32>
    %821 = arith.mulf %819, %820 : vector<16x16xf32>
    %cst_275 = arith.constant 4.471500e-02 : f32
    %822 = vector.broadcast %cst_275 : f32 to vector<16x16xf32>
    %823 = arith.mulf %822, %821 : vector<16x16xf32>
    %824 = arith.addf %819, %823 : vector<16x16xf32>
    %cst_276 = arith.constant 0.797884583 : f32
    %825 = vector.broadcast %cst_276 : f32 to vector<16x16xf32>
    %826 = arith.mulf %825, %824 : vector<16x16xf32>
    %827 = math.tanh %826 : vector<16x16xf32>
    %cst_277 = arith.constant 1.000000e+00 : f32
    %828 = vector.broadcast %cst_277 : f32 to vector<16x16xf32>
    %829 = arith.addf %828, %827 : vector<16x16xf32>
    %cst_278 = arith.constant 5.000000e-01 : f32
    %830 = vector.broadcast %cst_278 : f32 to vector<16x16xf32>
    %831 = arith.mulf %830, %829 : vector<16x16xf32>
    %832 = arith.mulf %819, %831 : vector<16x16xf32>
    %833 = vector.extract_strided_slice %832 {offsets = [0, 0], sizes = [16, 4], strides = [1, 1]} : vector<16x16xf32> to vector<16x4xf32>
    "tpu.trace_start"() <{level = 10 : i32, message = "kc,tc->kt"}> : () -> ()
    %cst_279 = arith.constant dense<0.000000e+00> : vector<4x16xf32>
    %834 = tpu.matmul %649, %833, %cst_279 {dimension_numbers = #tpu.dot_dimension_numbers<[1], [1], [0], [0], [0, 0, 1, 0], [], []>} : vector<4x4xf32>, vector<16x4xf32>, vector<4x16xf32> -> vector<4x16xf32>
    "tpu.trace_stop"() : () -> ()
    %835 = vector.extract_strided_slice %832 {offsets = [0, 4], sizes = [16, 4], strides = [1, 1]} : vector<16x16xf32> to vector<16x4xf32>
    "tpu.trace_start"() <{level = 10 : i32, message = "kc,tc->kt"}> : () -> ()
    %cst_280 = arith.constant dense<0.000000e+00> : vector<4x16xf32>
    %836 = tpu.matmul %649, %835, %cst_280 {dimension_numbers = #tpu.dot_dimension_numbers<[1], [1], [0], [0], [0, 0, 1, 0], [], []>} : vector<4x4xf32>, vector<16x4xf32>, vector<4x16xf32> -> vector<4x16xf32>
    "tpu.trace_stop"() : () -> ()
    %837 = vector.extract_strided_slice %832 {offsets = [0, 8], sizes = [16, 4], strides = [1, 1]} : vector<16x16xf32> to vector<16x4xf32>
    "tpu.trace_start"() <{level = 10 : i32, message = "kc,tc->kt"}> : () -> ()
    %cst_281 = arith.constant dense<0.000000e+00> : vector<4x16xf32>
    %838 = tpu.matmul %649, %837, %cst_281 {dimension_numbers = #tpu.dot_dimension_numbers<[1], [1], [0], [0], [0, 0, 1, 0], [], []>} : vector<4x4xf32>, vector<16x4xf32>, vector<4x16xf32> -> vector<4x16xf32>
    "tpu.trace_stop"() : () -> ()
    %839 = vector.extract_strided_slice %832 {offsets = [0, 12], sizes = [16, 4], strides = [1, 1]} : vector<16x16xf32> to vector<16x4xf32>
    "tpu.trace_start"() <{level = 10 : i32, message = "kc,tc->kt"}> : () -> ()
    %cst_282 = arith.constant dense<0.000000e+00> : vector<4x16xf32>
    %840 = tpu.matmul %649, %839, %cst_282 {dimension_numbers = #tpu.dot_dimension_numbers<[1], [1], [0], [0], [0, 0, 1, 0], [], []>} : vector<4x4xf32>, vector<16x4xf32>, vector<4x16xf32> -> vector<4x16xf32>
    "tpu.trace_stop"() : () -> ()
    %841 = vector.extract_strided_slice %654 {offsets = [0, 24], sizes = [16, 8], strides = [1, 1]} : vector<16x32xf32> to vector<16x8xf32>
    %cst_283 = arith.constant dense<0.000000e+00> : vector<16xf32>
    %842 = vector.multi_reduction <add>, %841, %cst_283 [1] : vector<16x8xf32> to vector<16xf32>
    %843 = vector.shape_cast %842 : vector<16xf32> to vector<16x1xf32>
    %cst_284 = arith.constant 8.000000e+00 : f32
    %844 = vector.broadcast %cst_284 : f32 to vector<16x1xf32>
    %845 = arith.divf %843, %844 : vector<16x1xf32>
    %846 = vector.broadcast %845 : vector<16x1xf32> to vector<16x8xf32>
    %847 = arith.subf %841, %846 : vector<16x8xf32>
    %848 = arith.mulf %847, %847 : vector<16x8xf32>
    %cst_285 = arith.constant dense<0.000000e+00> : vector<16xf32>
    %849 = vector.multi_reduction <add>, %848, %cst_285 [1] : vector<16x8xf32> to vector<16xf32>
    %850 = vector.shape_cast %849 : vector<16xf32> to vector<16x1xf32>
    %cst_286 = arith.constant 8.000000e+00 : f32
    %851 = vector.broadcast %cst_286 : f32 to vector<16x1xf32>
    %852 = arith.divf %850, %851 : vector<16x1xf32>
    %cst_287 = arith.constant 9.99999997E-7 : f32
    %853 = vector.broadcast %cst_287 : f32 to vector<16x1xf32>
    %854 = arith.addf %852, %853 : vector<16x1xf32>
    %855 = math.rsqrt %854 : vector<16x1xf32>
    %856 = vector.broadcast %855 : vector<16x1xf32> to vector<16x8xf32>
    %857 = arith.mulf %847, %856 : vector<16x8xf32>
    %c1384_288 = arith.constant 1384 : index
    %c0_289 = arith.constant 0 : index
    %858 = vector.load %arg1[%c1384_288, %c0_289] : memref<1632x256xf32, #tpu.memory_space<vmem>>, vector<1x8xf32>
    %859 = vector.broadcast %858 : vector<1x8xf32> to vector<16x8xf32>
    %860 = arith.mulf %857, %859 : vector<16x8xf32>
    %c1376_290 = arith.constant 1376 : index
    %c0_291 = arith.constant 0 : index
    %861 = vector.load %arg1[%c1376_290, %c0_291] : memref<1632x256xf32, #tpu.memory_space<vmem>>, vector<1x8xf32>
    %862 = vector.broadcast %861 : vector<1x8xf32> to vector<16x8xf32>
    %863 = arith.addf %860, %862 : vector<16x8xf32>
    %864 = arith.mulf %863, %863 : vector<16x8xf32>
    %865 = arith.mulf %863, %864 : vector<16x8xf32>
    %cst_292 = arith.constant 4.471500e-02 : f32
    %866 = vector.broadcast %cst_292 : f32 to vector<16x8xf32>
    %867 = arith.mulf %866, %865 : vector<16x8xf32>
    %868 = arith.addf %863, %867 : vector<16x8xf32>
    %cst_293 = arith.constant 0.797884583 : f32
    %869 = vector.broadcast %cst_293 : f32 to vector<16x8xf32>
    %870 = arith.mulf %869, %868 : vector<16x8xf32>
    %871 = math.tanh %870 : vector<16x8xf32>
    %cst_294 = arith.constant 1.000000e+00 : f32
    %872 = vector.broadcast %cst_294 : f32 to vector<16x8xf32>
    %873 = arith.addf %872, %871 : vector<16x8xf32>
    %cst_295 = arith.constant 5.000000e-01 : f32
    %874 = vector.broadcast %cst_295 : f32 to vector<16x8xf32>
    %875 = arith.mulf %874, %873 : vector<16x8xf32>
    %876 = arith.mulf %863, %875 : vector<16x8xf32>
    %c1368_296 = arith.constant 1368 : index
    %c0_297 = arith.constant 0 : index
    %877 = vector.load %arg1[%c1368_296, %c0_297] : memref<1632x256xf32, #tpu.memory_space<vmem>>, vector<8x16xf32>
    %cst_298 = arith.constant dense<0.000000e+00> : vector<16x16xf32>
    %878 = tpu.matmul %876, %877, %cst_298 {dimension_numbers = #tpu.dot_dimension_numbers<[1], [0], [0], [1], [0, 0, 1, 1], [], []>} : vector<16x8xf32>, vector<8x16xf32>, vector<16x16xf32> -> vector<16x16xf32>
    %c1360_299 = arith.constant 1360 : index
    %c0_300 = arith.constant 0 : index
    %879 = vector.load %arg1[%c1360_299, %c0_300] : memref<1632x256xf32, #tpu.memory_space<vmem>>, vector<1x16xf32>
    %880 = vector.broadcast %879 : vector<1x16xf32> to vector<16x16xf32>
    %881 = arith.addf %878, %880 : vector<16x16xf32>
    %882 = arith.mulf %881, %881 : vector<16x16xf32>
    %883 = arith.mulf %881, %882 : vector<16x16xf32>
    %cst_301 = arith.constant 4.471500e-02 : f32
    %884 = vector.broadcast %cst_301 : f32 to vector<16x16xf32>
    %885 = arith.mulf %884, %883 : vector<16x16xf32>
    %886 = arith.addf %881, %885 : vector<16x16xf32>
    %cst_302 = arith.constant 0.797884583 : f32
    %887 = vector.broadcast %cst_302 : f32 to vector<16x16xf32>
    %888 = arith.mulf %887, %886 : vector<16x16xf32>
    %889 = math.tanh %888 : vector<16x16xf32>
    %cst_303 = arith.constant 1.000000e+00 : f32
    %890 = vector.broadcast %cst_303 : f32 to vector<16x16xf32>
    %891 = arith.addf %890, %889 : vector<16x16xf32>
    %cst_304 = arith.constant 5.000000e-01 : f32
    %892 = vector.broadcast %cst_304 : f32 to vector<16x16xf32>
    %893 = arith.mulf %892, %891 : vector<16x16xf32>
    %894 = arith.mulf %881, %893 : vector<16x16xf32>
    %895 = vector.extract_strided_slice %894 {offsets = [0, 0], sizes = [16, 4], strides = [1, 1]} : vector<16x16xf32> to vector<16x4xf32>
    "tpu.trace_start"() <{level = 10 : i32, message = "kc,tc->kt"}> : () -> ()
    %cst_305 = arith.constant dense<0.000000e+00> : vector<4x16xf32>
    %896 = tpu.matmul %649, %895, %cst_305 {dimension_numbers = #tpu.dot_dimension_numbers<[1], [1], [0], [0], [0, 0, 1, 0], [], []>} : vector<4x4xf32>, vector<16x4xf32>, vector<4x16xf32> -> vector<4x16xf32>
    "tpu.trace_stop"() : () -> ()
    %897 = vector.extract_strided_slice %894 {offsets = [0, 4], sizes = [16, 4], strides = [1, 1]} : vector<16x16xf32> to vector<16x4xf32>
    "tpu.trace_start"() <{level = 10 : i32, message = "kc,tc->kt"}> : () -> ()
    %cst_306 = arith.constant dense<0.000000e+00> : vector<4x16xf32>
    %898 = tpu.matmul %649, %897, %cst_306 {dimension_numbers = #tpu.dot_dimension_numbers<[1], [1], [0], [0], [0, 0, 1, 0], [], []>} : vector<4x4xf32>, vector<16x4xf32>, vector<4x16xf32> -> vector<4x16xf32>
    "tpu.trace_stop"() : () -> ()
    %899 = vector.extract_strided_slice %894 {offsets = [0, 8], sizes = [16, 4], strides = [1, 1]} : vector<16x16xf32> to vector<16x4xf32>
    "tpu.trace_start"() <{level = 10 : i32, message = "kc,tc->kt"}> : () -> ()
    %cst_307 = arith.constant dense<0.000000e+00> : vector<4x16xf32>
    %900 = tpu.matmul %649, %899, %cst_307 {dimension_numbers = #tpu.dot_dimension_numbers<[1], [1], [0], [0], [0, 0, 1, 0], [], []>} : vector<4x4xf32>, vector<16x4xf32>, vector<4x16xf32> -> vector<4x16xf32>
    "tpu.trace_stop"() : () -> ()
    %901 = vector.extract_strided_slice %894 {offsets = [0, 12], sizes = [16, 4], strides = [1, 1]} : vector<16x16xf32> to vector<16x4xf32>
    "tpu.trace_start"() <{level = 10 : i32, message = "kc,tc->kt"}> : () -> ()
    %cst_308 = arith.constant dense<0.000000e+00> : vector<4x16xf32>
    %902 = tpu.matmul %649, %901, %cst_308 {dimension_numbers = #tpu.dot_dimension_numbers<[1], [1], [0], [0], [0, 0, 1, 0], [], []>} : vector<4x4xf32>, vector<16x4xf32>, vector<4x16xf32> -> vector<4x16xf32>
    "tpu.trace_stop"() : () -> ()
    %903 = tpu.concatenate %710, %712, %714, %716, %772, %774, %776, %778, %834, %836, %838, %840, %896, %898, %900, %902 in 1 : vector<4x16xf32>, vector<4x16xf32>, vector<4x16xf32>, vector<4x16xf32>, vector<4x16xf32>, vector<4x16xf32>, vector<4x16xf32>, vector<4x16xf32>, vector<4x16xf32>, vector<4x16xf32>, vector<4x16xf32>, vector<4x16xf32>, vector<4x16xf32>, vector<4x16xf32>, vector<4x16xf32>, vector<4x16xf32> -> vector<4x256xf32>
    %cst_309 = arith.constant 0.000000e+00 : f32
    %904 = vector.broadcast %cst_309 : f32 to vector<1x252xf32>
    %905 = tpu.concatenate %639, %904 in 1 : vector<1x4xf32>, vector<1x252xf32> -> vector<1x256xf32>
    %cst_310 = arith.constant 0.000000e+00 : f32
    %906 = vector.broadcast %cst_310 : f32 to vector<3x256xf32>
    %907 = tpu.concatenate %903, %905, %906 in 0 : vector<4x256xf32>, vector<1x256xf32>, vector<3x256xf32> -> vector<8x256xf32>
    %c0_311 = arith.constant 0 : index
    %c0_312 = arith.constant 0 : index
    %c0_313 = arith.constant 0 : index
    %908 = vector.load %arg4[%c0_311, %c0_312, %c0_313] : memref<1x8x256xf32, #tpu.memory_space<vmem>>, vector<1x8x256xf32>
    %909 = vector.shape_cast %908 : vector<1x8x256xf32> to vector<8x256xf32>
    %910 = vector.shape_cast %907 : vector<8x256xf32> to vector<1x8x256xf32>
    tpu.vector_store %arg4[%c0_311, %c0_312, %c0_313], %910 {strides = array<i32>} : memref<1x8x256xf32, #tpu.memory_space<vmem>>, vector<1x8x256xf32>,
    return
  }
  func.func @transform_0(%arg0: i32) -> (i32, i32) {
    %c0_i32 = arith.constant 0 : i32
    %c0_i32_0 = arith.constant 0 : i32
    %c0_i32_1 = arith.constant 0 : i32
    return %c0_i32, %c0_i32_0 : i32, i32
  }
  func.func @transform_1(%arg0: i32) -> (i32, i32) {
    %c0_i32 = arith.constant 0 : i32
    %c0_i32_0 = arith.constant 0 : i32
    %c0_i32_1 = arith.constant 0 : i32
    return %c0_i32, %c0_i32_0 : i32, i32
  }
  func.func @transform_2(%arg0: i32) -> (i32, i32, i32) {
    %c0_i32 = arith.constant 0 : i32
    %c0_i32_0 = arith.constant 0 : i32
    %c0_i32_1 = arith.constant 0 : i32
    return %arg0, %c0_i32, %c0_i32_0 : i32, i32, i32
  }
  func.func @transform_3(%arg0: i32) -> (i32, i32, i32) {
    %c0_i32 = arith.constant 0 : i32
    %c0_i32_0 = arith.constant 0 : i32
    %c0_i32_1 = arith.constant 0 : i32
    return %arg0, %c0_i32, %c0_i32_0 : i32, i32, i32
  }
}

</mosaic_0001>

<llo_original>
// kernel: forward.1
$region0: #{forward.1}
  #allocation0 [shape = 'u32[]', space=smem, size = 0x4, offset = 0x4, fixed_abs, tag = 'smem constant byte address 0x4 - core index']
  #allocation1 [shape = 'u32[144,128]{1,0:T(1,128)}', space=vmem, size = 0x12000, scoped, tag = 'internal scratch']
  #allocation2 [shape = 'f32[16,32]{1,0:T(8,128)}', space=vmem, size = 0x2000, scoped, tag = 'scratch operand']
  %s0 = inlined_call_operand.hbm [shape: f32[1632,256], index: 0, kind: input, shape index: {}]
  %s1 = inlined_call_operand.vmem [shape: f32[16,48], index: 1, kind: input, shape index: {}]
  %s2 = inlined_call_operand.vmem [shape: f32[1,7,32], index: 2, kind: input, shape index: {}]
  %s3 = inlined_call_operand.vmem [shape: f32[1,8,256], index: 3, kind: output, shape index: {}]
  %s4 = sld [smem:[#allocation0]]
  $region30: #{forward.1} parent=0
    _
  %s6 = ssub.s32 1, %s4
  %s7 = scalar_select 0, %s6, %s4
  $region1: #{forward.1} parent=0
    #allocation3 [shape = 'u8[1671168]{0}', space=vmem, size = 0x198000, scoped, tag = 'input window, operand 0, single buffered']
    #allocation4 [shape = 's32[1]{0}', space=sflag, size = 0x4, scoped, tag = 'scoped memory for forward.1']
    %8 = vsyncpa [#allocation4], 0
    // Predicated region
    $region2: #{forward.1} parent=1 // pred_check
      _
    $region3: #{forward.1} parent=1 // pred_check_branch
      %10 = sbr.rel (0) target = $region5
    $region4: #{forward.1} parent=1 // pred_region
      %s12 = ssub.s32 52224, 52224
      %13 = vsyncadd [#allocation4], %s12
      %s14 = sshll.u32 [#allocation3], 4
      %s15 = int_to_ptr.vmem [resolvable:$true] %s14
      %20 = dma.hbm_to_vmem [thread:$0]  %s0, 52224, %s15, [#allocation4], 256, 256, 16
    $region5: #{forward.1} parent=1 // pred_fallthru
      _
    // Predicated region
    $region6: #{forward.1} parent=1 // pred_check
      _
    $region7: #{forward.1} parent=1 // pred_check_branch
      %22 = sbr.rel (0) target = $region9
    $region8: #{forward.1} parent=1 // pred_region
      _
    $region9: #{forward.1} parent=1 // pred_fallthru
      _
    // Predicated region
    $region10: #{forward.1} parent=1 // pred_check
      _
    $region11: #{forward.1} parent=1 // pred_check_branch
      %24 = sbr.rel (0) target = $region13
    $region12: #{forward.1} parent=1 // pred_region
      _
    $region13: #{forward.1} parent=1 // pred_fallthru
      _
    // Predicated region
    $region14: #{forward.1} parent=1 // pred_check
      _
    $region15: #{forward.1} parent=1 // pred_check_branch
      %26 = sbr.rel (0) target = $region17
    $region16: #{forward.1} parent=1 // pred_region
      %27 = dma.done [#allocation4], 52224
    $region17: #{forward.1} parent=1 // pred_fallthru
      _
    %p28 = scmp.eq.s32.totalorder 0, 0
    // Predicated region
    $region18: #{forward.1} parent=1 // pred_check
      %p29 = pneg %p28
    $region19: #{forward.1} parent=1 // pred_check_branch
      %31 = sbr.rel (%p29) target = $region21
    $region20: #{forward.1} parent=1 // pred_region
      %v32 = vld [vmem:[%s1] sm:$0xff]
      %v33 = vld [vmem:[%s1 + $0x8] sm:$0xff]
      %v34 = vld [vmem:[#allocation3 + $0xc60] sm:$0xff]
      %v35 = vld [vmem:[#allocation3 + $0xc70] sm:$0xff]
      %v36 = vld [vmem:[#allocation3 + $0xc80] sm:$0xff]
      %v37 = vld [vmem:[#allocation3 + $0xc90] sm:$0xff]
      %v38 = vld [vmem:[#allocation3 + $0xca0] sm:$0xff]
      %v39 = vld [vmem:[#allocation3 + $0xcb0] sm:$0xff]
      %v40 = vld [vmem:[#allocation3 + $0xc50] ss:$0 sm:$0xff]
      %vm41 = vcmask 392192
      %v43 = vsel %vm41, %v32, 0
      %v46 = vsel %vm41, %v33, 0
      %48 = vmatprep.subr.mxu0 0.0
      %49 = vmatpush1.msra.mxu0 0.0
      %50 = vmatprep.subr.mxu0 0.0
      %51 = vmatpush1.msra.mxu0 0.0
      %52 = vmatprep.subr.mxu0 0.0
      %53 = vmatpush1.msra.mxu0 0.0
      %54 = vmatprep.subr.mxu0 0.0
      %55 = vmatpush1.msra.mxu0 0.0
      %56 = vmatprep.subr.mxu0 0.0
      %57 = vmatpush1.msra.mxu0 0.0
      %58 = vmatprep.subr.mxu0 0.0
      %59 = vmatpush1.msra.mxu0 0.0
      %60 = vmatprep.subr.mxu0 0.0
      %61 = vmatpush1.msra.mxu0 0.0
      %62 = vmatprep.subr.mxu0 0.0
      %63 = vmatpush1.msra.mxu0 0.0
      %64 = vmatprep.subr.mxu0 0.0
      %65 = vmatpush1.msra.mxu0 0.0
      %66 = vmatprep.subr.mxu0 0.0
      %67 = vmatpush1.msra.mxu0 0.0
      %68 = vmatprep.subr.mxu0 0.0
      %69 = vmatpush1.msra.mxu0 %v39
      %70 = vmatprep.subr.mxu0 0.0
      %71 = vmatpush1.msra.mxu0 %v38
      %72 = vmatprep.subr.mxu0 0.0
      %73 = vmatpush1.msra.mxu0 %v37
      %74 = vmatprep.subr.mxu0 0.0
      %75 = vmatpush1.msra.mxu0 %v36
      %76 = vmatprep.subr.mxu0 0.0
      %77 = vmatpush1.msra.mxu0 %v35
      %78 = vmatprep.subr.mxu0 0.0
      %79 = vmatpush1.msra.mxu0 %v34
      %80 = vmatprep.subr.mxu0 0.0
      %81 = vmatpush2.msra.mxu0 0.0
      %82 = vmatprep.subr.mxu0 0.0
      %83 = vmatpush2.msra.mxu0 0.0
      %84 = vmatprep.subr.mxu0 0.0
      %85 = vmatpush2.msra.mxu0 0.0
      %86 = vmatprep.subr.mxu0 0.0
      %87 = vmatpush2.msra.mxu0 0.0
      %88 = vmatprep.subr.mxu0 0.0
      %89 = vmatpush2.msra.mxu0 0.0
      %90 = vmatprep.subr.mxu0 0.0
      %91 = vmatpush2.msra.mxu0 0.0
      %92 = vmatprep.subr.mxu0 0.0
      %93 = vmatpush2.msra.mxu0 0.0
      %94 = vmatprep.subr.mxu0 0.0
      %95 = vmatpush2.msra.mxu0 0.0
      %96 = vmatprep.subr.mxu0 0.0
      %97 = vmatpush2.msra.mxu0 0.0
      %98 = vmatprep.subr.mxu0 0.0
      %99 = vmatpush2.msra.mxu0 0.0
      %100 = vmatprep.subr.mxu0 0.0
      %101 = vmatpush2.msra.mxu0 0.0
      %102 = vmatprep.subr.mxu0 0.0
      %103 = vmatpush2.msra.mxu0 0.0
      %104 = vmatprep.subr.mxu0 0.0
      %105 = vmatpush2.msra.mxu0 0.0
      %106 = vmatprep.subr.mxu0 0.0
      %107 = vmatpush2.msra.mxu0 0.0
      %108 = vmatprep.subr.mxu0 0.0
      %109 = vmatpush2.msra.mxu0 0.0
      %110 = vmatprep.subr.mxu0 0.0
      %111 = vmatpush2.msra.mxu0 0.0
      %112 = vmatprep.mubr.f32.mxu0 0.0
      %113 = vmatmul.mubr.f32.gmra.mxu0 %v43
      %v114 = vpop.f32.mrf.mxu0
      %v115 = vadd.f32 %v40, %v114
      %v116 = vpop.f32.mrf.mxu0
      %117 = vmatprep.mubr.f32.mxu0 0.0
      %118 = vmatmul.mubr.f32.gmra.mxu0 %v46
      %v119 = vpop.f32.mrf.mxu0
      %v120 = vadd.f32 %v40, %v119
      %v121 = vpop.f32.mrf.mxu0
      %122 = vdwg.mxu0
      %vm123 = vcmask 261120
      %v124 = vsel %vm123, %v115, 0.0
      %125 = vadd.xlane.f32.xlu0 %v124
      %v126 = vpop.xlane.xlu0 %125
      %v127 = vsel %vm123, %v120, 0.0
      %128 = vadd.xlane.f32.xlu0 %v127
      %v129 = vpop.xlane.xlu0 %128
      %v130 = vrcp.pop 32.0
      %v131 = vmul.f32 %v126, %v130
      %v132 = vmul.f32 %v129, %v130
      %v133 = vsub.f32 %v115, %v131
      %v134 = vsub.f32 %v120, %v132
      %v135 = vmul.f32 %v133, %v133
      %v136 = vmul.f32 %v134, %v134
      %v137 = vsel %vm123, %v135, 0.0
      %138 = vadd.xlane.f32.xlu0 %v137
      %v139 = vpop.xlane.xlu0 %138
      %v140 = vsel %vm123, %v136, 0.0
      %141 = vadd.xlane.f32.xlu0 %v140
      %v142 = vpop.xlane.xlu0 %141
      %v143 = vmul.f32 %v139, %v130
      %v144 = vmul.f32 %v142, %v130
      %v145 = vadd.f32 %v143, 1e-05
      %v146 = vadd.f32 %v144, 1e-05
      %v147 = vrsqrt.pop %v145
      %v148 = vrsqrt.pop %v146
      %v149 = vmul.f32 %v133, %v147
      %v150 = vmul.f32 %v134, %v148
      %v151 = vld [vmem:[#allocation3 + $0xaf0] ss:$0 sm:$0xff]
      %v152 = vmul.f32 %v149, %v151
      %v153 = vmul.f32 %v150, %v151
      %v154 = vld [vmem:[#allocation3 + $0xae0] ss:$0 sm:$0xff]
      %v155 = vadd.f32 %v152, %v154
      %v156 = vadd.f32 %v153, %v154
      %v157 = vld [vmem:[#allocation3 + $0xb30] sm:$0xff]
      %v158 = vld [vmem:[#allocation3 + $0xb40] sm:$0xff]
      %v159 = vld [vmem:[#allocation3 + $0xb50] sm:$0xff]
      %v160 = vld [vmem:[#allocation3 + $0xb60] sm:$0xff]
      %v161 = vld [vmem:[#allocation3 + $0xb20] ss:$0 sm:$0xff]
      %v163 = vsel %vm123, %v155, 0
      %v166 = vsel %vm123, %v156, 0
      %168 = vmatprep.subr.mxu0 0.0
      %169 = vmatpush1.msra.mxu0 0.0
      %170 = vmatprep.subr.mxu0 0.0
      %171 = vmatpush1.msra.mxu0 0.0
      %172 = vmatprep.subr.mxu0 0.0
      %173 = vmatpush1.msra.mxu0 0.0
      %174 = vmatprep.subr.mxu0 0.0
      %175 = vmatpush1.msra.mxu0 0.0
      %176 = vmatprep.subr.mxu0 0.0
      %177 = vmatpush1.msra.mxu0 0.0
      %178 = vmatprep.subr.mxu0 0.0
      %179 = vmatpush1.msra.mxu0 0.0
      %180 = vmatprep.subr.mxu0 0.0
      %181 = vmatpush1.msra.mxu0 0.0
      %182 = vmatprep.subr.mxu0 0.0
      %183 = vmatpush1.msra.mxu0 0.0
      %184 = vmatprep.subr.mxu0 0.0
      %185 = vmatpush1.msra.mxu0 0.0
      %186 = vmatprep.subr.mxu0 0.0
      %187 = vmatpush1.msra.mxu0 0.0
      %188 = vmatprep.subr.mxu0 0.0
      %189 = vmatpush1.msra.mxu0 0.0
      %190 = vmatprep.subr.mxu0 0.0
      %191 = vmatpush1.msra.mxu0 0.0
      %192 = vmatprep.subr.mxu0 0.0
      %193 = vmatpush1.msra.mxu0 %v160
      %194 = vmatprep.subr.mxu0 0.0
      %195 = vmatpush1.msra.mxu0 %v159
      %196 = vmatprep.subr.mxu0 0.0
      %197 = vmatpush1.msra.mxu0 %v158
      %198 = vmatprep.subr.mxu0 0.0
      %199 = vmatpush1.msra.mxu0 %v157
      %200 = vmatprep.subr.mxu0 0.0
      %201 = vmatpush2.msra.mxu0 0.0
      %202 = vmatprep.subr.mxu0 0.0
      %203 = vmatpush2.msra.mxu0 0.0
      %204 = vmatprep.subr.mxu0 0.0
      %205 = vmatpush2.msra.mxu0 0.0
      %206 = vmatprep.subr.mxu0 0.0
      %207 = vmatpush2.msra.mxu0 0.0
      %208 = vmatprep.subr.mxu0 0.0
      %209 = vmatpush2.msra.mxu0 0.0
      %210 = vmatprep.subr.mxu0 0.0
      %211 = vmatpush2.msra.mxu0 0.0
      %212 = vmatprep.subr.mxu0 0.0
      %213 = vmatpush2.msra.mxu0 0.0
      %214 = vmatprep.subr.mxu0 0.0
      %215 = vmatpush2.msra.mxu0 0.0
      %216 = vmatprep.subr.mxu0 0.0
      %217 = vmatpush2.msra.mxu0 0.0
      %218 = vmatprep.subr.mxu0 0.0
      %219 = vmatpush2.msra.mxu0 0.0
      %220 = vmatprep.subr.mxu0 0.0
      %221 = vmatpush2.msra.mxu0 0.0
      %222 = vmatprep.subr.mxu0 0.0
      %223 = vmatpush2.msra.mxu0 0.0
      %224 = vmatprep.subr.mxu0 0.0
      %225 = vmatpush2.msra.mxu0 0.0
      %226 = vmatprep.subr.mxu0 0.0
      %227 = vmatpush2.msra.mxu0 0.0
      %228 = vmatprep.subr.mxu0 0.0
      %229 = vmatpush2.msra.mxu0 0.0
      %230 = vmatprep.subr.mxu0 0.0
      %231 = vmatpush2.msra.mxu0 0.0
      %232 = vmatprep.mubr.f32.mxu0 0.0
      %233 = vmatmul.mubr.f32.gmra.mxu0 %v163
      %v234 = vpop.f32.mrf.mxu0
      %v235 = vadd.f32 %v161, %v234
      %v236 = vpop.f32.mrf.mxu0
      %237 = vmatprep.mubr.f32.mxu0 0.0
      %238 = vmatmul.mubr.f32.gmra.mxu0 %v166
      %v239 = vpop.f32.mrf.mxu0
      %v240 = vadd.f32 %v161, %v239
      %v241 = vpop.f32.mrf.mxu0
      %242 = vdwg.mxu0
      %v243 = vmul.f32 %v235, %v235
      %v244 = vmul.f32 %v240, %v240
      %v245 = vmul.f32 %v235, %v243
      %v246 = vmul.f32 %v240, %v244
      %v247 = vmul.f32 %v245, 0.044715
      %v248 = vmul.f32 %v246, 0.044715
      %v249 = vadd.f32 %v235, %v247
      %v250 = vadd.f32 %v240, %v248
      %v251 = vmul.f32 %v249, 0.7978846
      %v252 = vmul.f32 %v250, 0.7978846
      %v253 = vtanh.pop %v251
      %v254 = vtanh.pop %v252
      %v255 = vadd.f32 %v253, 1.0
      %v256 = vadd.f32 %v254, 1.0
      %v257 = vmul.f32 %v255, 0.5
      %v258 = vmul.f32 %v256, 0.5
      %v259 = vmul.f32 %v235, %v257
      %v260 = vmul.f32 %v240, %v258
      %v261 = vld [vmem:[#allocation3 + $0xb80] sm:$0xff]
      %v262 = vld [vmem:[#allocation3 + $0xb90] sm:$0xff]
      %v263 = vld [vmem:[#allocation3 + $0xba0] sm:$0xff]
      %v264 = vld [vmem:[#allocation3 + $0xbb0] sm:$0xff]
      %v265 = vld [vmem:[#allocation3 + $0xbc0] sm:$0xff]
      %v266 = vld [vmem:[#allocation3 + $0xbd0] sm:$0xff]
      %v267 = vld [vmem:[#allocation3 + $0xbe0] sm:$0xff]
      %v268 = vld [vmem:[#allocation3 + $0xbf0] sm:$0xff]
      %v269 = vld [vmem:[#allocation3 + $0xb70] ss:$0 sm:$0xff]
      %vm270 = vcmask 523264
      %v272 = vsel %vm270, %v259, 0
      %v275 = vsel %vm270, %v260, 0
      %277 = vmatprep.subr.mxu0 0.0
      %278 = vmatpush1.msra.mxu0 0.0
      %279 = vmatprep.subr.mxu0 0.0
      %280 = vmatpush1.msra.mxu0 0.0
      %281 = vmatprep.subr.mxu0 0.0
      %282 = vmatpush1.msra.mxu0 0.0
      %283 = vmatprep.subr.mxu0 0.0
      %284 = vmatpush1.msra.mxu0 0.0
      %285 = vmatprep.subr.mxu0 0.0
      %286 = vmatpush1.msra.mxu0 0.0
      %287 = vmatprep.subr.mxu0 0.0
      %288 = vmatpush1.msra.mxu0 0.0
      %289 = vmatprep.subr.mxu0 0.0
      %290 = vmatpush1.msra.mxu0 0.0
      %291 = vmatprep.subr.mxu0 0.0
      %292 = vmatpush1.msra.mxu0 0.0
      %293 = vmatprep.subr.mxu0 0.0
      %294 = vmatpush1.msra.mxu0 %v268
      %295 = vmatprep.subr.mxu0 0.0
      %296 = vmatpush1.msra.mxu0 %v267
      %297 = vmatprep.subr.mxu0 0.0
      %298 = vmatpush1.msra.mxu0 %v266
      %299 = vmatprep.subr.mxu0 0.0
      %300 = vmatpush1.msra.mxu0 %v265
      %301 = vmatprep.subr.mxu0 0.0
      %302 = vmatpush1.msra.mxu0 %v264
      %303 = vmatprep.subr.mxu0 0.0
      %304 = vmatpush1.msra.mxu0 %v263
      %305 = vmatprep.subr.mxu0 0.0
      %306 = vmatpush1.msra.mxu0 %v262
      %307 = vmatprep.subr.mxu0 0.0
      %308 = vmatpush1.msra.mxu0 %v261
      %309 = vmatprep.subr.mxu0 0.0
      %310 = vmatpush2.msra.mxu0 0.0
      %311 = vmatprep.subr.mxu0 0.0
      %312 = vmatpush2.msra.mxu0 0.0
      %313 = vmatprep.subr.mxu0 0.0
      %314 = vmatpush2.msra.mxu0 0.0
      %315 = vmatprep.subr.mxu0 0.0
      %316 = vmatpush2.msra.mxu0 0.0
      %317 = vmatprep.subr.mxu0 0.0
      %318 = vmatpush2.msra.mxu0 0.0
      %319 = vmatprep.subr.mxu0 0.0
      %320 = vmatpush2.msra.mxu0 0.0
      %321 = vmatprep.subr.mxu0 0.0
      %322 = vmatpush2.msra.mxu0 0.0
      %323 = vmatprep.subr.mxu0 0.0
      %324 = vmatpush2.msra.mxu0 0.0
      %325 = vmatprep.subr.mxu0 0.0
      %326 = vmatpush2.msra.mxu0 0.0
      %327 = vmatprep.subr.mxu0 0.0
      %328 = vmatpush2.msra.mxu0 0.0
      %329 = vmatprep.subr.mxu0 0.0
      %330 = vmatpush2.msra.mxu0 0.0
      %331 = vmatprep.subr.mxu0 0.0
      %332 = vmatpush2.msra.mxu0 0.0
      %333 = vmatprep.subr.mxu0 0.0
      %334 = vmatpush2.msra.mxu0 0.0
      %335 = vmatprep.subr.mxu0 0.0
      %336 = vmatpush2.msra.mxu0 0.0
      %337 = vmatprep.subr.mxu0 0.0
      %338 = vmatpush2.msra.mxu0 0.0
      %339 = vmatprep.subr.mxu0 0.0
      %340 = vmatpush2.msra.mxu0 0.0
      %341 = vmatprep.mubr.f32.mxu0 0.0
      %342 = vmatmul.mubr.f32.gmra.mxu0 %v272
      %v343 = vpop.f32.mrf.mxu0
      %v344 = vadd.f32 %v269, %v343
      %v345 = vpop.f32.mrf.mxu0
      %346 = vmatprep.mubr.f32.mxu0 0.0
      %347 = vmatmul.mubr.f32.gmra.mxu0 %v275
      %v348 = vpop.f32.mrf.mxu0
      %v349 = vadd.f32 %v269, %v348
      %v350 = vpop.f32.mrf.mxu0
      %351 = vdwg.mxu0
      %v352 = vadd.f32 %v115, %v344
      %v353 = vadd.f32 %v120, %v349
      %v354 = vld [vmem:[#allocation3 + $0xc10] sm:$0xff]
      %v355 = vld [vmem:[#allocation3 + $0xc20] sm:$0xff]
      %v356 = vld [vmem:[#allocation3 + $0xc30] sm:$0xff]
      %v357 = vld [vmem:[#allocation3 + $0xc40] sm:$0xff]
      %v358 = vld [vmem:[#allocation3 + $0xc00] ss:$0 sm:$0xff]
      %v360 = vsel %vm123, %v352, 0
      %v363 = vsel %vm123, %v353, 0
      %365 = vmatprep.subr.mxu0 0.0
      %366 = vmatpush1.msra.mxu0 0.0
      %367 = vmatprep.subr.mxu0 0.0
      %368 = vmatpush1.msra.mxu0 0.0
      %369 = vmatprep.subr.mxu0 0.0
      %370 = vmatpush1.msra.mxu0 0.0
      %371 = vmatprep.subr.mxu0 0.0
      %372 = vmatpush1.msra.mxu0 0.0
      %373 = vmatprep.subr.mxu0 0.0
      %374 = vmatpush1.msra.mxu0 0.0
      %375 = vmatprep.subr.mxu0 0.0
      %376 = vmatpush1.msra.mxu0 0.0
      %377 = vmatprep.subr.mxu0 0.0
      %378 = vmatpush1.msra.mxu0 0.0
      %379 = vmatprep.subr.mxu0 0.0
      %380 = vmatpush1.msra.mxu0 0.0
      %381 = vmatprep.subr.mxu0 0.0
      %382 = vmatpush1.msra.mxu0 0.0
      %383 = vmatprep.subr.mxu0 0.0
      %384 = vmatpush1.msra.mxu0 0.0
      %385 = vmatprep.subr.mxu0 0.0
      %386 = vmatpush1.msra.mxu0 0.0
      %387 = vmatprep.subr.mxu0 0.0
      %388 = vmatpush1.msra.mxu0 0.0
      %389 = vmatprep.subr.mxu0 0.0
      %390 = vmatpush1.msra.mxu0 %v357
      %391 = vmatprep.subr.mxu0 0.0
      %392 = vmatpush1.msra.mxu0 %v356
      %393 = vmatprep.subr.mxu0 0.0
      %394 = vmatpush1.msra.mxu0 %v355
      %395 = vmatprep.subr.mxu0 0.0
      %396 = vmatpush1.msra.mxu0 %v354
      %397 = vmatprep.subr.mxu0 0.0
      %398 = vmatpush2.msra.mxu0 0.0
      %399 = vmatprep.subr.mxu0 0.0
      %400 = vmatpush2.msra.mxu0 0.0
      %401 = vmatprep.subr.mxu0 0.0
      %402 = vmatpush2.msra.mxu0 0.0
      %403 = vmatprep.subr.mxu0 0.0
      %404 = vmatpush2.msra.mxu0 0.0
      %405 = vmatprep.subr.mxu0 0.0
      %406 = vmatpush2.msra.mxu0 0.0
      %407 = vmatprep.subr.mxu0 0.0
      %408 = vmatpush2.msra.mxu0 0.0
      %409 = vmatprep.subr.mxu0 0.0
      %410 = vmatpush2.msra.mxu0 0.0
      %411 = vmatprep.subr.mxu0 0.0
      %412 = vmatpush2.msra.mxu0 0.0
      %413 = vmatprep.subr.mxu0 0.0
      %414 = vmatpush2.msra.mxu0 0.0
      %415 = vmatprep.subr.mxu0 0.0
      %416 = vmatpush2.msra.mxu0 0.0
      %417 = vmatprep.subr.mxu0 0.0
      %418 = vmatpush2.msra.mxu0 0.0
      %419 = vmatprep.subr.mxu0 0.0
      %420 = vmatpush2.msra.mxu0 0.0
      %421 = vmatprep.subr.mxu0 0.0
      %422 = vmatpush2.msra.mxu0 0.0
      %423 = vmatprep.subr.mxu0 0.0
      %424 = vmatpush2.msra.mxu0 0.0
      %425 = vmatprep.subr.mxu0 0.0
      %426 = vmatpush2.msra.mxu0 0.0
      %427 = vmatprep.subr.mxu0 0.0
      %428 = vmatpush2.msra.mxu0 0.0
      %429 = vmatprep.mubr.f32.mxu0 0.0
      %430 = vmatmul.mubr.f32.gmra.mxu0 %v360
      %v431 = vpop.f32.mrf.mxu0
      %v432 = vadd.f32 %v358, %v431
      %v433 = vpop.f32.mrf.mxu0
      %434 = vmatprep.mubr.f32.mxu0 0.0
      %435 = vmatmul.mubr.f32.gmra.mxu0 %v363
      %v436 = vpop.f32.mrf.mxu0
      %v437 = vadd.f32 %v358, %v436
      %v438 = vpop.f32.mrf.mxu0
      %439 = vdwg.mxu0
      %v440 = vsel %vm123, %v432, 0.0
      %441 = vadd.xlane.f32.xlu0 %v440
      %v442 = vpop.xlane.xlu0 %441
      %v443 = vsel %vm123, %v437, 0.0
      %444 = vadd.xlane.f32.xlu0 %v443
      %v445 = vpop.xlane.xlu0 %444
      %v446 = vmul.f32 %v442, %v130
      %v447 = vmul.f32 %v445, %v130
      %v448 = vsub.f32 %v432, %v446
      %v449 = vsub.f32 %v437, %v447
      %v450 = vmul.f32 %v448, %v448
      %v451 = vmul.f32 %v449, %v449
      %v452 = vsel %vm123, %v450, 0.0
      %453 = vadd.xlane.f32.xlu0 %v452
      %v454 = vpop.xlane.xlu0 %453
      %v455 = vsel %vm123, %v451, 0.0
      %456 = vadd.xlane.f32.xlu0 %v455
      %v457 = vpop.xlane.xlu0 %456
      %v458 = vmul.f32 %v454, %v130
      %v459 = vmul.f32 %v457, %v130
      %v460 = vadd.f32 %v458, 1e-05
      %v461 = vadd.f32 %v459, 1e-05
      %v462 = vrsqrt.pop %v460
      %v463 = vrsqrt.pop %v461
      %v464 = vmul.f32 %v448, %v462
      %v465 = vmul.f32 %v449, %v463
      %v466 = vld [vmem:[#allocation3 + $0xb10] ss:$0 sm:$0xff]
      %v467 = vmul.f32 %v464, %v466
      %v468 = vmul.f32 %v465, %v466
      %v469 = vld [vmem:[#allocation3 + $0xb00] ss:$0 sm:$0xff]
      %v470 = vadd.f32 %v467, %v469
      %v471 = vadd.f32 %v468, %v469
      %v472 = vld [vmem:[#allocation3] ss:$0 sm:$0xff]
      %v473 = vadd.f32 %v470, %v472
      %v474 = vadd.f32 %v471, %v472
      %475 = vst.msk [vmem:[#allocation2] sm:$0xff] %vm123, %v473
      %476 = vst.msk [vmem:[#allocation2 + $0x8] sm:$0xff] %vm123, %v474
    $region21: #{forward.1} parent=1 // pred_fallthru
      _
    %v477 = vld [vmem:[%s2] sm:$0x7f]
    %v478 = vld [vmem:[#allocation3 + $0xa30] sm:$0xff]
    %v479 = vld [vmem:[#allocation3 + $0xa40] sm:$0xff]
    %v480 = vld [vmem:[#allocation2] sm:$0xff]
    %v481 = vld [vmem:[#allocation2 + $0x8] sm:$0xff]
    %v482 = vld [vmem:[#allocation3 + $0x6d0] sm:$0xff]
    %v483 = vld [vmem:[#allocation3 + $0x6e0] sm:$0xff]
    %v484 = vld [vmem:[#allocation3 + $0x6f0] sm:$0xff]
    %v485 = vld [vmem:[#allocation3 + $0x700] sm:$0xff]
    %v486 = vld [vmem:[#allocation3 + $0x6c0] ss:$0 sm:$0xff]
    %vm487 = vcmask 261120
    %v489 = vsel %vm487, %v477, 0
    %491 = vmatprep.subr.mxu0 0.0
    %492 = vmatpush1.msra.mxu0 0.0
    %493 = vmatprep.subr.mxu0 0.0
    %494 = vmatpush1.msra.mxu0 0.0
    %495 = vmatprep.subr.mxu0 0.0
    %496 = vmatpush1.msra.mxu0 0.0
    %497 = vmatprep.subr.mxu0 0.0
    %498 = vmatpush1.msra.mxu0 0.0
    %499 = vmatprep.subr.mxu0 0.0
    %500 = vmatpush1.msra.mxu0 0.0
    %501 = vmatprep.subr.mxu0 0.0
    %502 = vmatpush1.msra.mxu0 0.0
    %503 = vmatprep.subr.mxu0 0.0
    %504 = vmatpush1.msra.mxu0 0.0
    %505 = vmatprep.subr.mxu0 0.0
    %506 = vmatpush1.msra.mxu0 0.0
    %507 = vmatprep.subr.mxu0 0.0
    %508 = vmatpush1.msra.mxu0 0.0
    %509 = vmatprep.subr.mxu0 0.0
    %510 = vmatpush1.msra.mxu0 0.0
    %511 = vmatprep.subr.mxu0 0.0
    %512 = vmatpush1.msra.mxu0 0.0
    %513 = vmatprep.subr.mxu0 0.0
    %514 = vmatpush1.msra.mxu0 0.0
    %515 = vmatprep.subr.mxu0 0.0
    %516 = vmatpush1.msra.mxu0 %v485
    %517 = vmatprep.subr.mxu0 0.0
    %518 = vmatpush1.msra.mxu0 %v484
    %519 = vmatprep.subr.mxu0 0.0
    %520 = vmatpush1.msra.mxu0 %v483
    %521 = vmatprep.subr.mxu0 0.0
    %522 = vmatpush1.msra.mxu0 %v482
    %523 = vmatprep.subr.mxu0 0.0
    %524 = vmatpush2.msra.mxu0 0.0
    %525 = vmatprep.subr.mxu0 0.0
    %526 = vmatpush2.msra.mxu0 0.0
    %527 = vmatprep.subr.mxu0 0.0
    %528 = vmatpush2.msra.mxu0 0.0
    %529 = vmatprep.subr.mxu0 0.0
    %530 = vmatpush2.msra.mxu0 0.0
    %531 = vmatprep.subr.mxu0 0.0
    %532 = vmatpush2.msra.mxu0 0.0
    %533 = vmatprep.subr.mxu0 0.0
    %534 = vmatpush2.msra.mxu0 0.0
    %535 = vmatprep.subr.mxu0 0.0
    %536 = vmatpush2.msra.mxu0 0.0
    %537 = vmatprep.subr.mxu0 0.0
    %538 = vmatpush2.msra.mxu0 0.0
    %539 = vmatprep.subr.mxu0 0.0
    %540 = vmatpush2.msra.mxu0 0.0
    %541 = vmatprep.subr.mxu0 0.0
    %542 = vmatpush2.msra.mxu0 0.0
    %543 = vmatprep.subr.mxu0 0.0
    %544 = vmatpush2.msra.mxu0 0.0
    %545 = vmatprep.subr.mxu0 0.0
    %546 = vmatpush2.msra.mxu0 0.0
    %547 = vmatprep.subr.mxu0 0.0
    %548 = vmatpush2.msra.mxu0 0.0
    %549 = vmatprep.subr.mxu0 0.0
    %550 = vmatpush2.msra.mxu0 0.0
    %551 = vmatprep.subr.mxu0 0.0
    %552 = vmatpush2.msra.mxu0 0.0
    %553 = vmatprep.subr.mxu0 0.0
    %554 = vmatpush2.msra.mxu0 0.0
    %555 = vmatprep.mubr.f32.mxu0 0.0
    %556 = vmatmul.mubr.f32.gmra.mxu0 %v489
    %v557 = vpop.f32.mrf.mxu0
    %v558 = vadd.f32 %v486, %v557
    %v559 = vpop.f32.mrf.mxu0
    %560 = vdwg.mxu0
    %565 = vrot.lane.b32.xlu0 %v482, 96
    %v566 = vpop.permute.xlu0 %565
    %567 = vrot.lane.b32.xlu0 %v483, 96
    %v568 = vpop.permute.xlu0 %567
    %569 = vrot.lane.b32.xlu0 %v484, 96
    %v570 = vpop.permute.xlu0 %569
    %571 = vrot.lane.b32.xlu0 %v485, 96
    %v572 = vpop.permute.xlu0 %571
    %578 = vrot.lane.b32.xlu0 %v486, 96
    %v579 = vpop.permute.xlu0 %578
    %581 = vmatprep.subr.mxu0 0.0
    %582 = vmatpush1.msra.mxu0 0.0
    %583 = vmatprep.subr.mxu0 0.0
    %584 = vmatpush1.msra.mxu0 0.0
    %585 = vmatprep.subr.mxu0 0.0
    %586 = vmatpush1.msra.mxu0 0.0
    %587 = vmatprep.subr.mxu0 0.0
    %588 = vmatpush1.msra.mxu0 0.0
    %589 = vmatprep.subr.mxu0 0.0
    %590 = vmatpush1.msra.mxu0 0.0
    %591 = vmatprep.subr.mxu0 0.0
    %592 = vmatpush1.msra.mxu0 0.0
    %593 = vmatprep.subr.mxu0 0.0
    %594 = vmatpush1.msra.mxu0 0.0
    %595 = vmatprep.subr.mxu0 0.0
    %596 = vmatpush1.msra.mxu0 0.0
    %597 = vmatprep.subr.mxu0 0.0
    %598 = vmatpush1.msra.mxu0 0.0
    %599 = vmatprep.subr.mxu0 0.0
    %600 = vmatpush1.msra.mxu0 0.0
    %601 = vmatprep.subr.mxu0 0.0
    %602 = vmatpush1.msra.mxu0 0.0
    %603 = vmatprep.subr.mxu0 0.0
    %604 = vmatpush1.msra.mxu0 0.0
    %605 = vmatprep.subr.mxu0 0.0
    %606 = vmatpush1.msra.mxu0 %v572
    %607 = vmatprep.subr.mxu0 0.0
    %608 = vmatpush1.msra.mxu0 %v570
    %609 = vmatprep.subr.mxu0 0.0
    %610 = vmatpush1.msra.mxu0 %v568
    %611 = vmatprep.subr.mxu0 0.0
    %612 = vmatpush1.msra.mxu0 %v566
    %613 = vmatprep.subr.mxu0 0.0
    %614 = vmatpush2.msra.mxu0 0.0
    %615 = vmatprep.subr.mxu0 0.0
    %616 = vmatpush2.msra.mxu0 0.0
    %617 = vmatprep.subr.mxu0 0.0
    %618 = vmatpush2.msra.mxu0 0.0
    %619 = vmatprep.subr.mxu0 0.0
    %620 = vmatpush2.msra.mxu0 0.0
    %621 = vmatprep.subr.mxu0 0.0
    %622 = vmatpush2.msra.mxu0 0.0
    %623 = vmatprep.subr.mxu0 0.0
    %624 = vmatpush2.msra.mxu0 0.0
    %625 = vmatprep.subr.mxu0 0.0
    %626 = vmatpush2.msra.mxu0 0.0
    %627 = vmatprep.subr.mxu0 0.0
    %628 = vmatpush2.msra.mxu0 0.0
    %629 = vmatprep.subr.mxu0 0.0
    %630 = vmatpush2.msra.mxu0 0.0
    %631 = vmatprep.subr.mxu0 0.0
    %632 = vmatpush2.msra.mxu0 0.0
    %633 = vmatprep.subr.mxu0 0.0
    %634 = vmatpush2.msra.mxu0 0.0
    %635 = vmatprep.subr.mxu0 0.0
    %636 = vmatpush2.msra.mxu0 0.0
    %637 = vmatprep.subr.mxu0 0.0
    %638 = vmatpush2.msra.mxu0 0.0
    %639 = vmatprep.subr.mxu0 0.0
    %640 = vmatpush2.msra.mxu0 0.0
    %641 = vmatprep.subr.mxu0 0.0
    %642 = vmatpush2.msra.mxu0 0.0
    %643 = vmatprep.subr.mxu0 0.0
    %644 = vmatpush2.msra.mxu0 0.0
    %645 = vmatprep.mubr.f32.mxu0 0.0
    %646 = vmatmul.mubr.f32.gmra.mxu0 %v489
    %v647 = vpop.f32.mrf.mxu0
    %v648 = vadd.f32 %v579, %v647
    %v649 = vpop.f32.mrf.mxu0
    %650 = vdwg.mxu0
    %651 = vrot.lane.b32.xlu0 %v482, 64
    %v652 = vpop.permute.xlu0 %651
    %653 = vrot.lane.b32.xlu0 %v483, 64
    %v654 = vpop.permute.xlu0 %653
    %655 = vrot.lane.b32.xlu0 %v484, 64
    %v656 = vpop.permute.xlu0 %655
    %657 = vrot.lane.b32.xlu0 %v485, 64
    %v658 = vpop.permute.xlu0 %657
    %663 = vrot.lane.b32.xlu0 %v486, 64
    %v664 = vpop.permute.xlu0 %663
    %666 = vmatprep.subr.mxu0 0.0
    %667 = vmatpush1.msra.mxu0 0.0
    %668 = vmatprep.subr.mxu0 0.0
    %669 = vmatpush1.msra.mxu0 0.0
    %670 = vmatprep.subr.mxu0 0.0
    %671 = vmatpush1.msra.mxu0 0.0
    %672 = vmatprep.subr.mxu0 0.0
    %673 = vmatpush1.msra.mxu0 0.0
    %674 = vmatprep.subr.mxu0 0.0
    %675 = vmatpush1.msra.mxu0 0.0
    %676 = vmatprep.subr.mxu0 0.0
    %677 = vmatpush1.msra.mxu0 0.0
    %678 = vmatprep.subr.mxu0 0.0
    %679 = vmatpush1.msra.mxu0 0.0
    %680 = vmatprep.subr.mxu0 0.0
    %681 = vmatpush1.msra.mxu0 0.0
    %682 = vmatprep.subr.mxu0 0.0
    %683 = vmatpush1.msra.mxu0 0.0
    %684 = vmatprep.subr.mxu0 0.0
    %685 = vmatpush1.msra.mxu0 0.0
    %686 = vmatprep.subr.mxu0 0.0
    %687 = vmatpush1.msra.mxu0 0.0
    %688 = vmatprep.subr.mxu0 0.0
    %689 = vmatpush1.msra.mxu0 0.0
    %690 = vmatprep.subr.mxu0 0.0
    %691 = vmatpush1.msra.mxu0 %v658
    %692 = vmatprep.subr.mxu0 0.0
    %693 = vmatpush1.msra.mxu0 %v656
    %694 = vmatprep.subr.mxu0 0.0
    %695 = vmatpush1.msra.mxu0 %v654
    %696 = vmatprep.subr.mxu0 0.0
    %697 = vmatpush1.msra.mxu0 %v652
    %698 = vmatprep.subr.mxu0 0.0
    %699 = vmatpush2.msra.mxu0 0.0
    %700 = vmatprep.subr.mxu0 0.0
    %701 = vmatpush2.msra.mxu0 0.0
    %702 = vmatprep.subr.mxu0 0.0
    %703 = vmatpush2.msra.mxu0 0.0
    %704 = vmatprep.subr.mxu0 0.0
    %705 = vmatpush2.msra.mxu0 0.0
    %706 = vmatprep.subr.mxu0 0.0
    %707 = vmatpush2.msra.mxu0 0.0
    %708 = vmatprep.subr.mxu0 0.0
    %709 = vmatpush2.msra.mxu0 0.0
    %710 = vmatprep.subr.mxu0 0.0
    %711 = vmatpush2.msra.mxu0 0.0
    %712 = vmatprep.subr.mxu0 0.0
    %713 = vmatpush2.msra.mxu0 0.0
    %714 = vmatprep.subr.mxu0 0.0
    %715 = vmatpush2.msra.mxu0 0.0
    %716 = vmatprep.subr.mxu0 0.0
    %717 = vmatpush2.msra.mxu0 0.0
    %718 = vmatprep.subr.mxu0 0.0
    %719 = vmatpush2.msra.mxu0 0.0
    %720 = vmatprep.subr.mxu0 0.0
    %721 = vmatpush2.msra.mxu0 0.0
    %722 = vmatprep.subr.mxu0 0.0
    %723 = vmatpush2.msra.mxu0 0.0
    %724 = vmatprep.subr.mxu0 0.0
    %725 = vmatpush2.msra.mxu0 0.0
    %726 = vmatprep.subr.mxu0 0.0
    %727 = vmatpush2.msra.mxu0 0.0
    %728 = vmatprep.subr.mxu0 0.0
    %729 = vmatpush2.msra.mxu0 0.0
    %730 = vmatprep.mubr.f32.mxu0 0.0
    %731 = vmatmul.mubr.f32.gmra.mxu0 %v489
    %v732 = vpop.f32.mrf.mxu0
    %v733 = vadd.f32 %v664, %v732
    %v734 = vpop.f32.mrf.mxu0
    %735 = vdwg.mxu0
    %vm736 = vcmask 130048
    %v738 = vsel %vm736, %v558, 0
    %v741 = vsel %vm736, %v648, 0
    %743 = vmatprep.subr.mxu0 0.0
    %744 = vmatpush1.xpose.msra.mxu0 0.0
    %745 = vmatprep.subr.mxu0 0.0
    %746 = vmatpush1.xpose.msra.mxu0 0.0
    %747 = vmatprep.subr.mxu0 0.0
    %748 = vmatpush1.xpose.msra.mxu0 0.0
    %749 = vmatprep.subr.mxu0 0.0
    %750 = vmatpush1.xpose.msra.mxu0 0.0
    %751 = vmatprep.subr.mxu0 0.0
    %752 = vmatpush1.xpose.msra.mxu0 0.0
    %753 = vmatprep.subr.mxu0 0.0
    %754 = vmatpush1.xpose.msra.mxu0 0.0
    %755 = vmatprep.subr.mxu0 0.0
    %756 = vmatpush1.xpose.msra.mxu0 0.0
    %757 = vmatprep.subr.mxu0 0.0
    %758 = vmatpush1.xpose.msra.mxu0 0.0
    %759 = vmatprep.subr.mxu0 0.0
    %760 = vmatpush1.xpose.msra.mxu0 0.0
    %761 = vmatprep.subr.mxu0 0.0
    %762 = vmatpush1.xpose.msra.mxu0 0.0
    %763 = vmatprep.subr.mxu0 0.0
    %764 = vmatpush1.xpose.msra.mxu0 0.0
    %765 = vmatprep.subr.mxu0 0.0
    %766 = vmatpush1.xpose.msra.mxu0 0.0
    %767 = vmatprep.subr.mxu0 0.0
    %768 = vmatpush1.xpose.msra.mxu0 0.0
    %769 = vmatprep.subr.mxu0 0.0
    %770 = vmatpush1.xpose.msra.mxu0 0.0
    %771 = vmatprep.subr.mxu0 0.0
    %772 = vmatpush1.xpose.msra.mxu0 0.0
    %773 = vmatprep.subr.mxu0 0.0
    %774 = vmatpush1.xpose.msra.mxu0 %v741
    %775 = vmatprep.subr.mxu0 0.0
    %776 = vmatpush2.xpose.msra.mxu0 0.0
    %777 = vmatprep.subr.mxu0 0.0
    %778 = vmatpush2.xpose.msra.mxu0 0.0
    %779 = vmatprep.subr.mxu0 0.0
    %780 = vmatpush2.xpose.msra.mxu0 0.0
    %781 = vmatprep.subr.mxu0 0.0
    %782 = vmatpush2.xpose.msra.mxu0 0.0
    %783 = vmatprep.subr.mxu0 0.0
    %784 = vmatpush2.xpose.msra.mxu0 0.0
    %785 = vmatprep.subr.mxu0 0.0
    %786 = vmatpush2.xpose.msra.mxu0 0.0
    %787 = vmatprep.subr.mxu0 0.0
    %788 = vmatpush2.xpose.msra.mxu0 0.0
    %789 = vmatprep.subr.mxu0 0.0
    %790 = vmatpush2.xpose.msra.mxu0 0.0
    %791 = vmatprep.subr.mxu0 0.0
    %792 = vmatpush2.xpose.msra.mxu0 0.0
    %793 = vmatprep.subr.mxu0 0.0
    %794 = vmatpush2.xpose.msra.mxu0 0.0
    %795 = vmatprep.subr.mxu0 0.0
    %796 = vmatpush2.xpose.msra.mxu0 0.0
    %797 = vmatprep.subr.mxu0 0.0
    %798 = vmatpush2.xpose.msra.mxu0 0.0
    %799 = vmatprep.subr.mxu0 0.0
    %800 = vmatpush2.xpose.msra.mxu0 0.0
    %801 = vmatprep.subr.mxu0 0.0
    %802 = vmatpush2.xpose.msra.mxu0 0.0
    %803 = vmatprep.subr.mxu0 0.0
    %804 = vmatpush2.xpose.msra.mxu0 0.0
    %805 = vmatprep.subr.mxu0 0.0
    %806 = vmatpush2.xpose.msra.mxu0 0.0
    %807 = vmatprep.mubr.f32.mxu0 0.0
    %808 = vmatmul.mubr.f32.gmra.mxu0 %v738
    %v809 = vpop.f32.mrf.mxu0
    %v810 = vadd.f32 0.0, %v809
    %v811 = vpop.f32.mrf.mxu0
    %812 = vdwg.mxu0
    %vm813 = vcmask 55296
    %v814 = vsel %vm813, %v810, -inf
    %815 = vmax.xlane.f32.xlu0 %v814
    %v816 = vpop.xlane.xlu0 %815
    %v817 = vsub.f32 %v810, %v816
    %v818 = vmul.f32 %v817, 1.442695
    %v819 = vpow.pop %v818
    %v820 = vsel %vm813, %v819, 0.0
    %821 = vadd.xlane.f32.xlu0 %v820
    %v822 = vpop.xlane.xlu0 %821
    %v823 = vrcp.pop %v822
    %v824 = vmul.f32 %v819, %v823
    %vm825 = vcmask 56320
    %v827 = vsel %vm825, %v824, 0
    %vm829 = vcmask 1046528
    %v831 = vsel %vm829, %v733, 0
    %833 = vmatprep.subr.mxu0 0.0
    %834 = vmatpush1.msra.mxu0 0.0
    %835 = vmatprep.subr.mxu0 0.0
    %836 = vmatpush1.msra.mxu0 0.0
    %837 = vmatprep.subr.mxu0 0.0
    %838 = vmatpush1.msra.mxu0 0.0
    %839 = vmatprep.subr.mxu0 0.0
    %840 = vmatpush1.msra.mxu0 0.0
    %841 = vmatprep.subr.mxu0 0.0
    %842 = vmatpush1.msra.mxu0 0.0
    %843 = vmatprep.subr.mxu0 0.0
    %844 = vmatpush1.msra.mxu0 0.0
    %845 = vmatprep.subr.mxu0 0.0
    %846 = vmatpush1.msra.mxu0 0.0
    %847 = vmatprep.subr.mxu0 0.0
    %848 = vmatpush1.msra.mxu0 0.0
    %849 = vmatprep.subr.mxu0 0.0
    %850 = vmatpush1.msra.mxu0 0.0
    %851 = vmatprep.subr.mxu0 0.0
    %852 = vmatpush1.msra.mxu0 0.0
    %853 = vmatprep.subr.mxu0 0.0
    %854 = vmatpush1.msra.mxu0 0.0
    %855 = vmatprep.subr.mxu0 0.0
    %856 = vmatpush1.msra.mxu0 0.0
    %857 = vmatprep.subr.mxu0 0.0
    %858 = vmatpush1.msra.mxu0 0.0
    %859 = vmatprep.subr.mxu0 0.0
    %860 = vmatpush1.msra.mxu0 0.0
    %861 = vmatprep.subr.mxu0 0.0
    %862 = vmatpush1.msra.mxu0 0.0
    %863 = vmatprep.subr.mxu0 0.0
    %864 = vmatpush1.msra.mxu0 %v831
    %865 = vmatprep.subr.mxu0 0.0
    %866 = vmatpush2.msra.mxu0 0.0
    %867 = vmatprep.subr.mxu0 0.0
    %868 = vmatpush2.msra.mxu0 0.0
    %869 = vmatprep.subr.mxu0 0.0
    %870 = vmatpush2.msra.mxu0 0.0
    %871 = vmatprep.subr.mxu0 0.0
    %872 = vmatpush2.msra.mxu0 0.0
    %873 = vmatprep.subr.mxu0 0.0
    %874 = vmatpush2.msra.mxu0 0.0
    %875 = vmatprep.subr.mxu0 0.0
    %876 = vmatpush2.msra.mxu0 0.0
    %877 = vmatprep.subr.mxu0 0.0
    %878 = vmatpush2.msra.mxu0 0.0
    %879 = vmatprep.subr.mxu0 0.0
    %880 = vmatpush2.msra.mxu0 0.0
    %881 = vmatprep.subr.mxu0 0.0
    %882 = vmatpush2.msra.mxu0 0.0
    %883 = vmatprep.subr.mxu0 0.0
    %884 = vmatpush2.msra.mxu0 0.0
    %885 = vmatprep.subr.mxu0 0.0
    %886 = vmatpush2.msra.mxu0 0.0
    %887 = vmatprep.subr.mxu0 0.0
    %888 = vmatpush2.msra.mxu0 0.0
    %889 = vmatprep.subr.mxu0 0.0
    %890 = vmatpush2.msra.mxu0 0.0
    %891 = vmatprep.subr.mxu0 0.0
    %892 = vmatpush2.msra.mxu0 0.0
    %893 = vmatprep.subr.mxu0 0.0
    %894 = vmatpush2.msra.mxu0 0.0
    %895 = vmatprep.subr.mxu0 0.0
    %896 = vmatpush2.msra.mxu0 0.0
    %897 = vmatprep.mubr.f32.mxu0 0.0
    %898 = vmatmul.mubr.f32.gmra.mxu0 %v827
    %v899 = vpop.f32.mrf.mxu0
    %v900 = vadd.f32 0.0, %v899
    %v901 = vpop.f32.mrf.mxu0
    %902 = vdwg.mxu0
    %903 = vrot.lane.b32.xlu0 %v558, 112
    %v904 = vpop.permute.xlu0 %903
    %905 = vrot.lane.b32.xlu0 %v648, 112
    %v906 = vpop.permute.xlu0 %905
    %v907 = vsel %vm736, %v904, 0
    %v909 = vsel %vm736, %v906, 0
    %911 = vmatprep.subr.mxu0 0.0
    %912 = vmatpush1.xpose.msra.mxu0 0.0
    %913 = vmatprep.subr.mxu0 0.0
    %914 = vmatpush1.xpose.msra.mxu0 0.0
    %915 = vmatprep.subr.mxu0 0.0
    %916 = vmatpush1.xpose.msra.mxu0 0.0
    %917 = vmatprep.subr.mxu0 0.0
    %918 = vmatpush1.xpose.msra.mxu0 0.0
    %919 = vmatprep.subr.mxu0 0.0
    %920 = vmatpush1.xpose.msra.mxu0 0.0
    %921 = vmatprep.subr.mxu0 0.0
    %922 = vmatpush1.xpose.msra.mxu0 0.0
    %923 = vmatprep.subr.mxu0 0.0
    %924 = vmatpush1.xpose.msra.mxu0 0.0
    %925 = vmatprep.subr.mxu0 0.0
    %926 = vmatpush1.xpose.msra.mxu0 0.0
    %927 = vmatprep.subr.mxu0 0.0
    %928 = vmatpush1.xpose.msra.mxu0 0.0
    %929 = vmatprep.subr.mxu0 0.0
    %930 = vmatpush1.xpose.msra.mxu0 0.0
    %931 = vmatprep.subr.mxu0 0.0
    %932 = vmatpush1.xpose.msra.mxu0 0.0
    %933 = vmatprep.subr.mxu0 0.0
    %934 = vmatpush1.xpose.msra.mxu0 0.0
    %935 = vmatprep.subr.mxu0 0.0
    %936 = vmatpush1.xpose.msra.mxu0 0.0
    %937 = vmatprep.subr.mxu0 0.0
    %938 = vmatpush1.xpose.msra.mxu0 0.0
    %939 = vmatprep.subr.mxu0 0.0
    %940 = vmatpush1.xpose.msra.mxu0 0.0
    %941 = vmatprep.subr.mxu0 0.0
    %942 = vmatpush1.xpose.msra.mxu0 %v909
    %943 = vmatprep.subr.mxu0 0.0
    %944 = vmatpush2.xpose.msra.mxu0 0.0
    %945 = vmatprep.subr.mxu0 0.0
    %946 = vmatpush2.xpose.msra.mxu0 0.0
    %947 = vmatprep.subr.mxu0 0.0
    %948 = vmatpush2.xpose.msra.mxu0 0.0
    %949 = vmatprep.subr.mxu0 0.0
    %950 = vmatpush2.xpose.msra.mxu0 0.0
    %951 = vmatprep.subr.mxu0 0.0
    %952 = vmatpush2.xpose.msra.mxu0 0.0
    %953 = vmatprep.subr.mxu0 0.0
    %954 = vmatpush2.xpose.msra.mxu0 0.0
    %955 = vmatprep.subr.mxu0 0.0
    %956 = vmatpush2.xpose.msra.mxu0 0.0
    %957 = vmatprep.subr.mxu0 0.0
    %958 = vmatpush2.xpose.msra.mxu0 0.0
    %959 = vmatprep.subr.mxu0 0.0
    %960 = vmatpush2.xpose.msra.mxu0 0.0
    %961 = vmatprep.subr.mxu0 0.0
    %962 = vmatpush2.xpose.msra.mxu0 0.0
    %963 = vmatprep.subr.mxu0 0.0
    %964 = vmatpush2.xpose.msra.mxu0 0.0
    %965 = vmatprep.subr.mxu0 0.0
    %966 = vmatpush2.xpose.msra.mxu0 0.0
    %967 = vmatprep.subr.mxu0 0.0
    %968 = vmatpush2.xpose.msra.mxu0 0.0
    %969 = vmatprep.subr.mxu0 0.0
    %970 = vmatpush2.xpose.msra.mxu0 0.0
    %971 = vmatprep.subr.mxu0 0.0
    %972 = vmatpush2.xpose.msra.mxu0 0.0
    %973 = vmatprep.subr.mxu0 0.0
    %974 = vmatpush2.xpose.msra.mxu0 0.0
    %975 = vmatprep.mubr.f32.mxu0 0.0
    %976 = vmatmul.mubr.f32.gmra.mxu0 %v907
    %v977 = vpop.f32.mrf.mxu0
    %v978 = vadd.f32 0.0, %v977
    %v979 = vpop.f32.mrf.mxu0
    %980 = vdwg.mxu0
    %v981 = vsel %vm813, %v978, -inf
    %982 = vmax.xlane.f32.xlu0 %v981
    %v983 = vpop.xlane.xlu0 %982
    %v984 = vsub.f32 %v978, %v983
    %v985 = vmul.f32 %v984, 1.442695
    %v986 = vpow.pop %v985
    %v987 = vsel %vm813, %v986, 0.0
    %988 = vadd.xlane.f32.xlu0 %v987
    %v989 = vpop.xlane.xlu0 %988
    %v990 = vrcp.pop %v989
    %v991 = vmul.f32 %v986, %v990
    %992 = vrot.lane.b32.xlu0 %v733, 112
    %v993 = vpop.permute.xlu0 %992
    %v995 = vsel %vm825, %v991, 0
    %v997 = vsel %vm829, %v993, 0
    %999 = vmatprep.subr.mxu0 0.0
    %1000 = vmatpush1.msra.mxu0 0.0
    %1001 = vmatprep.subr.mxu0 0.0
    %1002 = vmatpush1.msra.mxu0 0.0
    %1003 = vmatprep.subr.mxu0 0.0
    %1004 = vmatpush1.msra.mxu0 0.0
    %1005 = vmatprep.subr.mxu0 0.0
    %1006 = vmatpush1.msra.mxu0 0.0
    %1007 = vmatprep.subr.mxu0 0.0
    %1008 = vmatpush1.msra.mxu0 0.0
    %1009 = vmatprep.subr.mxu0 0.0
    %1010 = vmatpush1.msra.mxu0 0.0
    %1011 = vmatprep.subr.mxu0 0.0
    %1012 = vmatpush1.msra.mxu0 0.0
    %1013 = vmatprep.subr.mxu0 0.0
    %1014 = vmatpush1.msra.mxu0 0.0
    %1015 = vmatprep.subr.mxu0 0.0
    %1016 = vmatpush1.msra.mxu0 0.0
    %1017 = vmatprep.subr.mxu0 0.0
    %1018 = vmatpush1.msra.mxu0 0.0
    %1019 = vmatprep.subr.mxu0 0.0
    %1020 = vmatpush1.msra.mxu0 0.0
    %1021 = vmatprep.subr.mxu0 0.0
    %1022 = vmatpush1.msra.mxu0 0.0
    %1023 = vmatprep.subr.mxu0 0.0
    %1024 = vmatpush1.msra.mxu0 0.0
    %1025 = vmatprep.subr.mxu0 0.0
    %1026 = vmatpush1.msra.mxu0 0.0
    %1027 = vmatprep.subr.mxu0 0.0
    %1028 = vmatpush1.msra.mxu0 0.0
    %1029 = vmatprep.subr.mxu0 0.0
    %1030 = vmatpush1.msra.mxu0 %v997
    %1031 = vmatprep.subr.mxu0 0.0
    %1032 = vmatpush2.msra.mxu0 0.0
    %1033 = vmatprep.subr.mxu0 0.0
    %1034 = vmatpush2.msra.mxu0 0.0
    %1035 = vmatprep.subr.mxu0 0.0
    %1036 = vmatpush2.msra.mxu0 0.0
    %1037 = vmatprep.subr.mxu0 0.0
    %1038 = vmatpush2.msra.mxu0 0.0
    %1039 = vmatprep.subr.mxu0 0.0
    %1040 = vmatpush2.msra.mxu0 0.0
    %1041 = vmatprep.subr.mxu0 0.0
    %1042 = vmatpush2.msra.mxu0 0.0
    %1043 = vmatprep.subr.mxu0 0.0
    %1044 = vmatpush2.msra.mxu0 0.0
    %1045 = vmatprep.subr.mxu0 0.0
    %1046 = vmatpush2.msra.mxu0 0.0
    %1047 = vmatprep.subr.mxu0 0.0
    %1048 = vmatpush2.msra.mxu0 0.0
    %1049 = vmatprep.subr.mxu0 0.0
    %1050 = vmatpush2.msra.mxu0 0.0
    %1051 = vmatprep.subr.mxu0 0.0
    %1052 = vmatpush2.msra.mxu0 0.0
    %1053 = vmatprep.subr.mxu0 0.0
    %1054 = vmatpush2.msra.mxu0 0.0
    %1055 = vmatprep.subr.mxu0 0.0
    %1056 = vmatpush2.msra.mxu0 0.0
    %1057 = vmatprep.subr.mxu0 0.0
    %1058 = vmatpush2.msra.mxu0 0.0
    %1059 = vmatprep.subr.mxu0 0.0
    %1060 = vmatpush2.msra.mxu0 0.0
    %1061 = vmatprep.subr.mxu0 0.0
    %1062 = vmatpush2.msra.mxu0 0.0
    %1063 = vmatprep.mubr.f32.mxu0 0.0
    %1064 = vmatmul.mubr.f32.gmra.mxu0 %v995
    %v1065 = vpop.f32.mrf.mxu0
    %v1066 = vadd.f32 0.0, %v1065
    %v1067 = vpop.f32.mrf.mxu0
    %1068 = vdwg.mxu0
    %1070 = vrot.lane.b32.xlu0 %v1066, 16
    %v1071 = vpop.permute.xlu0 %1070
    %v1073 = vsel %vm736, %v900, %v1071
    %v1074 = vld [vmem:[#allocation3 + $0x680] sm:$0xff]
    %v1075 = vld [vmem:[#allocation3 + $0x690] sm:$0xff]
    %v1076 = vld [vmem:[#allocation3 + $0x6a0] sm:$0xff]
    %v1077 = vld [vmem:[#allocation3 + $0x6b0] sm:$0xff]
    %v1078 = vld [vmem:[#allocation3 + $0x670] ss:$0 sm:$0xff]
    %v1080 = vsel %vm487, %v1073, 0
    %1082 = vmatprep.subr.mxu0 0.0
    %1083 = vmatpush1.msra.mxu0 0.0
    %1084 = vmatprep.subr.mxu0 0.0
    %1085 = vmatpush1.msra.mxu0 0.0
    %1086 = vmatprep.subr.mxu0 0.0
    %1087 = vmatpush1.msra.mxu0 0.0
    %1088 = vmatprep.subr.mxu0 0.0
    %1089 = vmatpush1.msra.mxu0 0.0
    %1090 = vmatprep.subr.mxu0 0.0
    %1091 = vmatpush1.msra.mxu0 0.0
    %1092 = vmatprep.subr.mxu0 0.0
    %1093 = vmatpush1.msra.mxu0 0.0
    %1094 = vmatprep.subr.mxu0 0.0
    %1095 = vmatpush1.msra.mxu0 0.0
    %1096 = vmatprep.subr.mxu0 0.0
    %1097 = vmatpush1.msra.mxu0 0.0
    %1098 = vmatprep.subr.mxu0 0.0
    %1099 = vmatpush1.msra.mxu0 0.0
    %1100 = vmatprep.subr.mxu0 0.0
    %1101 = vmatpush1.msra.mxu0 0.0
    %1102 = vmatprep.subr.mxu0 0.0
    %1103 = vmatpush1.msra.mxu0 0.0
    %1104 = vmatprep.subr.mxu0 0.0
    %1105 = vmatpush1.msra.mxu0 0.0
    %1106 = vmatprep.subr.mxu0 0.0
    %1107 = vmatpush1.msra.mxu0 %v1077
    %1108 = vmatprep.subr.mxu0 0.0
    %1109 = vmatpush1.msra.mxu0 %v1076
    %1110 = vmatprep.subr.mxu0 0.0
    %1111 = vmatpush1.msra.mxu0 %v1075
    %1112 = vmatprep.subr.mxu0 0.0
    %1113 = vmatpush1.msra.mxu0 %v1074
    %1114 = vmatprep.subr.mxu0 0.0
    %1115 = vmatpush2.msra.mxu0 0.0
    %1116 = vmatprep.subr.mxu0 0.0
    %1117 = vmatpush2.msra.mxu0 0.0
    %1118 = vmatprep.subr.mxu0 0.0
    %1119 = vmatpush2.msra.mxu0 0.0
    %1120 = vmatprep.subr.mxu0 0.0
    %1121 = vmatpush2.msra.mxu0 0.0
    %1122 = vmatprep.subr.mxu0 0.0
    %1123 = vmatpush2.msra.mxu0 0.0
    %1124 = vmatprep.subr.mxu0 0.0
    %1125 = vmatpush2.msra.mxu0 0.0
    %1126 = vmatprep.subr.mxu0 0.0
    %1127 = vmatpush2.msra.mxu0 0.0
    %1128 = vmatprep.subr.mxu0 0.0
    %1129 = vmatpush2.msra.mxu0 0.0
    %1130 = vmatprep.subr.mxu0 0.0
    %1131 = vmatpush2.msra.mxu0 0.0
    %1132 = vmatprep.subr.mxu0 0.0
    %1133 = vmatpush2.msra.mxu0 0.0
    %1134 = vmatprep.subr.mxu0 0.0
    %1135 = vmatpush2.msra.mxu0 0.0
    %1136 = vmatprep.subr.mxu0 0.0
    %1137 = vmatpush2.msra.mxu0 0.0
    %1138 = vmatprep.subr.mxu0 0.0
    %1139 = vmatpush2.msra.mxu0 0.0
    %1140 = vmatprep.subr.mxu0 0.0
    %1141 = vmatpush2.msra.mxu0 0.0
    %1142 = vmatprep.subr.mxu0 0.0
    %1143 = vmatpush2.msra.mxu0 0.0
    %1144 = vmatprep.subr.mxu0 0.0
    %1145 = vmatpush2.msra.mxu0 0.0
    %1146 = vmatprep.mubr.f32.mxu0 0.0
    %1147 = vmatmul.mubr.f32.gmra.mxu0 %v1080
    %v1148 = vpop.f32.mrf.mxu0
    %v1149 = vadd.f32 %v1078, %v1148
    %v1150 = vpop.f32.mrf.mxu0
    %1151 = vdwg.mxu0
    %vm1152 = vcmask 260096
    %v1153 = vsel %vm1152, %v1149, 0.0
    %1154 = vadd.xlane.f32.xlu0 %v1153
    %v1155 = vpop.xlane.xlu0 %1154
    %v1156 = vrcp.pop 32.0
    %v1157 = vmul.f32 %v1155, %v1156
    %v1158 = vsub.f32 %v1149, %v1157
    %v1159 = vmul.f32 %v1158, %v1158
    %v1160 = vsel %vm1152, %v1159, 0.0
    %1161 = vadd.xlane.f32.xlu0 %v1160
    %v1162 = vpop.xlane.xlu0 %1161
    %v1163 = vmul.f32 %v1162, %v1156
    %v1164 = vadd.f32 %v1163, 1e-05
    %v1165 = vrsqrt.pop %v1164
    %v1166 = vmul.f32 %v1158, %v1165
    %v1167 = vld [vmem:[#allocation3 + $0x600] ss:$0 sm:$0xff]
    %v1168 = vmul.f32 %v1166, %v1167
    %v1169 = vld [vmem:[#allocation3 + $0x5f0] ss:$0 sm:$0xff]
    %v1170 = vadd.f32 %v1168, %v1169
    %v1171 = vadd.f32 %v1170, %v477
    %v1172 = vadd.f32 %v480, %v478
    %v1173 = vadd.f32 %v481, %v479
    %v1174 = vld [vmem:[#allocation3 + $0x4d0] sm:$0xff]
    %v1175 = vld [vmem:[#allocation3 + $0x4e0] sm:$0xff]
    %v1176 = vld [vmem:[#allocation3 + $0x4f0] sm:$0xff]
    %v1177 = vld [vmem:[#allocation3 + $0x500] sm:$0xff]
    %v1178 = vld [vmem:[#allocation3 + $0x4c0] ss:$0 sm:$0xff]
    %v1180 = vsel %vm487, %v1171, 0
    %1182 = vmatprep.subr.mxu0 0.0
    %1183 = vmatpush1.msra.mxu0 0.0
    %1184 = vmatprep.subr.mxu0 0.0
    %1185 = vmatpush1.msra.mxu0 0.0
    %1186 = vmatprep.subr.mxu0 0.0
    %1187 = vmatpush1.msra.mxu0 0.0
    %1188 = vmatprep.subr.mxu0 0.0
    %1189 = vmatpush1.msra.mxu0 0.0
    %1190 = vmatprep.subr.mxu0 0.0
    %1191 = vmatpush1.msra.mxu0 0.0
    %1192 = vmatprep.subr.mxu0 0.0
    %1193 = vmatpush1.msra.mxu0 0.0
    %1194 = vmatprep.subr.mxu0 0.0
    %1195 = vmatpush1.msra.mxu0 0.0
    %1196 = vmatprep.subr.mxu0 0.0
    %1197 = vmatpush1.msra.mxu0 0.0
    %1198 = vmatprep.subr.mxu0 0.0
    %1199 = vmatpush1.msra.mxu0 0.0
    %1200 = vmatprep.subr.mxu0 0.0
    %1201 = vmatpush1.msra.mxu0 0.0
    %1202 = vmatprep.subr.mxu0 0.0
    %1203 = vmatpush1.msra.mxu0 0.0
    %1204 = vmatprep.subr.mxu0 0.0
    %1205 = vmatpush1.msra.mxu0 0.0
    %1206 = vmatprep.subr.mxu0 0.0
    %1207 = vmatpush1.msra.mxu0 %v1177
    %1208 = vmatprep.subr.mxu0 0.0
    %1209 = vmatpush1.msra.mxu0 %v1176
    %1210 = vmatprep.subr.mxu0 0.0
    %1211 = vmatpush1.msra.mxu0 %v1175
    %1212 = vmatprep.subr.mxu0 0.0
    %1213 = vmatpush1.msra.mxu0 %v1174
    %1214 = vmatprep.subr.mxu0 0.0
    %1215 = vmatpush2.msra.mxu0 0.0
    %1216 = vmatprep.subr.mxu0 0.0
    %1217 = vmatpush2.msra.mxu0 0.0
    %1218 = vmatprep.subr.mxu0 0.0
    %1219 = vmatpush2.msra.mxu0 0.0
    %1220 = vmatprep.subr.mxu0 0.0
    %1221 = vmatpush2.msra.mxu0 0.0
    %1222 = vmatprep.subr.mxu0 0.0
    %1223 = vmatpush2.msra.mxu0 0.0
    %1224 = vmatprep.subr.mxu0 0.0
    %1225 = vmatpush2.msra.mxu0 0.0
    %1226 = vmatprep.subr.mxu0 0.0
    %1227 = vmatpush2.msra.mxu0 0.0
    %1228 = vmatprep.subr.mxu0 0.0
    %1229 = vmatpush2.msra.mxu0 0.0
    %1230 = vmatprep.subr.mxu0 0.0
    %1231 = vmatpush2.msra.mxu0 0.0
    %1232 = vmatprep.subr.mxu0 0.0
    %1233 = vmatpush2.msra.mxu0 0.0
    %1234 = vmatprep.subr.mxu0 0.0
    %1235 = vmatpush2.msra.mxu0 0.0
    %1236 = vmatprep.subr.mxu0 0.0
    %1237 = vmatpush2.msra.mxu0 0.0
    %1238 = vmatprep.subr.mxu0 0.0
    %1239 = vmatpush2.msra.mxu0 0.0
    %1240 = vmatprep.subr.mxu0 0.0
    %1241 = vmatpush2.msra.mxu0 0.0
    %1242 = vmatprep.subr.mxu0 0.0
    %1243 = vmatpush2.msra.mxu0 0.0
    %1244 = vmatprep.subr.mxu0 0.0
    %1245 = vmatpush2.msra.mxu0 0.0
    %1246 = vmatprep.mubr.f32.mxu0 0.0
    %1247 = vmatmul.mubr.f32.gmra.mxu0 %v1180
    %v1248 = vpop.f32.mrf.mxu0
    %v1249 = vadd.f32 %v1178, %v1248
    %v1250 = vpop.f32.mrf.mxu0
    %1251 = vdwg.mxu0
    %1256 = vrot.lane.b32.xlu0 %v1174, 112
    %v1257 = vpop.permute.xlu0 %1256
    %1258 = vrot.lane.b32.xlu0 %v1175, 112
    %v1259 = vpop.permute.xlu0 %1258
    %1260 = vrot.lane.b32.xlu0 %v1176, 112
    %v1261 = vpop.permute.xlu0 %1260
    %1262 = vrot.lane.b32.xlu0 %v1177, 112
    %v1263 = vpop.permute.xlu0 %1262
    %1269 = vrot.lane.b32.xlu0 %v1178, 112
    %v1270 = vpop.permute.xlu0 %1269
    %v1273 = vsel %vm487, %v1172, 0
    %v1276 = vsel %vm487, %v1173, 0
    %1278 = vmatprep.subr.mxu0 0.0
    %1279 = vmatpush1.msra.mxu0 0.0
    %1280 = vmatprep.subr.mxu0 0.0
    %1281 = vmatpush1.msra.mxu0 0.0
    %1282 = vmatprep.subr.mxu0 0.0
    %1283 = vmatpush1.msra.mxu0 0.0
    %1284 = vmatprep.subr.mxu0 0.0
    %1285 = vmatpush1.msra.mxu0 0.0
    %1286 = vmatprep.subr.mxu0 0.0
    %1287 = vmatpush1.msra.mxu0 0.0
    %1288 = vmatprep.subr.mxu0 0.0
    %1289 = vmatpush1.msra.mxu0 0.0
    %1290 = vmatprep.subr.mxu0 0.0
    %1291 = vmatpush1.msra.mxu0 0.0
    %1292 = vmatprep.subr.mxu0 0.0
    %1293 = vmatpush1.msra.mxu0 0.0
    %1294 = vmatprep.subr.mxu0 0.0
    %1295 = vmatpush1.msra.mxu0 0.0
    %1296 = vmatprep.subr.mxu0 0.0
    %1297 = vmatpush1.msra.mxu0 0.0
    %1298 = vmatprep.subr.mxu0 0.0
    %1299 = vmatpush1.msra.mxu0 0.0
    %1300 = vmatprep.subr.mxu0 0.0
    %1301 = vmatpush1.msra.mxu0 0.0
    %1302 = vmatprep.subr.mxu0 0.0
    %1303 = vmatpush1.msra.mxu0 %v1263
    %1304 = vmatprep.subr.mxu0 0.0
    %1305 = vmatpush1.msra.mxu0 %v1261
    %1306 = vmatprep.subr.mxu0 0.0
    %1307 = vmatpush1.msra.mxu0 %v1259
    %1308 = vmatprep.subr.mxu0 0.0
    %1309 = vmatpush1.msra.mxu0 %v1257
    %1310 = vmatprep.subr.mxu0 0.0
    %1311 = vmatpush2.msra.mxu0 0.0
    %1312 = vmatprep.subr.mxu0 0.0
    %1313 = vmatpush2.msra.mxu0 0.0
    %1314 = vmatprep.subr.mxu0 0.0
    %1315 = vmatpush2.msra.mxu0 0.0
    %1316 = vmatprep.subr.mxu0 0.0
    %1317 = vmatpush2.msra.mxu0 0.0
    %1318 = vmatprep.subr.mxu0 0.0
    %1319 = vmatpush2.msra.mxu0 0.0
    %1320 = vmatprep.subr.mxu0 0.0
    %1321 = vmatpush2.msra.mxu0 0.0
    %1322 = vmatprep.subr.mxu0 0.0
    %1323 = vmatpush2.msra.mxu0 0.0
    %1324 = vmatprep.subr.mxu0 0.0
    %1325 = vmatpush2.msra.mxu0 0.0
    %1326 = vmatprep.subr.mxu0 0.0
    %1327 = vmatpush2.msra.mxu0 0.0
    %1328 = vmatprep.subr.mxu0 0.0
    %1329 = vmatpush2.msra.mxu0 0.0
    %1330 = vmatprep.subr.mxu0 0.0
    %1331 = vmatpush2.msra.mxu0 0.0
    %1332 = vmatprep.subr.mxu0 0.0
    %1333 = vmatpush2.msra.mxu0 0.0
    %1334 = vmatprep.subr.mxu0 0.0
    %1335 = vmatpush2.msra.mxu0 0.0
    %1336 = vmatprep.subr.mxu0 0.0
    %1337 = vmatpush2.msra.mxu0 0.0
    %1338 = vmatprep.subr.mxu0 0.0
    %1339 = vmatpush2.msra.mxu0 0.0
    %1340 = vmatprep.subr.mxu0 0.0
    %1341 = vmatpush2.msra.mxu0 0.0
    %1342 = vmatprep.mubr.f32.mxu0 0.0
    %1343 = vmatmul.mubr.f32.gmra.mxu0 %v1273
    %v1344 = vpop.f32.mrf.mxu0
    %v1345 = vadd.f32 %v1270, %v1344
    %v1346 = vpop.f32.mrf.mxu0
    %1347 = vmatprep.mubr.f32.mxu0 0.0
    %1348 = vmatmul.mubr.f32.gmra.mxu0 %v1276
    %v1349 = vpop.f32.mrf.mxu0
    %v1350 = vadd.f32 %v1270, %v1349
    %v1351 = vpop.f32.mrf.mxu0
    %1352 = vdwg.mxu0
    %1353 = vrot.lane.b32.xlu0 %v1174, 96
    %v1354 = vpop.permute.xlu0 %1353
    %1355 = vrot.lane.b32.xlu0 %v1175, 96
    %v1356 = vpop.permute.xlu0 %1355
    %1357 = vrot.lane.b32.xlu0 %v1176, 96
    %v1358 = vpop.permute.xlu0 %1357
    %1359 = vrot.lane.b32.xlu0 %v1177, 96
    %v1360 = vpop.permute.xlu0 %1359
    %1365 = vrot.lane.b32.xlu0 %v1178, 96
    %v1366 = vpop.permute.xlu0 %1365
    %v1369 = vsel %vm487, %v480, 0
    %v1372 = vsel %vm487, %v481, 0
    %1374 = vmatprep.subr.mxu0 0.0
    %1375 = vmatpush1.msra.mxu0 0.0
    %1376 = vmatprep.subr.mxu0 0.0
    %1377 = vmatpush1.msra.mxu0 0.0
    %1378 = vmatprep.subr.mxu0 0.0
    %1379 = vmatpush1.msra.mxu0 0.0
    %1380 = vmatprep.subr.mxu0 0.0
    %1381 = vmatpush1.msra.mxu0 0.0
    %1382 = vmatprep.subr.mxu0 0.0
    %1383 = vmatpush1.msra.mxu0 0.0
    %1384 = vmatprep.subr.mxu0 0.0
    %1385 = vmatpush1.msra.mxu0 0.0
    %1386 = vmatprep.subr.mxu0 0.0
    %1387 = vmatpush1.msra.mxu0 0.0
    %1388 = vmatprep.subr.mxu0 0.0
    %1389 = vmatpush1.msra.mxu0 0.0
    %1390 = vmatprep.subr.mxu0 0.0
    %1391 = vmatpush1.msra.mxu0 0.0
    %1392 = vmatprep.subr.mxu0 0.0
    %1393 = vmatpush1.msra.mxu0 0.0
    %1394 = vmatprep.subr.mxu0 0.0
    %1395 = vmatpush1.msra.mxu0 0.0
    %1396 = vmatprep.subr.mxu0 0.0
    %1397 = vmatpush1.msra.mxu0 0.0
    %1398 = vmatprep.subr.mxu0 0.0
    %1399 = vmatpush1.msra.mxu0 %v1360
    %1400 = vmatprep.subr.mxu0 0.0
    %1401 = vmatpush1.msra.mxu0 %v1358
    %1402 = vmatprep.subr.mxu0 0.0
    %1403 = vmatpush1.msra.mxu0 %v1356
    %1404 = vmatprep.subr.mxu0 0.0
    %1405 = vmatpush1.msra.mxu0 %v1354
    %1406 = vmatprep.subr.mxu0 0.0
    %1407 = vmatpush2.msra.mxu0 0.0
    %1408 = vmatprep.subr.mxu0 0.0
    %1409 = vmatpush2.msra.mxu0 0.0
    %1410 = vmatprep.subr.mxu0 0.0
    %1411 = vmatpush2.msra.mxu0 0.0
    %1412 = vmatprep.subr.mxu0 0.0
    %1413 = vmatpush2.msra.mxu0 0.0
    %1414 = vmatprep.subr.mxu0 0.0
    %1415 = vmatpush2.msra.mxu0 0.0
    %1416 = vmatprep.subr.mxu0 0.0
    %1417 = vmatpush2.msra.mxu0 0.0
    %1418 = vmatprep.subr.mxu0 0.0
    %1419 = vmatpush2.msra.mxu0 0.0
    %1420 = vmatprep.subr.mxu0 0.0
    %1421 = vmatpush2.msra.mxu0 0.0
    %1422 = vmatprep.subr.mxu0 0.0
    %1423 = vmatpush2.msra.mxu0 0.0
    %1424 = vmatprep.subr.mxu0 0.0
    %1425 = vmatpush2.msra.mxu0 0.0
    %1426 = vmatprep.subr.mxu0 0.0
    %1427 = vmatpush2.msra.mxu0 0.0
    %1428 = vmatprep.subr.mxu0 0.0
    %1429 = vmatpush2.msra.mxu0 0.0
    %1430 = vmatprep.subr.mxu0 0.0
    %1431 = vmatpush2.msra.mxu0 0.0
    %1432 = vmatprep.subr.mxu0 0.0
    %1433 = vmatpush2.msra.mxu0 0.0
    %1434 = vmatprep.subr.mxu0 0.0
    %1435 = vmatpush2.msra.mxu0 0.0
    %1436 = vmatprep.subr.mxu0 0.0
    %1437 = vmatpush2.msra.mxu0 0.0
    %1438 = vmatprep.mubr.f32.mxu0 0.0
    %1439 = vmatmul.mubr.f32.gmra.mxu0 %v1369
    %v1440 = vpop.f32.mrf.mxu0
    %v1441 = vadd.f32 %v1366, %v1440
    %v1442 = vpop.f32.mrf.mxu0
    %1443 = vmatprep.mubr.f32.mxu0 0.0
    %1444 = vmatmul.mubr.f32.gmra.mxu0 %v1372
    %v1445 = vpop.f32.mrf.mxu0
    %v1446 = vadd.f32 %v1366, %v1445
    %v1447 = vpop.f32.mrf.mxu0
    %1448 = vdwg.mxu0
    %vm1449 = vcmask 64512
    %v1451 = vsel %vm1449, %v1249, 0
    %v1454 = vsel %vm1449, %v1345, 0
    %v1457 = vsel %vm1449, %v1350, 0
    %1459 = vmatprep.subr.mxu0 0.0
    %1460 = vmatpush1.xpose.msra.mxu0 0.0
    %1461 = vmatprep.subr.mxu0 0.0
    %1462 = vmatpush1.xpose.msra.mxu0 0.0
    %1463 = vmatprep.subr.mxu0 0.0
    %1464 = vmatpush1.xpose.msra.mxu0 0.0
    %1465 = vmatprep.subr.mxu0 0.0
    %1466 = vmatpush1.xpose.msra.mxu0 0.0
    %1467 = vmatprep.subr.mxu0 0.0
    %1468 = vmatpush1.xpose.msra.mxu0 0.0
    %1469 = vmatprep.subr.mxu0 0.0
    %1470 = vmatpush1.xpose.msra.mxu0 0.0
    %1471 = vmatprep.subr.mxu0 0.0
    %1472 = vmatpush1.xpose.msra.mxu0 0.0
    %1473 = vmatprep.subr.mxu0 0.0
    %1474 = vmatpush1.xpose.msra.mxu0 0.0
    %1475 = vmatprep.subr.mxu0 0.0
    %1476 = vmatpush1.xpose.msra.mxu0 0.0
    %1477 = vmatprep.subr.mxu0 0.0
    %1478 = vmatpush1.xpose.msra.mxu0 0.0
    %1479 = vmatprep.subr.mxu0 0.0
    %1480 = vmatpush1.xpose.msra.mxu0 0.0
    %1481 = vmatprep.subr.mxu0 0.0
    %1482 = vmatpush1.xpose.msra.mxu0 0.0
    %1483 = vmatprep.subr.mxu0 0.0
    %1484 = vmatpush1.xpose.msra.mxu0 0.0
    %1485 = vmatprep.subr.mxu0 0.0
    %1486 = vmatpush1.xpose.msra.mxu0 0.0
    %1487 = vmatprep.subr.mxu0 0.0
    %1488 = vmatpush1.xpose.msra.mxu0 %v1457
    %1489 = vmatprep.subr.mxu0 0.0
    %1490 = vmatpush1.xpose.msra.mxu0 %v1454
    %1491 = vmatprep.subr.mxu0 0.0
    %1492 = vmatpush2.xpose.msra.mxu0 0.0
    %1493 = vmatprep.subr.mxu0 0.0
    %1494 = vmatpush2.xpose.msra.mxu0 0.0
    %1495 = vmatprep.subr.mxu0 0.0
    %1496 = vmatpush2.xpose.msra.mxu0 0.0
    %1497 = vmatprep.subr.mxu0 0.0
    %1498 = vmatpush2.xpose.msra.mxu0 0.0
    %1499 = vmatprep.subr.mxu0 0.0
    %1500 = vmatpush2.xpose.msra.mxu0 0.0
    %1501 = vmatprep.subr.mxu0 0.0
    %1502 = vmatpush2.xpose.msra.mxu0 0.0
    %1503 = vmatprep.subr.mxu0 0.0
    %1504 = vmatpush2.xpose.msra.mxu0 0.0
    %1505 = vmatprep.subr.mxu0 0.0
    %1506 = vmatpush2.xpose.msra.mxu0 0.0
    %1507 = vmatprep.subr.mxu0 0.0
    %1508 = vmatpush2.xpose.msra.mxu0 0.0
    %1509 = vmatprep.subr.mxu0 0.0
    %1510 = vmatpush2.xpose.msra.mxu0 0.0
    %1511 = vmatprep.subr.mxu0 0.0
    %1512 = vmatpush2.xpose.msra.mxu0 0.0
    %1513 = vmatprep.subr.mxu0 0.0
    %1514 = vmatpush2.xpose.msra.mxu0 0.0
    %1515 = vmatprep.subr.mxu0 0.0
    %1516 = vmatpush2.xpose.msra.mxu0 0.0
    %1517 = vmatprep.subr.mxu0 0.0
    %1518 = vmatpush2.xpose.msra.mxu0 0.0
    %1519 = vmatprep.subr.mxu0 0.0
    %1520 = vmatpush2.xpose.msra.mxu0 0.0
    %1521 = vmatprep.subr.mxu0 0.0
    %1522 = vmatpush2.xpose.msra.mxu0 0.0
    %1523 = vmatprep.mubr.f32.mxu0 0.0
    %1524 = vmatmul.mubr.f32.gmra.mxu0 %v1451
    %v1525 = vpop.f32.mrf.mxu0
    %v1526 = vadd.f32 0.0, %v1525
    %v1527 = vpop.f32.mrf.mxu0
    %1528 = vdwg.mxu0
    %vm1529 = vcmask 129024
    %v1530 = vsel %vm1529, %v1526, -inf
    %1531 = vmax.xlane.f32.xlu0 %v1530
    %v1532 = vpop.xlane.xlu0 %1531
    %v1533 = vsub.f32 %v1526, %v1532
    %v1534 = vmul.f32 %v1533, 1.442695
    %v1535 = vpow.pop %v1534
    %v1536 = vsel %vm1529, %v1535, 0.0
    %1537 = vadd.xlane.f32.xlu0 %v1536
    %v1538 = vpop.xlane.xlu0 %1537
    %v1539 = vrcp.pop %v1538
    %v1540 = vmul.f32 %v1535, %v1539
    %v1542 = vsel %vm736, %v1540, 0
    %1544 = vmatprep.subr.mxu0 0.0
    %1545 = vmatpush1.msra.mxu0 0.0
    %1546 = vmatprep.subr.mxu0 0.0
    %1547 = vmatpush1.msra.mxu0 0.0
    %1548 = vmatprep.subr.mxu0 0.0
    %1549 = vmatpush1.msra.mxu0 0.0
    %1550 = vmatprep.subr.mxu0 0.0
    %1551 = vmatpush1.msra.mxu0 0.0
    %1552 = vmatprep.subr.mxu0 0.0
    %1553 = vmatpush1.msra.mxu0 0.0
    %1554 = vmatprep.subr.mxu0 0.0
    %1555 = vmatpush1.msra.mxu0 0.0
    %1556 = vmatprep.subr.mxu0 0.0
    %1557 = vmatpush1.msra.mxu0 0.0
    %1558 = vmatprep.subr.mxu0 0.0
    %1559 = vmatpush1.msra.mxu0 0.0
    %1560 = vmatprep.subr.mxu0 0.0
    %1561 = vmatpush1.msra.mxu0 0.0
    %1562 = vmatprep.subr.mxu0 0.0
    %1563 = vmatpush1.msra.mxu0 0.0
    %1564 = vmatprep.subr.mxu0 0.0
    %1565 = vmatpush1.msra.mxu0 0.0
    %1566 = vmatprep.subr.mxu0 0.0
    %1567 = vmatpush1.msra.mxu0 0.0
    %1568 = vmatprep.subr.mxu0 0.0
    %1569 = vmatpush1.msra.mxu0 0.0
    %1570 = vmatprep.subr.mxu0 0.0
    %1571 = vmatpush1.msra.mxu0 0.0
    %1572 = vmatprep.subr.mxu0 0.0
    %1573 = vmatpush1.msra.mxu0 %v1446
    %1574 = vmatprep.subr.mxu0 0.0
    %1575 = vmatpush1.msra.mxu0 %v1441
    %1576 = vmatprep.subr.mxu0 0.0
    %1577 = vmatpush2.msra.mxu0 0.0
    %1578 = vmatprep.subr.mxu0 0.0
    %1579 = vmatpush2.msra.mxu0 0.0
    %1580 = vmatprep.subr.mxu0 0.0
    %1581 = vmatpush2.msra.mxu0 0.0
    %1582 = vmatprep.subr.mxu0 0.0
    %1583 = vmatpush2.msra.mxu0 0.0
    %1584 = vmatprep.subr.mxu0 0.0
    %1585 = vmatpush2.msra.mxu0 0.0
    %1586 = vmatprep.subr.mxu0 0.0
    %1587 = vmatpush2.msra.mxu0 0.0
    %1588 = vmatprep.subr.mxu0 0.0
    %1589 = vmatpush2.msra.mxu0 0.0
    %1590 = vmatprep.subr.mxu0 0.0
    %1591 = vmatpush2.msra.mxu0 0.0
    %1592 = vmatprep.subr.mxu0 0.0
    %1593 = vmatpush2.msra.mxu0 0.0
    %1594 = vmatprep.subr.mxu0 0.0
    %1595 = vmatpush2.msra.mxu0 0.0
    %1596 = vmatprep.subr.mxu0 0.0
    %1597 = vmatpush2.msra.mxu0 0.0
    %1598 = vmatprep.subr.mxu0 0.0
    %1599 = vmatpush2.msra.mxu0 0.0
    %1600 = vmatprep.subr.mxu0 0.0
    %1601 = vmatpush2.msra.mxu0 0.0
    %1602 = vmatprep.subr.mxu0 0.0
    %1603 = vmatpush2.msra.mxu0 0.0
    %1604 = vmatprep.subr.mxu0 0.0
    %1605 = vmatpush2.msra.mxu0 0.0
    %1606 = vmatprep.subr.mxu0 0.0
    %1607 = vmatpush2.msra.mxu0 0.0
    %1608 = vmatprep.mubr.f32.mxu0 0.0
    %1609 = vmatmul.mubr.f32.gmra.mxu0 %v1542
    %v1610 = vpop.f32.mrf.mxu0
    %v1611 = vadd.f32 0.0, %v1610
    %v1612 = vpop.f32.mrf.mxu0
    %1613 = vdwg.mxu0
    %1614 = vrot.lane.b32.xlu0 %v1249, 120
    %v1615 = vpop.permute.xlu0 %1614
    %1616 = vrot.lane.b32.xlu0 %v1345, 120
    %v1617 = vpop.permute.xlu0 %1616
    %1618 = vrot.lane.b32.xlu0 %v1350, 120
    %v1619 = vpop.permute.xlu0 %1618
    %v1620 = vsel %vm1449, %v1615, 0
    %v1622 = vsel %vm1449, %v1617, 0
    %v1624 = vsel %vm1449, %v1619, 0
    %1626 = vmatprep.subr.mxu0 0.0
    %1627 = vmatpush1.xpose.msra.mxu0 0.0
    %1628 = vmatprep.subr.mxu0 0.0
    %1629 = vmatpush1.xpose.msra.mxu0 0.0
    %1630 = vmatprep.subr.mxu0 0.0
    %1631 = vmatpush1.xpose.msra.mxu0 0.0
    %1632 = vmatprep.subr.mxu0 0.0
    %1633 = vmatpush1.xpose.msra.mxu0 0.0
    %1634 = vmatprep.subr.mxu0 0.0
    %1635 = vmatpush1.xpose.msra.mxu0 0.0
    %1636 = vmatprep.subr.mxu0 0.0
    %1637 = vmatpush1.xpose.msra.mxu0 0.0
    %1638 = vmatprep.subr.mxu0 0.0
    %1639 = vmatpush1.xpose.msra.mxu0 0.0
    %1640 = vmatprep.subr.mxu0 0.0
    %1641 = vmatpush1.xpose.msra.mxu0 0.0
    %1642 = vmatprep.subr.mxu0 0.0
    %1643 = vmatpush1.xpose.msra.mxu0 0.0
    %1644 = vmatprep.subr.mxu0 0.0
    %1645 = vmatpush1.xpose.msra.mxu0 0.0
    %1646 = vmatprep.subr.mxu0 0.0
    %1647 = vmatpush1.xpose.msra.mxu0 0.0
    %1648 = vmatprep.subr.mxu0 0.0
    %1649 = vmatpush1.xpose.msra.mxu0 0.0
    %1650 = vmatprep.subr.mxu0 0.0
    %1651 = vmatpush1.xpose.msra.mxu0 0.0
    %1652 = vmatprep.subr.mxu0 0.0
    %1653 = vmatpush1.xpose.msra.mxu0 0.0
    %1654 = vmatprep.subr.mxu0 0.0
    %1655 = vmatpush1.xpose.msra.mxu0 %v1624
    %1656 = vmatprep.subr.mxu0 0.0
    %1657 = vmatpush1.xpose.msra.mxu0 %v1622
    %1658 = vmatprep.subr.mxu0 0.0
    %1659 = vmatpush2.xpose.msra.mxu0 0.0
    %1660 = vmatprep.subr.mxu0 0.0
    %1661 = vmatpush2.xpose.msra.mxu0 0.0
    %1662 = vmatprep.subr.mxu0 0.0
    %1663 = vmatpush2.xpose.msra.mxu0 0.0
    %1664 = vmatprep.subr.mxu0 0.0
    %1665 = vmatpush2.xpose.msra.mxu0 0.0
    %1666 = vmatprep.subr.mxu0 0.0
    %1667 = vmatpush2.xpose.msra.mxu0 0.0
    %1668 = vmatprep.subr.mxu0 0.0
    %1669 = vmatpush2.xpose.msra.mxu0 0.0
    %1670 = vmatprep.subr.mxu0 0.0
    %1671 = vmatpush2.xpose.msra.mxu0 0.0
    %1672 = vmatprep.subr.mxu0 0.0
    %1673 = vmatpush2.xpose.msra.mxu0 0.0
    %1674 = vmatprep.subr.mxu0 0.0
    %1675 = vmatpush2.xpose.msra.mxu0 0.0
    %1676 = vmatprep.subr.mxu0 0.0
    %1677 = vmatpush2.xpose.msra.mxu0 0.0
    %1678 = vmatprep.subr.mxu0 0.0
    %1679 = vmatpush2.xpose.msra.mxu0 0.0
    %1680 = vmatprep.subr.mxu0 0.0
    %1681 = vmatpush2.xpose.msra.mxu0 0.0
    %1682 = vmatprep.subr.mxu0 0.0
    %1683 = vmatpush2.xpose.msra.mxu0 0.0
    %1684 = vmatprep.subr.mxu0 0.0
    %1685 = vmatpush2.xpose.msra.mxu0 0.0
    %1686 = vmatprep.subr.mxu0 0.0
    %1687 = vmatpush2.xpose.msra.mxu0 0.0
    %1688 = vmatprep.subr.mxu0 0.0
    %1689 = vmatpush2.xpose.msra.mxu0 0.0
    %1690 = vmatprep.mubr.f32.mxu0 0.0
    %1691 = vmatmul.mubr.f32.gmra.mxu0 %v1620
    %v1692 = vpop.f32.mrf.mxu0
    %v1693 = vadd.f32 0.0, %v1692
    %v1694 = vpop.f32.mrf.mxu0
    %1695 = vdwg.mxu0
    %v1696 = vsel %vm1529, %v1693, -inf
    %1697 = vmax.xlane.f32.xlu0 %v1696
    %v1698 = vpop.xlane.xlu0 %1697
    %v1699 = vsub.f32 %v1693, %v1698
    %v1700 = vmul.f32 %v1699, 1.442695
    %v1701 = vpow.pop %v1700
    %v1702 = vsel %vm1529, %v1701, 0.0
    %1703 = vadd.xlane.f32.xlu0 %v1702
    %v1704 = vpop.xlane.xlu0 %1703
    %v1705 = vrcp.pop %v1704
    %v1706 = vmul.f32 %v1701, %v1705
    %1709 = vrot.lane.b32.xlu0 %v1441, 120
    %v1710 = vpop.permute.xlu0 %1709
    %1711 = vrot.lane.b32.xlu0 %v1446, 120
    %v1712 = vpop.permute.xlu0 %1711
    %v1716 = vsel %vm736, %v1706, 0
    %1718 = vmatprep.subr.mxu0 0.0
    %1719 = vmatpush1.msra.mxu0 0.0
    %1720 = vmatprep.subr.mxu0 0.0
    %1721 = vmatpush1.msra.mxu0 0.0
    %1722 = vmatprep.subr.mxu0 0.0
    %1723 = vmatpush1.msra.mxu0 0.0
    %1724 = vmatprep.subr.mxu0 0.0
    %1725 = vmatpush1.msra.mxu0 0.0
    %1726 = vmatprep.subr.mxu0 0.0
    %1727 = vmatpush1.msra.mxu0 0.0
    %1728 = vmatprep.subr.mxu0 0.0
    %1729 = vmatpush1.msra.mxu0 0.0
    %1730 = vmatprep.subr.mxu0 0.0
    %1731 = vmatpush1.msra.mxu0 0.0
    %1732 = vmatprep.subr.mxu0 0.0
    %1733 = vmatpush1.msra.mxu0 0.0
    %1734 = vmatprep.subr.mxu0 0.0
    %1735 = vmatpush1.msra.mxu0 0.0
    %1736 = vmatprep.subr.mxu0 0.0
    %1737 = vmatpush1.msra.mxu0 0.0
    %1738 = vmatprep.subr.mxu0 0.0
    %1739 = vmatpush1.msra.mxu0 0.0
    %1740 = vmatprep.subr.mxu0 0.0
    %1741 = vmatpush1.msra.mxu0 0.0
    %1742 = vmatprep.subr.mxu0 0.0
    %1743 = vmatpush1.msra.mxu0 0.0
    %1744 = vmatprep.subr.mxu0 0.0
    %1745 = vmatpush1.msra.mxu0 0.0
    %1746 = vmatprep.subr.mxu0 0.0
    %1747 = vmatpush1.msra.mxu0 %v1712
    %1748 = vmatprep.subr.mxu0 0.0
    %1749 = vmatpush1.msra.mxu0 %v1710
    %1750 = vmatprep.subr.mxu0 0.0
    %1751 = vmatpush2.msra.mxu0 0.0
    %1752 = vmatprep.subr.mxu0 0.0
    %1753 = vmatpush2.msra.mxu0 0.0
    %1754 = vmatprep.subr.mxu0 0.0
    %1755 = vmatpush2.msra.mxu0 0.0
    %1756 = vmatprep.subr.mxu0 0.0
    %1757 = vmatpush2.msra.mxu0 0.0
    %1758 = vmatprep.subr.mxu0 0.0
    %1759 = vmatpush2.msra.mxu0 0.0
    %1760 = vmatprep.subr.mxu0 0.0
    %1761 = vmatpush2.msra.mxu0 0.0
    %1762 = vmatprep.subr.mxu0 0.0
    %1763 = vmatpush2.msra.mxu0 0.0
    %1764 = vmatprep.subr.mxu0 0.0
    %1765 = vmatpush2.msra.mxu0 0.0
    %1766 = vmatprep.subr.mxu0 0.0
    %1767 = vmatpush2.msra.mxu0 0.0
    %1768 = vmatprep.subr.mxu0 0.0
    %1769 = vmatpush2.msra.mxu0 0.0
    %1770 = vmatprep.subr.mxu0 0.0
    %1771 = vmatpush2.msra.mxu0 0.0
    %1772 = vmatprep.subr.mxu0 0.0
    %1773 = vmatpush2.msra.mxu0 0.0
    %1774 = vmatprep.subr.mxu0 0.0
    %1775 = vmatpush2.msra.mxu0 0.0
    %1776 = vmatprep.subr.mxu0 0.0
    %1777 = vmatpush2.msra.mxu0 0.0
    %1778 = vmatprep.subr.mxu0 0.0
    %1779 = vmatpush2.msra.mxu0 0.0
    %1780 = vmatprep.subr.mxu0 0.0
    %1781 = vmatpush2.msra.mxu0 0.0
    %1782 = vmatprep.mubr.f32.mxu0 0.0
    %1783 = vmatmul.mubr.f32.gmra.mxu0 %v1716
    %v1784 = vpop.f32.mrf.mxu0
    %v1785 = vadd.f32 0.0, %v1784
    %v1786 = vpop.f32.mrf.mxu0
    %1787 = vdwg.mxu0
    %1789 = vrot.lane.b32.xlu0 %v1785, 8
    %v1790 = vpop.permute.xlu0 %1789
    %v1792 = vsel %vm1449, %v1611, %v1790
    %v1793 = vld [vmem:[#allocation3 + $0x4a0] sm:$0xff]
    %v1794 = vld [vmem:[#allocation3 + $0x4b0] sm:$0xff]
    %v1795 = vld [vmem:[#allocation3 + $0x490] ss:$0 sm:$0xff]
    %v1797 = vsel %vm736, %v1792, 0
    %1799 = vmatprep.subr.mxu0 0.0
    %1800 = vmatpush1.msra.mxu0 0.0
    %1801 = vmatprep.subr.mxu0 0.0
    %1802 = vmatpush1.msra.mxu0 0.0
    %1803 = vmatprep.subr.mxu0 0.0
    %1804 = vmatpush1.msra.mxu0 0.0
    %1805 = vmatprep.subr.mxu0 0.0
    %1806 = vmatpush1.msra.mxu0 0.0
    %1807 = vmatprep.subr.mxu0 0.0
    %1808 = vmatpush1.msra.mxu0 0.0
    %1809 = vmatprep.subr.mxu0 0.0
    %1810 = vmatpush1.msra.mxu0 0.0
    %1811 = vmatprep.subr.mxu0 0.0
    %1812 = vmatpush1.msra.mxu0 0.0
    %1813 = vmatprep.subr.mxu0 0.0
    %1814 = vmatpush1.msra.mxu0 0.0
    %1815 = vmatprep.subr.mxu0 0.0
    %1816 = vmatpush1.msra.mxu0 0.0
    %1817 = vmatprep.subr.mxu0 0.0
    %1818 = vmatpush1.msra.mxu0 0.0
    %1819 = vmatprep.subr.mxu0 0.0
    %1820 = vmatpush1.msra.mxu0 0.0
    %1821 = vmatprep.subr.mxu0 0.0
    %1822 = vmatpush1.msra.mxu0 0.0
    %1823 = vmatprep.subr.mxu0 0.0
    %1824 = vmatpush1.msra.mxu0 0.0
    %1825 = vmatprep.subr.mxu0 0.0
    %1826 = vmatpush1.msra.mxu0 0.0
    %1827 = vmatprep.subr.mxu0 0.0
    %1828 = vmatpush1.msra.mxu0 %v1794
    %1829 = vmatprep.subr.mxu0 0.0
    %1830 = vmatpush1.msra.mxu0 %v1793
    %1831 = vmatprep.subr.mxu0 0.0
    %1832 = vmatpush2.msra.mxu0 0.0
    %1833 = vmatprep.subr.mxu0 0.0
    %1834 = vmatpush2.msra.mxu0 0.0
    %1835 = vmatprep.subr.mxu0 0.0
    %1836 = vmatpush2.msra.mxu0 0.0
    %1837 = vmatprep.subr.mxu0 0.0
    %1838 = vmatpush2.msra.mxu0 0.0
    %1839 = vmatprep.subr.mxu0 0.0
    %1840 = vmatpush2.msra.mxu0 0.0
    %1841 = vmatprep.subr.mxu0 0.0
    %1842 = vmatpush2.msra.mxu0 0.0
    %1843 = vmatprep.subr.mxu0 0.0
    %1844 = vmatpush2.msra.mxu0 0.0
    %1845 = vmatprep.subr.mxu0 0.0
    %1846 = vmatpush2.msra.mxu0 0.0
    %1847 = vmatprep.subr.mxu0 0.0
    %1848 = vmatpush2.msra.mxu0 0.0
    %1849 = vmatprep.subr.mxu0 0.0
    %1850 = vmatpush2.msra.mxu0 0.0
    %1851 = vmatprep.subr.mxu0 0.0
    %1852 = vmatpush2.msra.mxu0 0.0
    %1853 = vmatprep.subr.mxu0 0.0
    %1854 = vmatpush2.msra.mxu0 0.0
    %1855 = vmatprep.subr.mxu0 0.0
    %1856 = vmatpush2.msra.mxu0 0.0
    %1857 = vmatprep.subr.mxu0 0.0
    %1858 = vmatpush2.msra.mxu0 0.0
    %1859 = vmatprep.subr.mxu0 0.0
    %1860 = vmatpush2.msra.mxu0 0.0
    %1861 = vmatprep.subr.mxu0 0.0
    %1862 = vmatpush2.msra.mxu0 0.0
    %1863 = vmatprep.mubr.f32.mxu0 0.0
    %1864 = vmatmul.mubr.f32.gmra.mxu0 %v1797
    %v1865 = vpop.f32.mrf.mxu0
    %v1866 = vadd.f32 %v1795, %v1865
    %v1867 = vpop.f32.mrf.mxu0
    %1868 = vdwg.mxu0
    %v1869 = vadd.f32 %v1170, %v1866
    %v1870 = vsel %vm1152, %v1869, 0.0
    %1871 = vadd.xlane.f32.xlu0 %v1870
    %v1872 = vpop.xlane.xlu0 %1871
    %v1873 = vmul.f32 %v1872, %v1156
    %v1874 = vsub.f32 %v1869, %v1873
    %v1875 = vmul.f32 %v1874, %v1874
    %v1876 = vsel %vm1152, %v1875, 0.0
    %1877 = vadd.xlane.f32.xlu0 %v1876
    %v1878 = vpop.xlane.xlu0 %1877
    %v1879 = vmul.f32 %v1878, %v1156
    %v1880 = vadd.f32 %v1879, 1e-05
    %v1881 = vrsqrt.pop %v1880
    %v1882 = vmul.f32 %v1874, %v1881
    %v1883 = vld [vmem:[#allocation3 + $0x620] ss:$0 sm:$0xff]
    %v1884 = vmul.f32 %v1882, %v1883
    %v1885 = vld [vmem:[#allocation3 + $0x610] ss:$0 sm:$0xff]
    %v1886 = vadd.f32 %v1884, %v1885
    %v1887 = vld [vmem:[#allocation3 + $0x520] sm:$0xff]
    %v1888 = vld [vmem:[#allocation3 + $0x530] sm:$0xff]
    %v1889 = vld [vmem:[#allocation3 + $0x540] sm:$0xff]
    %v1890 = vld [vmem:[#allocation3 + $0x550] sm:$0xff]
    %v1891 = vld [vmem:[#allocation3 + $0x510] ss:$0 sm:$0xff]
    %v1893 = vsel %vm487, %v1886, 0
    %1895 = vmatprep.subr.mxu0 0.0
    %1896 = vmatpush1.msra.mxu0 0.0
    %1897 = vmatprep.subr.mxu0 0.0
    %1898 = vmatpush1.msra.mxu0 0.0
    %1899 = vmatprep.subr.mxu0 0.0
    %1900 = vmatpush1.msra.mxu0 0.0
    %1901 = vmatprep.subr.mxu0 0.0
    %1902 = vmatpush1.msra.mxu0 0.0
    %1903 = vmatprep.subr.mxu0 0.0
    %1904 = vmatpush1.msra.mxu0 0.0
    %1905 = vmatprep.subr.mxu0 0.0
    %1906 = vmatpush1.msra.mxu0 0.0
    %1907 = vmatprep.subr.mxu0 0.0
    %1908 = vmatpush1.msra.mxu0 0.0
    %1909 = vmatprep.subr.mxu0 0.0
    %1910 = vmatpush1.msra.mxu0 0.0
    %1911 = vmatprep.subr.mxu0 0.0
    %1912 = vmatpush1.msra.mxu0 0.0
    %1913 = vmatprep.subr.mxu0 0.0
    %1914 = vmatpush1.msra.mxu0 0.0
    %1915 = vmatprep.subr.mxu0 0.0
    %1916 = vmatpush1.msra.mxu0 0.0
    %1917 = vmatprep.subr.mxu0 0.0
    %1918 = vmatpush1.msra.mxu0 0.0
    %1919 = vmatprep.subr.mxu0 0.0
    %1920 = vmatpush1.msra.mxu0 %v1890
    %1921 = vmatprep.subr.mxu0 0.0
    %1922 = vmatpush1.msra.mxu0 %v1889
    %1923 = vmatprep.subr.mxu0 0.0
    %1924 = vmatpush1.msra.mxu0 %v1888
    %1925 = vmatprep.subr.mxu0 0.0
    %1926 = vmatpush1.msra.mxu0 %v1887
    %1927 = vmatprep.subr.mxu0 0.0
    %1928 = vmatpush2.msra.mxu0 0.0
    %1929 = vmatprep.subr.mxu0 0.0
    %1930 = vmatpush2.msra.mxu0 0.0
    %1931 = vmatprep.subr.mxu0 0.0
    %1932 = vmatpush2.msra.mxu0 0.0
    %1933 = vmatprep.subr.mxu0 0.0
    %1934 = vmatpush2.msra.mxu0 0.0
    %1935 = vmatprep.subr.mxu0 0.0
    %1936 = vmatpush2.msra.mxu0 0.0
    %1937 = vmatprep.subr.mxu0 0.0
    %1938 = vmatpush2.msra.mxu0 0.0
    %1939 = vmatprep.subr.mxu0 0.0
    %1940 = vmatpush2.msra.mxu0 0.0
    %1941 = vmatprep.subr.mxu0 0.0
    %1942 = vmatpush2.msra.mxu0 0.0
    %1943 = vmatprep.subr.mxu0 0.0
    %1944 = vmatpush2.msra.mxu0 0.0
    %1945 = vmatprep.subr.mxu0 0.0
    %1946 = vmatpush2.msra.mxu0 0.0
    %1947 = vmatprep.subr.mxu0 0.0
    %1948 = vmatpush2.msra.mxu0 0.0
    %1949 = vmatprep.subr.mxu0 0.0
    %1950 = vmatpush2.msra.mxu0 0.0
    %1951 = vmatprep.subr.mxu0 0.0
    %1952 = vmatpush2.msra.mxu0 0.0
    %1953 = vmatprep.subr.mxu0 0.0
    %1954 = vmatpush2.msra.mxu0 0.0
    %1955 = vmatprep.subr.mxu0 0.0
    %1956 = vmatpush2.msra.mxu0 0.0
    %1957 = vmatprep.subr.mxu0 0.0
    %1958 = vmatpush2.msra.mxu0 0.0
    %1959 = vmatprep.mubr.f32.mxu0 0.0
    %1960 = vmatmul.mubr.f32.gmra.mxu0 %v1893
    %v1961 = vpop.f32.mrf.mxu0
    %v1962 = vadd.f32 %v1891, %v1961
    %v1963 = vpop.f32.mrf.mxu0
    %1964 = vdwg.mxu0
    %v1965 = vmax.f32 %v1962, 0.0
    %v1966 = vld [vmem:[#allocation3 + $0x570] sm:$0xff]
    %v1967 = vld [vmem:[#allocation3 + $0x580] sm:$0xff]
    %v1968 = vld [vmem:[#allocation3 + $0x590] sm:$0xff]
    %v1969 = vld [vmem:[#allocation3 + $0x5a0] sm:$0xff]
    %v1970 = vld [vmem:[#allocation3 + $0x5b0] sm:$0xff]
    %v1971 = vld [vmem:[#allocation3 + $0x5c0] sm:$0xff]
    %v1972 = vld [vmem:[#allocation3 + $0x5d0] sm:$0xff]
    %v1973 = vld [vmem:[#allocation3 + $0x5e0] sm:$0xff]
    %v1974 = vld [vmem:[#allocation3 + $0x560] ss:$0 sm:$0xff]
    %vm1975 = vcmask 523264
    %v1977 = vsel %vm1975, %v1965, 0
    %1979 = vmatprep.subr.mxu0 0.0
    %1980 = vmatpush1.msra.mxu0 0.0
    %1981 = vmatprep.subr.mxu0 0.0
    %1982 = vmatpush1.msra.mxu0 0.0
    %1983 = vmatprep.subr.mxu0 0.0
    %1984 = vmatpush1.msra.mxu0 0.0
    %1985 = vmatprep.subr.mxu0 0.0
    %1986 = vmatpush1.msra.mxu0 0.0
    %1987 = vmatprep.subr.mxu0 0.0
    %1988 = vmatpush1.msra.mxu0 0.0
    %1989 = vmatprep.subr.mxu0 0.0
    %1990 = vmatpush1.msra.mxu0 0.0
    %1991 = vmatprep.subr.mxu0 0.0
    %1992 = vmatpush1.msra.mxu0 0.0
    %1993 = vmatprep.subr.mxu0 0.0
    %1994 = vmatpush1.msra.mxu0 0.0
    %1995 = vmatprep.subr.mxu0 0.0
    %1996 = vmatpush1.msra.mxu0 %v1973
    %1997 = vmatprep.subr.mxu0 0.0
    %1998 = vmatpush1.msra.mxu0 %v1972
    %1999 = vmatprep.subr.mxu0 0.0
    %2000 = vmatpush1.msra.mxu0 %v1971
    %2001 = vmatprep.subr.mxu0 0.0
    %2002 = vmatpush1.msra.mxu0 %v1970
    %2003 = vmatprep.subr.mxu0 0.0
    %2004 = vmatpush1.msra.mxu0 %v1969
    %2005 = vmatprep.subr.mxu0 0.0
    %2006 = vmatpush1.msra.mxu0 %v1968
    %2007 = vmatprep.subr.mxu0 0.0
    %2008 = vmatpush1.msra.mxu0 %v1967
    %2009 = vmatprep.subr.mxu0 0.0
    %2010 = vmatpush1.msra.mxu0 %v1966
    %2011 = vmatprep.subr.mxu0 0.0
    %2012 = vmatpush2.msra.mxu0 0.0
    %2013 = vmatprep.subr.mxu0 0.0
    %2014 = vmatpush2.msra.mxu0 0.0
    %2015 = vmatprep.subr.mxu0 0.0
    %2016 = vmatpush2.msra.mxu0 0.0
    %2017 = vmatprep.subr.mxu0 0.0
    %2018 = vmatpush2.msra.mxu0 0.0
    %2019 = vmatprep.subr.mxu0 0.0
    %2020 = vmatpush2.msra.mxu0 0.0
    %2021 = vmatprep.subr.mxu0 0.0
    %2022 = vmatpush2.msra.mxu0 0.0
    %2023 = vmatprep.subr.mxu0 0.0
    %2024 = vmatpush2.msra.mxu0 0.0
    %2025 = vmatprep.subr.mxu0 0.0
    %2026 = vmatpush2.msra.mxu0 0.0
    %2027 = vmatprep.subr.mxu0 0.0
    %2028 = vmatpush2.msra.mxu0 0.0
    %2029 = vmatprep.subr.mxu0 0.0
    %2030 = vmatpush2.msra.mxu0 0.0
    %2031 = vmatprep.subr.mxu0 0.0
    %2032 = vmatpush2.msra.mxu0 0.0
    %2033 = vmatprep.subr.mxu0 0.0
    %2034 = vmatpush2.msra.mxu0 0.0
    %2035 = vmatprep.subr.mxu0 0.0
    %2036 = vmatpush2.msra.mxu0 0.0
    %2037 = vmatprep.subr.mxu0 0.0
    %2038 = vmatpush2.msra.mxu0 0.0
    %2039 = vmatprep.subr.mxu0 0.0
    %2040 = vmatpush2.msra.mxu0 0.0
    %2041 = vmatprep.subr.mxu0 0.0
    %2042 = vmatpush2.msra.mxu0 0.0
    %2043 = vmatprep.mubr.f32.mxu0 0.0
    %2044 = vmatmul.mubr.f32.gmra.mxu0 %v1977
    %v2045 = vpop.f32.mrf.mxu0
    %v2046 = vadd.f32 %v1974, %v2045
    %v2047 = vpop.f32.mrf.mxu0
    %2048 = vdwg.mxu0
    %v2049 = vadd.f32 %v1886, %v2046
    %v2050 = vsel %vm1152, %v2049, 0.0
    %2051 = vadd.xlane.f32.xlu0 %v2050
    %v2052 = vpop.xlane.xlu0 %2051
    %v2053 = vmul.f32 %v2052, %v1156
    %v2054 = vsub.f32 %v2049, %v2053
    %v2055 = vmul.f32 %v2054, %v2054
    %v2056 = vsel %vm1152, %v2055, 0.0
    %2057 = vadd.xlane.f32.xlu0 %v2056
    %v2058 = vpop.xlane.xlu0 %2057
    %v2059 = vmul.f32 %v2058, %v1156
    %v2060 = vadd.f32 %v2059, 1e-05
    %v2061 = vrsqrt.pop %v2060
    %v2062 = vmul.f32 %v2054, %v2061
    %v2063 = vld [vmem:[#allocation3 + $0x640] ss:$0 sm:$0xff]
    %v2064 = vmul.f32 %v2062, %v2063
    %v2065 = vld [vmem:[#allocation3 + $0x630] ss:$0 sm:$0xff]
    %v2066 = vadd.f32 %v2064, %v2065
    %v2067 = vadd.f32 %v2066, %v477
    %v2068 = vld [vmem:[#allocation3 + $0x450] sm:$0xff]
    %v2069 = vld [vmem:[#allocation3 + $0x460] sm:$0xff]
    %v2070 = vld [vmem:[#allocation3 + $0x470] sm:$0xff]
    %v2071 = vld [vmem:[#allocation3 + $0x480] sm:$0xff]
    %v2072 = vld [vmem:[#allocation3 + $0x440] ss:$0 sm:$0xff]
    %2073 = vmatprep.subr.mxu0 0.0
    %2074 = vmatpush1.msra.mxu0 0.0
    %2075 = vmatprep.subr.mxu0 0.0
    %2076 = vmatpush1.msra.mxu0 0.0
    %2077 = vmatprep.subr.mxu0 0.0
    %2078 = vmatpush1.msra.mxu0 0.0
    %2079 = vmatprep.subr.mxu0 0.0
    %2080 = vmatpush1.msra.mxu0 0.0
    %2081 = vmatprep.subr.mxu0 0.0
    %2082 = vmatpush1.msra.mxu0 0.0
    %2083 = vmatprep.subr.mxu0 0.0
    %2084 = vmatpush1.msra.mxu0 0.0
    %2085 = vmatprep.subr.mxu0 0.0
    %2086 = vmatpush1.msra.mxu0 0.0
    %2087 = vmatprep.subr.mxu0 0.0
    %2088 = vmatpush1.msra.mxu0 0.0
    %2089 = vmatprep.subr.mxu0 0.0
    %2090 = vmatpush1.msra.mxu0 0.0
    %2091 = vmatprep.subr.mxu0 0.0
    %2092 = vmatpush1.msra.mxu0 0.0
    %2093 = vmatprep.subr.mxu0 0.0
    %2094 = vmatpush1.msra.mxu0 0.0
    %2095 = vmatprep.subr.mxu0 0.0
    %2096 = vmatpush1.msra.mxu0 0.0
    %2097 = vmatprep.subr.mxu0 0.0
    %2098 = vmatpush1.msra.mxu0 %v2071
    %2099 = vmatprep.subr.mxu0 0.0
    %2100 = vmatpush1.msra.mxu0 %v2070
    %2101 = vmatprep.subr.mxu0 0.0
    %2102 = vmatpush1.msra.mxu0 %v2069
    %2103 = vmatprep.subr.mxu0 0.0
    %2104 = vmatpush1.msra.mxu0 %v2068
    %2105 = vmatprep.subr.mxu0 0.0
    %2106 = vmatpush2.msra.mxu0 0.0
    %2107 = vmatprep.subr.mxu0 0.0
    %2108 = vmatpush2.msra.mxu0 0.0
    %2109 = vmatprep.subr.mxu0 0.0
    %2110 = vmatpush2.msra.mxu0 0.0
    %2111 = vmatprep.subr.mxu0 0.0
    %2112 = vmatpush2.msra.mxu0 0.0
    %2113 = vmatprep.subr.mxu0 0.0
    %2114 = vmatpush2.msra.mxu0 0.0
    %2115 = vmatprep.subr.mxu0 0.0
    %2116 = vmatpush2.msra.mxu0 0.0
    %2117 = vmatprep.subr.mxu0 0.0
    %2118 = vmatpush2.msra.mxu0 0.0
    %2119 = vmatprep.subr.mxu0 0.0
    %2120 = vmatpush2.msra.mxu0 0.0
    %2121 = vmatprep.subr.mxu0 0.0
    %2122 = vmatpush2.msra.mxu0 0.0
    %2123 = vmatprep.subr.mxu0 0.0
    %2124 = vmatpush2.msra.mxu0 0.0
    %2125 = vmatprep.subr.mxu0 0.0
    %2126 = vmatpush2.msra.mxu0 0.0
    %2127 = vmatprep.subr.mxu0 0.0
    %2128 = vmatpush2.msra.mxu0 0.0
    %2129 = vmatprep.subr.mxu0 0.0
    %2130 = vmatpush2.msra.mxu0 0.0
    %2131 = vmatprep.subr.mxu0 0.0
    %2132 = vmatpush2.msra.mxu0 0.0
    %2133 = vmatprep.subr.mxu0 0.0
    %2134 = vmatpush2.msra.mxu0 0.0
    %2135 = vmatprep.subr.mxu0 0.0
    %2136 = vmatpush2.msra.mxu0 0.0
    %2137 = vmatprep.mubr.f32.mxu0 0.0
    %2138 = vmatmul.mubr.f32.gmra.mxu0 %v1273
    %v2139 = vpop.f32.mrf.mxu0
    %v2140 = vadd.f32 %v2072, %v2139
    %v2141 = vpop.f32.mrf.mxu0
    %2142 = vmatprep.mubr.f32.mxu0 0.0
    %2143 = vmatmul.mubr.f32.gmra.mxu0 %v1276
    %v2144 = vpop.f32.mrf.mxu0
    %v2145 = vadd.f32 %v2072, %v2144
    %v2146 = vpop.f32.mrf.mxu0
    %2147 = vdwg.mxu0
    %2152 = vrot.lane.b32.xlu0 %v2068, 112
    %v2153 = vpop.permute.xlu0 %2152
    %2154 = vrot.lane.b32.xlu0 %v2069, 112
    %v2155 = vpop.permute.xlu0 %2154
    %2156 = vrot.lane.b32.xlu0 %v2070, 112
    %v2157 = vpop.permute.xlu0 %2156
    %2158 = vrot.lane.b32.xlu0 %v2071, 112
    %v2159 = vpop.permute.xlu0 %2158
    %2165 = vrot.lane.b32.xlu0 %v2072, 112
    %v2166 = vpop.permute.xlu0 %2165
    %v2169 = vsel %vm487, %v2067, 0
    %2171 = vmatprep.subr.mxu0 0.0
    %2172 = vmatpush1.msra.mxu0 0.0
    %2173 = vmatprep.subr.mxu0 0.0
    %2174 = vmatpush1.msra.mxu0 0.0
    %2175 = vmatprep.subr.mxu0 0.0
    %2176 = vmatpush1.msra.mxu0 0.0
    %2177 = vmatprep.subr.mxu0 0.0
    %2178 = vmatpush1.msra.mxu0 0.0
    %2179 = vmatprep.subr.mxu0 0.0
    %2180 = vmatpush1.msra.mxu0 0.0
    %2181 = vmatprep.subr.mxu0 0.0
    %2182 = vmatpush1.msra.mxu0 0.0
    %2183 = vmatprep.subr.mxu0 0.0
    %2184 = vmatpush1.msra.mxu0 0.0
    %2185 = vmatprep.subr.mxu0 0.0
    %2186 = vmatpush1.msra.mxu0 0.0
    %2187 = vmatprep.subr.mxu0 0.0
    %2188 = vmatpush1.msra.mxu0 0.0
    %2189 = vmatprep.subr.mxu0 0.0
    %2190 = vmatpush1.msra.mxu0 0.0
    %2191 = vmatprep.subr.mxu0 0.0
    %2192 = vmatpush1.msra.mxu0 0.0
    %2193 = vmatprep.subr.mxu0 0.0
    %2194 = vmatpush1.msra.mxu0 0.0
    %2195 = vmatprep.subr.mxu0 0.0
    %2196 = vmatpush1.msra.mxu0 %v2159
    %2197 = vmatprep.subr.mxu0 0.0
    %2198 = vmatpush1.msra.mxu0 %v2157
    %2199 = vmatprep.subr.mxu0 0.0
    %2200 = vmatpush1.msra.mxu0 %v2155
    %2201 = vmatprep.subr.mxu0 0.0
    %2202 = vmatpush1.msra.mxu0 %v2153
    %2203 = vmatprep.subr.mxu0 0.0
    %2204 = vmatpush2.msra.mxu0 0.0
    %2205 = vmatprep.subr.mxu0 0.0
    %2206 = vmatpush2.msra.mxu0 0.0
    %2207 = vmatprep.subr.mxu0 0.0
    %2208 = vmatpush2.msra.mxu0 0.0
    %2209 = vmatprep.subr.mxu0 0.0
    %2210 = vmatpush2.msra.mxu0 0.0
    %2211 = vmatprep.subr.mxu0 0.0
    %2212 = vmatpush2.msra.mxu0 0.0
    %2213 = vmatprep.subr.mxu0 0.0
    %2214 = vmatpush2.msra.mxu0 0.0
    %2215 = vmatprep.subr.mxu0 0.0
    %2216 = vmatpush2.msra.mxu0 0.0
    %2217 = vmatprep.subr.mxu0 0.0
    %2218 = vmatpush2.msra.mxu0 0.0
    %2219 = vmatprep.subr.mxu0 0.0
    %2220 = vmatpush2.msra.mxu0 0.0
    %2221 = vmatprep.subr.mxu0 0.0
    %2222 = vmatpush2.msra.mxu0 0.0
    %2223 = vmatprep.subr.mxu0 0.0
    %2224 = vmatpush2.msra.mxu0 0.0
    %2225 = vmatprep.subr.mxu0 0.0
    %2226 = vmatpush2.msra.mxu0 0.0
    %2227 = vmatprep.subr.mxu0 0.0
    %2228 = vmatpush2.msra.mxu0 0.0
    %2229 = vmatprep.subr.mxu0 0.0
    %2230 = vmatpush2.msra.mxu0 0.0
    %2231 = vmatprep.subr.mxu0 0.0
    %2232 = vmatpush2.msra.mxu0 0.0
    %2233 = vmatprep.subr.mxu0 0.0
    %2234 = vmatpush2.msra.mxu0 0.0
    %2235 = vmatprep.mubr.f32.mxu0 0.0
    %2236 = vmatmul.mubr.f32.gmra.mxu0 %v2169
    %v2237 = vpop.f32.mrf.mxu0
    %v2238 = vadd.f32 %v2166, %v2237
    %v2239 = vpop.f32.mrf.mxu0
    %2240 = vdwg.mxu0
    %2241 = vrot.lane.b32.xlu0 %v2068, 96
    %v2242 = vpop.permute.xlu0 %2241
    %2243 = vrot.lane.b32.xlu0 %v2069, 96
    %v2244 = vpop.permute.xlu0 %2243
    %2245 = vrot.lane.b32.xlu0 %v2070, 96
    %v2246 = vpop.permute.xlu0 %2245
    %2247 = vrot.lane.b32.xlu0 %v2071, 96
    %v2248 = vpop.permute.xlu0 %2247
    %2253 = vrot.lane.b32.xlu0 %v2072, 96
    %v2254 = vpop.permute.xlu0 %2253
    %v2257 = vsel %vm487, %v2066, 0
    %2259 = vmatprep.subr.mxu0 0.0
    %2260 = vmatpush1.msra.mxu0 0.0
    %2261 = vmatprep.subr.mxu0 0.0
    %2262 = vmatpush1.msra.mxu0 0.0
    %2263 = vmatprep.subr.mxu0 0.0
    %2264 = vmatpush1.msra.mxu0 0.0
    %2265 = vmatprep.subr.mxu0 0.0
    %2266 = vmatpush1.msra.mxu0 0.0
    %2267 = vmatprep.subr.mxu0 0.0
    %2268 = vmatpush1.msra.mxu0 0.0
    %2269 = vmatprep.subr.mxu0 0.0
    %2270 = vmatpush1.msra.mxu0 0.0
    %2271 = vmatprep.subr.mxu0 0.0
    %2272 = vmatpush1.msra.mxu0 0.0
    %2273 = vmatprep.subr.mxu0 0.0
    %2274 = vmatpush1.msra.mxu0 0.0
    %2275 = vmatprep.subr.mxu0 0.0
    %2276 = vmatpush1.msra.mxu0 0.0
    %2277 = vmatprep.subr.mxu0 0.0
    %2278 = vmatpush1.msra.mxu0 0.0
    %2279 = vmatprep.subr.mxu0 0.0
    %2280 = vmatpush1.msra.mxu0 0.0
    %2281 = vmatprep.subr.mxu0 0.0
    %2282 = vmatpush1.msra.mxu0 0.0
    %2283 = vmatprep.subr.mxu0 0.0
    %2284 = vmatpush1.msra.mxu0 %v2248
    %2285 = vmatprep.subr.mxu0 0.0
    %2286 = vmatpush1.msra.mxu0 %v2246
    %2287 = vmatprep.subr.mxu0 0.0
    %2288 = vmatpush1.msra.mxu0 %v2244
    %2289 = vmatprep.subr.mxu0 0.0
    %2290 = vmatpush1.msra.mxu0 %v2242
    %2291 = vmatprep.subr.mxu0 0.0
    %2292 = vmatpush2.msra.mxu0 0.0
    %2293 = vmatprep.subr.mxu0 0.0
    %2294 = vmatpush2.msra.mxu0 0.0
    %2295 = vmatprep.subr.mxu0 0.0
    %2296 = vmatpush2.msra.mxu0 0.0
    %2297 = vmatprep.subr.mxu0 0.0
    %2298 = vmatpush2.msra.mxu0 0.0
    %2299 = vmatprep.subr.mxu0 0.0
    %2300 = vmatpush2.msra.mxu0 0.0
    %2301 = vmatprep.subr.mxu0 0.0
    %2302 = vmatpush2.msra.mxu0 0.0
    %2303 = vmatprep.subr.mxu0 0.0
    %2304 = vmatpush2.msra.mxu0 0.0
    %2305 = vmatprep.subr.mxu0 0.0
    %2306 = vmatpush2.msra.mxu0 0.0
    %2307 = vmatprep.subr.mxu0 0.0
    %2308 = vmatpush2.msra.mxu0 0.0
    %2309 = vmatprep.subr.mxu0 0.0
    %2310 = vmatpush2.msra.mxu0 0.0
    %2311 = vmatprep.subr.mxu0 0.0
    %2312 = vmatpush2.msra.mxu0 0.0
    %2313 = vmatprep.subr.mxu0 0.0
    %2314 = vmatpush2.msra.mxu0 0.0
    %2315 = vmatprep.subr.mxu0 0.0
    %2316 = vmatpush2.msra.mxu0 0.0
    %2317 = vmatprep.subr.mxu0 0.0
    %2318 = vmatpush2.msra.mxu0 0.0
    %2319 = vmatprep.subr.mxu0 0.0
    %2320 = vmatpush2.msra.mxu0 0.0
    %2321 = vmatprep.subr.mxu0 0.0
    %2322 = vmatpush2.msra.mxu0 0.0
    %2323 = vmatprep.mubr.f32.mxu0 0.0
    %2324 = vmatmul.mubr.f32.gmra.mxu0 %v2257
    %v2325 = vpop.f32.mrf.mxu0
    %v2326 = vadd.f32 %v2254, %v2325
    %v2327 = vpop.f32.mrf.mxu0
    %2328 = vdwg.mxu0
    %v2330 = vsel %vm1449, %v2140, 0
    %v2333 = vsel %vm1449, %v2145, 0
    %v2336 = vsel %vm1449, %v2238, 0
    %2338 = vmatprep.subr.mxu0 0.0
    %2339 = vmatpush1.xpose.msra.mxu0 0.0
    %2340 = vmatprep.subr.mxu0 0.0
    %2341 = vmatpush1.xpose.msra.mxu0 0.0
    %2342 = vmatprep.subr.mxu0 0.0
    %2343 = vmatpush1.xpose.msra.mxu0 0.0
    %2344 = vmatprep.subr.mxu0 0.0
    %2345 = vmatpush1.xpose.msra.mxu0 0.0
    %2346 = vmatprep.subr.mxu0 0.0
    %2347 = vmatpush1.xpose.msra.mxu0 0.0
    %2348 = vmatprep.subr.mxu0 0.0
    %2349 = vmatpush1.xpose.msra.mxu0 0.0
    %2350 = vmatprep.subr.mxu0 0.0
    %2351 = vmatpush1.xpose.msra.mxu0 0.0
    %2352 = vmatprep.subr.mxu0 0.0
    %2353 = vmatpush1.xpose.msra.mxu0 0.0
    %2354 = vmatprep.subr.mxu0 0.0
    %2355 = vmatpush1.xpose.msra.mxu0 0.0
    %2356 = vmatprep.subr.mxu0 0.0
    %2357 = vmatpush1.xpose.msra.mxu0 0.0
    %2358 = vmatprep.subr.mxu0 0.0
    %2359 = vmatpush1.xpose.msra.mxu0 0.0
    %2360 = vmatprep.subr.mxu0 0.0
    %2361 = vmatpush1.xpose.msra.mxu0 0.0
    %2362 = vmatprep.subr.mxu0 0.0
    %2363 = vmatpush1.xpose.msra.mxu0 0.0
    %2364 = vmatprep.subr.mxu0 0.0
    %2365 = vmatpush1.xpose.msra.mxu0 0.0
    %2366 = vmatprep.subr.mxu0 0.0
    %2367 = vmatpush1.xpose.msra.mxu0 0.0
    %2368 = vmatprep.subr.mxu0 0.0
    %2369 = vmatpush1.xpose.msra.mxu0 %v2336
    %2370 = vmatprep.subr.mxu0 0.0
    %2371 = vmatpush2.xpose.msra.mxu0 0.0
    %2372 = vmatprep.subr.mxu0 0.0
    %2373 = vmatpush2.xpose.msra.mxu0 0.0
    %2374 = vmatprep.subr.mxu0 0.0
    %2375 = vmatpush2.xpose.msra.mxu0 0.0
    %2376 = vmatprep.subr.mxu0 0.0
    %2377 = vmatpush2.xpose.msra.mxu0 0.0
    %2378 = vmatprep.subr.mxu0 0.0
    %2379 = vmatpush2.xpose.msra.mxu0 0.0
    %2380 = vmatprep.subr.mxu0 0.0
    %2381 = vmatpush2.xpose.msra.mxu0 0.0
    %2382 = vmatprep.subr.mxu0 0.0
    %2383 = vmatpush2.xpose.msra.mxu0 0.0
    %2384 = vmatprep.subr.mxu0 0.0
    %2385 = vmatpush2.xpose.msra.mxu0 0.0
    %2386 = vmatprep.subr.mxu0 0.0
    %2387 = vmatpush2.xpose.msra.mxu0 0.0
    %2388 = vmatprep.subr.mxu0 0.0
    %2389 = vmatpush2.xpose.msra.mxu0 0.0
    %2390 = vmatprep.subr.mxu0 0.0
    %2391 = vmatpush2.xpose.msra.mxu0 0.0
    %2392 = vmatprep.subr.mxu0 0.0
    %2393 = vmatpush2.xpose.msra.mxu0 0.0
    %2394 = vmatprep.subr.mxu0 0.0
    %2395 = vmatpush2.xpose.msra.mxu0 0.0
    %2396 = vmatprep.subr.mxu0 0.0
    %2397 = vmatpush2.xpose.msra.mxu0 0.0
    %2398 = vmatprep.subr.mxu0 0.0
    %2399 = vmatpush2.xpose.msra.mxu0 0.0
    %2400 = vmatprep.subr.mxu0 0.0
    %2401 = vmatpush2.xpose.msra.mxu0 0.0
    %2402 = vmatprep.mubr.f32.mxu0 0.0
    %2403 = vmatmul.mubr.f32.gmra.mxu0 %v2330
    %v2404 = vpop.f32.mrf.mxu0
    %v2405 = vadd.f32 0.0, %v2404
    %v2406 = vpop.f32.mrf.mxu0
    %2407 = vmatprep.mubr.f32.mxu0 0.0
    %2408 = vmatmul.mubr.f32.gmra.mxu0 %v2333
    %v2409 = vpop.f32.mrf.mxu0
    %v2410 = vadd.f32 0.0, %v2409
    %v2411 = vpop.f32.mrf.mxu0
    %2412 = vdwg.mxu0
    %v2413 = vsel %vm825, %v2405, -inf
    %2414 = vmax.xlane.f32.xlu0 %v2413
    %v2415 = vpop.xlane.xlu0 %2414
    %v2416 = vsel %vm825, %v2410, -inf
    %2417 = vmax.xlane.f32.xlu0 %v2416
    %v2418 = vpop.xlane.xlu0 %2417
    %v2419 = vsub.f32 %v2405, %v2415
    %v2420 = vsub.f32 %v2410, %v2418
    %v2421 = vmul.f32 %v2419, 1.442695
    %v2422 = vpow.pop %v2421
    %v2423 = vmul.f32 %v2420, 1.442695
    %v2424 = vpow.pop %v2423
    %v2425 = vsel %vm825, %v2422, 0.0
    %2426 = vadd.xlane.f32.xlu0 %v2425
    %v2427 = vpop.xlane.xlu0 %2426
    %v2428 = vsel %vm825, %v2424, 0.0
    %2429 = vadd.xlane.f32.xlu0 %v2428
    %v2430 = vpop.xlane.xlu0 %2429
    %v2431 = vrcp.pop %v2427
    %v2432 = vrcp.pop %v2430
    %v2433 = vmul.f32 %v2422, %v2431
    %v2434 = vmul.f32 %v2424, %v2432
    %v2436 = vsel %vm825, %v2433, 0
    %v2439 = vsel %vm825, %v2434, 0
    %v2442 = vsel %vm829, %v2326, 0
    %2444 = vmatprep.subr.mxu0 0.0
    %2445 = vmatpush1.msra.mxu0 0.0
    %2446 = vmatprep.subr.mxu0 0.0
    %2447 = vmatpush1.msra.mxu0 0.0
    %2448 = vmatprep.subr.mxu0 0.0
    %2449 = vmatpush1.msra.mxu0 0.0
    %2450 = vmatprep.subr.mxu0 0.0
    %2451 = vmatpush1.msra.mxu0 0.0
    %2452 = vmatprep.subr.mxu0 0.0
    %2453 = vmatpush1.msra.mxu0 0.0
    %2454 = vmatprep.subr.mxu0 0.0
    %2455 = vmatpush1.msra.mxu0 0.0
    %2456 = vmatprep.subr.mxu0 0.0
    %2457 = vmatpush1.msra.mxu0 0.0
    %2458 = vmatprep.subr.mxu0 0.0
    %2459 = vmatpush1.msra.mxu0 0.0
    %2460 = vmatprep.subr.mxu0 0.0
    %2461 = vmatpush1.msra.mxu0 0.0
    %2462 = vmatprep.subr.mxu0 0.0
    %2463 = vmatpush1.msra.mxu0 0.0
    %2464 = vmatprep.subr.mxu0 0.0
    %2465 = vmatpush1.msra.mxu0 0.0
    %2466 = vmatprep.subr.mxu0 0.0
    %2467 = vmatpush1.msra.mxu0 0.0
    %2468 = vmatprep.subr.mxu0 0.0
    %2469 = vmatpush1.msra.mxu0 0.0
    %2470 = vmatprep.subr.mxu0 0.0
    %2471 = vmatpush1.msra.mxu0 0.0
    %2472 = vmatprep.subr.mxu0 0.0
    %2473 = vmatpush1.msra.mxu0 0.0
    %2474 = vmatprep.subr.mxu0 0.0
    %2475 = vmatpush1.msra.mxu0 %v2442
    %2476 = vmatprep.subr.mxu0 0.0
    %2477 = vmatpush2.msra.mxu0 0.0
    %2478 = vmatprep.subr.mxu0 0.0
    %2479 = vmatpush2.msra.mxu0 0.0
    %2480 = vmatprep.subr.mxu0 0.0
    %2481 = vmatpush2.msra.mxu0 0.0
    %2482 = vmatprep.subr.mxu0 0.0
    %2483 = vmatpush2.msra.mxu0 0.0
    %2484 = vmatprep.subr.mxu0 0.0
    %2485 = vmatpush2.msra.mxu0 0.0
    %2486 = vmatprep.subr.mxu0 0.0
    %2487 = vmatpush2.msra.mxu0 0.0
    %2488 = vmatprep.subr.mxu0 0.0
    %2489 = vmatpush2.msra.mxu0 0.0
    %2490 = vmatprep.subr.mxu0 0.0
    %2491 = vmatpush2.msra.mxu0 0.0
    %2492 = vmatprep.subr.mxu0 0.0
    %2493 = vmatpush2.msra.mxu0 0.0
    %2494 = vmatprep.subr.mxu0 0.0
    %2495 = vmatpush2.msra.mxu0 0.0
    %2496 = vmatprep.subr.mxu0 0.0
    %2497 = vmatpush2.msra.mxu0 0.0
    %2498 = vmatprep.subr.mxu0 0.0
    %2499 = vmatpush2.msra.mxu0 0.0
    %2500 = vmatprep.subr.mxu0 0.0
    %2501 = vmatpush2.msra.mxu0 0.0
    %2502 = vmatprep.subr.mxu0 0.0
    %2503 = vmatpush2.msra.mxu0 0.0
    %2504 = vmatprep.subr.mxu0 0.0
    %2505 = vmatpush2.msra.mxu0 0.0
    %2506 = vmatprep.subr.mxu0 0.0
    %2507 = vmatpush2.msra.mxu0 0.0
    %2508 = vmatprep.mubr.f32.mxu0 0.0
    %2509 = vmatmul.mubr.f32.gmra.mxu0 %v2436
    %v2510 = vpop.f32.mrf.mxu0
    %v2511 = vadd.f32 0.0, %v2510
    %v2512 = vpop.f32.mrf.mxu0
    %2513 = vmatprep.mubr.f32.mxu0 0.0
    %2514 = vmatmul.mubr.f32.gmra.mxu0 %v2439
    %v2515 = vpop.f32.mrf.mxu0
    %v2516 = vadd.f32 0.0, %v2515
    %v2517 = vpop.f32.mrf.mxu0
    %2518 = vdwg.mxu0
    %2519 = vrot.lane.b32.xlu0 %v2140, 120
    %v2520 = vpop.permute.xlu0 %2519
    %2521 = vrot.lane.b32.xlu0 %v2145, 120
    %v2522 = vpop.permute.xlu0 %2521
    %2523 = vrot.lane.b32.xlu0 %v2238, 120
    %v2524 = vpop.permute.xlu0 %2523
    %v2525 = vsel %vm1449, %v2520, 0
    %v2527 = vsel %vm1449, %v2522, 0
    %v2529 = vsel %vm1449, %v2524, 0
    %2531 = vmatprep.subr.mxu0 0.0
    %2532 = vmatpush1.xpose.msra.mxu0 0.0
    %2533 = vmatprep.subr.mxu0 0.0
    %2534 = vmatpush1.xpose.msra.mxu0 0.0
    %2535 = vmatprep.subr.mxu0 0.0
    %2536 = vmatpush1.xpose.msra.mxu0 0.0
    %2537 = vmatprep.subr.mxu0 0.0
    %2538 = vmatpush1.xpose.msra.mxu0 0.0
    %2539 = vmatprep.subr.mxu0 0.0
    %2540 = vmatpush1.xpose.msra.mxu0 0.0
    %2541 = vmatprep.subr.mxu0 0.0
    %2542 = vmatpush1.xpose.msra.mxu0 0.0
    %2543 = vmatprep.subr.mxu0 0.0
    %2544 = vmatpush1.xpose.msra.mxu0 0.0
    %2545 = vmatprep.subr.mxu0 0.0
    %2546 = vmatpush1.xpose.msra.mxu0 0.0
    %2547 = vmatprep.subr.mxu0 0.0
    %2548 = vmatpush1.xpose.msra.mxu0 0.0
    %2549 = vmatprep.subr.mxu0 0.0
    %2550 = vmatpush1.xpose.msra.mxu0 0.0
    %2551 = vmatprep.subr.mxu0 0.0
    %2552 = vmatpush1.xpose.msra.mxu0 0.0
    %2553 = vmatprep.subr.mxu0 0.0
    %2554 = vmatpush1.xpose.msra.mxu0 0.0
    %2555 = vmatprep.subr.mxu0 0.0
    %2556 = vmatpush1.xpose.msra.mxu0 0.0
    %2557 = vmatprep.subr.mxu0 0.0
    %2558 = vmatpush1.xpose.msra.mxu0 0.0
    %2559 = vmatprep.subr.mxu0 0.0
    %2560 = vmatpush1.xpose.msra.mxu0 0.0
    %2561 = vmatprep.subr.mxu0 0.0
    %2562 = vmatpush1.xpose.msra.mxu0 %v2529
    %2563 = vmatprep.subr.mxu0 0.0
    %2564 = vmatpush2.xpose.msra.mxu0 0.0
    %2565 = vmatprep.subr.mxu0 0.0
    %2566 = vmatpush2.xpose.msra.mxu0 0.0
    %2567 = vmatprep.subr.mxu0 0.0
    %2568 = vmatpush2.xpose.msra.mxu0 0.0
    %2569 = vmatprep.subr.mxu0 0.0
    %2570 = vmatpush2.xpose.msra.mxu0 0.0
    %2571 = vmatprep.subr.mxu0 0.0
    %2572 = vmatpush2.xpose.msra.mxu0 0.0
    %2573 = vmatprep.subr.mxu0 0.0
    %2574 = vmatpush2.xpose.msra.mxu0 0.0
    %2575 = vmatprep.subr.mxu0 0.0
    %2576 = vmatpush2.xpose.msra.mxu0 0.0
    %2577 = vmatprep.subr.mxu0 0.0
    %2578 = vmatpush2.xpose.msra.mxu0 0.0
    %2579 = vmatprep.subr.mxu0 0.0
    %2580 = vmatpush2.xpose.msra.mxu0 0.0
    %2581 = vmatprep.subr.mxu0 0.0
    %2582 = vmatpush2.xpose.msra.mxu0 0.0
    %2583 = vmatprep.subr.mxu0 0.0
    %2584 = vmatpush2.xpose.msra.mxu0 0.0
    %2585 = vmatprep.subr.mxu0 0.0
    %2586 = vmatpush2.xpose.msra.mxu0 0.0
    %2587 = vmatprep.subr.mxu0 0.0
    %2588 = vmatpush2.xpose.msra.mxu0 0.0
    %2589 = vmatprep.subr.mxu0 0.0
    %2590 = vmatpush2.xpose.msra.mxu0 0.0
    %2591 = vmatprep.subr.mxu0 0.0
    %2592 = vmatpush2.xpose.msra.mxu0 0.0
    %2593 = vmatprep.subr.mxu0 0.0
    %2594 = vmatpush2.xpose.msra.mxu0 0.0
    %2595 = vmatprep.mubr.f32.mxu0 0.0
    %2596 = vmatmul.mubr.f32.gmra.mxu0 %v2525
    %v2597 = vpop.f32.mrf.mxu0
    %v2598 = vadd.f32 0.0, %v2597
    %v2599 = vpop.f32.mrf.mxu0
    %2600 = vmatprep.mubr.f32.mxu0 0.0
    %2601 = vmatmul.mubr.f32.gmra.mxu0 %v2527
    %v2602 = vpop.f32.mrf.mxu0
    %v2603 = vadd.f32 0.0, %v2602
    %v2604 = vpop.f32.mrf.mxu0
    %2605 = vdwg.mxu0
    %v2606 = vsel %vm825, %v2598, -inf
    %2607 = vmax.xlane.f32.xlu0 %v2606
    %v2608 = vpop.xlane.xlu0 %2607
    %v2609 = vsel %vm825, %v2603, -inf
    %2610 = vmax.xlane.f32.xlu0 %v2609
    %v2611 = vpop.xlane.xlu0 %2610
    %v2612 = vsub.f32 %v2598, %v2608
    %v2613 = vsub.f32 %v2603, %v2611
    %v2614 = vmul.f32 %v2612, 1.442695
    %v2615 = vpow.pop %v2614
    %v2616 = vmul.f32 %v2613, 1.442695
    %v2617 = vpow.pop %v2616
    %v2618 = vsel %vm825, %v2615, 0.0
    %2619 = vadd.xlane.f32.xlu0 %v2618
    %v2620 = vpop.xlane.xlu0 %2619
    %v2621 = vsel %vm825, %v2617, 0.0
    %2622 = vadd.xlane.f32.xlu0 %v2621
    %v2623 = vpop.xlane.xlu0 %2622
    %v2624 = vrcp.pop %v2620
    %v2625 = vrcp.pop %v2623
    %v2626 = vmul.f32 %v2615, %v2624
    %v2627 = vmul.f32 %v2617, %v2625
    %2628 = vrot.lane.b32.xlu0 %v2326, 120
    %v2629 = vpop.permute.xlu0 %2628
    %v2631 = vsel %vm825, %v2626, 0
    %v2634 = vsel %vm825, %v2627, 0
    %v2636 = vsel %vm829, %v2629, 0
    %2638 = vmatprep.subr.mxu0 0.0
    %2639 = vmatpush1.msra.mxu0 0.0
    %2640 = vmatprep.subr.mxu0 0.0
    %2641 = vmatpush1.msra.mxu0 0.0
    %2642 = vmatprep.subr.mxu0 0.0
    %2643 = vmatpush1.msra.mxu0 0.0
    %2644 = vmatprep.subr.mxu0 0.0
    %2645 = vmatpush1.msra.mxu0 0.0
    %2646 = vmatprep.subr.mxu0 0.0
    %2647 = vmatpush1.msra.mxu0 0.0
    %2648 = vmatprep.subr.mxu0 0.0
    %2649 = vmatpush1.msra.mxu0 0.0
    %2650 = vmatprep.subr.mxu0 0.0
    %2651 = vmatpush1.msra.mxu0 0.0
    %2652 = vmatprep.subr.mxu0 0.0
    %2653 = vmatpush1.msra.mxu0 0.0
    %2654 = vmatprep.subr.mxu0 0.0
    %2655 = vmatpush1.msra.mxu0 0.0
    %2656 = vmatprep.subr.mxu0 0.0
    %2657 = vmatpush1.msra.mxu0 0.0
    %2658 = vmatprep.subr.mxu0 0.0
    %2659 = vmatpush1.msra.mxu0 0.0
    %2660 = vmatprep.subr.mxu0 0.0
    %2661 = vmatpush1.msra.mxu0 0.0
    %2662 = vmatprep.subr.mxu0 0.0
    %2663 = vmatpush1.msra.mxu0 0.0
    %2664 = vmatprep.subr.mxu0 0.0
    %2665 = vmatpush1.msra.mxu0 0.0
    %2666 = vmatprep.subr.mxu0 0.0
    %2667 = vmatpush1.msra.mxu0 0.0
    %2668 = vmatprep.subr.mxu0 0.0
    %2669 = vmatpush1.msra.mxu0 %v2636
    %2670 = vmatprep.subr.mxu0 0.0
    %2671 = vmatpush2.msra.mxu0 0.0
    %2672 = vmatprep.subr.mxu0 0.0
    %2673 = vmatpush2.msra.mxu0 0.0
    %2674 = vmatprep.subr.mxu0 0.0
    %2675 = vmatpush2.msra.mxu0 0.0
    %2676 = vmatprep.subr.mxu0 0.0
    %2677 = vmatpush2.msra.mxu0 0.0
    %2678 = vmatprep.subr.mxu0 0.0
    %2679 = vmatpush2.msra.mxu0 0.0
    %2680 = vmatprep.subr.mxu0 0.0
    %2681 = vmatpush2.msra.mxu0 0.0
    %2682 = vmatprep.subr.mxu0 0.0
    %2683 = vmatpush2.msra.mxu0 0.0
    %2684 = vmatprep.subr.mxu0 0.0
    %2685 = vmatpush2.msra.mxu0 0.0
    %2686 = vmatprep.subr.mxu0 0.0
    %2687 = vmatpush2.msra.mxu0 0.0
    %2688 = vmatprep.subr.mxu0 0.0
    %2689 = vmatpush2.msra.mxu0 0.0
    %2690 = vmatprep.subr.mxu0 0.0
    %2691 = vmatpush2.msra.mxu0 0.0
    %2692 = vmatprep.subr.mxu0 0.0
    %2693 = vmatpush2.msra.mxu0 0.0
    %2694 = vmatprep.subr.mxu0 0.0
    %2695 = vmatpush2.msra.mxu0 0.0
    %2696 = vmatprep.subr.mxu0 0.0
    %2697 = vmatpush2.msra.mxu0 0.0
    %2698 = vmatprep.subr.mxu0 0.0
    %2699 = vmatpush2.msra.mxu0 0.0
    %2700 = vmatprep.subr.mxu0 0.0
    %2701 = vmatpush2.msra.mxu0 0.0
    %2702 = vmatprep.mubr.f32.mxu0 0.0
    %2703 = vmatmul.mubr.f32.gmra.mxu0 %v2631
    %v2704 = vpop.f32.mrf.mxu0
    %v2705 = vadd.f32 0.0, %v2704
    %v2706 = vpop.f32.mrf.mxu0
    %2707 = vmatprep.mubr.f32.mxu0 0.0
    %2708 = vmatmul.mubr.f32.gmra.mxu0 %v2634
    %v2709 = vpop.f32.mrf.mxu0
    %v2710 = vadd.f32 0.0, %v2709
    %v2711 = vpop.f32.mrf.mxu0
    %2712 = vdwg.mxu0
    %2715 = vrot.lane.b32.xlu0 %v2705, 8
    %v2716 = vpop.permute.xlu0 %2715
    %2717 = vrot.lane.b32.xlu0 %v2710, 8
    %v2718 = vpop.permute.xlu0 %2717
    %v2721 = vsel %vm1449, %v2511, %v2716
    %v2722 = vsel %vm1449, %v2516, %v2718
    %v2723 = vld [vmem:[#allocation3 + $0x420] sm:$0xff]
    %v2724 = vld [vmem:[#allocation3 + $0x430] sm:$0xff]
    %v2725 = vld [vmem:[#allocation3 + $0x410] ss:$0 sm:$0xff]
    %v2727 = vsel %vm736, %v2721, 0
    %v2730 = vsel %vm736, %v2722, 0
    %2732 = vmatprep.subr.mxu0 0.0
    %2733 = vmatpush1.msra.mxu0 0.0
    %2734 = vmatprep.subr.mxu0 0.0
    %2735 = vmatpush1.msra.mxu0 0.0
    %2736 = vmatprep.subr.mxu0 0.0
    %2737 = vmatpush1.msra.mxu0 0.0
    %2738 = vmatprep.subr.mxu0 0.0
    %2739 = vmatpush1.msra.mxu0 0.0
    %2740 = vmatprep.subr.mxu0 0.0
    %2741 = vmatpush1.msra.mxu0 0.0
    %2742 = vmatprep.subr.mxu0 0.0
    %2743 = vmatpush1.msra.mxu0 0.0
    %2744 = vmatprep.subr.mxu0 0.0
    %2745 = vmatpush1.msra.mxu0 0.0
    %2746 = vmatprep.subr.mxu0 0.0
    %2747 = vmatpush1.msra.mxu0 0.0
    %2748 = vmatprep.subr.mxu0 0.0
    %2749 = vmatpush1.msra.mxu0 0.0
    %2750 = vmatprep.subr.mxu0 0.0
    %2751 = vmatpush1.msra.mxu0 0.0
    %2752 = vmatprep.subr.mxu0 0.0
    %2753 = vmatpush1.msra.mxu0 0.0
    %2754 = vmatprep.subr.mxu0 0.0
    %2755 = vmatpush1.msra.mxu0 0.0
    %2756 = vmatprep.subr.mxu0 0.0
    %2757 = vmatpush1.msra.mxu0 0.0
    %2758 = vmatprep.subr.mxu0 0.0
    %2759 = vmatpush1.msra.mxu0 0.0
    %2760 = vmatprep.subr.mxu0 0.0
    %2761 = vmatpush1.msra.mxu0 %v2724
    %2762 = vmatprep.subr.mxu0 0.0
    %2763 = vmatpush1.msra.mxu0 %v2723
    %2764 = vmatprep.subr.mxu0 0.0
    %2765 = vmatpush2.msra.mxu0 0.0
    %2766 = vmatprep.subr.mxu0 0.0
    %2767 = vmatpush2.msra.mxu0 0.0
    %2768 = vmatprep.subr.mxu0 0.0
    %2769 = vmatpush2.msra.mxu0 0.0
    %2770 = vmatprep.subr.mxu0 0.0
    %2771 = vmatpush2.msra.mxu0 0.0
    %2772 = vmatprep.subr.mxu0 0.0
    %2773 = vmatpush2.msra.mxu0 0.0
    %2774 = vmatprep.subr.mxu0 0.0
    %2775 = vmatpush2.msra.mxu0 0.0
    %2776 = vmatprep.subr.mxu0 0.0
    %2777 = vmatpush2.msra.mxu0 0.0
    %2778 = vmatprep.subr.mxu0 0.0
    %2779 = vmatpush2.msra.mxu0 0.0
    %2780 = vmatprep.subr.mxu0 0.0
    %2781 = vmatpush2.msra.mxu0 0.0
    %2782 = vmatprep.subr.mxu0 0.0
    %2783 = vmatpush2.msra.mxu0 0.0
    %2784 = vmatprep.subr.mxu0 0.0
    %2785 = vmatpush2.msra.mxu0 0.0
    %2786 = vmatprep.subr.mxu0 0.0
    %2787 = vmatpush2.msra.mxu0 0.0
    %2788 = vmatprep.subr.mxu0 0.0
    %2789 = vmatpush2.msra.mxu0 0.0
    %2790 = vmatprep.subr.mxu0 0.0
    %2791 = vmatpush2.msra.mxu0 0.0
    %2792 = vmatprep.subr.mxu0 0.0
    %2793 = vmatpush2.msra.mxu0 0.0
    %2794 = vmatprep.subr.mxu0 0.0
    %2795 = vmatpush2.msra.mxu0 0.0
    %2796 = vmatprep.mubr.f32.mxu0 0.0
    %2797 = vmatmul.mubr.f32.gmra.mxu0 %v2727
    %v2798 = vpop.f32.mrf.mxu0
    %v2799 = vadd.f32 %v2725, %v2798
    %v2800 = vpop.f32.mrf.mxu0
    %2801 = vmatprep.mubr.f32.mxu0 0.0
    %2802 = vmatmul.mubr.f32.gmra.mxu0 %v2730
    %v2803 = vpop.f32.mrf.mxu0
    %v2804 = vadd.f32 %v2725, %v2803
    %v2805 = vpop.f32.mrf.mxu0
    %2806 = vdwg.mxu0
    %v2807 = vadd.f32 %v480, %v2799
    %v2808 = vadd.f32 %v481, %v2804
    %v2809 = vsel %vm487, %v2807, 0.0
    %2810 = vadd.xlane.f32.xlu0 %v2809
    %v2811 = vpop.xlane.xlu0 %2810
    %v2812 = vsel %vm487, %v2808, 0.0
    %2813 = vadd.xlane.f32.xlu0 %v2812
    %v2814 = vpop.xlane.xlu0 %2813
    %v2815 = vmul.f32 %v2811, %v1156
    %v2816 = vmul.f32 %v2814, %v1156
    %v2817 = vsub.f32 %v2807, %v2815
    %v2818 = vsub.f32 %v2808, %v2816
    %v2819 = vmul.f32 %v2817, %v2817
    %v2820 = vmul.f32 %v2818, %v2818
    %v2821 = vsel %vm487, %v2819, 0.0
    %2822 = vadd.xlane.f32.xlu0 %v2821
    %v2823 = vpop.xlane.xlu0 %2822
    %v2824 = vsel %vm487, %v2820, 0.0
    %2825 = vadd.xlane.f32.xlu0 %v2824
    %v2826 = vpop.xlane.xlu0 %2825
    %v2827 = vmul.f32 %v2823, %v1156
    %v2828 = vmul.f32 %v2826, %v1156
    %v2829 = vadd.f32 %v2827, 1e-05
    %v2830 = vadd.f32 %v2828, 1e-05
    %v2831 = vrsqrt.pop %v2829
    %v2832 = vrsqrt.pop %v2830
    %v2833 = vmul.f32 %v2817, %v2831
    %v2834 = vmul.f32 %v2818, %v2832
    %v2835 = vld [vmem:[#allocation3 + $0x660] ss:$0 sm:$0xff]
    %v2836 = vmul.f32 %v2833, %v2835
    %v2837 = vmul.f32 %v2834, %v2835
    %v2838 = vld [vmem:[#allocation3 + $0x650] ss:$0 sm:$0xff]
    %v2839 = vadd.f32 %v2836, %v2838
    %v2840 = vadd.f32 %v2837, %v2838
    %v2841 = vld [vmem:[#allocation3 + $0x9d0] sm:$0xff]
    %v2842 = vld [vmem:[#allocation3 + $0x9e0] sm:$0xff]
    %v2843 = vld [vmem:[#allocation3 + $0x9f0] sm:$0xff]
    %v2844 = vld [vmem:[#allocation3 + $0xa00] sm:$0xff]
    %v2845 = vld [vmem:[#allocation3 + $0x9c0] ss:$0 sm:$0xff]
    %2846 = vmatprep.subr.mxu0 0.0
    %2847 = vmatpush1.msra.mxu0 0.0
    %2848 = vmatprep.subr.mxu0 0.0
    %2849 = vmatpush1.msra.mxu0 0.0
    %2850 = vmatprep.subr.mxu0 0.0
    %2851 = vmatpush1.msra.mxu0 0.0
    %2852 = vmatprep.subr.mxu0 0.0
    %2853 = vmatpush1.msra.mxu0 0.0
    %2854 = vmatprep.subr.mxu0 0.0
    %2855 = vmatpush1.msra.mxu0 0.0
    %2856 = vmatprep.subr.mxu0 0.0
    %2857 = vmatpush1.msra.mxu0 0.0
    %2858 = vmatprep.subr.mxu0 0.0
    %2859 = vmatpush1.msra.mxu0 0.0
    %2860 = vmatprep.subr.mxu0 0.0
    %2861 = vmatpush1.msra.mxu0 0.0
    %2862 = vmatprep.subr.mxu0 0.0
    %2863 = vmatpush1.msra.mxu0 0.0
    %2864 = vmatprep.subr.mxu0 0.0
    %2865 = vmatpush1.msra.mxu0 0.0
    %2866 = vmatprep.subr.mxu0 0.0
    %2867 = vmatpush1.msra.mxu0 0.0
    %2868 = vmatprep.subr.mxu0 0.0
    %2869 = vmatpush1.msra.mxu0 0.0
    %2870 = vmatprep.subr.mxu0 0.0
    %2871 = vmatpush1.msra.mxu0 %v2844
    %2872 = vmatprep.subr.mxu0 0.0
    %2873 = vmatpush1.msra.mxu0 %v2843
    %2874 = vmatprep.subr.mxu0 0.0
    %2875 = vmatpush1.msra.mxu0 %v2842
    %2876 = vmatprep.subr.mxu0 0.0
    %2877 = vmatpush1.msra.mxu0 %v2841
    %2878 = vmatprep.subr.mxu0 0.0
    %2879 = vmatpush2.msra.mxu0 0.0
    %2880 = vmatprep.subr.mxu0 0.0
    %2881 = vmatpush2.msra.mxu0 0.0
    %2882 = vmatprep.subr.mxu0 0.0
    %2883 = vmatpush2.msra.mxu0 0.0
    %2884 = vmatprep.subr.mxu0 0.0
    %2885 = vmatpush2.msra.mxu0 0.0
    %2886 = vmatprep.subr.mxu0 0.0
    %2887 = vmatpush2.msra.mxu0 0.0
    %2888 = vmatprep.subr.mxu0 0.0
    %2889 = vmatpush2.msra.mxu0 0.0
    %2890 = vmatprep.subr.mxu0 0.0
    %2891 = vmatpush2.msra.mxu0 0.0
    %2892 = vmatprep.subr.mxu0 0.0
    %2893 = vmatpush2.msra.mxu0 0.0
    %2894 = vmatprep.subr.mxu0 0.0
    %2895 = vmatpush2.msra.mxu0 0.0
    %2896 = vmatprep.subr.mxu0 0.0
    %2897 = vmatpush2.msra.mxu0 0.0
    %2898 = vmatprep.subr.mxu0 0.0
    %2899 = vmatpush2.msra.mxu0 0.0
    %2900 = vmatprep.subr.mxu0 0.0
    %2901 = vmatpush2.msra.mxu0 0.0
    %2902 = vmatprep.subr.mxu0 0.0
    %2903 = vmatpush2.msra.mxu0 0.0
    %2904 = vmatprep.subr.mxu0 0.0
    %2905 = vmatpush2.msra.mxu0 0.0
    %2906 = vmatprep.subr.mxu0 0.0
    %2907 = vmatpush2.msra.mxu0 0.0
    %2908 = vmatprep.subr.mxu0 0.0
    %2909 = vmatpush2.msra.mxu0 0.0
    %2910 = vmatprep.mubr.f32.mxu0 0.0
    %2911 = vmatmul.mubr.f32.gmra.mxu0 %v2169
    %v2912 = vpop.f32.mrf.mxu0
    %v2913 = vadd.f32 %v2845, %v2912
    %v2914 = vpop.f32.mrf.mxu0
    %2915 = vdwg.mxu0
    %2920 = vrot.lane.b32.xlu0 %v2841, 96
    %v2921 = vpop.permute.xlu0 %2920
    %2922 = vrot.lane.b32.xlu0 %v2842, 96
    %v2923 = vpop.permute.xlu0 %2922
    %2924 = vrot.lane.b32.xlu0 %v2843, 96
    %v2925 = vpop.permute.xlu0 %2924
    %2926 = vrot.lane.b32.xlu0 %v2844, 96
    %v2927 = vpop.permute.xlu0 %2926
    %2933 = vrot.lane.b32.xlu0 %v2845, 96
    %v2934 = vpop.permute.xlu0 %2933
    %2936 = vmatprep.subr.mxu0 0.0
    %2937 = vmatpush1.msra.mxu0 0.0
    %2938 = vmatprep.subr.mxu0 0.0
    %2939 = vmatpush1.msra.mxu0 0.0
    %2940 = vmatprep.subr.mxu0 0.0
    %2941 = vmatpush1.msra.mxu0 0.0
    %2942 = vmatprep.subr.mxu0 0.0
    %2943 = vmatpush1.msra.mxu0 0.0
    %2944 = vmatprep.subr.mxu0 0.0
    %2945 = vmatpush1.msra.mxu0 0.0
    %2946 = vmatprep.subr.mxu0 0.0
    %2947 = vmatpush1.msra.mxu0 0.0
    %2948 = vmatprep.subr.mxu0 0.0
    %2949 = vmatpush1.msra.mxu0 0.0
    %2950 = vmatprep.subr.mxu0 0.0
    %2951 = vmatpush1.msra.mxu0 0.0
    %2952 = vmatprep.subr.mxu0 0.0
    %2953 = vmatpush1.msra.mxu0 0.0
    %2954 = vmatprep.subr.mxu0 0.0
    %2955 = vmatpush1.msra.mxu0 0.0
    %2956 = vmatprep.subr.mxu0 0.0
    %2957 = vmatpush1.msra.mxu0 0.0
    %2958 = vmatprep.subr.mxu0 0.0
    %2959 = vmatpush1.msra.mxu0 0.0
    %2960 = vmatprep.subr.mxu0 0.0
    %2961 = vmatpush1.msra.mxu0 %v2927
    %2962 = vmatprep.subr.mxu0 0.0
    %2963 = vmatpush1.msra.mxu0 %v2925
    %2964 = vmatprep.subr.mxu0 0.0
    %2965 = vmatpush1.msra.mxu0 %v2923
    %2966 = vmatprep.subr.mxu0 0.0
    %2967 = vmatpush1.msra.mxu0 %v2921
    %2968 = vmatprep.subr.mxu0 0.0
    %2969 = vmatpush2.msra.mxu0 0.0
    %2970 = vmatprep.subr.mxu0 0.0
    %2971 = vmatpush2.msra.mxu0 0.0
    %2972 = vmatprep.subr.mxu0 0.0
    %2973 = vmatpush2.msra.mxu0 0.0
    %2974 = vmatprep.subr.mxu0 0.0
    %2975 = vmatpush2.msra.mxu0 0.0
    %2976 = vmatprep.subr.mxu0 0.0
    %2977 = vmatpush2.msra.mxu0 0.0
    %2978 = vmatprep.subr.mxu0 0.0
    %2979 = vmatpush2.msra.mxu0 0.0
    %2980 = vmatprep.subr.mxu0 0.0
    %2981 = vmatpush2.msra.mxu0 0.0
    %2982 = vmatprep.subr.mxu0 0.0
    %2983 = vmatpush2.msra.mxu0 0.0
    %2984 = vmatprep.subr.mxu0 0.0
    %2985 = vmatpush2.msra.mxu0 0.0
    %2986 = vmatprep.subr.mxu0 0.0
    %2987 = vmatpush2.msra.mxu0 0.0
    %2988 = vmatprep.subr.mxu0 0.0
    %2989 = vmatpush2.msra.mxu0 0.0
    %2990 = vmatprep.subr.mxu0 0.0
    %2991 = vmatpush2.msra.mxu0 0.0
    %2992 = vmatprep.subr.mxu0 0.0
    %2993 = vmatpush2.msra.mxu0 0.0
    %2994 = vmatprep.subr.mxu0 0.0
    %2995 = vmatpush2.msra.mxu0 0.0
    %2996 = vmatprep.subr.mxu0 0.0
    %2997 = vmatpush2.msra.mxu0 0.0
    %2998 = vmatprep.subr.mxu0 0.0
    %2999 = vmatpush2.msra.mxu0 0.0
    %3000 = vmatprep.mubr.f32.mxu0 0.0
    %3001 = vmatmul.mubr.f32.gmra.mxu0 %v2169
    %v3002 = vpop.f32.mrf.mxu0
    %v3003 = vadd.f32 %v2934, %v3002
    %v3004 = vpop.f32.mrf.mxu0
    %3005 = vdwg.mxu0
    %3006 = vrot.lane.b32.xlu0 %v2841, 64
    %v3007 = vpop.permute.xlu0 %3006
    %3008 = vrot.lane.b32.xlu0 %v2842, 64
    %v3009 = vpop.permute.xlu0 %3008
    %3010 = vrot.lane.b32.xlu0 %v2843, 64
    %v3011 = vpop.permute.xlu0 %3010
    %3012 = vrot.lane.b32.xlu0 %v2844, 64
    %v3013 = vpop.permute.xlu0 %3012
    %3018 = vrot.lane.b32.xlu0 %v2845, 64
    %v3019 = vpop.permute.xlu0 %3018
    %3021 = vmatprep.subr.mxu0 0.0
    %3022 = vmatpush1.msra.mxu0 0.0
    %3023 = vmatprep.subr.mxu0 0.0
    %3024 = vmatpush1.msra.mxu0 0.0
    %3025 = vmatprep.subr.mxu0 0.0
    %3026 = vmatpush1.msra.mxu0 0.0
    %3027 = vmatprep.subr.mxu0 0.0
    %3028 = vmatpush1.msra.mxu0 0.0
    %3029 = vmatprep.subr.mxu0 0.0
    %3030 = vmatpush1.msra.mxu0 0.0
    %3031 = vmatprep.subr.mxu0 0.0
    %3032 = vmatpush1.msra.mxu0 0.0
    %3033 = vmatprep.subr.mxu0 0.0
    %3034 = vmatpush1.msra.mxu0 0.0
    %3035 = vmatprep.subr.mxu0 0.0
    %3036 = vmatpush1.msra.mxu0 0.0
    %3037 = vmatprep.subr.mxu0 0.0
    %3038 = vmatpush1.msra.mxu0 0.0
    %3039 = vmatprep.subr.mxu0 0.0
    %3040 = vmatpush1.msra.mxu0 0.0
    %3041 = vmatprep.subr.mxu0 0.0
    %3042 = vmatpush1.msra.mxu0 0.0
    %3043 = vmatprep.subr.mxu0 0.0
    %3044 = vmatpush1.msra.mxu0 0.0
    %3045 = vmatprep.subr.mxu0 0.0
    %3046 = vmatpush1.msra.mxu0 %v3013
    %3047 = vmatprep.subr.mxu0 0.0
    %3048 = vmatpush1.msra.mxu0 %v3011
    %3049 = vmatprep.subr.mxu0 0.0
    %3050 = vmatpush1.msra.mxu0 %v3009
    %3051 = vmatprep.subr.mxu0 0.0
    %3052 = vmatpush1.msra.mxu0 %v3007
    %3053 = vmatprep.subr.mxu0 0.0
    %3054 = vmatpush2.msra.mxu0 0.0
    %3055 = vmatprep.subr.mxu0 0.0
    %3056 = vmatpush2.msra.mxu0 0.0
    %3057 = vmatprep.subr.mxu0 0.0
    %3058 = vmatpush2.msra.mxu0 0.0
    %3059 = vmatprep.subr.mxu0 0.0
    %3060 = vmatpush2.msra.mxu0 0.0
    %3061 = vmatprep.subr.mxu0 0.0
    %3062 = vmatpush2.msra.mxu0 0.0
    %3063 = vmatprep.subr.mxu0 0.0
    %3064 = vmatpush2.msra.mxu0 0.0
    %3065 = vmatprep.subr.mxu0 0.0
    %3066 = vmatpush2.msra.mxu0 0.0
    %3067 = vmatprep.subr.mxu0 0.0
    %3068 = vmatpush2.msra.mxu0 0.0
    %3069 = vmatprep.subr.mxu0 0.0
    %3070 = vmatpush2.msra.mxu0 0.0
    %3071 = vmatprep.subr.mxu0 0.0
    %3072 = vmatpush2.msra.mxu0 0.0
    %3073 = vmatprep.subr.mxu0 0.0
    %3074 = vmatpush2.msra.mxu0 0.0
    %3075 = vmatprep.subr.mxu0 0.0
    %3076 = vmatpush2.msra.mxu0 0.0
    %3077 = vmatprep.subr.mxu0 0.0
    %3078 = vmatpush2.msra.mxu0 0.0
    %3079 = vmatprep.subr.mxu0 0.0
    %3080 = vmatpush2.msra.mxu0 0.0
    %3081 = vmatprep.subr.mxu0 0.0
    %3082 = vmatpush2.msra.mxu0 0.0
    %3083 = vmatprep.subr.mxu0 0.0
    %3084 = vmatpush2.msra.mxu0 0.0
    %3085 = vmatprep.mubr.f32.mxu0 0.0
    %3086 = vmatmul.mubr.f32.gmra.mxu0 %v2257
    %v3087 = vpop.f32.mrf.mxu0
    %v3088 = vadd.f32 %v3019, %v3087
    %v3089 = vpop.f32.mrf.mxu0
    %3090 = vdwg.mxu0
    %v3092 = vsel %vm736, %v2913, 0
    %v3095 = vsel %vm736, %v3003, 0
    %3097 = vmatprep.subr.mxu0 0.0
    %3098 = vmatpush1.xpose.msra.mxu0 0.0
    %3099 = vmatprep.subr.mxu0 0.0
    %3100 = vmatpush1.xpose.msra.mxu0 0.0
    %3101 = vmatprep.subr.mxu0 0.0
    %3102 = vmatpush1.xpose.msra.mxu0 0.0
    %3103 = vmatprep.subr.mxu0 0.0
    %3104 = vmatpush1.xpose.msra.mxu0 0.0
    %3105 = vmatprep.subr.mxu0 0.0
    %3106 = vmatpush1.xpose.msra.mxu0 0.0
    %3107 = vmatprep.subr.mxu0 0.0
    %3108 = vmatpush1.xpose.msra.mxu0 0.0
    %3109 = vmatprep.subr.mxu0 0.0
    %3110 = vmatpush1.xpose.msra.mxu0 0.0
    %3111 = vmatprep.subr.mxu0 0.0
    %3112 = vmatpush1.xpose.msra.mxu0 0.0
    %3113 = vmatprep.subr.mxu0 0.0
    %3114 = vmatpush1.xpose.msra.mxu0 0.0
    %3115 = vmatprep.subr.mxu0 0.0
    %3116 = vmatpush1.xpose.msra.mxu0 0.0
    %3117 = vmatprep.subr.mxu0 0.0
    %3118 = vmatpush1.xpose.msra.mxu0 0.0
    %3119 = vmatprep.subr.mxu0 0.0
    %3120 = vmatpush1.xpose.msra.mxu0 0.0
    %3121 = vmatprep.subr.mxu0 0.0
    %3122 = vmatpush1.xpose.msra.mxu0 0.0
    %3123 = vmatprep.subr.mxu0 0.0
    %3124 = vmatpush1.xpose.msra.mxu0 0.0
    %3125 = vmatprep.subr.mxu0 0.0
    %3126 = vmatpush1.xpose.msra.mxu0 0.0
    %3127 = vmatprep.subr.mxu0 0.0
    %3128 = vmatpush1.xpose.msra.mxu0 %v3095
    %3129 = vmatprep.subr.mxu0 0.0
    %3130 = vmatpush2.xpose.msra.mxu0 0.0
    %3131 = vmatprep.subr.mxu0 0.0
    %3132 = vmatpush2.xpose.msra.mxu0 0.0
    %3133 = vmatprep.subr.mxu0 0.0
    %3134 = vmatpush2.xpose.msra.mxu0 0.0
    %3135 = vmatprep.subr.mxu0 0.0
    %3136 = vmatpush2.xpose.msra.mxu0 0.0
    %3137 = vmatprep.subr.mxu0 0.0
    %3138 = vmatpush2.xpose.msra.mxu0 0.0
    %3139 = vmatprep.subr.mxu0 0.0
    %3140 = vmatpush2.xpose.msra.mxu0 0.0
    %3141 = vmatprep.subr.mxu0 0.0
    %3142 = vmatpush2.xpose.msra.mxu0 0.0
    %3143 = vmatprep.subr.mxu0 0.0
    %3144 = vmatpush2.xpose.msra.mxu0 0.0
    %3145 = vmatprep.subr.mxu0 0.0
    %3146 = vmatpush2.xpose.msra.mxu0 0.0
    %3147 = vmatprep.subr.mxu0 0.0
    %3148 = vmatpush2.xpose.msra.mxu0 0.0
    %3149 = vmatprep.subr.mxu0 0.0
    %3150 = vmatpush2.xpose.msra.mxu0 0.0
    %3151 = vmatprep.subr.mxu0 0.0
    %3152 = vmatpush2.xpose.msra.mxu0 0.0
    %3153 = vmatprep.subr.mxu0 0.0
    %3154 = vmatpush2.xpose.msra.mxu0 0.0
    %3155 = vmatprep.subr.mxu0 0.0
    %3156 = vmatpush2.xpose.msra.mxu0 0.0
    %3157 = vmatprep.subr.mxu0 0.0
    %3158 = vmatpush2.xpose.msra.mxu0 0.0
    %3159 = vmatprep.subr.mxu0 0.0
    %3160 = vmatpush2.xpose.msra.mxu0 0.0
    %3161 = vmatprep.mubr.f32.mxu0 0.0
    %3162 = vmatmul.mubr.f32.gmra.mxu0 %v3092
    %v3163 = vpop.f32.mrf.mxu0
    %v3164 = vadd.f32 0.0, %v3163
    %v3165 = vpop.f32.mrf.mxu0
    %3166 = vdwg.mxu0
    %v3167 = vsel %vm813, %v3164, -inf
    %3168 = vmax.xlane.f32.xlu0 %v3167
    %v3169 = vpop.xlane.xlu0 %3168
    %v3170 = vsub.f32 %v3164, %v3169
    %v3171 = vmul.f32 %v3170, 1.442695
    %v3172 = vpow.pop %v3171
    %v3173 = vsel %vm813, %v3172, 0.0
    %3174 = vadd.xlane.f32.xlu0 %v3173
    %v3175 = vpop.xlane.xlu0 %3174
    %v3176 = vrcp.pop %v3175
    %v3177 = vmul.f32 %v3172, %v3176
    %v3179 = vsel %vm825, %v3177, 0
    %v3182 = vsel %vm829, %v3088, 0
    %3184 = vmatprep.subr.mxu0 0.0
    %3185 = vmatpush1.msra.mxu0 0.0
    %3186 = vmatprep.subr.mxu0 0.0
    %3187 = vmatpush1.msra.mxu0 0.0
    %3188 = vmatprep.subr.mxu0 0.0
    %3189 = vmatpush1.msra.mxu0 0.0
    %3190 = vmatprep.subr.mxu0 0.0
    %3191 = vmatpush1.msra.mxu0 0.0
    %3192 = vmatprep.subr.mxu0 0.0
    %3193 = vmatpush1.msra.mxu0 0.0
    %3194 = vmatprep.subr.mxu0 0.0
    %3195 = vmatpush1.msra.mxu0 0.0
    %3196 = vmatprep.subr.mxu0 0.0
    %3197 = vmatpush1.msra.mxu0 0.0
    %3198 = vmatprep.subr.mxu0 0.0
    %3199 = vmatpush1.msra.mxu0 0.0
    %3200 = vmatprep.subr.mxu0 0.0
    %3201 = vmatpush1.msra.mxu0 0.0
    %3202 = vmatprep.subr.mxu0 0.0
    %3203 = vmatpush1.msra.mxu0 0.0
    %3204 = vmatprep.subr.mxu0 0.0
    %3205 = vmatpush1.msra.mxu0 0.0
    %3206 = vmatprep.subr.mxu0 0.0
    %3207 = vmatpush1.msra.mxu0 0.0
    %3208 = vmatprep.subr.mxu0 0.0
    %3209 = vmatpush1.msra.mxu0 0.0
    %3210 = vmatprep.subr.mxu0 0.0
    %3211 = vmatpush1.msra.mxu0 0.0
    %3212 = vmatprep.subr.mxu0 0.0
    %3213 = vmatpush1.msra.mxu0 0.0
    %3214 = vmatprep.subr.mxu0 0.0
    %3215 = vmatpush1.msra.mxu0 %v3182
    %3216 = vmatprep.subr.mxu0 0.0
    %3217 = vmatpush2.msra.mxu0 0.0
    %3218 = vmatprep.subr.mxu0 0.0
    %3219 = vmatpush2.msra.mxu0 0.0
    %3220 = vmatprep.subr.mxu0 0.0
    %3221 = vmatpush2.msra.mxu0 0.0
    %3222 = vmatprep.subr.mxu0 0.0
    %3223 = vmatpush2.msra.mxu0 0.0
    %3224 = vmatprep.subr.mxu0 0.0
    %3225 = vmatpush2.msra.mxu0 0.0
    %3226 = vmatprep.subr.mxu0 0.0
    %3227 = vmatpush2.msra.mxu0 0.0
    %3228 = vmatprep.subr.mxu0 0.0
    %3229 = vmatpush2.msra.mxu0 0.0
    %3230 = vmatprep.subr.mxu0 0.0
    %3231 = vmatpush2.msra.mxu0 0.0
    %3232 = vmatprep.subr.mxu0 0.0
    %3233 = vmatpush2.msra.mxu0 0.0
    %3234 = vmatprep.subr.mxu0 0.0
    %3235 = vmatpush2.msra.mxu0 0.0
    %3236 = vmatprep.subr.mxu0 0.0
    %3237 = vmatpush2.msra.mxu0 0.0
    %3238 = vmatprep.subr.mxu0 0.0
    %3239 = vmatpush2.msra.mxu0 0.0
    %3240 = vmatprep.subr.mxu0 0.0
    %3241 = vmatpush2.msra.mxu0 0.0
    %3242 = vmatprep.subr.mxu0 0.0
    %3243 = vmatpush2.msra.mxu0 0.0
    %3244 = vmatprep.subr.mxu0 0.0
    %3245 = vmatpush2.msra.mxu0 0.0
    %3246 = vmatprep.subr.mxu0 0.0
    %3247 = vmatpush2.msra.mxu0 0.0
    %3248 = vmatprep.mubr.f32.mxu0 0.0
    %3249 = vmatmul.mubr.f32.gmra.mxu0 %v3179
    %v3250 = vpop.f32.mrf.mxu0
    %v3251 = vadd.f32 0.0, %v3250
    %v3252 = vpop.f32.mrf.mxu0
    %3253 = vdwg.mxu0
    %3254 = vrot.lane.b32.xlu0 %v2913, 112
    %v3255 = vpop.permute.xlu0 %3254
    %3256 = vrot.lane.b32.xlu0 %v3003, 112
    %v3257 = vpop.permute.xlu0 %3256
    %v3258 = vsel %vm736, %v3255, 0
    %v3260 = vsel %vm736, %v3257, 0
    %3262 = vmatprep.subr.mxu0 0.0
    %3263 = vmatpush1.xpose.msra.mxu0 0.0
    %3264 = vmatprep.subr.mxu0 0.0
    %3265 = vmatpush1.xpose.msra.mxu0 0.0
    %3266 = vmatprep.subr.mxu0 0.0
    %3267 = vmatpush1.xpose.msra.mxu0 0.0
    %3268 = vmatprep.subr.mxu0 0.0
    %3269 = vmatpush1.xpose.msra.mxu0 0.0
    %3270 = vmatprep.subr.mxu0 0.0
    %3271 = vmatpush1.xpose.msra.mxu0 0.0
    %3272 = vmatprep.subr.mxu0 0.0
    %3273 = vmatpush1.xpose.msra.mxu0 0.0
    %3274 = vmatprep.subr.mxu0 0.0
    %3275 = vmatpush1.xpose.msra.mxu0 0.0
    %3276 = vmatprep.subr.mxu0 0.0
    %3277 = vmatpush1.xpose.msra.mxu0 0.0
    %3278 = vmatprep.subr.mxu0 0.0
    %3279 = vmatpush1.xpose.msra.mxu0 0.0
    %3280 = vmatprep.subr.mxu0 0.0
    %3281 = vmatpush1.xpose.msra.mxu0 0.0
    %3282 = vmatprep.subr.mxu0 0.0
    %3283 = vmatpush1.xpose.msra.mxu0 0.0
    %3284 = vmatprep.subr.mxu0 0.0
    %3285 = vmatpush1.xpose.msra.mxu0 0.0
    %3286 = vmatprep.subr.mxu0 0.0
    %3287 = vmatpush1.xpose.msra.mxu0 0.0
    %3288 = vmatprep.subr.mxu0 0.0
    %3289 = vmatpush1.xpose.msra.mxu0 0.0
    %3290 = vmatprep.subr.mxu0 0.0
    %3291 = vmatpush1.xpose.msra.mxu0 0.0
    %3292 = vmatprep.subr.mxu0 0.0
    %3293 = vmatpush1.xpose.msra.mxu0 %v3260
    %3294 = vmatprep.subr.mxu0 0.0
    %3295 = vmatpush2.xpose.msra.mxu0 0.0
    %3296 = vmatprep.subr.mxu0 0.0
    %3297 = vmatpush2.xpose.msra.mxu0 0.0
    %3298 = vmatprep.subr.mxu0 0.0
    %3299 = vmatpush2.xpose.msra.mxu0 0.0
    %3300 = vmatprep.subr.mxu0 0.0
    %3301 = vmatpush2.xpose.msra.mxu0 0.0
    %3302 = vmatprep.subr.mxu0 0.0
    %3303 = vmatpush2.xpose.msra.mxu0 0.0
    %3304 = vmatprep.subr.mxu0 0.0
    %3305 = vmatpush2.xpose.msra.mxu0 0.0
    %3306 = vmatprep.subr.mxu0 0.0
    %3307 = vmatpush2.xpose.msra.mxu0 0.0
    %3308 = vmatprep.subr.mxu0 0.0
    %3309 = vmatpush2.xpose.msra.mxu0 0.0
    %3310 = vmatprep.subr.mxu0 0.0
    %3311 = vmatpush2.xpose.msra.mxu0 0.0
    %3312 = vmatprep.subr.mxu0 0.0
    %3313 = vmatpush2.xpose.msra.mxu0 0.0
    %3314 = vmatprep.subr.mxu0 0.0
    %3315 = vmatpush2.xpose.msra.mxu0 0.0
    %3316 = vmatprep.subr.mxu0 0.0
    %3317 = vmatpush2.xpose.msra.mxu0 0.0
    %3318 = vmatprep.subr.mxu0 0.0
    %3319 = vmatpush2.xpose.msra.mxu0 0.0
    %3320 = vmatprep.subr.mxu0 0.0
    %3321 = vmatpush2.xpose.msra.mxu0 0.0
    %3322 = vmatprep.subr.mxu0 0.0
    %3323 = vmatpush2.xpose.msra.mxu0 0.0
    %3324 = vmatprep.subr.mxu0 0.0
    %3325 = vmatpush2.xpose.msra.mxu0 0.0
    %3326 = vmatprep.mubr.f32.mxu0 0.0
    %3327 = vmatmul.mubr.f32.gmra.mxu0 %v3258
    %v3328 = vpop.f32.mrf.mxu0
    %v3329 = vadd.f32 0.0, %v3328
    %v3330 = vpop.f32.mrf.mxu0
    %3331 = vdwg.mxu0
    %v3332 = vsel %vm813, %v3329, -inf
    %3333 = vmax.xlane.f32.xlu0 %v3332
    %v3334 = vpop.xlane.xlu0 %3333
    %v3335 = vsub.f32 %v3329, %v3334
    %v3336 = vmul.f32 %v3335, 1.442695
    %v3337 = vpow.pop %v3336
    %v3338 = vsel %vm813, %v3337, 0.0
    %3339 = vadd.xlane.f32.xlu0 %v3338
    %v3340 = vpop.xlane.xlu0 %3339
    %v3341 = vrcp.pop %v3340
    %v3342 = vmul.f32 %v3337, %v3341
    %3343 = vrot.lane.b32.xlu0 %v3088, 112
    %v3344 = vpop.permute.xlu0 %3343
    %v3346 = vsel %vm825, %v3342, 0
    %v3348 = vsel %vm829, %v3344, 0
    %3350 = vmatprep.subr.mxu0 0.0
    %3351 = vmatpush1.msra.mxu0 0.0
    %3352 = vmatprep.subr.mxu0 0.0
    %3353 = vmatpush1.msra.mxu0 0.0
    %3354 = vmatprep.subr.mxu0 0.0
    %3355 = vmatpush1.msra.mxu0 0.0
    %3356 = vmatprep.subr.mxu0 0.0
    %3357 = vmatpush1.msra.mxu0 0.0
    %3358 = vmatprep.subr.mxu0 0.0
    %3359 = vmatpush1.msra.mxu0 0.0
    %3360 = vmatprep.subr.mxu0 0.0
    %3361 = vmatpush1.msra.mxu0 0.0
    %3362 = vmatprep.subr.mxu0 0.0
    %3363 = vmatpush1.msra.mxu0 0.0
    %3364 = vmatprep.subr.mxu0 0.0
    %3365 = vmatpush1.msra.mxu0 0.0
    %3366 = vmatprep.subr.mxu0 0.0
    %3367 = vmatpush1.msra.mxu0 0.0
    %3368 = vmatprep.subr.mxu0 0.0
    %3369 = vmatpush1.msra.mxu0 0.0
    %3370 = vmatprep.subr.mxu0 0.0
    %3371 = vmatpush1.msra.mxu0 0.0
    %3372 = vmatprep.subr.mxu0 0.0
    %3373 = vmatpush1.msra.mxu0 0.0
    %3374 = vmatprep.subr.mxu0 0.0
    %3375 = vmatpush1.msra.mxu0 0.0
    %3376 = vmatprep.subr.mxu0 0.0
    %3377 = vmatpush1.msra.mxu0 0.0
    %3378 = vmatprep.subr.mxu0 0.0
    %3379 = vmatpush1.msra.mxu0 0.0
    %3380 = vmatprep.subr.mxu0 0.0
    %3381 = vmatpush1.msra.mxu0 %v3348
    %3382 = vmatprep.subr.mxu0 0.0
    %3383 = vmatpush2.msra.mxu0 0.0
    %3384 = vmatprep.subr.mxu0 0.0
    %3385 = vmatpush2.msra.mxu0 0.0
    %3386 = vmatprep.subr.mxu0 0.0
    %3387 = vmatpush2.msra.mxu0 0.0
    %3388 = vmatprep.subr.mxu0 0.0
    %3389 = vmatpush2.msra.mxu0 0.0
    %3390 = vmatprep.subr.mxu0 0.0
    %3391 = vmatpush2.msra.mxu0 0.0
    %3392 = vmatprep.subr.mxu0 0.0
    %3393 = vmatpush2.msra.mxu0 0.0
    %3394 = vmatprep.subr.mxu0 0.0
    %3395 = vmatpush2.msra.mxu0 0.0
    %3396 = vmatprep.subr.mxu0 0.0
    %3397 = vmatpush2.msra.mxu0 0.0
    %3398 = vmatprep.subr.mxu0 0.0
    %3399 = vmatpush2.msra.mxu0 0.0
    %3400 = vmatprep.subr.mxu0 0.0
    %3401 = vmatpush2.msra.mxu0 0.0
    %3402 = vmatprep.subr.mxu0 0.0
    %3403 = vmatpush2.msra.mxu0 0.0
    %3404 = vmatprep.subr.mxu0 0.0
    %3405 = vmatpush2.msra.mxu0 0.0
    %3406 = vmatprep.subr.mxu0 0.0
    %3407 = vmatpush2.msra.mxu0 0.0
    %3408 = vmatprep.subr.mxu0 0.0
    %3409 = vmatpush2.msra.mxu0 0.0
    %3410 = vmatprep.subr.mxu0 0.0
    %3411 = vmatpush2.msra.mxu0 0.0
    %3412 = vmatprep.subr.mxu0 0.0
    %3413 = vmatpush2.msra.mxu0 0.0
    %3414 = vmatprep.mubr.f32.mxu0 0.0
    %3415 = vmatmul.mubr.f32.gmra.mxu0 %v3346
    %v3416 = vpop.f32.mrf.mxu0
    %v3417 = vadd.f32 0.0, %v3416
    %v3418 = vpop.f32.mrf.mxu0
    %3419 = vdwg.mxu0
    %3421 = vrot.lane.b32.xlu0 %v3417, 16
    %v3422 = vpop.permute.xlu0 %3421
    %v3424 = vsel %vm736, %v3251, %v3422
    %v3425 = vld [vmem:[#allocation3 + $0x980] sm:$0xff]
    %v3426 = vld [vmem:[#allocation3 + $0x990] sm:$0xff]
    %v3427 = vld [vmem:[#allocation3 + $0x9a0] sm:$0xff]
    %v3428 = vld [vmem:[#allocation3 + $0x9b0] sm:$0xff]
    %v3429 = vld [vmem:[#allocation3 + $0x970] ss:$0 sm:$0xff]
    %v3431 = vsel %vm487, %v3424, 0
    %3433 = vmatprep.subr.mxu0 0.0
    %3434 = vmatpush1.msra.mxu0 0.0
    %3435 = vmatprep.subr.mxu0 0.0
    %3436 = vmatpush1.msra.mxu0 0.0
    %3437 = vmatprep.subr.mxu0 0.0
    %3438 = vmatpush1.msra.mxu0 0.0
    %3439 = vmatprep.subr.mxu0 0.0
    %3440 = vmatpush1.msra.mxu0 0.0
    %3441 = vmatprep.subr.mxu0 0.0
    %3442 = vmatpush1.msra.mxu0 0.0
    %3443 = vmatprep.subr.mxu0 0.0
    %3444 = vmatpush1.msra.mxu0 0.0
    %3445 = vmatprep.subr.mxu0 0.0
    %3446 = vmatpush1.msra.mxu0 0.0
    %3447 = vmatprep.subr.mxu0 0.0
    %3448 = vmatpush1.msra.mxu0 0.0
    %3449 = vmatprep.subr.mxu0 0.0
    %3450 = vmatpush1.msra.mxu0 0.0
    %3451 = vmatprep.subr.mxu0 0.0
    %3452 = vmatpush1.msra.mxu0 0.0
    %3453 = vmatprep.subr.mxu0 0.0
    %3454 = vmatpush1.msra.mxu0 0.0
    %3455 = vmatprep.subr.mxu0 0.0
    %3456 = vmatpush1.msra.mxu0 0.0
    %3457 = vmatprep.subr.mxu0 0.0
    %3458 = vmatpush1.msra.mxu0 %v3428
    %3459 = vmatprep.subr.mxu0 0.0
    %3460 = vmatpush1.msra.mxu0 %v3427
    %3461 = vmatprep.subr.mxu0 0.0
    %3462 = vmatpush1.msra.mxu0 %v3426
    %3463 = vmatprep.subr.mxu0 0.0
    %3464 = vmatpush1.msra.mxu0 %v3425
    %3465 = vmatprep.subr.mxu0 0.0
    %3466 = vmatpush2.msra.mxu0 0.0
    %3467 = vmatprep.subr.mxu0 0.0
    %3468 = vmatpush2.msra.mxu0 0.0
    %3469 = vmatprep.subr.mxu0 0.0
    %3470 = vmatpush2.msra.mxu0 0.0
    %3471 = vmatprep.subr.mxu0 0.0
    %3472 = vmatpush2.msra.mxu0 0.0
    %3473 = vmatprep.subr.mxu0 0.0
    %3474 = vmatpush2.msra.mxu0 0.0
    %3475 = vmatprep.subr.mxu0 0.0
    %3476 = vmatpush2.msra.mxu0 0.0
    %3477 = vmatprep.subr.mxu0 0.0
    %3478 = vmatpush2.msra.mxu0 0.0
    %3479 = vmatprep.subr.mxu0 0.0
    %3480 = vmatpush2.msra.mxu0 0.0
    %3481 = vmatprep.subr.mxu0 0.0
    %3482 = vmatpush2.msra.mxu0 0.0
    %3483 = vmatprep.subr.mxu0 0.0
    %3484 = vmatpush2.msra.mxu0 0.0
    %3485 = vmatprep.subr.mxu0 0.0
    %3486 = vmatpush2.msra.mxu0 0.0
    %3487 = vmatprep.subr.mxu0 0.0
    %3488 = vmatpush2.msra.mxu0 0.0
    %3489 = vmatprep.subr.mxu0 0.0
    %3490 = vmatpush2.msra.mxu0 0.0
    %3491 = vmatprep.subr.mxu0 0.0
    %3492 = vmatpush2.msra.mxu0 0.0
    %3493 = vmatprep.subr.mxu0 0.0
    %3494 = vmatpush2.msra.mxu0 0.0
    %3495 = vmatprep.subr.mxu0 0.0
    %3496 = vmatpush2.msra.mxu0 0.0
    %3497 = vmatprep.mubr.f32.mxu0 0.0
    %3498 = vmatmul.mubr.f32.gmra.mxu0 %v3431
    %v3499 = vpop.f32.mrf.mxu0
    %v3500 = vadd.f32 %v3429, %v3499
    %v3501 = vpop.f32.mrf.mxu0
    %3502 = vdwg.mxu0
    %v3503 = vadd.f32 %v2066, %v3500
    %v3504 = vsel %vm1152, %v3503, 0.0
    %3505 = vadd.xlane.f32.xlu0 %v3504
    %v3506 = vpop.xlane.xlu0 %3505
    %v3507 = vmul.f32 %v3506, %v1156
    %v3508 = vsub.f32 %v3503, %v3507
    %v3509 = vmul.f32 %v3508, %v3508
    %v3510 = vsel %vm1152, %v3509, 0.0
    %3511 = vadd.xlane.f32.xlu0 %v3510
    %v3512 = vpop.xlane.xlu0 %3511
    %v3513 = vmul.f32 %v3512, %v1156
    %v3514 = vadd.f32 %v3513, 1e-05
    %v3515 = vrsqrt.pop %v3514
    %v3516 = vmul.f32 %v3508, %v3515
    %v3517 = vld [vmem:[#allocation3 + $0x900] ss:$0 sm:$0xff]
    %v3518 = vmul.f32 %v3516, %v3517
    %v3519 = vld [vmem:[#allocation3 + $0x8f0] ss:$0 sm:$0xff]
    %v3520 = vadd.f32 %v3518, %v3519
    %v3521 = vadd.f32 %v3520, %v477
    %v3522 = vadd.f32 %v2839, %v478
    %v3523 = vadd.f32 %v2840, %v479
    %v3524 = vld [vmem:[#allocation3 + $0x7d0] sm:$0xff]
    %v3525 = vld [vmem:[#allocation3 + $0x7e0] sm:$0xff]
    %v3526 = vld [vmem:[#allocation3 + $0x7f0] sm:$0xff]
    %v3527 = vld [vmem:[#allocation3 + $0x800] sm:$0xff]
    %v3528 = vld [vmem:[#allocation3 + $0x7c0] ss:$0 sm:$0xff]
    %v3530 = vsel %vm487, %v3521, 0
    %3532 = vmatprep.subr.mxu0 0.0
    %3533 = vmatpush1.msra.mxu0 0.0
    %3534 = vmatprep.subr.mxu0 0.0
    %3535 = vmatpush1.msra.mxu0 0.0
    %3536 = vmatprep.subr.mxu0 0.0
    %3537 = vmatpush1.msra.mxu0 0.0
    %3538 = vmatprep.subr.mxu0 0.0
    %3539 = vmatpush1.msra.mxu0 0.0
    %3540 = vmatprep.subr.mxu0 0.0
    %3541 = vmatpush1.msra.mxu0 0.0
    %3542 = vmatprep.subr.mxu0 0.0
    %3543 = vmatpush1.msra.mxu0 0.0
    %3544 = vmatprep.subr.mxu0 0.0
    %3545 = vmatpush1.msra.mxu0 0.0
    %3546 = vmatprep.subr.mxu0 0.0
    %3547 = vmatpush1.msra.mxu0 0.0
    %3548 = vmatprep.subr.mxu0 0.0
    %3549 = vmatpush1.msra.mxu0 0.0
    %3550 = vmatprep.subr.mxu0 0.0
    %3551 = vmatpush1.msra.mxu0 0.0
    %3552 = vmatprep.subr.mxu0 0.0
    %3553 = vmatpush1.msra.mxu0 0.0
    %3554 = vmatprep.subr.mxu0 0.0
    %3555 = vmatpush1.msra.mxu0 0.0
    %3556 = vmatprep.subr.mxu0 0.0
    %3557 = vmatpush1.msra.mxu0 %v3527
    %3558 = vmatprep.subr.mxu0 0.0
    %3559 = vmatpush1.msra.mxu0 %v3526
    %3560 = vmatprep.subr.mxu0 0.0
    %3561 = vmatpush1.msra.mxu0 %v3525
    %3562 = vmatprep.subr.mxu0 0.0
    %3563 = vmatpush1.msra.mxu0 %v3524
    %3564 = vmatprep.subr.mxu0 0.0
    %3565 = vmatpush2.msra.mxu0 0.0
    %3566 = vmatprep.subr.mxu0 0.0
    %3567 = vmatpush2.msra.mxu0 0.0
    %3568 = vmatprep.subr.mxu0 0.0
    %3569 = vmatpush2.msra.mxu0 0.0
    %3570 = vmatprep.subr.mxu0 0.0
    %3571 = vmatpush2.msra.mxu0 0.0
    %3572 = vmatprep.subr.mxu0 0.0
    %3573 = vmatpush2.msra.mxu0 0.0
    %3574 = vmatprep.subr.mxu0 0.0
    %3575 = vmatpush2.msra.mxu0 0.0
    %3576 = vmatprep.subr.mxu0 0.0
    %3577 = vmatpush2.msra.mxu0 0.0
    %3578 = vmatprep.subr.mxu0 0.0
    %3579 = vmatpush2.msra.mxu0 0.0
    %3580 = vmatprep.subr.mxu0 0.0
    %3581 = vmatpush2.msra.mxu0 0.0
    %3582 = vmatprep.subr.mxu0 0.0
    %3583 = vmatpush2.msra.mxu0 0.0
    %3584 = vmatprep.subr.mxu0 0.0
    %3585 = vmatpush2.msra.mxu0 0.0
    %3586 = vmatprep.subr.mxu0 0.0
    %3587 = vmatpush2.msra.mxu0 0.0
    %3588 = vmatprep.subr.mxu0 0.0
    %3589 = vmatpush2.msra.mxu0 0.0
    %3590 = vmatprep.subr.mxu0 0.0
    %3591 = vmatpush2.msra.mxu0 0.0
    %3592 = vmatprep.subr.mxu0 0.0
    %3593 = vmatpush2.msra.mxu0 0.0
    %3594 = vmatprep.subr.mxu0 0.0
    %3595 = vmatpush2.msra.mxu0 0.0
    %3596 = vmatprep.mubr.f32.mxu0 0.0
    %3597 = vmatmul.mubr.f32.gmra.mxu0 %v3530
    %v3598 = vpop.f32.mrf.mxu0
    %v3599 = vadd.f32 %v3528, %v3598
    %v3600 = vpop.f32.mrf.mxu0
    %3601 = vdwg.mxu0
    %3606 = vrot.lane.b32.xlu0 %v3524, 112
    %v3607 = vpop.permute.xlu0 %3606
    %3608 = vrot.lane.b32.xlu0 %v3525, 112
    %v3609 = vpop.permute.xlu0 %3608
    %3610 = vrot.lane.b32.xlu0 %v3526, 112
    %v3611 = vpop.permute.xlu0 %3610
    %3612 = vrot.lane.b32.xlu0 %v3527, 112
    %v3613 = vpop.permute.xlu0 %3612
    %3619 = vrot.lane.b32.xlu0 %v3528, 112
    %v3620 = vpop.permute.xlu0 %3619
    %v3623 = vsel %vm487, %v3522, 0
    %v3626 = vsel %vm487, %v3523, 0
    %3628 = vmatprep.subr.mxu0 0.0
    %3629 = vmatpush1.msra.mxu0 0.0
    %3630 = vmatprep.subr.mxu0 0.0
    %3631 = vmatpush1.msra.mxu0 0.0
    %3632 = vmatprep.subr.mxu0 0.0
    %3633 = vmatpush1.msra.mxu0 0.0
    %3634 = vmatprep.subr.mxu0 0.0
    %3635 = vmatpush1.msra.mxu0 0.0
    %3636 = vmatprep.subr.mxu0 0.0
    %3637 = vmatpush1.msra.mxu0 0.0
    %3638 = vmatprep.subr.mxu0 0.0
    %3639 = vmatpush1.msra.mxu0 0.0
    %3640 = vmatprep.subr.mxu0 0.0
    %3641 = vmatpush1.msra.mxu0 0.0
    %3642 = vmatprep.subr.mxu0 0.0
    %3643 = vmatpush1.msra.mxu0 0.0
    %3644 = vmatprep.subr.mxu0 0.0
    %3645 = vmatpush1.msra.mxu0 0.0
    %3646 = vmatprep.subr.mxu0 0.0
    %3647 = vmatpush1.msra.mxu0 0.0
    %3648 = vmatprep.subr.mxu0 0.0
    %3649 = vmatpush1.msra.mxu0 0.0
    %3650 = vmatprep.subr.mxu0 0.0
    %3651 = vmatpush1.msra.mxu0 0.0
    %3652 = vmatprep.subr.mxu0 0.0
    %3653 = vmatpush1.msra.mxu0 %v3613
    %3654 = vmatprep.subr.mxu0 0.0
    %3655 = vmatpush1.msra.mxu0 %v3611
    %3656 = vmatprep.subr.mxu0 0.0
    %3657 = vmatpush1.msra.mxu0 %v3609
    %3658 = vmatprep.subr.mxu0 0.0
    %3659 = vmatpush1.msra.mxu0 %v3607
    %3660 = vmatprep.subr.mxu0 0.0
    %3661 = vmatpush2.msra.mxu0 0.0
    %3662 = vmatprep.subr.mxu0 0.0
    %3663 = vmatpush2.msra.mxu0 0.0
    %3664 = vmatprep.subr.mxu0 0.0
    %3665 = vmatpush2.msra.mxu0 0.0
    %3666 = vmatprep.subr.mxu0 0.0
    %3667 = vmatpush2.msra.mxu0 0.0
    %3668 = vmatprep.subr.mxu0 0.0
    %3669 = vmatpush2.msra.mxu0 0.0
    %3670 = vmatprep.subr.mxu0 0.0
    %3671 = vmatpush2.msra.mxu0 0.0
    %3672 = vmatprep.subr.mxu0 0.0
    %3673 = vmatpush2.msra.mxu0 0.0
    %3674 = vmatprep.subr.mxu0 0.0
    %3675 = vmatpush2.msra.mxu0 0.0
    %3676 = vmatprep.subr.mxu0 0.0
    %3677 = vmatpush2.msra.mxu0 0.0
    %3678 = vmatprep.subr.mxu0 0.0
    %3679 = vmatpush2.msra.mxu0 0.0
    %3680 = vmatprep.subr.mxu0 0.0
    %3681 = vmatpush2.msra.mxu0 0.0
    %3682 = vmatprep.subr.mxu0 0.0
    %3683 = vmatpush2.msra.mxu0 0.0
    %3684 = vmatprep.subr.mxu0 0.0
    %3685 = vmatpush2.msra.mxu0 0.0
    %3686 = vmatprep.subr.mxu0 0.0
    %3687 = vmatpush2.msra.mxu0 0.0
    %3688 = vmatprep.subr.mxu0 0.0
    %3689 = vmatpush2.msra.mxu0 0.0
    %3690 = vmatprep.subr.mxu0 0.0
    %3691 = vmatpush2.msra.mxu0 0.0
    %3692 = vmatprep.mubr.f32.mxu0 0.0
    %3693 = vmatmul.mubr.f32.gmra.mxu0 %v3623
    %v3694 = vpop.f32.mrf.mxu0
    %v3695 = vadd.f32 %v3620, %v3694
    %v3696 = vpop.f32.mrf.mxu0
    %3697 = vmatprep.mubr.f32.mxu0 0.0
    %3698 = vmatmul.mubr.f32.gmra.mxu0 %v3626
    %v3699 = vpop.f32.mrf.mxu0
    %v3700 = vadd.f32 %v3620, %v3699
    %v3701 = vpop.f32.mrf.mxu0
    %3702 = vdwg.mxu0
    %3703 = vrot.lane.b32.xlu0 %v3524, 96
    %v3704 = vpop.permute.xlu0 %3703
    %3705 = vrot.lane.b32.xlu0 %v3525, 96
    %v3706 = vpop.permute.xlu0 %3705
    %3707 = vrot.lane.b32.xlu0 %v3526, 96
    %v3708 = vpop.permute.xlu0 %3707
    %3709 = vrot.lane.b32.xlu0 %v3527, 96
    %v3710 = vpop.permute.xlu0 %3709
    %3715 = vrot.lane.b32.xlu0 %v3528, 96
    %v3716 = vpop.permute.xlu0 %3715
    %v3719 = vsel %vm487, %v2839, 0
    %v3722 = vsel %vm487, %v2840, 0
    %3724 = vmatprep.subr.mxu0 0.0
    %3725 = vmatpush1.msra.mxu0 0.0
    %3726 = vmatprep.subr.mxu0 0.0
    %3727 = vmatpush1.msra.mxu0 0.0
    %3728 = vmatprep.subr.mxu0 0.0
    %3729 = vmatpush1.msra.mxu0 0.0
    %3730 = vmatprep.subr.mxu0 0.0
    %3731 = vmatpush1.msra.mxu0 0.0
    %3732 = vmatprep.subr.mxu0 0.0
    %3733 = vmatpush1.msra.mxu0 0.0
    %3734 = vmatprep.subr.mxu0 0.0
    %3735 = vmatpush1.msra.mxu0 0.0
    %3736 = vmatprep.subr.mxu0 0.0
    %3737 = vmatpush1.msra.mxu0 0.0
    %3738 = vmatprep.subr.mxu0 0.0
    %3739 = vmatpush1.msra.mxu0 0.0
    %3740 = vmatprep.subr.mxu0 0.0
    %3741 = vmatpush1.msra.mxu0 0.0
    %3742 = vmatprep.subr.mxu0 0.0
    %3743 = vmatpush1.msra.mxu0 0.0
    %3744 = vmatprep.subr.mxu0 0.0
    %3745 = vmatpush1.msra.mxu0 0.0
    %3746 = vmatprep.subr.mxu0 0.0
    %3747 = vmatpush1.msra.mxu0 0.0
    %3748 = vmatprep.subr.mxu0 0.0
    %3749 = vmatpush1.msra.mxu0 %v3710
    %3750 = vmatprep.subr.mxu0 0.0
    %3751 = vmatpush1.msra.mxu0 %v3708
    %3752 = vmatprep.subr.mxu0 0.0
    %3753 = vmatpush1.msra.mxu0 %v3706
    %3754 = vmatprep.subr.mxu0 0.0
    %3755 = vmatpush1.msra.mxu0 %v3704
    %3756 = vmatprep.subr.mxu0 0.0
    %3757 = vmatpush2.msra.mxu0 0.0
    %3758 = vmatprep.subr.mxu0 0.0
    %3759 = vmatpush2.msra.mxu0 0.0
    %3760 = vmatprep.subr.mxu0 0.0
    %3761 = vmatpush2.msra.mxu0 0.0
    %3762 = vmatprep.subr.mxu0 0.0
    %3763 = vmatpush2.msra.mxu0 0.0
    %3764 = vmatprep.subr.mxu0 0.0
    %3765 = vmatpush2.msra.mxu0 0.0
    %3766 = vmatprep.subr.mxu0 0.0
    %3767 = vmatpush2.msra.mxu0 0.0
    %3768 = vmatprep.subr.mxu0 0.0
    %3769 = vmatpush2.msra.mxu0 0.0
    %3770 = vmatprep.subr.mxu0 0.0
    %3771 = vmatpush2.msra.mxu0 0.0
    %3772 = vmatprep.subr.mxu0 0.0
    %3773 = vmatpush2.msra.mxu0 0.0
    %3774 = vmatprep.subr.mxu0 0.0
    %3775 = vmatpush2.msra.mxu0 0.0
    %3776 = vmatprep.subr.mxu0 0.0
    %3777 = vmatpush2.msra.mxu0 0.0
    %3778 = vmatprep.subr.mxu0 0.0
    %3779 = vmatpush2.msra.mxu0 0.0
    %3780 = vmatprep.subr.mxu0 0.0
    %3781 = vmatpush2.msra.mxu0 0.0
    %3782 = vmatprep.subr.mxu0 0.0
    %3783 = vmatpush2.msra.mxu0 0.0
    %3784 = vmatprep.subr.mxu0 0.0
    %3785 = vmatpush2.msra.mxu0 0.0
    %3786 = vmatprep.subr.mxu0 0.0
    %3787 = vmatpush2.msra.mxu0 0.0
    %3788 = vmatprep.mubr.f32.mxu0 0.0
    %3789 = vmatmul.mubr.f32.gmra.mxu0 %v3719
    %v3790 = vpop.f32.mrf.mxu0
    %v3791 = vadd.f32 %v3716, %v3790
    %v3792 = vpop.f32.mrf.mxu0
    %3793 = vmatprep.mubr.f32.mxu0 0.0
    %3794 = vmatmul.mubr.f32.gmra.mxu0 %v3722
    %v3795 = vpop.f32.mrf.mxu0
    %v3796 = vadd.f32 %v3716, %v3795
    %v3797 = vpop.f32.mrf.mxu0
    %3798 = vdwg.mxu0
    %v3800 = vsel %vm1449, %v3599, 0
    %v3803 = vsel %vm1449, %v3695, 0
    %v3806 = vsel %vm1449, %v3700, 0
    %3808 = vmatprep.subr.mxu0 0.0
    %3809 = vmatpush1.xpose.msra.mxu0 0.0
    %3810 = vmatprep.subr.mxu0 0.0
    %3811 = vmatpush1.xpose.msra.mxu0 0.0
    %3812 = vmatprep.subr.mxu0 0.0
    %3813 = vmatpush1.xpose.msra.mxu0 0.0
    %3814 = vmatprep.subr.mxu0 0.0
    %3815 = vmatpush1.xpose.msra.mxu0 0.0
    %3816 = vmatprep.subr.mxu0 0.0
    %3817 = vmatpush1.xpose.msra.mxu0 0.0
    %3818 = vmatprep.subr.mxu0 0.0
    %3819 = vmatpush1.xpose.msra.mxu0 0.0
    %3820 = vmatprep.subr.mxu0 0.0
    %3821 = vmatpush1.xpose.msra.mxu0 0.0
    %3822 = vmatprep.subr.mxu0 0.0
    %3823 = vmatpush1.xpose.msra.mxu0 0.0
    %3824 = vmatprep.subr.mxu0 0.0
    %3825 = vmatpush1.xpose.msra.mxu0 0.0
    %3826 = vmatprep.subr.mxu0 0.0
    %3827 = vmatpush1.xpose.msra.mxu0 0.0
    %3828 = vmatprep.subr.mxu0 0.0
    %3829 = vmatpush1.xpose.msra.mxu0 0.0
    %3830 = vmatprep.subr.mxu0 0.0
    %3831 = vmatpush1.xpose.msra.mxu0 0.0
    %3832 = vmatprep.subr.mxu0 0.0
    %3833 = vmatpush1.xpose.msra.mxu0 0.0
    %3834 = vmatprep.subr.mxu0 0.0
    %3835 = vmatpush1.xpose.msra.mxu0 0.0
    %3836 = vmatprep.subr.mxu0 0.0
    %3837 = vmatpush1.xpose.msra.mxu0 %v3806
    %3838 = vmatprep.subr.mxu0 0.0
    %3839 = vmatpush1.xpose.msra.mxu0 %v3803
    %3840 = vmatprep.subr.mxu0 0.0
    %3841 = vmatpush2.xpose.msra.mxu0 0.0
    %3842 = vmatprep.subr.mxu0 0.0
    %3843 = vmatpush2.xpose.msra.mxu0 0.0
    %3844 = vmatprep.subr.mxu0 0.0
    %3845 = vmatpush2.xpose.msra.mxu0 0.0
    %3846 = vmatprep.subr.mxu0 0.0
    %3847 = vmatpush2.xpose.msra.mxu0 0.0
    %3848 = vmatprep.subr.mxu0 0.0
    %3849 = vmatpush2.xpose.msra.mxu0 0.0
    %3850 = vmatprep.subr.mxu0 0.0
    %3851 = vmatpush2.xpose.msra.mxu0 0.0
    %3852 = vmatprep.subr.mxu0 0.0
    %3853 = vmatpush2.xpose.msra.mxu0 0.0
    %3854 = vmatprep.subr.mxu0 0.0
    %3855 = vmatpush2.xpose.msra.mxu0 0.0
    %3856 = vmatprep.subr.mxu0 0.0
    %3857 = vmatpush2.xpose.msra.mxu0 0.0
    %3858 = vmatprep.subr.mxu0 0.0
    %3859 = vmatpush2.xpose.msra.mxu0 0.0
    %3860 = vmatprep.subr.mxu0 0.0
    %3861 = vmatpush2.xpose.msra.mxu0 0.0
    %3862 = vmatprep.subr.mxu0 0.0
    %3863 = vmatpush2.xpose.msra.mxu0 0.0
    %3864 = vmatprep.subr.mxu0 0.0
    %3865 = vmatpush2.xpose.msra.mxu0 0.0
    %3866 = vmatprep.subr.mxu0 0.0
    %3867 = vmatpush2.xpose.msra.mxu0 0.0
    %3868 = vmatprep.subr.mxu0 0.0
    %3869 = vmatpush2.xpose.msra.mxu0 0.0
    %3870 = vmatprep.subr.mxu0 0.0
    %3871 = vmatpush2.xpose.msra.mxu0 0.0
    %3872 = vmatprep.mubr.f32.mxu0 0.0
    %3873 = vmatmul.mubr.f32.gmra.mxu0 %v3800
    %v3874 = vpop.f32.mrf.mxu0
    %v3875 = vadd.f32 0.0, %v3874
    %v3876 = vpop.f32.mrf.mxu0
    %3877 = vdwg.mxu0
    %v3878 = vsel %vm1529, %v3875, -inf
    %3879 = vmax.xlane.f32.xlu0 %v3878
    %v3880 = vpop.xlane.xlu0 %3879
    %v3881 = vsub.f32 %v3875, %v3880
    %v3882 = vmul.f32 %v3881, 1.442695
    %v3883 = vpow.pop %v3882
    %v3884 = vsel %vm1529, %v3883, 0.0
    %3885 = vadd.xlane.f32.xlu0 %v3884
    %v3886 = vpop.xlane.xlu0 %3885
    %v3887 = vrcp.pop %v3886
    %v3888 = vmul.f32 %v3883, %v3887
    %v3890 = vsel %vm736, %v3888, 0
    %3892 = vmatprep.subr.mxu0 0.0
    %3893 = vmatpush1.msra.mxu0 0.0
    %3894 = vmatprep.subr.mxu0 0.0
    %3895 = vmatpush1.msra.mxu0 0.0
    %3896 = vmatprep.subr.mxu0 0.0
    %3897 = vmatpush1.msra.mxu0 0.0
    %3898 = vmatprep.subr.mxu0 0.0
    %3899 = vmatpush1.msra.mxu0 0.0
    %3900 = vmatprep.subr.mxu0 0.0
    %3901 = vmatpush1.msra.mxu0 0.0
    %3902 = vmatprep.subr.mxu0 0.0
    %3903 = vmatpush1.msra.mxu0 0.0
    %3904 = vmatprep.subr.mxu0 0.0
    %3905 = vmatpush1.msra.mxu0 0.0
    %3906 = vmatprep.subr.mxu0 0.0
    %3907 = vmatpush1.msra.mxu0 0.0
    %3908 = vmatprep.subr.mxu0 0.0
    %3909 = vmatpush1.msra.mxu0 0.0
    %3910 = vmatprep.subr.mxu0 0.0
    %3911 = vmatpush1.msra.mxu0 0.0
    %3912 = vmatprep.subr.mxu0 0.0
    %3913 = vmatpush1.msra.mxu0 0.0
    %3914 = vmatprep.subr.mxu0 0.0
    %3915 = vmatpush1.msra.mxu0 0.0
    %3916 = vmatprep.subr.mxu0 0.0
    %3917 = vmatpush1.msra.mxu0 0.0
    %3918 = vmatprep.subr.mxu0 0.0
    %3919 = vmatpush1.msra.mxu0 0.0
    %3920 = vmatprep.subr.mxu0 0.0
    %3921 = vmatpush1.msra.mxu0 %v3796
    %3922 = vmatprep.subr.mxu0 0.0
    %3923 = vmatpush1.msra.mxu0 %v3791
    %3924 = vmatprep.subr.mxu0 0.0
    %3925 = vmatpush2.msra.mxu0 0.0
    %3926 = vmatprep.subr.mxu0 0.0
    %3927 = vmatpush2.msra.mxu0 0.0
    %3928 = vmatprep.subr.mxu0 0.0
    %3929 = vmatpush2.msra.mxu0 0.0
    %3930 = vmatprep.subr.mxu0 0.0
    %3931 = vmatpush2.msra.mxu0 0.0
    %3932 = vmatprep.subr.mxu0 0.0
    %3933 = vmatpush2.msra.mxu0 0.0
    %3934 = vmatprep.subr.mxu0 0.0
    %3935 = vmatpush2.msra.mxu0 0.0
    %3936 = vmatprep.subr.mxu0 0.0
    %3937 = vmatpush2.msra.mxu0 0.0
    %3938 = vmatprep.subr.mxu0 0.0
    %3939 = vmatpush2.msra.mxu0 0.0
    %3940 = vmatprep.subr.mxu0 0.0
    %3941 = vmatpush2.msra.mxu0 0.0
    %3942 = vmatprep.subr.mxu0 0.0
    %3943 = vmatpush2.msra.mxu0 0.0
    %3944 = vmatprep.subr.mxu0 0.0
    %3945 = vmatpush2.msra.mxu0 0.0
    %3946 = vmatprep.subr.mxu0 0.0
    %3947 = vmatpush2.msra.mxu0 0.0
    %3948 = vmatprep.subr.mxu0 0.0
    %3949 = vmatpush2.msra.mxu0 0.0
    %3950 = vmatprep.subr.mxu0 0.0
    %3951 = vmatpush2.msra.mxu0 0.0
    %3952 = vmatprep.subr.mxu0 0.0
    %3953 = vmatpush2.msra.mxu0 0.0
    %3954 = vmatprep.subr.mxu0 0.0
    %3955 = vmatpush2.msra.mxu0 0.0
    %3956 = vmatprep.mubr.f32.mxu0 0.0
    %3957 = vmatmul.mubr.f32.gmra.mxu0 %v3890
    %v3958 = vpop.f32.mrf.mxu0
    %v3959 = vadd.f32 0.0, %v3958
    %v3960 = vpop.f32.mrf.mxu0
    %3961 = vdwg.mxu0
    %3962 = vrot.lane.b32.xlu0 %v3599, 120
    %v3963 = vpop.permute.xlu0 %3962
    %3964 = vrot.lane.b32.xlu0 %v3695, 120
    %v3965 = vpop.permute.xlu0 %3964
    %3966 = vrot.lane.b32.xlu0 %v3700, 120
    %v3967 = vpop.permute.xlu0 %3966
    %v3968 = vsel %vm1449, %v3963, 0
    %v3970 = vsel %vm1449, %v3965, 0
    %v3972 = vsel %vm1449, %v3967, 0
    %3974 = vmatprep.subr.mxu0 0.0
    %3975 = vmatpush1.xpose.msra.mxu0 0.0
    %3976 = vmatprep.subr.mxu0 0.0
    %3977 = vmatpush1.xpose.msra.mxu0 0.0
    %3978 = vmatprep.subr.mxu0 0.0
    %3979 = vmatpush1.xpose.msra.mxu0 0.0
    %3980 = vmatprep.subr.mxu0 0.0
    %3981 = vmatpush1.xpose.msra.mxu0 0.0
    %3982 = vmatprep.subr.mxu0 0.0
    %3983 = vmatpush1.xpose.msra.mxu0 0.0
    %3984 = vmatprep.subr.mxu0 0.0
    %3985 = vmatpush1.xpose.msra.mxu0 0.0
    %3986 = vmatprep.subr.mxu0 0.0
    %3987 = vmatpush1.xpose.msra.mxu0 0.0
    %3988 = vmatprep.subr.mxu0 0.0
    %3989 = vmatpush1.xpose.msra.mxu0 0.0
    %3990 = vmatprep.subr.mxu0 0.0
    %3991 = vmatpush1.xpose.msra.mxu0 0.0
    %3992 = vmatprep.subr.mxu0 0.0
    %3993 = vmatpush1.xpose.msra.mxu0 0.0
    %3994 = vmatprep.subr.mxu0 0.0
    %3995 = vmatpush1.xpose.msra.mxu0 0.0
    %3996 = vmatprep.subr.mxu0 0.0
    %3997 = vmatpush1.xpose.msra.mxu0 0.0
    %3998 = vmatprep.subr.mxu0 0.0
    %3999 = vmatpush1.xpose.msra.mxu0 0.0
    %4000 = vmatprep.subr.mxu0 0.0
    %4001 = vmatpush1.xpose.msra.mxu0 0.0
    %4002 = vmatprep.subr.mxu0 0.0
    %4003 = vmatpush1.xpose.msra.mxu0 %v3972
    %4004 = vmatprep.subr.mxu0 0.0
    %4005 = vmatpush1.xpose.msra.mxu0 %v3970
    %4006 = vmatprep.subr.mxu0 0.0
    %4007 = vmatpush2.xpose.msra.mxu0 0.0
    %4008 = vmatprep.subr.mxu0 0.0
    %4009 = vmatpush2.xpose.msra.mxu0 0.0
    %4010 = vmatprep.subr.mxu0 0.0
    %4011 = vmatpush2.xpose.msra.mxu0 0.0
    %4012 = vmatprep.subr.mxu0 0.0
    %4013 = vmatpush2.xpose.msra.mxu0 0.0
    %4014 = vmatprep.subr.mxu0 0.0
    %4015 = vmatpush2.xpose.msra.mxu0 0.0
    %4016 = vmatprep.subr.mxu0 0.0
    %4017 = vmatpush2.xpose.msra.mxu0 0.0
    %4018 = vmatprep.subr.mxu0 0.0
    %4019 = vmatpush2.xpose.msra.mxu0 0.0
    %4020 = vmatprep.subr.mxu0 0.0
    %4021 = vmatpush2.xpose.msra.mxu0 0.0
    %4022 = vmatprep.subr.mxu0 0.0
    %4023 = vmatpush2.xpose.msra.mxu0 0.0
    %4024 = vmatprep.subr.mxu0 0.0
    %4025 = vmatpush2.xpose.msra.mxu0 0.0
    %4026 = vmatprep.subr.mxu0 0.0
    %4027 = vmatpush2.xpose.msra.mxu0 0.0
    %4028 = vmatprep.subr.mxu0 0.0
    %4029 = vmatpush2.xpose.msra.mxu0 0.0
    %4030 = vmatprep.subr.mxu0 0.0
    %4031 = vmatpush2.xpose.msra.mxu0 0.0
    %4032 = vmatprep.subr.mxu0 0.0
    %4033 = vmatpush2.xpose.msra.mxu0 0.0
    %4034 = vmatprep.subr.mxu0 0.0
    %4035 = vmatpush2.xpose.msra.mxu0 0.0
    %4036 = vmatprep.subr.mxu0 0.0
    %4037 = vmatpush2.xpose.msra.mxu0 0.0
    %4038 = vmatprep.mubr.f32.mxu0 0.0
    %4039 = vmatmul.mubr.f32.gmra.mxu0 %v3968
    %v4040 = vpop.f32.mrf.mxu0
    %v4041 = vadd.f32 0.0, %v4040
    %v4042 = vpop.f32.mrf.mxu0
    %4043 = vdwg.mxu0
    %v4044 = vsel %vm1529, %v4041, -inf
    %4045 = vmax.xlane.f32.xlu0 %v4044
    %v4046 = vpop.xlane.xlu0 %4045
    %v4047 = vsub.f32 %v4041, %v4046
    %v4048 = vmul.f32 %v4047, 1.442695
    %v4049 = vpow.pop %v4048
    %v4050 = vsel %vm1529, %v4049, 0.0
    %4051 = vadd.xlane.f32.xlu0 %v4050
    %v4052 = vpop.xlane.xlu0 %4051
    %v4053 = vrcp.pop %v4052
    %v4054 = vmul.f32 %v4049, %v4053
    %4057 = vrot.lane.b32.xlu0 %v3791, 120
    %v4058 = vpop.permute.xlu0 %4057
    %4059 = vrot.lane.b32.xlu0 %v3796, 120
    %v4060 = vpop.permute.xlu0 %4059
    %v4064 = vsel %vm736, %v4054, 0
    %4066 = vmatprep.subr.mxu0 0.0
    %4067 = vmatpush1.msra.mxu0 0.0
    %4068 = vmatprep.subr.mxu0 0.0
    %4069 = vmatpush1.msra.mxu0 0.0
    %4070 = vmatprep.subr.mxu0 0.0
    %4071 = vmatpush1.msra.mxu0 0.0
    %4072 = vmatprep.subr.mxu0 0.0
    %4073 = vmatpush1.msra.mxu0 0.0
    %4074 = vmatprep.subr.mxu0 0.0
    %4075 = vmatpush1.msra.mxu0 0.0
    %4076 = vmatprep.subr.mxu0 0.0
    %4077 = vmatpush1.msra.mxu0 0.0
    %4078 = vmatprep.subr.mxu0 0.0
    %4079 = vmatpush1.msra.mxu0 0.0
    %4080 = vmatprep.subr.mxu0 0.0
    %4081 = vmatpush1.msra.mxu0 0.0
    %4082 = vmatprep.subr.mxu0 0.0
    %4083 = vmatpush1.msra.mxu0 0.0
    %4084 = vmatprep.subr.mxu0 0.0
    %4085 = vmatpush1.msra.mxu0 0.0
    %4086 = vmatprep.subr.mxu0 0.0
    %4087 = vmatpush1.msra.mxu0 0.0
    %4088 = vmatprep.subr.mxu0 0.0
    %4089 = vmatpush1.msra.mxu0 0.0
    %4090 = vmatprep.subr.mxu0 0.0
    %4091 = vmatpush1.msra.mxu0 0.0
    %4092 = vmatprep.subr.mxu0 0.0
    %4093 = vmatpush1.msra.mxu0 0.0
    %4094 = vmatprep.subr.mxu0 0.0
    %4095 = vmatpush1.msra.mxu0 %v4060
    %4096 = vmatprep.subr.mxu0 0.0
    %4097 = vmatpush1.msra.mxu0 %v4058
    %4098 = vmatprep.subr.mxu0 0.0
    %4099 = vmatpush2.msra.mxu0 0.0
    %4100 = vmatprep.subr.mxu0 0.0
    %4101 = vmatpush2.msra.mxu0 0.0
    %4102 = vmatprep.subr.mxu0 0.0
    %4103 = vmatpush2.msra.mxu0 0.0
    %4104 = vmatprep.subr.mxu0 0.0
    %4105 = vmatpush2.msra.mxu0 0.0
    %4106 = vmatprep.subr.mxu0 0.0
    %4107 = vmatpush2.msra.mxu0 0.0
    %4108 = vmatprep.subr.mxu0 0.0
    %4109 = vmatpush2.msra.mxu0 0.0
    %4110 = vmatprep.subr.mxu0 0.0
    %4111 = vmatpush2.msra.mxu0 0.0
    %4112 = vmatprep.subr.mxu0 0.0
    %4113 = vmatpush2.msra.mxu0 0.0
    %4114 = vmatprep.subr.mxu0 0.0
    %4115 = vmatpush2.msra.mxu0 0.0
    %4116 = vmatprep.subr.mxu0 0.0
    %4117 = vmatpush2.msra.mxu0 0.0
    %4118 = vmatprep.subr.mxu0 0.0
    %4119 = vmatpush2.msra.mxu0 0.0
    %4120 = vmatprep.subr.mxu0 0.0
    %4121 = vmatpush2.msra.mxu0 0.0
    %4122 = vmatprep.subr.mxu0 0.0
    %4123 = vmatpush2.msra.mxu0 0.0
    %4124 = vmatprep.subr.mxu0 0.0
    %4125 = vmatpush2.msra.mxu0 0.0
    %4126 = vmatprep.subr.mxu0 0.0
    %4127 = vmatpush2.msra.mxu0 0.0
    %4128 = vmatprep.subr.mxu0 0.0
    %4129 = vmatpush2.msra.mxu0 0.0
    %4130 = vmatprep.mubr.f32.mxu0 0.0
    %4131 = vmatmul.mubr.f32.gmra.mxu0 %v4064
    %v4132 = vpop.f32.mrf.mxu0
    %v4133 = vadd.f32 0.0, %v4132
    %v4134 = vpop.f32.mrf.mxu0
    %4135 = vdwg.mxu0
    %4137 = vrot.lane.b32.xlu0 %v4133, 8
    %v4138 = vpop.permute.xlu0 %4137
    %v4140 = vsel %vm1449, %v3959, %v4138
    %v4141 = vld [vmem:[#allocation3 + $0x7a0] sm:$0xff]
    %v4142 = vld [vmem:[#allocation3 + $0x7b0] sm:$0xff]
    %v4143 = vld [vmem:[#allocation3 + $0x790] ss:$0 sm:$0xff]
    %v4145 = vsel %vm736, %v4140, 0
    %4147 = vmatprep.subr.mxu0 0.0
    %4148 = vmatpush1.msra.mxu0 0.0
    %4149 = vmatprep.subr.mxu0 0.0
    %4150 = vmatpush1.msra.mxu0 0.0
    %4151 = vmatprep.subr.mxu0 0.0
    %4152 = vmatpush1.msra.mxu0 0.0
    %4153 = vmatprep.subr.mxu0 0.0
    %4154 = vmatpush1.msra.mxu0 0.0
    %4155 = vmatprep.subr.mxu0 0.0
    %4156 = vmatpush1.msra.mxu0 0.0
    %4157 = vmatprep.subr.mxu0 0.0
    %4158 = vmatpush1.msra.mxu0 0.0
    %4159 = vmatprep.subr.mxu0 0.0
    %4160 = vmatpush1.msra.mxu0 0.0
    %4161 = vmatprep.subr.mxu0 0.0
    %4162 = vmatpush1.msra.mxu0 0.0
    %4163 = vmatprep.subr.mxu0 0.0
    %4164 = vmatpush1.msra.mxu0 0.0
    %4165 = vmatprep.subr.mxu0 0.0
    %4166 = vmatpush1.msra.mxu0 0.0
    %4167 = vmatprep.subr.mxu0 0.0
    %4168 = vmatpush1.msra.mxu0 0.0
    %4169 = vmatprep.subr.mxu0 0.0
    %4170 = vmatpush1.msra.mxu0 0.0
    %4171 = vmatprep.subr.mxu0 0.0
    %4172 = vmatpush1.msra.mxu0 0.0
    %4173 = vmatprep.subr.mxu0 0.0
    %4174 = vmatpush1.msra.mxu0 0.0
    %4175 = vmatprep.subr.mxu0 0.0
    %4176 = vmatpush1.msra.mxu0 %v4142
    %4177 = vmatprep.subr.mxu0 0.0
    %4178 = vmatpush1.msra.mxu0 %v4141
    %4179 = vmatprep.subr.mxu0 0.0
    %4180 = vmatpush2.msra.mxu0 0.0
    %4181 = vmatprep.subr.mxu0 0.0
    %4182 = vmatpush2.msra.mxu0 0.0
    %4183 = vmatprep.subr.mxu0 0.0
    %4184 = vmatpush2.msra.mxu0 0.0
    %4185 = vmatprep.subr.mxu0 0.0
    %4186 = vmatpush2.msra.mxu0 0.0
    %4187 = vmatprep.subr.mxu0 0.0
    %4188 = vmatpush2.msra.mxu0 0.0
    %4189 = vmatprep.subr.mxu0 0.0
    %4190 = vmatpush2.msra.mxu0 0.0
    %4191 = vmatprep.subr.mxu0 0.0
    %4192 = vmatpush2.msra.mxu0 0.0
    %4193 = vmatprep.subr.mxu0 0.0
    %4194 = vmatpush2.msra.mxu0 0.0
    %4195 = vmatprep.subr.mxu0 0.0
    %4196 = vmatpush2.msra.mxu0 0.0
    %4197 = vmatprep.subr.mxu0 0.0
    %4198 = vmatpush2.msra.mxu0 0.0
    %4199 = vmatprep.subr.mxu0 0.0
    %4200 = vmatpush2.msra.mxu0 0.0
    %4201 = vmatprep.subr.mxu0 0.0
    %4202 = vmatpush2.msra.mxu0 0.0
    %4203 = vmatprep.subr.mxu0 0.0
    %4204 = vmatpush2.msra.mxu0 0.0
    %4205 = vmatprep.subr.mxu0 0.0
    %4206 = vmatpush2.msra.mxu0 0.0
    %4207 = vmatprep.subr.mxu0 0.0
    %4208 = vmatpush2.msra.mxu0 0.0
    %4209 = vmatprep.subr.mxu0 0.0
    %4210 = vmatpush2.msra.mxu0 0.0
    %4211 = vmatprep.mubr.f32.mxu0 0.0
    %4212 = vmatmul.mubr.f32.gmra.mxu0 %v4145
    %v4213 = vpop.f32.mrf.mxu0
    %v4214 = vadd.f32 %v4143, %v4213
    %v4215 = vpop.f32.mrf.mxu0
    %4216 = vdwg.mxu0
    %v4217 = vadd.f32 %v3520, %v4214
    %v4218 = vsel %vm1152, %v4217, 0.0
    %4219 = vadd.xlane.f32.xlu0 %v4218
    %v4220 = vpop.xlane.xlu0 %4219
    %v4221 = vmul.f32 %v4220, %v1156
    %v4222 = vsub.f32 %v4217, %v4221
    %v4223 = vmul.f32 %v4222, %v4222
    %v4224 = vsel %vm1152, %v4223, 0.0
    %4225 = vadd.xlane.f32.xlu0 %v4224
    %v4226 = vpop.xlane.xlu0 %4225
    %v4227 = vmul.f32 %v4226, %v1156
    %v4228 = vadd.f32 %v4227, 1e-05
    %v4229 = vrsqrt.pop %v4228
    %v4230 = vmul.f32 %v4222, %v4229
    %v4231 = vld [vmem:[#allocation3 + $0x920] ss:$0 sm:$0xff]
    %v4232 = vmul.f32 %v4230, %v4231
    %v4233 = vld [vmem:[#allocation3 + $0x910] ss:$0 sm:$0xff]
    %v4234 = vadd.f32 %v4232, %v4233
    %v4235 = vld [vmem:[#allocation3 + $0x820] sm:$0xff]
    %v4236 = vld [vmem:[#allocation3 + $0x830] sm:$0xff]
    %v4237 = vld [vmem:[#allocation3 + $0x840] sm:$0xff]
    %v4238 = vld [vmem:[#allocation3 + $0x850] sm:$0xff]
    %v4239 = vld [vmem:[#allocation3 + $0x810] ss:$0 sm:$0xff]
    %v4241 = vsel %vm487, %v4234, 0
    %4243 = vmatprep.subr.mxu0 0.0
    %4244 = vmatpush1.msra.mxu0 0.0
    %4245 = vmatprep.subr.mxu0 0.0
    %4246 = vmatpush1.msra.mxu0 0.0
    %4247 = vmatprep.subr.mxu0 0.0
    %4248 = vmatpush1.msra.mxu0 0.0
    %4249 = vmatprep.subr.mxu0 0.0
    %4250 = vmatpush1.msra.mxu0 0.0
    %4251 = vmatprep.subr.mxu0 0.0
    %4252 = vmatpush1.msra.mxu0 0.0
    %4253 = vmatprep.subr.mxu0 0.0
    %4254 = vmatpush1.msra.mxu0 0.0
    %4255 = vmatprep.subr.mxu0 0.0
    %4256 = vmatpush1.msra.mxu0 0.0
    %4257 = vmatprep.subr.mxu0 0.0
    %4258 = vmatpush1.msra.mxu0 0.0
    %4259 = vmatprep.subr.mxu0 0.0
    %4260 = vmatpush1.msra.mxu0 0.0
    %4261 = vmatprep.subr.mxu0 0.0
    %4262 = vmatpush1.msra.mxu0 0.0
    %4263 = vmatprep.subr.mxu0 0.0
    %4264 = vmatpush1.msra.mxu0 0.0
    %4265 = vmatprep.subr.mxu0 0.0
    %4266 = vmatpush1.msra.mxu0 0.0
    %4267 = vmatprep.subr.mxu0 0.0
    %4268 = vmatpush1.msra.mxu0 %v4238
    %4269 = vmatprep.subr.mxu0 0.0
    %4270 = vmatpush1.msra.mxu0 %v4237
    %4271 = vmatprep.subr.mxu0 0.0
    %4272 = vmatpush1.msra.mxu0 %v4236
    %4273 = vmatprep.subr.mxu0 0.0
    %4274 = vmatpush1.msra.mxu0 %v4235
    %4275 = vmatprep.subr.mxu0 0.0
    %4276 = vmatpush2.msra.mxu0 0.0
    %4277 = vmatprep.subr.mxu0 0.0
    %4278 = vmatpush2.msra.mxu0 0.0
    %4279 = vmatprep.subr.mxu0 0.0
    %4280 = vmatpush2.msra.mxu0 0.0
    %4281 = vmatprep.subr.mxu0 0.0
    %4282 = vmatpush2.msra.mxu0 0.0
    %4283 = vmatprep.subr.mxu0 0.0
    %4284 = vmatpush2.msra.mxu0 0.0
    %4285 = vmatprep.subr.mxu0 0.0
    %4286 = vmatpush2.msra.mxu0 0.0
    %4287 = vmatprep.subr.mxu0 0.0
    %4288 = vmatpush2.msra.mxu0 0.0
    %4289 = vmatprep.subr.mxu0 0.0
    %4290 = vmatpush2.msra.mxu0 0.0
    %4291 = vmatprep.subr.mxu0 0.0
    %4292 = vmatpush2.msra.mxu0 0.0
    %4293 = vmatprep.subr.mxu0 0.0
    %4294 = vmatpush2.msra.mxu0 0.0
    %4295 = vmatprep.subr.mxu0 0.0
    %4296 = vmatpush2.msra.mxu0 0.0
    %4297 = vmatprep.subr.mxu0 0.0
    %4298 = vmatpush2.msra.mxu0 0.0
    %4299 = vmatprep.subr.mxu0 0.0
    %4300 = vmatpush2.msra.mxu0 0.0
    %4301 = vmatprep.subr.mxu0 0.0
    %4302 = vmatpush2.msra.mxu0 0.0
    %4303 = vmatprep.subr.mxu0 0.0
    %4304 = vmatpush2.msra.mxu0 0.0
    %4305 = vmatprep.subr.mxu0 0.0
    %4306 = vmatpush2.msra.mxu0 0.0
    %4307 = vmatprep.mubr.f32.mxu0 0.0
    %4308 = vmatmul.mubr.f32.gmra.mxu0 %v4241
    %v4309 = vpop.f32.mrf.mxu0
    %v4310 = vadd.f32 %v4239, %v4309
    %v4311 = vpop.f32.mrf.mxu0
    %4312 = vdwg.mxu0
    %v4313 = vmax.f32 %v4310, 0.0
    %v4314 = vld [vmem:[#allocation3 + $0x870] sm:$0xff]
    %v4315 = vld [vmem:[#allocation3 + $0x880] sm:$0xff]
    %v4316 = vld [vmem:[#allocation3 + $0x890] sm:$0xff]
    %v4317 = vld [vmem:[#allocation3 + $0x8a0] sm:$0xff]
    %v4318 = vld [vmem:[#allocation3 + $0x8b0] sm:$0xff]
    %v4319 = vld [vmem:[#allocation3 + $0x8c0] sm:$0xff]
    %v4320 = vld [vmem:[#allocation3 + $0x8d0] sm:$0xff]
    %v4321 = vld [vmem:[#allocation3 + $0x8e0] sm:$0xff]
    %v4322 = vld [vmem:[#allocation3 + $0x860] ss:$0 sm:$0xff]
    %v4324 = vsel %vm1975, %v4313, 0
    %4326 = vmatprep.subr.mxu0 0.0
    %4327 = vmatpush1.msra.mxu0 0.0
    %4328 = vmatprep.subr.mxu0 0.0
    %4329 = vmatpush1.msra.mxu0 0.0
    %4330 = vmatprep.subr.mxu0 0.0
    %4331 = vmatpush1.msra.mxu0 0.0
    %4332 = vmatprep.subr.mxu0 0.0
    %4333 = vmatpush1.msra.mxu0 0.0
    %4334 = vmatprep.subr.mxu0 0.0
    %4335 = vmatpush1.msra.mxu0 0.0
    %4336 = vmatprep.subr.mxu0 0.0
    %4337 = vmatpush1.msra.mxu0 0.0
    %4338 = vmatprep.subr.mxu0 0.0
    %4339 = vmatpush1.msra.mxu0 0.0
    %4340 = vmatprep.subr.mxu0 0.0
    %4341 = vmatpush1.msra.mxu0 0.0
    %4342 = vmatprep.subr.mxu0 0.0
    %4343 = vmatpush1.msra.mxu0 %v4321
    %4344 = vmatprep.subr.mxu0 0.0
    %4345 = vmatpush1.msra.mxu0 %v4320
    %4346 = vmatprep.subr.mxu0 0.0
    %4347 = vmatpush1.msra.mxu0 %v4319
    %4348 = vmatprep.subr.mxu0 0.0
    %4349 = vmatpush1.msra.mxu0 %v4318
    %4350 = vmatprep.subr.mxu0 0.0
    %4351 = vmatpush1.msra.mxu0 %v4317
    %4352 = vmatprep.subr.mxu0 0.0
    %4353 = vmatpush1.msra.mxu0 %v4316
    %4354 = vmatprep.subr.mxu0 0.0
    %4355 = vmatpush1.msra.mxu0 %v4315
    %4356 = vmatprep.subr.mxu0 0.0
    %4357 = vmatpush1.msra.mxu0 %v4314
    %4358 = vmatprep.subr.mxu0 0.0
    %4359 = vmatpush2.msra.mxu0 0.0
    %4360 = vmatprep.subr.mxu0 0.0
    %4361 = vmatpush2.msra.mxu0 0.0
    %4362 = vmatprep.subr.mxu0 0.0
    %4363 = vmatpush2.msra.mxu0 0.0
    %4364 = vmatprep.subr.mxu0 0.0
    %4365 = vmatpush2.msra.mxu0 0.0
    %4366 = vmatprep.subr.mxu0 0.0
    %4367 = vmatpush2.msra.mxu0 0.0
    %4368 = vmatprep.subr.mxu0 0.0
    %4369 = vmatpush2.msra.mxu0 0.0
    %4370 = vmatprep.subr.mxu0 0.0
    %4371 = vmatpush2.msra.mxu0 0.0
    %4372 = vmatprep.subr.mxu0 0.0
    %4373 = vmatpush2.msra.mxu0 0.0
    %4374 = vmatprep.subr.mxu0 0.0
    %4375 = vmatpush2.msra.mxu0 0.0
    %4376 = vmatprep.subr.mxu0 0.0
    %4377 = vmatpush2.msra.mxu0 0.0
    %4378 = vmatprep.subr.mxu0 0.0
    %4379 = vmatpush2.msra.mxu0 0.0
    %4380 = vmatprep.subr.mxu0 0.0
    %4381 = vmatpush2.msra.mxu0 0.0
    %4382 = vmatprep.subr.mxu0 0.0
    %4383 = vmatpush2.msra.mxu0 0.0
    %4384 = vmatprep.subr.mxu0 0.0
    %4385 = vmatpush2.msra.mxu0 0.0
    %4386 = vmatprep.subr.mxu0 0.0
    %4387 = vmatpush2.msra.mxu0 0.0
    %4388 = vmatprep.subr.mxu0 0.0
    %4389 = vmatpush2.msra.mxu0 0.0
    %4390 = vmatprep.mubr.f32.mxu0 0.0
    %4391 = vmatmul.mubr.f32.gmra.mxu0 %v4324
    %v4392 = vpop.f32.mrf.mxu0
    %v4393 = vadd.f32 %v4322, %v4392
    %v4394 = vpop.f32.mrf.mxu0
    %4395 = vdwg.mxu0
    %v4396 = vadd.f32 %v4234, %v4393
    %v4397 = vsel %vm1152, %v4396, 0.0
    %4398 = vadd.xlane.f32.xlu0 %v4397
    %v4399 = vpop.xlane.xlu0 %4398
    %v4400 = vmul.f32 %v4399, %v1156
    %v4401 = vsub.f32 %v4396, %v4400
    %v4402 = vmul.f32 %v4401, %v4401
    %v4403 = vsel %vm1152, %v4402, 0.0
    %4404 = vadd.xlane.f32.xlu0 %v4403
    %v4405 = vpop.xlane.xlu0 %4404
    %v4406 = vmul.f32 %v4405, %v1156
    %v4407 = vadd.f32 %v4406, 1e-05
    %v4408 = vrsqrt.pop %v4407
    %v4409 = vmul.f32 %v4401, %v4408
    %v4410 = vld [vmem:[#allocation3 + $0x940] ss:$0 sm:$0xff]
    %v4411 = vmul.f32 %v4409, %v4410
    %v4412 = vld [vmem:[#allocation3 + $0x930] ss:$0 sm:$0xff]
    %v4413 = vadd.f32 %v4411, %v4412
    %v4414 = vadd.f32 %v4413, %v477
    %v4415 = vld [vmem:[#allocation3 + $0x750] sm:$0xff]
    %v4416 = vld [vmem:[#allocation3 + $0x760] sm:$0xff]
    %v4417 = vld [vmem:[#allocation3 + $0x770] sm:$0xff]
    %v4418 = vld [vmem:[#allocation3 + $0x780] sm:$0xff]
    %v4419 = vld [vmem:[#allocation3 + $0x740] ss:$0 sm:$0xff]
    %4420 = vmatprep.subr.mxu0 0.0
    %4421 = vmatpush1.msra.mxu0 0.0
    %4422 = vmatprep.subr.mxu0 0.0
    %4423 = vmatpush1.msra.mxu0 0.0
    %4424 = vmatprep.subr.mxu0 0.0
    %4425 = vmatpush1.msra.mxu0 0.0
    %4426 = vmatprep.subr.mxu0 0.0
    %4427 = vmatpush1.msra.mxu0 0.0
    %4428 = vmatprep.subr.mxu0 0.0
    %4429 = vmatpush1.msra.mxu0 0.0
    %4430 = vmatprep.subr.mxu0 0.0
    %4431 = vmatpush1.msra.mxu0 0.0
    %4432 = vmatprep.subr.mxu0 0.0
    %4433 = vmatpush1.msra.mxu0 0.0
    %4434 = vmatprep.subr.mxu0 0.0
    %4435 = vmatpush1.msra.mxu0 0.0
    %4436 = vmatprep.subr.mxu0 0.0
    %4437 = vmatpush1.msra.mxu0 0.0
    %4438 = vmatprep.subr.mxu0 0.0
    %4439 = vmatpush1.msra.mxu0 0.0
    %4440 = vmatprep.subr.mxu0 0.0
    %4441 = vmatpush1.msra.mxu0 0.0
    %4442 = vmatprep.subr.mxu0 0.0
    %4443 = vmatpush1.msra.mxu0 0.0
    %4444 = vmatprep.subr.mxu0 0.0
    %4445 = vmatpush1.msra.mxu0 %v4418
    %4446 = vmatprep.subr.mxu0 0.0
    %4447 = vmatpush1.msra.mxu0 %v4417
    %4448 = vmatprep.subr.mxu0 0.0
    %4449 = vmatpush1.msra.mxu0 %v4416
    %4450 = vmatprep.subr.mxu0 0.0
    %4451 = vmatpush1.msra.mxu0 %v4415
    %4452 = vmatprep.subr.mxu0 0.0
    %4453 = vmatpush2.msra.mxu0 0.0
    %4454 = vmatprep.subr.mxu0 0.0
    %4455 = vmatpush2.msra.mxu0 0.0
    %4456 = vmatprep.subr.mxu0 0.0
    %4457 = vmatpush2.msra.mxu0 0.0
    %4458 = vmatprep.subr.mxu0 0.0
    %4459 = vmatpush2.msra.mxu0 0.0
    %4460 = vmatprep.subr.mxu0 0.0
    %4461 = vmatpush2.msra.mxu0 0.0
    %4462 = vmatprep.subr.mxu0 0.0
    %4463 = vmatpush2.msra.mxu0 0.0
    %4464 = vmatprep.subr.mxu0 0.0
    %4465 = vmatpush2.msra.mxu0 0.0
    %4466 = vmatprep.subr.mxu0 0.0
    %4467 = vmatpush2.msra.mxu0 0.0
    %4468 = vmatprep.subr.mxu0 0.0
    %4469 = vmatpush2.msra.mxu0 0.0
    %4470 = vmatprep.subr.mxu0 0.0
    %4471 = vmatpush2.msra.mxu0 0.0
    %4472 = vmatprep.subr.mxu0 0.0
    %4473 = vmatpush2.msra.mxu0 0.0
    %4474 = vmatprep.subr.mxu0 0.0
    %4475 = vmatpush2.msra.mxu0 0.0
    %4476 = vmatprep.subr.mxu0 0.0
    %4477 = vmatpush2.msra.mxu0 0.0
    %4478 = vmatprep.subr.mxu0 0.0
    %4479 = vmatpush2.msra.mxu0 0.0
    %4480 = vmatprep.subr.mxu0 0.0
    %4481 = vmatpush2.msra.mxu0 0.0
    %4482 = vmatprep.subr.mxu0 0.0
    %4483 = vmatpush2.msra.mxu0 0.0
    %4484 = vmatprep.mubr.f32.mxu0 0.0
    %4485 = vmatmul.mubr.f32.gmra.mxu0 %v3623
    %v4486 = vpop.f32.mrf.mxu0
    %v4487 = vadd.f32 %v4419, %v4486
    %v4488 = vpop.f32.mrf.mxu0
    %4489 = vmatprep.mubr.f32.mxu0 0.0
    %4490 = vmatmul.mubr.f32.gmra.mxu0 %v3626
    %v4491 = vpop.f32.mrf.mxu0
    %v4492 = vadd.f32 %v4419, %v4491
    %v4493 = vpop.f32.mrf.mxu0
    %4494 = vdwg.mxu0
    %4499 = vrot.lane.b32.xlu0 %v4415, 112
    %v4500 = vpop.permute.xlu0 %4499
    %4501 = vrot.lane.b32.xlu0 %v4416, 112
    %v4502 = vpop.permute.xlu0 %4501
    %4503 = vrot.lane.b32.xlu0 %v4417, 112
    %v4504 = vpop.permute.xlu0 %4503
    %4505 = vrot.lane.b32.xlu0 %v4418, 112
    %v4506 = vpop.permute.xlu0 %4505
    %4512 = vrot.lane.b32.xlu0 %v4419, 112
    %v4513 = vpop.permute.xlu0 %4512
    %v4516 = vsel %vm487, %v4414, 0
    %4518 = vmatprep.subr.mxu0 0.0
    %4519 = vmatpush1.msra.mxu0 0.0
    %4520 = vmatprep.subr.mxu0 0.0
    %4521 = vmatpush1.msra.mxu0 0.0
    %4522 = vmatprep.subr.mxu0 0.0
    %4523 = vmatpush1.msra.mxu0 0.0
    %4524 = vmatprep.subr.mxu0 0.0
    %4525 = vmatpush1.msra.mxu0 0.0
    %4526 = vmatprep.subr.mxu0 0.0
    %4527 = vmatpush1.msra.mxu0 0.0
    %4528 = vmatprep.subr.mxu0 0.0
    %4529 = vmatpush1.msra.mxu0 0.0
    %4530 = vmatprep.subr.mxu0 0.0
    %4531 = vmatpush1.msra.mxu0 0.0
    %4532 = vmatprep.subr.mxu0 0.0
    %4533 = vmatpush1.msra.mxu0 0.0
    %4534 = vmatprep.subr.mxu0 0.0
    %4535 = vmatpush1.msra.mxu0 0.0
    %4536 = vmatprep.subr.mxu0 0.0
    %4537 = vmatpush1.msra.mxu0 0.0
    %4538 = vmatprep.subr.mxu0 0.0
    %4539 = vmatpush1.msra.mxu0 0.0
    %4540 = vmatprep.subr.mxu0 0.0
    %4541 = vmatpush1.msra.mxu0 0.0
    %4542 = vmatprep.subr.mxu0 0.0
    %4543 = vmatpush1.msra.mxu0 %v4506
    %4544 = vmatprep.subr.mxu0 0.0
    %4545 = vmatpush1.msra.mxu0 %v4504
    %4546 = vmatprep.subr.mxu0 0.0
    %4547 = vmatpush1.msra.mxu0 %v4502
    %4548 = vmatprep.subr.mxu0 0.0
    %4549 = vmatpush1.msra.mxu0 %v4500
    %4550 = vmatprep.subr.mxu0 0.0
    %4551 = vmatpush2.msra.mxu0 0.0
    %4552 = vmatprep.subr.mxu0 0.0
    %4553 = vmatpush2.msra.mxu0 0.0
    %4554 = vmatprep.subr.mxu0 0.0
    %4555 = vmatpush2.msra.mxu0 0.0
    %4556 = vmatprep.subr.mxu0 0.0
    %4557 = vmatpush2.msra.mxu0 0.0
    %4558 = vmatprep.subr.mxu0 0.0
    %4559 = vmatpush2.msra.mxu0 0.0
    %4560 = vmatprep.subr.mxu0 0.0
    %4561 = vmatpush2.msra.mxu0 0.0
    %4562 = vmatprep.subr.mxu0 0.0
    %4563 = vmatpush2.msra.mxu0 0.0
    %4564 = vmatprep.subr.mxu0 0.0
    %4565 = vmatpush2.msra.mxu0 0.0
    %4566 = vmatprep.subr.mxu0 0.0
    %4567 = vmatpush2.msra.mxu0 0.0
    %4568 = vmatprep.subr.mxu0 0.0
    %4569 = vmatpush2.msra.mxu0 0.0
    %4570 = vmatprep.subr.mxu0 0.0
    %4571 = vmatpush2.msra.mxu0 0.0
    %4572 = vmatprep.subr.mxu0 0.0
    %4573 = vmatpush2.msra.mxu0 0.0
    %4574 = vmatprep.subr.mxu0 0.0
    %4575 = vmatpush2.msra.mxu0 0.0
    %4576 = vmatprep.subr.mxu0 0.0
    %4577 = vmatpush2.msra.mxu0 0.0
    %4578 = vmatprep.subr.mxu0 0.0
    %4579 = vmatpush2.msra.mxu0 0.0
    %4580 = vmatprep.subr.mxu0 0.0
    %4581 = vmatpush2.msra.mxu0 0.0
    %4582 = vmatprep.mubr.f32.mxu0 0.0
    %4583 = vmatmul.mubr.f32.gmra.mxu0 %v4516
    %v4584 = vpop.f32.mrf.mxu0
    %v4585 = vadd.f32 %v4513, %v4584
    %v4586 = vpop.f32.mrf.mxu0
    %4587 = vdwg.mxu0
    %4588 = vrot.lane.b32.xlu0 %v4415, 96
    %v4589 = vpop.permute.xlu0 %4588
    %4590 = vrot.lane.b32.xlu0 %v4416, 96
    %v4591 = vpop.permute.xlu0 %4590
    %4592 = vrot.lane.b32.xlu0 %v4417, 96
    %v4593 = vpop.permute.xlu0 %4592
    %4594 = vrot.lane.b32.xlu0 %v4418, 96
    %v4595 = vpop.permute.xlu0 %4594
    %4600 = vrot.lane.b32.xlu0 %v4419, 96
    %v4601 = vpop.permute.xlu0 %4600
    %v4604 = vsel %vm487, %v4413, 0
    %4606 = vmatprep.subr.mxu0 0.0
    %4607 = vmatpush1.msra.mxu0 0.0
    %4608 = vmatprep.subr.mxu0 0.0
    %4609 = vmatpush1.msra.mxu0 0.0
    %4610 = vmatprep.subr.mxu0 0.0
    %4611 = vmatpush1.msra.mxu0 0.0
    %4612 = vmatprep.subr.mxu0 0.0
    %4613 = vmatpush1.msra.mxu0 0.0
    %4614 = vmatprep.subr.mxu0 0.0
    %4615 = vmatpush1.msra.mxu0 0.0
    %4616 = vmatprep.subr.mxu0 0.0
    %4617 = vmatpush1.msra.mxu0 0.0
    %4618 = vmatprep.subr.mxu0 0.0
    %4619 = vmatpush1.msra.mxu0 0.0
    %4620 = vmatprep.subr.mxu0 0.0
    %4621 = vmatpush1.msra.mxu0 0.0
    %4622 = vmatprep.subr.mxu0 0.0
    %4623 = vmatpush1.msra.mxu0 0.0
    %4624 = vmatprep.subr.mxu0 0.0
    %4625 = vmatpush1.msra.mxu0 0.0
    %4626 = vmatprep.subr.mxu0 0.0
    %4627 = vmatpush1.msra.mxu0 0.0
    %4628 = vmatprep.subr.mxu0 0.0
    %4629 = vmatpush1.msra.mxu0 0.0
    %4630 = vmatprep.subr.mxu0 0.0
    %4631 = vmatpush1.msra.mxu0 %v4595
    %4632 = vmatprep.subr.mxu0 0.0
    %4633 = vmatpush1.msra.mxu0 %v4593
    %4634 = vmatprep.subr.mxu0 0.0
    %4635 = vmatpush1.msra.mxu0 %v4591
    %4636 = vmatprep.subr.mxu0 0.0
    %4637 = vmatpush1.msra.mxu0 %v4589
    %4638 = vmatprep.subr.mxu0 0.0
    %4639 = vmatpush2.msra.mxu0 0.0
    %4640 = vmatprep.subr.mxu0 0.0
    %4641 = vmatpush2.msra.mxu0 0.0
    %4642 = vmatprep.subr.mxu0 0.0
    %4643 = vmatpush2.msra.mxu0 0.0
    %4644 = vmatprep.subr.mxu0 0.0
    %4645 = vmatpush2.msra.mxu0 0.0
    %4646 = vmatprep.subr.mxu0 0.0
    %4647 = vmatpush2.msra.mxu0 0.0
    %4648 = vmatprep.subr.mxu0 0.0
    %4649 = vmatpush2.msra.mxu0 0.0
    %4650 = vmatprep.subr.mxu0 0.0
    %4651 = vmatpush2.msra.mxu0 0.0
    %4652 = vmatprep.subr.mxu0 0.0
    %4653 = vmatpush2.msra.mxu0 0.0
    %4654 = vmatprep.subr.mxu0 0.0
    %4655 = vmatpush2.msra.mxu0 0.0
    %4656 = vmatprep.subr.mxu0 0.0
    %4657 = vmatpush2.msra.mxu0 0.0
    %4658 = vmatprep.subr.mxu0 0.0
    %4659 = vmatpush2.msra.mxu0 0.0
    %4660 = vmatprep.subr.mxu0 0.0
    %4661 = vmatpush2.msra.mxu0 0.0
    %4662 = vmatprep.subr.mxu0 0.0
    %4663 = vmatpush2.msra.mxu0 0.0
    %4664 = vmatprep.subr.mxu0 0.0
    %4665 = vmatpush2.msra.mxu0 0.0
    %4666 = vmatprep.subr.mxu0 0.0
    %4667 = vmatpush2.msra.mxu0 0.0
    %4668 = vmatprep.subr.mxu0 0.0
    %4669 = vmatpush2.msra.mxu0 0.0
    %4670 = vmatprep.mubr.f32.mxu0 0.0
    %4671 = vmatmul.mubr.f32.gmra.mxu0 %v4604
    %v4672 = vpop.f32.mrf.mxu0
    %v4673 = vadd.f32 %v4601, %v4672
    %v4674 = vpop.f32.mrf.mxu0
    %4675 = vdwg.mxu0
    %v4677 = vsel %vm1449, %v4487, 0
    %v4680 = vsel %vm1449, %v4492, 0
    %v4683 = vsel %vm1449, %v4585, 0
    %4685 = vmatprep.subr.mxu0 0.0
    %4686 = vmatpush1.xpose.msra.mxu0 0.0
    %4687 = vmatprep.subr.mxu0 0.0
    %4688 = vmatpush1.xpose.msra.mxu0 0.0
    %4689 = vmatprep.subr.mxu0 0.0
    %4690 = vmatpush1.xpose.msra.mxu0 0.0
    %4691 = vmatprep.subr.mxu0 0.0
    %4692 = vmatpush1.xpose.msra.mxu0 0.0
    %4693 = vmatprep.subr.mxu0 0.0
    %4694 = vmatpush1.xpose.msra.mxu0 0.0
    %4695 = vmatprep.subr.mxu0 0.0
    %4696 = vmatpush1.xpose.msra.mxu0 0.0
    %4697 = vmatprep.subr.mxu0 0.0
    %4698 = vmatpush1.xpose.msra.mxu0 0.0
    %4699 = vmatprep.subr.mxu0 0.0
    %4700 = vmatpush1.xpose.msra.mxu0 0.0
    %4701 = vmatprep.subr.mxu0 0.0
    %4702 = vmatpush1.xpose.msra.mxu0 0.0
    %4703 = vmatprep.subr.mxu0 0.0
    %4704 = vmatpush1.xpose.msra.mxu0 0.0
    %4705 = vmatprep.subr.mxu0 0.0
    %4706 = vmatpush1.xpose.msra.mxu0 0.0
    %4707 = vmatprep.subr.mxu0 0.0
    %4708 = vmatpush1.xpose.msra.mxu0 0.0
    %4709 = vmatprep.subr.mxu0 0.0
    %4710 = vmatpush1.xpose.msra.mxu0 0.0
    %4711 = vmatprep.subr.mxu0 0.0
    %4712 = vmatpush1.xpose.msra.mxu0 0.0
    %4713 = vmatprep.subr.mxu0 0.0
    %4714 = vmatpush1.xpose.msra.mxu0 0.0
    %4715 = vmatprep.subr.mxu0 0.0
    %4716 = vmatpush1.xpose.msra.mxu0 %v4683
    %4717 = vmatprep.subr.mxu0 0.0
    %4718 = vmatpush2.xpose.msra.mxu0 0.0
    %4719 = vmatprep.subr.mxu0 0.0
    %4720 = vmatpush2.xpose.msra.mxu0 0.0
    %4721 = vmatprep.subr.mxu0 0.0
    %4722 = vmatpush2.xpose.msra.mxu0 0.0
    %4723 = vmatprep.subr.mxu0 0.0
    %4724 = vmatpush2.xpose.msra.mxu0 0.0
    %4725 = vmatprep.subr.mxu0 0.0
    %4726 = vmatpush2.xpose.msra.mxu0 0.0
    %4727 = vmatprep.subr.mxu0 0.0
    %4728 = vmatpush2.xpose.msra.mxu0 0.0
    %4729 = vmatprep.subr.mxu0 0.0
    %4730 = vmatpush2.xpose.msra.mxu0 0.0
    %4731 = vmatprep.subr.mxu0 0.0
    %4732 = vmatpush2.xpose.msra.mxu0 0.0
    %4733 = vmatprep.subr.mxu0 0.0
    %4734 = vmatpush2.xpose.msra.mxu0 0.0
    %4735 = vmatprep.subr.mxu0 0.0
    %4736 = vmatpush2.xpose.msra.mxu0 0.0
    %4737 = vmatprep.subr.mxu0 0.0
    %4738 = vmatpush2.xpose.msra.mxu0 0.0
    %4739 = vmatprep.subr.mxu0 0.0
    %4740 = vmatpush2.xpose.msra.mxu0 0.0
    %4741 = vmatprep.subr.mxu0 0.0
    %4742 = vmatpush2.xpose.msra.mxu0 0.0
    %4743 = vmatprep.subr.mxu0 0.0
    %4744 = vmatpush2.xpose.msra.mxu0 0.0
    %4745 = vmatprep.subr.mxu0 0.0
    %4746 = vmatpush2.xpose.msra.mxu0 0.0
    %4747 = vmatprep.subr.mxu0 0.0
    %4748 = vmatpush2.xpose.msra.mxu0 0.0
    %4749 = vmatprep.mubr.f32.mxu0 0.0
    %4750 = vmatmul.mubr.f32.gmra.mxu0 %v4677
    %v4751 = vpop.f32.mrf.mxu0
    %v4752 = vadd.f32 0.0, %v4751
    %v4753 = vpop.f32.mrf.mxu0
    %4754 = vmatprep.mubr.f32.mxu0 0.0
    %4755 = vmatmul.mubr.f32.gmra.mxu0 %v4680
    %v4756 = vpop.f32.mrf.mxu0
    %v4757 = vadd.f32 0.0, %v4756
    %v4758 = vpop.f32.mrf.mxu0
    %4759 = vdwg.mxu0
    %v4760 = vsel %vm825, %v4752, -inf
    %4761 = vmax.xlane.f32.xlu0 %v4760
    %v4762 = vpop.xlane.xlu0 %4761
    %v4763 = vsel %vm825, %v4757, -inf
    %4764 = vmax.xlane.f32.xlu0 %v4763
    %v4765 = vpop.xlane.xlu0 %4764
    %v4766 = vsub.f32 %v4752, %v4762
    %v4767 = vsub.f32 %v4757, %v4765
    %v4768 = vmul.f32 %v4766, 1.442695
    %v4769 = vpow.pop %v4768
    %v4770 = vmul.f32 %v4767, 1.442695
    %v4771 = vpow.pop %v4770
    %v4772 = vsel %vm825, %v4769, 0.0
    %4773 = vadd.xlane.f32.xlu0 %v4772
    %v4774 = vpop.xlane.xlu0 %4773
    %v4775 = vsel %vm825, %v4771, 0.0
    %4776 = vadd.xlane.f32.xlu0 %v4775
    %v4777 = vpop.xlane.xlu0 %4776
    %v4778 = vrcp.pop %v4774
    %v4779 = vrcp.pop %v4777
    %v4780 = vmul.f32 %v4769, %v4778
    %v4781 = vmul.f32 %v4771, %v4779
    %v4783 = vsel %vm825, %v4780, 0
    %v4786 = vsel %vm825, %v4781, 0
    %v4789 = vsel %vm829, %v4673, 0
    %4791 = vmatprep.subr.mxu0 0.0
    %4792 = vmatpush1.msra.mxu0 0.0
    %4793 = vmatprep.subr.mxu0 0.0
    %4794 = vmatpush1.msra.mxu0 0.0
    %4795 = vmatprep.subr.mxu0 0.0
    %4796 = vmatpush1.msra.mxu0 0.0
    %4797 = vmatprep.subr.mxu0 0.0
    %4798 = vmatpush1.msra.mxu0 0.0
    %4799 = vmatprep.subr.mxu0 0.0
    %4800 = vmatpush1.msra.mxu0 0.0
    %4801 = vmatprep.subr.mxu0 0.0
    %4802 = vmatpush1.msra.mxu0 0.0
    %4803 = vmatprep.subr.mxu0 0.0
    %4804 = vmatpush1.msra.mxu0 0.0
    %4805 = vmatprep.subr.mxu0 0.0
    %4806 = vmatpush1.msra.mxu0 0.0
    %4807 = vmatprep.subr.mxu0 0.0
    %4808 = vmatpush1.msra.mxu0 0.0
    %4809 = vmatprep.subr.mxu0 0.0
    %4810 = vmatpush1.msra.mxu0 0.0
    %4811 = vmatprep.subr.mxu0 0.0
    %4812 = vmatpush1.msra.mxu0 0.0
    %4813 = vmatprep.subr.mxu0 0.0
    %4814 = vmatpush1.msra.mxu0 0.0
    %4815 = vmatprep.subr.mxu0 0.0
    %4816 = vmatpush1.msra.mxu0 0.0
    %4817 = vmatprep.subr.mxu0 0.0
    %4818 = vmatpush1.msra.mxu0 0.0
    %4819 = vmatprep.subr.mxu0 0.0
    %4820 = vmatpush1.msra.mxu0 0.0
    %4821 = vmatprep.subr.mxu0 0.0
    %4822 = vmatpush1.msra.mxu0 %v4789
    %4823 = vmatprep.subr.mxu0 0.0
    %4824 = vmatpush2.msra.mxu0 0.0
    %4825 = vmatprep.subr.mxu0 0.0
    %4826 = vmatpush2.msra.mxu0 0.0
    %4827 = vmatprep.subr.mxu0 0.0
    %4828 = vmatpush2.msra.mxu0 0.0
    %4829 = vmatprep.subr.mxu0 0.0
    %4830 = vmatpush2.msra.mxu0 0.0
    %4831 = vmatprep.subr.mxu0 0.0
    %4832 = vmatpush2.msra.mxu0 0.0
    %4833 = vmatprep.subr.mxu0 0.0
    %4834 = vmatpush2.msra.mxu0 0.0
    %4835 = vmatprep.subr.mxu0 0.0
    %4836 = vmatpush2.msra.mxu0 0.0
    %4837 = vmatprep.subr.mxu0 0.0
    %4838 = vmatpush2.msra.mxu0 0.0
    %4839 = vmatprep.subr.mxu0 0.0
    %4840 = vmatpush2.msra.mxu0 0.0
    %4841 = vmatprep.subr.mxu0 0.0
    %4842 = vmatpush2.msra.mxu0 0.0
    %4843 = vmatprep.subr.mxu0 0.0
    %4844 = vmatpush2.msra.mxu0 0.0
    %4845 = vmatprep.subr.mxu0 0.0
    %4846 = vmatpush2.msra.mxu0 0.0
    %4847 = vmatprep.subr.mxu0 0.0
    %4848 = vmatpush2.msra.mxu0 0.0
    %4849 = vmatprep.subr.mxu0 0.0
    %4850 = vmatpush2.msra.mxu0 0.0
    %4851 = vmatprep.subr.mxu0 0.0
    %4852 = vmatpush2.msra.mxu0 0.0
    %4853 = vmatprep.subr.mxu0 0.0
    %4854 = vmatpush2.msra.mxu0 0.0
    %4855 = vmatprep.mubr.f32.mxu0 0.0
    %4856 = vmatmul.mubr.f32.gmra.mxu0 %v4783
    %v4857 = vpop.f32.mrf.mxu0
    %v4858 = vadd.f32 0.0, %v4857
    %v4859 = vpop.f32.mrf.mxu0
    %4860 = vmatprep.mubr.f32.mxu0 0.0
    %4861 = vmatmul.mubr.f32.gmra.mxu0 %v4786
    %v4862 = vpop.f32.mrf.mxu0
    %v4863 = vadd.f32 0.0, %v4862
    %v4864 = vpop.f32.mrf.mxu0
    %4865 = vdwg.mxu0
    %4866 = vrot.lane.b32.xlu0 %v4487, 120
    %v4867 = vpop.permute.xlu0 %4866
    %4868 = vrot.lane.b32.xlu0 %v4492, 120
    %v4869 = vpop.permute.xlu0 %4868
    %4870 = vrot.lane.b32.xlu0 %v4585, 120
    %v4871 = vpop.permute.xlu0 %4870
    %v4872 = vsel %vm1449, %v4867, 0
    %v4874 = vsel %vm1449, %v4869, 0
    %v4876 = vsel %vm1449, %v4871, 0
    %4878 = vmatprep.subr.mxu0 0.0
    %4879 = vmatpush1.xpose.msra.mxu0 0.0
    %4880 = vmatprep.subr.mxu0 0.0
    %4881 = vmatpush1.xpose.msra.mxu0 0.0
    %4882 = vmatprep.subr.mxu0 0.0
    %4883 = vmatpush1.xpose.msra.mxu0 0.0
    %4884 = vmatprep.subr.mxu0 0.0
    %4885 = vmatpush1.xpose.msra.mxu0 0.0
    %4886 = vmatprep.subr.mxu0 0.0
    %4887 = vmatpush1.xpose.msra.mxu0 0.0
    %4888 = vmatprep.subr.mxu0 0.0
    %4889 = vmatpush1.xpose.msra.mxu0 0.0
    %4890 = vmatprep.subr.mxu0 0.0
    %4891 = vmatpush1.xpose.msra.mxu0 0.0
    %4892 = vmatprep.subr.mxu0 0.0
    %4893 = vmatpush1.xpose.msra.mxu0 0.0
    %4894 = vmatprep.subr.mxu0 0.0
    %4895 = vmatpush1.xpose.msra.mxu0 0.0
    %4896 = vmatprep.subr.mxu0 0.0
    %4897 = vmatpush1.xpose.msra.mxu0 0.0
    %4898 = vmatprep.subr.mxu0 0.0
    %4899 = vmatpush1.xpose.msra.mxu0 0.0
    %4900 = vmatprep.subr.mxu0 0.0
    %4901 = vmatpush1.xpose.msra.mxu0 0.0
    %4902 = vmatprep.subr.mxu0 0.0
    %4903 = vmatpush1.xpose.msra.mxu0 0.0
    %4904 = vmatprep.subr.mxu0 0.0
    %4905 = vmatpush1.xpose.msra.mxu0 0.0
    %4906 = vmatprep.subr.mxu0 0.0
    %4907 = vmatpush1.xpose.msra.mxu0 0.0
    %4908 = vmatprep.subr.mxu0 0.0
    %4909 = vmatpush1.xpose.msra.mxu0 %v4876
    %4910 = vmatprep.subr.mxu0 0.0
    %4911 = vmatpush2.xpose.msra.mxu0 0.0
    %4912 = vmatprep.subr.mxu0 0.0
    %4913 = vmatpush2.xpose.msra.mxu0 0.0
    %4914 = vmatprep.subr.mxu0 0.0
    %4915 = vmatpush2.xpose.msra.mxu0 0.0
    %4916 = vmatprep.subr.mxu0 0.0
    %4917 = vmatpush2.xpose.msra.mxu0 0.0
    %4918 = vmatprep.subr.mxu0 0.0
    %4919 = vmatpush2.xpose.msra.mxu0 0.0
    %4920 = vmatprep.subr.mxu0 0.0
    %4921 = vmatpush2.xpose.msra.mxu0 0.0
    %4922 = vmatprep.subr.mxu0 0.0
    %4923 = vmatpush2.xpose.msra.mxu0 0.0
    %4924 = vmatprep.subr.mxu0 0.0
    %4925 = vmatpush2.xpose.msra.mxu0 0.0
    %4926 = vmatprep.subr.mxu0 0.0
    %4927 = vmatpush2.xpose.msra.mxu0 0.0
    %4928 = vmatprep.subr.mxu0 0.0
    %4929 = vmatpush2.xpose.msra.mxu0 0.0
    %4930 = vmatprep.subr.mxu0 0.0
    %4931 = vmatpush2.xpose.msra.mxu0 0.0
    %4932 = vmatprep.subr.mxu0 0.0
    %4933 = vmatpush2.xpose.msra.mxu0 0.0
    %4934 = vmatprep.subr.mxu0 0.0
    %4935 = vmatpush2.xpose.msra.mxu0 0.0
    %4936 = vmatprep.subr.mxu0 0.0
    %4937 = vmatpush2.xpose.msra.mxu0 0.0
    %4938 = vmatprep.subr.mxu0 0.0
    %4939 = vmatpush2.xpose.msra.mxu0 0.0
    %4940 = vmatprep.subr.mxu0 0.0
    %4941 = vmatpush2.xpose.msra.mxu0 0.0
    %4942 = vmatprep.mubr.f32.mxu0 0.0
    %4943 = vmatmul.mubr.f32.gmra.mxu0 %v4872
    %v4944 = vpop.f32.mrf.mxu0
    %v4945 = vadd.f32 0.0, %v4944
    %v4946 = vpop.f32.mrf.mxu0
    %4947 = vmatprep.mubr.f32.mxu0 0.0
    %4948 = vmatmul.mubr.f32.gmra.mxu0 %v4874
    %v4949 = vpop.f32.mrf.mxu0
    %v4950 = vadd.f32 0.0, %v4949
    %v4951 = vpop.f32.mrf.mxu0
    %4952 = vdwg.mxu0
    %v4953 = vsel %vm825, %v4945, -inf
    %4954 = vmax.xlane.f32.xlu0 %v4953
    %v4955 = vpop.xlane.xlu0 %4954
    %v4956 = vsel %vm825, %v4950, -inf
    %4957 = vmax.xlane.f32.xlu0 %v4956
    %v4958 = vpop.xlane.xlu0 %4957
    %v4959 = vsub.f32 %v4945, %v4955
    %v4960 = vsub.f32 %v4950, %v4958
    %v4961 = vmul.f32 %v4959, 1.442695
    %v4962 = vpow.pop %v4961
    %v4963 = vmul.f32 %v4960, 1.442695
    %v4964 = vpow.pop %v4963
    %v4965 = vsel %vm825, %v4962, 0.0
    %4966 = vadd.xlane.f32.xlu0 %v4965
    %v4967 = vpop.xlane.xlu0 %4966
    %v4968 = vsel %vm825, %v4964, 0.0
    %4969 = vadd.xlane.f32.xlu0 %v4968
    %v4970 = vpop.xlane.xlu0 %4969
    %v4971 = vrcp.pop %v4967
    %v4972 = vrcp.pop %v4970
    %v4973 = vmul.f32 %v4962, %v4971
    %v4974 = vmul.f32 %v4964, %v4972
    %4975 = vrot.lane.b32.xlu0 %v4673, 120
    %v4976 = vpop.permute.xlu0 %4975
    %v4978 = vsel %vm825, %v4973, 0
    %v4981 = vsel %vm825, %v4974, 0
    %v4983 = vsel %vm829, %v4976, 0
    %4985 = vmatprep.subr.mxu0 0.0
    %4986 = vmatpush1.msra.mxu0 0.0
    %4987 = vmatprep.subr.mxu0 0.0
    %4988 = vmatpush1.msra.mxu0 0.0
    %4989 = vmatprep.subr.mxu0 0.0
    %4990 = vmatpush1.msra.mxu0 0.0
    %4991 = vmatprep.subr.mxu0 0.0
    %4992 = vmatpush1.msra.mxu0 0.0
    %4993 = vmatprep.subr.mxu0 0.0
    %4994 = vmatpush1.msra.mxu0 0.0
    %4995 = vmatprep.subr.mxu0 0.0
    %4996 = vmatpush1.msra.mxu0 0.0
    %4997 = vmatprep.subr.mxu0 0.0
    %4998 = vmatpush1.msra.mxu0 0.0
    %4999 = vmatprep.subr.mxu0 0.0
    %5000 = vmatpush1.msra.mxu0 0.0
    %5001 = vmatprep.subr.mxu0 0.0
    %5002 = vmatpush1.msra.mxu0 0.0
    %5003 = vmatprep.subr.mxu0 0.0
    %5004 = vmatpush1.msra.mxu0 0.0
    %5005 = vmatprep.subr.mxu0 0.0
    %5006 = vmatpush1.msra.mxu0 0.0
    %5007 = vmatprep.subr.mxu0 0.0
    %5008 = vmatpush1.msra.mxu0 0.0
    %5009 = vmatprep.subr.mxu0 0.0
    %5010 = vmatpush1.msra.mxu0 0.0
    %5011 = vmatprep.subr.mxu0 0.0
    %5012 = vmatpush1.msra.mxu0 0.0
    %5013 = vmatprep.subr.mxu0 0.0
    %5014 = vmatpush1.msra.mxu0 0.0
    %5015 = vmatprep.subr.mxu0 0.0
    %5016 = vmatpush1.msra.mxu0 %v4983
    %5017 = vmatprep.subr.mxu0 0.0
    %5018 = vmatpush2.msra.mxu0 0.0
    %5019 = vmatprep.subr.mxu0 0.0
    %5020 = vmatpush2.msra.mxu0 0.0
    %5021 = vmatprep.subr.mxu0 0.0
    %5022 = vmatpush2.msra.mxu0 0.0
    %5023 = vmatprep.subr.mxu0 0.0
    %5024 = vmatpush2.msra.mxu0 0.0
    %5025 = vmatprep.subr.mxu0 0.0
    %5026 = vmatpush2.msra.mxu0 0.0
    %5027 = vmatprep.subr.mxu0 0.0
    %5028 = vmatpush2.msra.mxu0 0.0
    %5029 = vmatprep.subr.mxu0 0.0
    %5030 = vmatpush2.msra.mxu0 0.0
    %5031 = vmatprep.subr.mxu0 0.0
    %5032 = vmatpush2.msra.mxu0 0.0
    %5033 = vmatprep.subr.mxu0 0.0
    %5034 = vmatpush2.msra.mxu0 0.0
    %5035 = vmatprep.subr.mxu0 0.0
    %5036 = vmatpush2.msra.mxu0 0.0
    %5037 = vmatprep.subr.mxu0 0.0
    %5038 = vmatpush2.msra.mxu0 0.0
    %5039 = vmatprep.subr.mxu0 0.0
    %5040 = vmatpush2.msra.mxu0 0.0
    %5041 = vmatprep.subr.mxu0 0.0
    %5042 = vmatpush2.msra.mxu0 0.0
    %5043 = vmatprep.subr.mxu0 0.0
    %5044 = vmatpush2.msra.mxu0 0.0
    %5045 = vmatprep.subr.mxu0 0.0
    %5046 = vmatpush2.msra.mxu0 0.0
    %5047 = vmatprep.subr.mxu0 0.0
    %5048 = vmatpush2.msra.mxu0 0.0
    %5049 = vmatprep.mubr.f32.mxu0 0.0
    %5050 = vmatmul.mubr.f32.gmra.mxu0 %v4978
    %v5051 = vpop.f32.mrf.mxu0
    %v5052 = vadd.f32 0.0, %v5051
    %v5053 = vpop.f32.mrf.mxu0
    %5054 = vmatprep.mubr.f32.mxu0 0.0
    %5055 = vmatmul.mubr.f32.gmra.mxu0 %v4981
    %v5056 = vpop.f32.mrf.mxu0
    %v5057 = vadd.f32 0.0, %v5056
    %v5058 = vpop.f32.mrf.mxu0
    %5059 = vdwg.mxu0
    %5062 = vrot.lane.b32.xlu0 %v5052, 8
    %v5063 = vpop.permute.xlu0 %5062
    %5064 = vrot.lane.b32.xlu0 %v5057, 8
    %v5065 = vpop.permute.xlu0 %5064
    %v5068 = vsel %vm1449, %v4858, %v5063
    %v5069 = vsel %vm1449, %v4863, %v5065
    %v5070 = vld [vmem:[#allocation3 + $0x720] sm:$0xff]
    %v5071 = vld [vmem:[#allocation3 + $0x730] sm:$0xff]
    %v5072 = vld [vmem:[#allocation3 + $0x710] ss:$0 sm:$0xff]
    %v5074 = vsel %vm736, %v5068, 0
    %v5077 = vsel %vm736, %v5069, 0
    %5079 = vmatprep.subr.mxu0 0.0
    %5080 = vmatpush1.msra.mxu0 0.0
    %5081 = vmatprep.subr.mxu0 0.0
    %5082 = vmatpush1.msra.mxu0 0.0
    %5083 = vmatprep.subr.mxu0 0.0
    %5084 = vmatpush1.msra.mxu0 0.0
    %5085 = vmatprep.subr.mxu0 0.0
    %5086 = vmatpush1.msra.mxu0 0.0
    %5087 = vmatprep.subr.mxu0 0.0
    %5088 = vmatpush1.msra.mxu0 0.0
    %5089 = vmatprep.subr.mxu0 0.0
    %5090 = vmatpush1.msra.mxu0 0.0
    %5091 = vmatprep.subr.mxu0 0.0
    %5092 = vmatpush1.msra.mxu0 0.0
    %5093 = vmatprep.subr.mxu0 0.0
    %5094 = vmatpush1.msra.mxu0 0.0
    %5095 = vmatprep.subr.mxu0 0.0
    %5096 = vmatpush1.msra.mxu0 0.0
    %5097 = vmatprep.subr.mxu0 0.0
    %5098 = vmatpush1.msra.mxu0 0.0
    %5099 = vmatprep.subr.mxu0 0.0
    %5100 = vmatpush1.msra.mxu0 0.0
    %5101 = vmatprep.subr.mxu0 0.0
    %5102 = vmatpush1.msra.mxu0 0.0
    %5103 = vmatprep.subr.mxu0 0.0
    %5104 = vmatpush1.msra.mxu0 0.0
    %5105 = vmatprep.subr.mxu0 0.0
    %5106 = vmatpush1.msra.mxu0 0.0
    %5107 = vmatprep.subr.mxu0 0.0
    %5108 = vmatpush1.msra.mxu0 %v5071
    %5109 = vmatprep.subr.mxu0 0.0
    %5110 = vmatpush1.msra.mxu0 %v5070
    %5111 = vmatprep.subr.mxu0 0.0
    %5112 = vmatpush2.msra.mxu0 0.0
    %5113 = vmatprep.subr.mxu0 0.0
    %5114 = vmatpush2.msra.mxu0 0.0
    %5115 = vmatprep.subr.mxu0 0.0
    %5116 = vmatpush2.msra.mxu0 0.0
    %5117 = vmatprep.subr.mxu0 0.0
    %5118 = vmatpush2.msra.mxu0 0.0
    %5119 = vmatprep.subr.mxu0 0.0
    %5120 = vmatpush2.msra.mxu0 0.0
    %5121 = vmatprep.subr.mxu0 0.0
    %5122 = vmatpush2.msra.mxu0 0.0
    %5123 = vmatprep.subr.mxu0 0.0
    %5124 = vmatpush2.msra.mxu0 0.0
    %5125 = vmatprep.subr.mxu0 0.0
    %5126 = vmatpush2.msra.mxu0 0.0
    %5127 = vmatprep.subr.mxu0 0.0
    %5128 = vmatpush2.msra.mxu0 0.0
    %5129 = vmatprep.subr.mxu0 0.0
    %5130 = vmatpush2.msra.mxu0 0.0
    %5131 = vmatprep.subr.mxu0 0.0
    %5132 = vmatpush2.msra.mxu0 0.0
    %5133 = vmatprep.subr.mxu0 0.0
    %5134 = vmatpush2.msra.mxu0 0.0
    %5135 = vmatprep.subr.mxu0 0.0
    %5136 = vmatpush2.msra.mxu0 0.0
    %5137 = vmatprep.subr.mxu0 0.0
    %5138 = vmatpush2.msra.mxu0 0.0
    %5139 = vmatprep.subr.mxu0 0.0
    %5140 = vmatpush2.msra.mxu0 0.0
    %5141 = vmatprep.subr.mxu0 0.0
    %5142 = vmatpush2.msra.mxu0 0.0
    %5143 = vmatprep.mubr.f32.mxu0 0.0
    %5144 = vmatmul.mubr.f32.gmra.mxu0 %v5074
    %v5145 = vpop.f32.mrf.mxu0
    %v5146 = vadd.f32 %v5072, %v5145
    %v5147 = vpop.f32.mrf.mxu0
    %5148 = vmatprep.mubr.f32.mxu0 0.0
    %5149 = vmatmul.mubr.f32.gmra.mxu0 %v5077
    %v5150 = vpop.f32.mrf.mxu0
    %v5151 = vadd.f32 %v5072, %v5150
    %v5152 = vpop.f32.mrf.mxu0
    %5153 = vdwg.mxu0
    %v5154 = vadd.f32 %v2839, %v5146
    %v5155 = vadd.f32 %v2840, %v5151
    %v5156 = vsel %vm487, %v5154, 0.0
    %5157 = vadd.xlane.f32.xlu0 %v5156
    %v5158 = vpop.xlane.xlu0 %5157
    %v5159 = vsel %vm487, %v5155, 0.0
    %5160 = vadd.xlane.f32.xlu0 %v5159
    %v5161 = vpop.xlane.xlu0 %5160
    %v5162 = vmul.f32 %v5158, %v1156
    %v5163 = vmul.f32 %v5161, %v1156
    %v5164 = vsub.f32 %v5154, %v5162
    %v5165 = vsub.f32 %v5155, %v5163
    %v5166 = vmul.f32 %v5164, %v5164
    %v5167 = vmul.f32 %v5165, %v5165
    %v5168 = vsel %vm487, %v5166, 0.0
    %5169 = vadd.xlane.f32.xlu0 %v5168
    %v5170 = vpop.xlane.xlu0 %5169
    %v5171 = vsel %vm487, %v5167, 0.0
    %5172 = vadd.xlane.f32.xlu0 %v5171
    %v5173 = vpop.xlane.xlu0 %5172
    %v5174 = vmul.f32 %v5170, %v1156
    %v5175 = vmul.f32 %v5173, %v1156
    %v5176 = vadd.f32 %v5174, 1e-05
    %v5177 = vadd.f32 %v5175, 1e-05
    %v5178 = vrsqrt.pop %v5176
    %v5179 = vrsqrt.pop %v5177
    %v5180 = vmul.f32 %v5164, %v5178
    %v5181 = vmul.f32 %v5165, %v5179
    %v5182 = vld [vmem:[#allocation3 + $0x960] ss:$0 sm:$0xff]
    %v5183 = vmul.f32 %v5180, %v5182
    %v5184 = vmul.f32 %v5181, %v5182
    %v5185 = vld [vmem:[#allocation3 + $0x950] ss:$0 sm:$0xff]
    %v5186 = vadd.f32 %v5183, %v5185
    %v5187 = vadd.f32 %v5184, %v5185
    %v5188 = vadd.f32 %v5186, %v478
    %v5189 = vadd.f32 %v5187, %v479
    %v5190 = vld [vmem:[#allocation3 + $0x50] sm:$0xff]
    %v5191 = vld [vmem:[#allocation3 + $0x60] sm:$0xff]
    %v5192 = vld [vmem:[#allocation3 + $0x70] sm:$0xff]
    %v5193 = vld [vmem:[#allocation3 + $0x80] sm:$0xff]
    %v5194 = vld [vmem:[#allocation3 + $0x40] ss:$0 sm:$0xff]
    %5195 = vmatprep.subr.mxu0 0.0
    %5196 = vmatpush1.msra.mxu0 0.0
    %5197 = vmatprep.subr.mxu0 0.0
    %5198 = vmatpush1.msra.mxu0 0.0
    %5199 = vmatprep.subr.mxu0 0.0
    %5200 = vmatpush1.msra.mxu0 0.0
    %5201 = vmatprep.subr.mxu0 0.0
    %5202 = vmatpush1.msra.mxu0 0.0
    %5203 = vmatprep.subr.mxu0 0.0
    %5204 = vmatpush1.msra.mxu0 0.0
    %5205 = vmatprep.subr.mxu0 0.0
    %5206 = vmatpush1.msra.mxu0 0.0
    %5207 = vmatprep.subr.mxu0 0.0
    %5208 = vmatpush1.msra.mxu0 0.0
    %5209 = vmatprep.subr.mxu0 0.0
    %5210 = vmatpush1.msra.mxu0 0.0
    %5211 = vmatprep.subr.mxu0 0.0
    %5212 = vmatpush1.msra.mxu0 0.0
    %5213 = vmatprep.subr.mxu0 0.0
    %5214 = vmatpush1.msra.mxu0 0.0
    %5215 = vmatprep.subr.mxu0 0.0
    %5216 = vmatpush1.msra.mxu0 0.0
    %5217 = vmatprep.subr.mxu0 0.0
    %5218 = vmatpush1.msra.mxu0 0.0
    %5219 = vmatprep.subr.mxu0 0.0
    %5220 = vmatpush1.msra.mxu0 %v5193
    %5221 = vmatprep.subr.mxu0 0.0
    %5222 = vmatpush1.msra.mxu0 %v5192
    %5223 = vmatprep.subr.mxu0 0.0
    %5224 = vmatpush1.msra.mxu0 %v5191
    %5225 = vmatprep.subr.mxu0 0.0
    %5226 = vmatpush1.msra.mxu0 %v5190
    %5227 = vmatprep.subr.mxu0 0.0
    %5228 = vmatpush2.msra.mxu0 0.0
    %5229 = vmatprep.subr.mxu0 0.0
    %5230 = vmatpush2.msra.mxu0 0.0
    %5231 = vmatprep.subr.mxu0 0.0
    %5232 = vmatpush2.msra.mxu0 0.0
    %5233 = vmatprep.subr.mxu0 0.0
    %5234 = vmatpush2.msra.mxu0 0.0
    %5235 = vmatprep.subr.mxu0 0.0
    %5236 = vmatpush2.msra.mxu0 0.0
    %5237 = vmatprep.subr.mxu0 0.0
    %5238 = vmatpush2.msra.mxu0 0.0
    %5239 = vmatprep.subr.mxu0 0.0
    %5240 = vmatpush2.msra.mxu0 0.0
    %5241 = vmatprep.subr.mxu0 0.0
    %5242 = vmatpush2.msra.mxu0 0.0
    %5243 = vmatprep.subr.mxu0 0.0
    %5244 = vmatpush2.msra.mxu0 0.0
    %5245 = vmatprep.subr.mxu0 0.0
    %5246 = vmatpush2.msra.mxu0 0.0
    %5247 = vmatprep.subr.mxu0 0.0
    %5248 = vmatpush2.msra.mxu0 0.0
    %5249 = vmatprep.subr.mxu0 0.0
    %5250 = vmatpush2.msra.mxu0 0.0
    %5251 = vmatprep.subr.mxu0 0.0
    %5252 = vmatpush2.msra.mxu0 0.0
    %5253 = vmatprep.subr.mxu0 0.0
    %5254 = vmatpush2.msra.mxu0 0.0
    %5255 = vmatprep.subr.mxu0 0.0
    %5256 = vmatpush2.msra.mxu0 0.0
    %5257 = vmatprep.subr.mxu0 0.0
    %5258 = vmatpush2.msra.mxu0 0.0
    %5259 = vmatprep.mubr.f32.mxu0 0.0
    %5260 = vmatmul.mubr.f32.gmra.mxu0 %v4516
    %v5261 = vpop.f32.mrf.mxu0
    %v5262 = vadd.f32 %v5194, %v5261
    %v5263 = vpop.f32.mrf.mxu0
    %5264 = vdwg.mxu0
    %5269 = vrot.lane.b32.xlu0 %v5190, 112
    %v5270 = vpop.permute.xlu0 %5269
    %5271 = vrot.lane.b32.xlu0 %v5191, 112
    %v5272 = vpop.permute.xlu0 %5271
    %5273 = vrot.lane.b32.xlu0 %v5192, 112
    %v5274 = vpop.permute.xlu0 %5273
    %5275 = vrot.lane.b32.xlu0 %v5193, 112
    %v5276 = vpop.permute.xlu0 %5275
    %5282 = vrot.lane.b32.xlu0 %v5194, 112
    %v5283 = vpop.permute.xlu0 %5282
    %v5286 = vsel %vm487, %v5188, 0
    %v5289 = vsel %vm487, %v5189, 0
    %5291 = vmatprep.subr.mxu0 0.0
    %5292 = vmatpush1.msra.mxu0 0.0
    %5293 = vmatprep.subr.mxu0 0.0
    %5294 = vmatpush1.msra.mxu0 0.0
    %5295 = vmatprep.subr.mxu0 0.0
    %5296 = vmatpush1.msra.mxu0 0.0
    %5297 = vmatprep.subr.mxu0 0.0
    %5298 = vmatpush1.msra.mxu0 0.0
    %5299 = vmatprep.subr.mxu0 0.0
    %5300 = vmatpush1.msra.mxu0 0.0
    %5301 = vmatprep.subr.mxu0 0.0
    %5302 = vmatpush1.msra.mxu0 0.0
    %5303 = vmatprep.subr.mxu0 0.0
    %5304 = vmatpush1.msra.mxu0 0.0
    %5305 = vmatprep.subr.mxu0 0.0
    %5306 = vmatpush1.msra.mxu0 0.0
    %5307 = vmatprep.subr.mxu0 0.0
    %5308 = vmatpush1.msra.mxu0 0.0
    %5309 = vmatprep.subr.mxu0 0.0
    %5310 = vmatpush1.msra.mxu0 0.0
    %5311 = vmatprep.subr.mxu0 0.0
    %5312 = vmatpush1.msra.mxu0 0.0
    %5313 = vmatprep.subr.mxu0 0.0
    %5314 = vmatpush1.msra.mxu0 0.0
    %5315 = vmatprep.subr.mxu0 0.0
    %5316 = vmatpush1.msra.mxu0 %v5276
    %5317 = vmatprep.subr.mxu0 0.0
    %5318 = vmatpush1.msra.mxu0 %v5274
    %5319 = vmatprep.subr.mxu0 0.0
    %5320 = vmatpush1.msra.mxu0 %v5272
    %5321 = vmatprep.subr.mxu0 0.0
    %5322 = vmatpush1.msra.mxu0 %v5270
    %5323 = vmatprep.subr.mxu0 0.0
    %5324 = vmatpush2.msra.mxu0 0.0
    %5325 = vmatprep.subr.mxu0 0.0
    %5326 = vmatpush2.msra.mxu0 0.0
    %5327 = vmatprep.subr.mxu0 0.0
    %5328 = vmatpush2.msra.mxu0 0.0
    %5329 = vmatprep.subr.mxu0 0.0
    %5330 = vmatpush2.msra.mxu0 0.0
    %5331 = vmatprep.subr.mxu0 0.0
    %5332 = vmatpush2.msra.mxu0 0.0
    %5333 = vmatprep.subr.mxu0 0.0
    %5334 = vmatpush2.msra.mxu0 0.0
    %5335 = vmatprep.subr.mxu0 0.0
    %5336 = vmatpush2.msra.mxu0 0.0
    %5337 = vmatprep.subr.mxu0 0.0
    %5338 = vmatpush2.msra.mxu0 0.0
    %5339 = vmatprep.subr.mxu0 0.0
    %5340 = vmatpush2.msra.mxu0 0.0
    %5341 = vmatprep.subr.mxu0 0.0
    %5342 = vmatpush2.msra.mxu0 0.0
    %5343 = vmatprep.subr.mxu0 0.0
    %5344 = vmatpush2.msra.mxu0 0.0
    %5345 = vmatprep.subr.mxu0 0.0
    %5346 = vmatpush2.msra.mxu0 0.0
    %5347 = vmatprep.subr.mxu0 0.0
    %5348 = vmatpush2.msra.mxu0 0.0
    %5349 = vmatprep.subr.mxu0 0.0
    %5350 = vmatpush2.msra.mxu0 0.0
    %5351 = vmatprep.subr.mxu0 0.0
    %5352 = vmatpush2.msra.mxu0 0.0
    %5353 = vmatprep.subr.mxu0 0.0
    %5354 = vmatpush2.msra.mxu0 0.0
    %5355 = vmatprep.mubr.f32.mxu0 0.0
    %5356 = vmatmul.mubr.f32.gmra.mxu0 %v5286
    %v5357 = vpop.f32.mrf.mxu0
    %v5358 = vadd.f32 %v5283, %v5357
    %v5359 = vpop.f32.mrf.mxu0
    %5360 = vmatprep.mubr.f32.mxu0 0.0
    %5361 = vmatmul.mubr.f32.gmra.mxu0 %v5289
    %v5362 = vpop.f32.mrf.mxu0
    %v5363 = vadd.f32 %v5283, %v5362
    %v5364 = vpop.f32.mrf.mxu0
    %5365 = vdwg.mxu0
    %5366 = vrot.lane.b32.xlu0 %v5190, 96
    %v5367 = vpop.permute.xlu0 %5366
    %5368 = vrot.lane.b32.xlu0 %v5191, 96
    %v5369 = vpop.permute.xlu0 %5368
    %5370 = vrot.lane.b32.xlu0 %v5192, 96
    %v5371 = vpop.permute.xlu0 %5370
    %5372 = vrot.lane.b32.xlu0 %v5193, 96
    %v5373 = vpop.permute.xlu0 %5372
    %5378 = vrot.lane.b32.xlu0 %v5194, 96
    %v5379 = vpop.permute.xlu0 %5378
    %v5382 = vsel %vm487, %v5186, 0
    %v5385 = vsel %vm487, %v5187, 0
    %5387 = vmatprep.subr.mxu0 0.0
    %5388 = vmatpush1.msra.mxu0 0.0
    %5389 = vmatprep.subr.mxu0 0.0
    %5390 = vmatpush1.msra.mxu0 0.0
    %5391 = vmatprep.subr.mxu0 0.0
    %5392 = vmatpush1.msra.mxu0 0.0
    %5393 = vmatprep.subr.mxu0 0.0
    %5394 = vmatpush1.msra.mxu0 0.0
    %5395 = vmatprep.subr.mxu0 0.0
    %5396 = vmatpush1.msra.mxu0 0.0
    %5397 = vmatprep.subr.mxu0 0.0
    %5398 = vmatpush1.msra.mxu0 0.0
    %5399 = vmatprep.subr.mxu0 0.0
    %5400 = vmatpush1.msra.mxu0 0.0
    %5401 = vmatprep.subr.mxu0 0.0
    %5402 = vmatpush1.msra.mxu0 0.0
    %5403 = vmatprep.subr.mxu0 0.0
    %5404 = vmatpush1.msra.mxu0 0.0
    %5405 = vmatprep.subr.mxu0 0.0
    %5406 = vmatpush1.msra.mxu0 0.0
    %5407 = vmatprep.subr.mxu0 0.0
    %5408 = vmatpush1.msra.mxu0 0.0
    %5409 = vmatprep.subr.mxu0 0.0
    %5410 = vmatpush1.msra.mxu0 0.0
    %5411 = vmatprep.subr.mxu0 0.0
    %5412 = vmatpush1.msra.mxu0 %v5373
    %5413 = vmatprep.subr.mxu0 0.0
    %5414 = vmatpush1.msra.mxu0 %v5371
    %5415 = vmatprep.subr.mxu0 0.0
    %5416 = vmatpush1.msra.mxu0 %v5369
    %5417 = vmatprep.subr.mxu0 0.0
    %5418 = vmatpush1.msra.mxu0 %v5367
    %5419 = vmatprep.subr.mxu0 0.0
    %5420 = vmatpush2.msra.mxu0 0.0
    %5421 = vmatprep.subr.mxu0 0.0
    %5422 = vmatpush2.msra.mxu0 0.0
    %5423 = vmatprep.subr.mxu0 0.0
    %5424 = vmatpush2.msra.mxu0 0.0
    %5425 = vmatprep.subr.mxu0 0.0
    %5426 = vmatpush2.msra.mxu0 0.0
    %5427 = vmatprep.subr.mxu0 0.0
    %5428 = vmatpush2.msra.mxu0 0.0
    %5429 = vmatprep.subr.mxu0 0.0
    %5430 = vmatpush2.msra.mxu0 0.0
    %5431 = vmatprep.subr.mxu0 0.0
    %5432 = vmatpush2.msra.mxu0 0.0
    %5433 = vmatprep.subr.mxu0 0.0
    %5434 = vmatpush2.msra.mxu0 0.0
    %5435 = vmatprep.subr.mxu0 0.0
    %5436 = vmatpush2.msra.mxu0 0.0
    %5437 = vmatprep.subr.mxu0 0.0
    %5438 = vmatpush2.msra.mxu0 0.0
    %5439 = vmatprep.subr.mxu0 0.0
    %5440 = vmatpush2.msra.mxu0 0.0
    %5441 = vmatprep.subr.mxu0 0.0
    %5442 = vmatpush2.msra.mxu0 0.0
    %5443 = vmatprep.subr.mxu0 0.0
    %5444 = vmatpush2.msra.mxu0 0.0
    %5445 = vmatprep.subr.mxu0 0.0
    %5446 = vmatpush2.msra.mxu0 0.0
    %5447 = vmatprep.subr.mxu0 0.0
    %5448 = vmatpush2.msra.mxu0 0.0
    %5449 = vmatprep.subr.mxu0 0.0
    %5450 = vmatpush2.msra.mxu0 0.0
    %5451 = vmatprep.mubr.f32.mxu0 0.0
    %5452 = vmatmul.mubr.f32.gmra.mxu0 %v5382
    %v5453 = vpop.f32.mrf.mxu0
    %v5454 = vadd.f32 %v5379, %v5453
    %v5455 = vpop.f32.mrf.mxu0
    %5456 = vmatprep.mubr.f32.mxu0 0.0
    %5457 = vmatmul.mubr.f32.gmra.mxu0 %v5385
    %v5458 = vpop.f32.mrf.mxu0
    %v5459 = vadd.f32 %v5379, %v5458
    %v5460 = vpop.f32.mrf.mxu0
    %5461 = vdwg.mxu0
    %v5463 = vsel %vm1449, %v5262, 0
    %v5466 = vsel %vm1449, %v5358, 0
    %v5469 = vsel %vm1449, %v5363, 0
    %5471 = vmatprep.subr.mxu0 0.0
    %5472 = vmatpush1.xpose.msra.mxu0 0.0
    %5473 = vmatprep.subr.mxu0 0.0
    %5474 = vmatpush1.xpose.msra.mxu0 0.0
    %5475 = vmatprep.subr.mxu0 0.0
    %5476 = vmatpush1.xpose.msra.mxu0 0.0
    %5477 = vmatprep.subr.mxu0 0.0
    %5478 = vmatpush1.xpose.msra.mxu0 0.0
    %5479 = vmatprep.subr.mxu0 0.0
    %5480 = vmatpush1.xpose.msra.mxu0 0.0
    %5481 = vmatprep.subr.mxu0 0.0
    %5482 = vmatpush1.xpose.msra.mxu0 0.0
    %5483 = vmatprep.subr.mxu0 0.0
    %5484 = vmatpush1.xpose.msra.mxu0 0.0
    %5485 = vmatprep.subr.mxu0 0.0
    %5486 = vmatpush1.xpose.msra.mxu0 0.0
    %5487 = vmatprep.subr.mxu0 0.0
    %5488 = vmatpush1.xpose.msra.mxu0 0.0
    %5489 = vmatprep.subr.mxu0 0.0
    %5490 = vmatpush1.xpose.msra.mxu0 0.0
    %5491 = vmatprep.subr.mxu0 0.0
    %5492 = vmatpush1.xpose.msra.mxu0 0.0
    %5493 = vmatprep.subr.mxu0 0.0
    %5494 = vmatpush1.xpose.msra.mxu0 0.0
    %5495 = vmatprep.subr.mxu0 0.0
    %5496 = vmatpush1.xpose.msra.mxu0 0.0
    %5497 = vmatprep.subr.mxu0 0.0
    %5498 = vmatpush1.xpose.msra.mxu0 0.0
    %5499 = vmatprep.subr.mxu0 0.0
    %5500 = vmatpush1.xpose.msra.mxu0 %v5469
    %5501 = vmatprep.subr.mxu0 0.0
    %5502 = vmatpush1.xpose.msra.mxu0 %v5466
    %5503 = vmatprep.subr.mxu0 0.0
    %5504 = vmatpush2.xpose.msra.mxu0 0.0
    %5505 = vmatprep.subr.mxu0 0.0
    %5506 = vmatpush2.xpose.msra.mxu0 0.0
    %5507 = vmatprep.subr.mxu0 0.0
    %5508 = vmatpush2.xpose.msra.mxu0 0.0
    %5509 = vmatprep.subr.mxu0 0.0
    %5510 = vmatpush2.xpose.msra.mxu0 0.0
    %5511 = vmatprep.subr.mxu0 0.0
    %5512 = vmatpush2.xpose.msra.mxu0 0.0
    %5513 = vmatprep.subr.mxu0 0.0
    %5514 = vmatpush2.xpose.msra.mxu0 0.0
    %5515 = vmatprep.subr.mxu0 0.0
    %5516 = vmatpush2.xpose.msra.mxu0 0.0
    %5517 = vmatprep.subr.mxu0 0.0
    %5518 = vmatpush2.xpose.msra.mxu0 0.0
    %5519 = vmatprep.subr.mxu0 0.0
    %5520 = vmatpush2.xpose.msra.mxu0 0.0
    %5521 = vmatprep.subr.mxu0 0.0
    %5522 = vmatpush2.xpose.msra.mxu0 0.0
    %5523 = vmatprep.subr.mxu0 0.0
    %5524 = vmatpush2.xpose.msra.mxu0 0.0
    %5525 = vmatprep.subr.mxu0 0.0
    %5526 = vmatpush2.xpose.msra.mxu0 0.0
    %5527 = vmatprep.subr.mxu0 0.0
    %5528 = vmatpush2.xpose.msra.mxu0 0.0
    %5529 = vmatprep.subr.mxu0 0.0
    %5530 = vmatpush2.xpose.msra.mxu0 0.0
    %5531 = vmatprep.subr.mxu0 0.0
    %5532 = vmatpush2.xpose.msra.mxu0 0.0
    %5533 = vmatprep.subr.mxu0 0.0
    %5534 = vmatpush2.xpose.msra.mxu0 0.0
    %5535 = vmatprep.mubr.f32.mxu0 0.0
    %5536 = vmatmul.mubr.f32.gmra.mxu0 %v5463
    %v5537 = vpop.f32.mrf.mxu0
    %v5538 = vadd.f32 0.0, %v5537
    %v5539 = vpop.f32.mrf.mxu0
    %5540 = vdwg.mxu0
    %v5541 = vsel %vm1529, %v5538, -inf
    %5542 = vmax.xlane.f32.xlu0 %v5541
    %v5543 = vpop.xlane.xlu0 %5542
    %v5544 = vsub.f32 %v5538, %v5543
    %v5545 = vmul.f32 %v5544, 1.442695
    %v5546 = vpow.pop %v5545
    %v5547 = vsel %vm1529, %v5546, 0.0
    %5548 = vadd.xlane.f32.xlu0 %v5547
    %v5549 = vpop.xlane.xlu0 %5548
    %v5550 = vrcp.pop %v5549
    %v5551 = vmul.f32 %v5546, %v5550
    %v5553 = vsel %vm736, %v5551, 0
    %5555 = vmatprep.subr.mxu0 0.0
    %5556 = vmatpush1.msra.mxu0 0.0
    %5557 = vmatprep.subr.mxu0 0.0
    %5558 = vmatpush1.msra.mxu0 0.0
    %5559 = vmatprep.subr.mxu0 0.0
    %5560 = vmatpush1.msra.mxu0 0.0
    %5561 = vmatprep.subr.mxu0 0.0
    %5562 = vmatpush1.msra.mxu0 0.0
    %5563 = vmatprep.subr.mxu0 0.0
    %5564 = vmatpush1.msra.mxu0 0.0
    %5565 = vmatprep.subr.mxu0 0.0
    %5566 = vmatpush1.msra.mxu0 0.0
    %5567 = vmatprep.subr.mxu0 0.0
    %5568 = vmatpush1.msra.mxu0 0.0
    %5569 = vmatprep.subr.mxu0 0.0
    %5570 = vmatpush1.msra.mxu0 0.0
    %5571 = vmatprep.subr.mxu0 0.0
    %5572 = vmatpush1.msra.mxu0 0.0
    %5573 = vmatprep.subr.mxu0 0.0
    %5574 = vmatpush1.msra.mxu0 0.0
    %5575 = vmatprep.subr.mxu0 0.0
    %5576 = vmatpush1.msra.mxu0 0.0
    %5577 = vmatprep.subr.mxu0 0.0
    %5578 = vmatpush1.msra.mxu0 0.0
    %5579 = vmatprep.subr.mxu0 0.0
    %5580 = vmatpush1.msra.mxu0 0.0
    %5581 = vmatprep.subr.mxu0 0.0
    %5582 = vmatpush1.msra.mxu0 0.0
    %5583 = vmatprep.subr.mxu0 0.0
    %5584 = vmatpush1.msra.mxu0 %v5459
    %5585 = vmatprep.subr.mxu0 0.0
    %5586 = vmatpush1.msra.mxu0 %v5454
    %5587 = vmatprep.subr.mxu0 0.0
    %5588 = vmatpush2.msra.mxu0 0.0
    %5589 = vmatprep.subr.mxu0 0.0
    %5590 = vmatpush2.msra.mxu0 0.0
    %5591 = vmatprep.subr.mxu0 0.0
    %5592 = vmatpush2.msra.mxu0 0.0
    %5593 = vmatprep.subr.mxu0 0.0
    %5594 = vmatpush2.msra.mxu0 0.0
    %5595 = vmatprep.subr.mxu0 0.0
    %5596 = vmatpush2.msra.mxu0 0.0
    %5597 = vmatprep.subr.mxu0 0.0
    %5598 = vmatpush2.msra.mxu0 0.0
    %5599 = vmatprep.subr.mxu0 0.0
    %5600 = vmatpush2.msra.mxu0 0.0
    %5601 = vmatprep.subr.mxu0 0.0
    %5602 = vmatpush2.msra.mxu0 0.0
    %5603 = vmatprep.subr.mxu0 0.0
    %5604 = vmatpush2.msra.mxu0 0.0
    %5605 = vmatprep.subr.mxu0 0.0
    %5606 = vmatpush2.msra.mxu0 0.0
    %5607 = vmatprep.subr.mxu0 0.0
    %5608 = vmatpush2.msra.mxu0 0.0
    %5609 = vmatprep.subr.mxu0 0.0
    %5610 = vmatpush2.msra.mxu0 0.0
    %5611 = vmatprep.subr.mxu0 0.0
    %5612 = vmatpush2.msra.mxu0 0.0
    %5613 = vmatprep.subr.mxu0 0.0
    %5614 = vmatpush2.msra.mxu0 0.0
    %5615 = vmatprep.subr.mxu0 0.0
    %5616 = vmatpush2.msra.mxu0 0.0
    %5617 = vmatprep.subr.mxu0 0.0
    %5618 = vmatpush2.msra.mxu0 0.0
    %5619 = vmatprep.mubr.f32.mxu0 0.0
    %5620 = vmatmul.mubr.f32.gmra.mxu0 %v5553
    %v5621 = vpop.f32.mrf.mxu0
    %v5622 = vadd.f32 0.0, %v5621
    %v5623 = vpop.f32.mrf.mxu0
    %5624 = vdwg.mxu0
    %5625 = vrot.lane.b32.xlu0 %v5262, 120
    %v5626 = vpop.permute.xlu0 %5625
    %5627 = vrot.lane.b32.xlu0 %v5358, 120
    %v5628 = vpop.permute.xlu0 %5627
    %5629 = vrot.lane.b32.xlu0 %v5363, 120
    %v5630 = vpop.permute.xlu0 %5629
    %v5631 = vsel %vm1449, %v5626, 0
    %v5633 = vsel %vm1449, %v5628, 0
    %v5635 = vsel %vm1449, %v5630, 0
    %5637 = vmatprep.subr.mxu0 0.0
    %5638 = vmatpush1.xpose.msra.mxu0 0.0
    %5639 = vmatprep.subr.mxu0 0.0
    %5640 = vmatpush1.xpose.msra.mxu0 0.0
    %5641 = vmatprep.subr.mxu0 0.0
    %5642 = vmatpush1.xpose.msra.mxu0 0.0
    %5643 = vmatprep.subr.mxu0 0.0
    %5644 = vmatpush1.xpose.msra.mxu0 0.0
    %5645 = vmatprep.subr.mxu0 0.0
    %5646 = vmatpush1.xpose.msra.mxu0 0.0
    %5647 = vmatprep.subr.mxu0 0.0
    %5648 = vmatpush1.xpose.msra.mxu0 0.0
    %5649 = vmatprep.subr.mxu0 0.0
    %5650 = vmatpush1.xpose.msra.mxu0 0.0
    %5651 = vmatprep.subr.mxu0 0.0
    %5652 = vmatpush1.xpose.msra.mxu0 0.0
    %5653 = vmatprep.subr.mxu0 0.0
    %5654 = vmatpush1.xpose.msra.mxu0 0.0
    %5655 = vmatprep.subr.mxu0 0.0
    %5656 = vmatpush1.xpose.msra.mxu0 0.0
    %5657 = vmatprep.subr.mxu0 0.0
    %5658 = vmatpush1.xpose.msra.mxu0 0.0
    %5659 = vmatprep.subr.mxu0 0.0
    %5660 = vmatpush1.xpose.msra.mxu0 0.0
    %5661 = vmatprep.subr.mxu0 0.0
    %5662 = vmatpush1.xpose.msra.mxu0 0.0
    %5663 = vmatprep.subr.mxu0 0.0
    %5664 = vmatpush1.xpose.msra.mxu0 0.0
    %5665 = vmatprep.subr.mxu0 0.0
    %5666 = vmatpush1.xpose.msra.mxu0 %v5635
    %5667 = vmatprep.subr.mxu0 0.0
    %5668 = vmatpush1.xpose.msra.mxu0 %v5633
    %5669 = vmatprep.subr.mxu0 0.0
    %5670 = vmatpush2.xpose.msra.mxu0 0.0
    %5671 = vmatprep.subr.mxu0 0.0
    %5672 = vmatpush2.xpose.msra.mxu0 0.0
    %5673 = vmatprep.subr.mxu0 0.0
    %5674 = vmatpush2.xpose.msra.mxu0 0.0
    %5675 = vmatprep.subr.mxu0 0.0
    %5676 = vmatpush2.xpose.msra.mxu0 0.0
    %5677 = vmatprep.subr.mxu0 0.0
    %5678 = vmatpush2.xpose.msra.mxu0 0.0
    %5679 = vmatprep.subr.mxu0 0.0
    %5680 = vmatpush2.xpose.msra.mxu0 0.0
    %5681 = vmatprep.subr.mxu0 0.0
    %5682 = vmatpush2.xpose.msra.mxu0 0.0
    %5683 = vmatprep.subr.mxu0 0.0
    %5684 = vmatpush2.xpose.msra.mxu0 0.0
    %5685 = vmatprep.subr.mxu0 0.0
    %5686 = vmatpush2.xpose.msra.mxu0 0.0
    %5687 = vmatprep.subr.mxu0 0.0
    %5688 = vmatpush2.xpose.msra.mxu0 0.0
    %5689 = vmatprep.subr.mxu0 0.0
    %5690 = vmatpush2.xpose.msra.mxu0 0.0
    %5691 = vmatprep.subr.mxu0 0.0
    %5692 = vmatpush2.xpose.msra.mxu0 0.0
    %5693 = vmatprep.subr.mxu0 0.0
    %5694 = vmatpush2.xpose.msra.mxu0 0.0
    %5695 = vmatprep.subr.mxu0 0.0
    %5696 = vmatpush2.xpose.msra.mxu0 0.0
    %5697 = vmatprep.subr.mxu0 0.0
    %5698 = vmatpush2.xpose.msra.mxu0 0.0
    %5699 = vmatprep.subr.mxu0 0.0
    %5700 = vmatpush2.xpose.msra.mxu0 0.0
    %5701 = vmatprep.mubr.f32.mxu0 0.0
    %5702 = vmatmul.mubr.f32.gmra.mxu0 %v5631
    %v5703 = vpop.f32.mrf.mxu0
    %v5704 = vadd.f32 0.0, %v5703
    %v5705 = vpop.f32.mrf.mxu0
    %5706 = vdwg.mxu0
    %v5707 = vsel %vm1529, %v5704, -inf
    %5708 = vmax.xlane.f32.xlu0 %v5707
    %v5709 = vpop.xlane.xlu0 %5708
    %v5710 = vsub.f32 %v5704, %v5709
    %v5711 = vmul.f32 %v5710, 1.442695
    %v5712 = vpow.pop %v5711
    %v5713 = vsel %vm1529, %v5712, 0.0
    %5714 = vadd.xlane.f32.xlu0 %v5713
    %v5715 = vpop.xlane.xlu0 %5714
    %v5716 = vrcp.pop %v5715
    %v5717 = vmul.f32 %v5712, %v5716
    %5720 = vrot.lane.b32.xlu0 %v5454, 120
    %v5721 = vpop.permute.xlu0 %5720
    %5722 = vrot.lane.b32.xlu0 %v5459, 120
    %v5723 = vpop.permute.xlu0 %5722
    %v5727 = vsel %vm736, %v5717, 0
    %5729 = vmatprep.subr.mxu0 0.0
    %5730 = vmatpush1.msra.mxu0 0.0
    %5731 = vmatprep.subr.mxu0 0.0
    %5732 = vmatpush1.msra.mxu0 0.0
    %5733 = vmatprep.subr.mxu0 0.0
    %5734 = vmatpush1.msra.mxu0 0.0
    %5735 = vmatprep.subr.mxu0 0.0
    %5736 = vmatpush1.msra.mxu0 0.0
    %5737 = vmatprep.subr.mxu0 0.0
    %5738 = vmatpush1.msra.mxu0 0.0
    %5739 = vmatprep.subr.mxu0 0.0
    %5740 = vmatpush1.msra.mxu0 0.0
    %5741 = vmatprep.subr.mxu0 0.0
    %5742 = vmatpush1.msra.mxu0 0.0
    %5743 = vmatprep.subr.mxu0 0.0
    %5744 = vmatpush1.msra.mxu0 0.0
    %5745 = vmatprep.subr.mxu0 0.0
    %5746 = vmatpush1.msra.mxu0 0.0
    %5747 = vmatprep.subr.mxu0 0.0
    %5748 = vmatpush1.msra.mxu0 0.0
    %5749 = vmatprep.subr.mxu0 0.0
    %5750 = vmatpush1.msra.mxu0 0.0
    %5751 = vmatprep.subr.mxu0 0.0
    %5752 = vmatpush1.msra.mxu0 0.0
    %5753 = vmatprep.subr.mxu0 0.0
    %5754 = vmatpush1.msra.mxu0 0.0
    %5755 = vmatprep.subr.mxu0 0.0
    %5756 = vmatpush1.msra.mxu0 0.0
    %5757 = vmatprep.subr.mxu0 0.0
    %5758 = vmatpush1.msra.mxu0 %v5723
    %5759 = vmatprep.subr.mxu0 0.0
    %5760 = vmatpush1.msra.mxu0 %v5721
    %5761 = vmatprep.subr.mxu0 0.0
    %5762 = vmatpush2.msra.mxu0 0.0
    %5763 = vmatprep.subr.mxu0 0.0
    %5764 = vmatpush2.msra.mxu0 0.0
    %5765 = vmatprep.subr.mxu0 0.0
    %5766 = vmatpush2.msra.mxu0 0.0
    %5767 = vmatprep.subr.mxu0 0.0
    %5768 = vmatpush2.msra.mxu0 0.0
    %5769 = vmatprep.subr.mxu0 0.0
    %5770 = vmatpush2.msra.mxu0 0.0
    %5771 = vmatprep.subr.mxu0 0.0
    %5772 = vmatpush2.msra.mxu0 0.0
    %5773 = vmatprep.subr.mxu0 0.0
    %5774 = vmatpush2.msra.mxu0 0.0
    %5775 = vmatprep.subr.mxu0 0.0
    %5776 = vmatpush2.msra.mxu0 0.0
    %5777 = vmatprep.subr.mxu0 0.0
    %5778 = vmatpush2.msra.mxu0 0.0
    %5779 = vmatprep.subr.mxu0 0.0
    %5780 = vmatpush2.msra.mxu0 0.0
    %5781 = vmatprep.subr.mxu0 0.0
    %5782 = vmatpush2.msra.mxu0 0.0
    %5783 = vmatprep.subr.mxu0 0.0
    %5784 = vmatpush2.msra.mxu0 0.0
    %5785 = vmatprep.subr.mxu0 0.0
    %5786 = vmatpush2.msra.mxu0 0.0
    %5787 = vmatprep.subr.mxu0 0.0
    %5788 = vmatpush2.msra.mxu0 0.0
    %5789 = vmatprep.subr.mxu0 0.0
    %5790 = vmatpush2.msra.mxu0 0.0
    %5791 = vmatprep.subr.mxu0 0.0
    %5792 = vmatpush2.msra.mxu0 0.0
    %5793 = vmatprep.mubr.f32.mxu0 0.0
    %5794 = vmatmul.mubr.f32.gmra.mxu0 %v5727
    %v5795 = vpop.f32.mrf.mxu0
    %v5796 = vadd.f32 0.0, %v5795
    %v5797 = vpop.f32.mrf.mxu0
    %5798 = vdwg.mxu0
    %5800 = vrot.lane.b32.xlu0 %v5796, 8
    %v5801 = vpop.permute.xlu0 %5800
    %v5803 = vsel %vm1449, %v5622, %v5801
    %v5804 = vld [vmem:[#allocation3 + $0x20] sm:$0xff]
    %v5805 = vld [vmem:[#allocation3 + $0x30] sm:$0xff]
    %v5806 = vld [vmem:[#allocation3 + $0x10] ss:$0 sm:$0xff]
    %v5808 = vsel %vm736, %v5803, 0
    %5810 = vmatprep.subr.mxu0 0.0
    %5811 = vmatpush1.msra.mxu0 0.0
    %5812 = vmatprep.subr.mxu0 0.0
    %5813 = vmatpush1.msra.mxu0 0.0
    %5814 = vmatprep.subr.mxu0 0.0
    %5815 = vmatpush1.msra.mxu0 0.0
    %5816 = vmatprep.subr.mxu0 0.0
    %5817 = vmatpush1.msra.mxu0 0.0
    %5818 = vmatprep.subr.mxu0 0.0
    %5819 = vmatpush1.msra.mxu0 0.0
    %5820 = vmatprep.subr.mxu0 0.0
    %5821 = vmatpush1.msra.mxu0 0.0
    %5822 = vmatprep.subr.mxu0 0.0
    %5823 = vmatpush1.msra.mxu0 0.0
    %5824 = vmatprep.subr.mxu0 0.0
    %5825 = vmatpush1.msra.mxu0 0.0
    %5826 = vmatprep.subr.mxu0 0.0
    %5827 = vmatpush1.msra.mxu0 0.0
    %5828 = vmatprep.subr.mxu0 0.0
    %5829 = vmatpush1.msra.mxu0 0.0
    %5830 = vmatprep.subr.mxu0 0.0
    %5831 = vmatpush1.msra.mxu0 0.0
    %5832 = vmatprep.subr.mxu0 0.0
    %5833 = vmatpush1.msra.mxu0 0.0
    %5834 = vmatprep.subr.mxu0 0.0
    %5835 = vmatpush1.msra.mxu0 0.0
    %5836 = vmatprep.subr.mxu0 0.0
    %5837 = vmatpush1.msra.mxu0 0.0
    %5838 = vmatprep.subr.mxu0 0.0
    %5839 = vmatpush1.msra.mxu0 %v5805
    %5840 = vmatprep.subr.mxu0 0.0
    %5841 = vmatpush1.msra.mxu0 %v5804
    %5842 = vmatprep.subr.mxu0 0.0
    %5843 = vmatpush2.msra.mxu0 0.0
    %5844 = vmatprep.subr.mxu0 0.0
    %5845 = vmatpush2.msra.mxu0 0.0
    %5846 = vmatprep.subr.mxu0 0.0
    %5847 = vmatpush2.msra.mxu0 0.0
    %5848 = vmatprep.subr.mxu0 0.0
    %5849 = vmatpush2.msra.mxu0 0.0
    %5850 = vmatprep.subr.mxu0 0.0
    %5851 = vmatpush2.msra.mxu0 0.0
    %5852 = vmatprep.subr.mxu0 0.0
    %5853 = vmatpush2.msra.mxu0 0.0
    %5854 = vmatprep.subr.mxu0 0.0
    %5855 = vmatpush2.msra.mxu0 0.0
    %5856 = vmatprep.subr.mxu0 0.0
    %5857 = vmatpush2.msra.mxu0 0.0
    %5858 = vmatprep.subr.mxu0 0.0
    %5859 = vmatpush2.msra.mxu0 0.0
    %5860 = vmatprep.subr.mxu0 0.0
    %5861 = vmatpush2.msra.mxu0 0.0
    %5862 = vmatprep.subr.mxu0 0.0
    %5863 = vmatpush2.msra.mxu0 0.0
    %5864 = vmatprep.subr.mxu0 0.0
    %5865 = vmatpush2.msra.mxu0 0.0
    %5866 = vmatprep.subr.mxu0 0.0
    %5867 = vmatpush2.msra.mxu0 0.0
    %5868 = vmatprep.subr.mxu0 0.0
    %5869 = vmatpush2.msra.mxu0 0.0
    %5870 = vmatprep.subr.mxu0 0.0
    %5871 = vmatpush2.msra.mxu0 0.0
    %5872 = vmatprep.subr.mxu0 0.0
    %5873 = vmatpush2.msra.mxu0 0.0
    %5874 = vmatprep.mubr.f32.mxu0 0.0
    %5875 = vmatmul.mubr.f32.gmra.mxu0 %v5808
    %v5876 = vpop.f32.mrf.mxu0
    %v5877 = vadd.f32 %v5806, %v5876
    %v5878 = vpop.f32.mrf.mxu0
    %5879 = vdwg.mxu0
    %v5880 = vadd.f32 %v4413, %v5877
    %v5881 = vsel %vm1152, %v5880, 0.0
    %5882 = vadd.xlane.f32.xlu0 %v5881
    %v5883 = vpop.xlane.xlu0 %5882
    %v5884 = vmul.f32 %v5883, %v1156
    %v5885 = vsub.f32 %v5880, %v5884
    %v5886 = vmul.f32 %v5885, %v5885
    %v5887 = vsel %vm1152, %v5886, 0.0
    %5888 = vadd.xlane.f32.xlu0 %v5887
    %v5889 = vpop.xlane.xlu0 %5888
    %v5890 = vmul.f32 %v5889, %v1156
    %v5891 = vadd.f32 %v5890, 1e-05
    %v5892 = vrsqrt.pop %v5891
    %v5893 = vmul.f32 %v5885, %v5892
    %v5894 = vld [vmem:[#allocation3 + $0xa20] ss:$0 sm:$0xff]
    %v5895 = vmul.f32 %v5893, %v5894
    %v5896 = vld [vmem:[#allocation3 + $0xa10] ss:$0 sm:$0xff]
    %v5897 = vadd.f32 %v5895, %v5896
    %v5898 = vld [vmem:[#allocation3 + $0xc0] sm:$0xff]
    %v5899 = vld [vmem:[#allocation3 + $0xc8] sm:$0xff]
    %v5900 = vld [vmem:[#allocation3 + $0xd0] sm:$0xff]
    %v5901 = vld [vmem:[#allocation3 + $0xd8] sm:$0xff]
    %v5902 = vld [vmem:[#allocation3 + $0xe0] sm:$0xff]
    %v5903 = vld [vmem:[#allocation3 + $0xe8] sm:$0xff]
    %v5904 = vld [vmem:[#allocation3 + $0xf0] sm:$0xff]
    %v5905 = vld [vmem:[#allocation3 + $0xf8] sm:$0xff]
    %s5906 = scalar_lea.vmem [#allocation3], 144
    %v5907 = vld [vmem:[%s5906] ss:$8 sm:$0x3]
    %v5909 = vlaneseq
    %v5910 = vshrl.u32 %v5909, 7
    %v5911 = vsub.s32 0, %v5910
    %v5912 = vrot.slane %v5907, %v5911
    %v5913 = vlaneseq
    %v5914 = vshrl.u32 %v5913, 7
    %v5915 = vsub.s32 1, %v5914
    %v5916 = vrot.slane %v5907, %v5915
    %v5920 = vsel %vm487, %v5897, 0
    %5922 = vmatprep.subr.mxu0 0.0
    %5923 = vmatpush1.msra.mxu0 0.0
    %5924 = vmatprep.subr.mxu0 0.0
    %5925 = vmatpush1.msra.mxu0 0.0
    %5926 = vmatprep.subr.mxu0 0.0
    %5927 = vmatpush1.msra.mxu0 0.0
    %5928 = vmatprep.subr.mxu0 0.0
    %5929 = vmatpush1.msra.mxu0 0.0
    %5930 = vmatprep.subr.mxu0 0.0
    %5931 = vmatpush1.msra.mxu0 0.0
    %5932 = vmatprep.subr.mxu0 0.0
    %5933 = vmatpush1.msra.mxu0 0.0
    %5934 = vmatprep.subr.mxu0 0.0
    %5935 = vmatpush1.msra.mxu0 0.0
    %5936 = vmatprep.subr.mxu0 0.0
    %5937 = vmatpush1.msra.mxu0 0.0
    %5938 = vmatprep.subr.mxu0 0.0
    %5939 = vmatpush1.msra.mxu0 0.0
    %5940 = vmatprep.subr.mxu0 0.0
    %5941 = vmatpush1.msra.mxu0 0.0
    %5942 = vmatprep.subr.mxu0 0.0
    %5943 = vmatpush1.msra.mxu0 0.0
    %5944 = vmatprep.subr.mxu0 0.0
    %5945 = vmatpush1.msra.mxu0 0.0
    %5946 = vmatprep.subr.mxu0 %v5905
    %5947 = vmatpush1.msra.mxu0 %v5904
    %5948 = vmatprep.subr.mxu0 %v5903
    %5949 = vmatpush1.msra.mxu0 %v5902
    %5950 = vmatprep.subr.mxu0 %v5901
    %5951 = vmatpush1.msra.mxu0 %v5900
    %5952 = vmatprep.subr.mxu0 %v5899
    %5953 = vmatpush1.msra.mxu0 %v5898
    %5954 = vmatprep.subr.mxu0 0.0
    %5955 = vmatpush2.msra.mxu0 0.0
    %5956 = vmatprep.subr.mxu0 0.0
    %5957 = vmatpush2.msra.mxu0 0.0
    %5958 = vmatprep.subr.mxu0 0.0
    %5959 = vmatpush2.msra.mxu0 0.0
    %5960 = vmatprep.subr.mxu0 0.0
    %5961 = vmatpush2.msra.mxu0 0.0
    %5962 = vmatprep.subr.mxu0 0.0
    %5963 = vmatpush2.msra.mxu0 0.0
    %5964 = vmatprep.subr.mxu0 0.0
    %5965 = vmatpush2.msra.mxu0 0.0
    %5966 = vmatprep.subr.mxu0 0.0
    %5967 = vmatpush2.msra.mxu0 0.0
    %5968 = vmatprep.subr.mxu0 0.0
    %5969 = vmatpush2.msra.mxu0 0.0
    %5970 = vmatprep.subr.mxu0 0.0
    %5971 = vmatpush2.msra.mxu0 0.0
    %5972 = vmatprep.subr.mxu0 0.0
    %5973 = vmatpush2.msra.mxu0 0.0
    %5974 = vmatprep.subr.mxu0 0.0
    %5975 = vmatpush2.msra.mxu0 0.0
    %5976 = vmatprep.subr.mxu0 0.0
    %5977 = vmatpush2.msra.mxu0 0.0
    %5978 = vmatprep.subr.mxu0 0.0
    %5979 = vmatpush2.msra.mxu0 0.0
    %5980 = vmatprep.subr.mxu0 0.0
    %5981 = vmatpush2.msra.mxu0 0.0
    %5982 = vmatprep.subr.mxu0 0.0
    %5983 = vmatpush2.msra.mxu0 0.0
    %5984 = vmatprep.subr.mxu0 0.0
    %5985 = vmatpush2.msra.mxu0 0.0
    %5986 = vmatprep.mubr.f32.mxu0 0.0
    %5987 = vmatmul.mubr.f32.gmra.mxu0 %v5920
    %v5988 = vpop.f32.mrf.mxu0
    %v5989 = vadd.f32 %v5912, %v5988
    %v5990 = vpop.f32.mrf.mxu0
    %v5991 = vadd.f32 %v5916, %v5990
    %5992 = vdwg.mxu0
    %v5993 = vmax.f32 %v5989, 0.0
    %v5994 = vmax.f32 %v5991, 0.0
    %v5995 = vld [vmem:[#allocation3 + $0x100] sm:$0xff]
    %v5996 = vld [vmem:[#allocation3 + $0x108] sm:$0xff]
    %v5997 = vld [vmem:[#allocation3 + $0x110] sm:$0xff]
    %v5998 = vld [vmem:[#allocation3 + $0x118] sm:$0xff]
    %v5999 = vld [vmem:[#allocation3 + $0x120] sm:$0xff]
    %v6000 = vld [vmem:[#allocation3 + $0x128] sm:$0xff]
    %v6001 = vld [vmem:[#allocation3 + $0x130] sm:$0xff]
    %v6002 = vld [vmem:[#allocation3 + $0x138] sm:$0xff]
    %v6003 = vld [vmem:[#allocation3 + $0x140] sm:$0xff]
    %v6004 = vld [vmem:[#allocation3 + $0x148] sm:$0xff]
    %v6005 = vld [vmem:[#allocation3 + $0x150] sm:$0xff]
    %v6006 = vld [vmem:[#allocation3 + $0x158] sm:$0xff]
    %v6007 = vld [vmem:[#allocation3 + $0x160] sm:$0xff]
    %v6008 = vld [vmem:[#allocation3 + $0x168] sm:$0xff]
    %v6009 = vld [vmem:[#allocation3 + $0x170] sm:$0xff]
    %v6010 = vld [vmem:[#allocation3 + $0x178] sm:$0xff]
    %v6011 = vld [vmem:[#allocation3 + $0x180] sm:$0xff]
    %v6012 = vld [vmem:[#allocation3 + $0x188] sm:$0xff]
    %v6013 = vld [vmem:[#allocation3 + $0x190] sm:$0xff]
    %v6014 = vld [vmem:[#allocation3 + $0x198] sm:$0xff]
    %v6015 = vld [vmem:[#allocation3 + $0x1a0] sm:$0xff]
    %v6016 = vld [vmem:[#allocation3 + $0x1a8] sm:$0xff]
    %v6017 = vld [vmem:[#allocation3 + $0x1b0] sm:$0xff]
    %v6018 = vld [vmem:[#allocation3 + $0x1b8] sm:$0xff]
    %v6019 = vld [vmem:[#allocation3 + $0x1c0] sm:$0xff]
    %v6020 = vld [vmem:[#allocation3 + $0x1c8] sm:$0xff]
    %v6021 = vld [vmem:[#allocation3 + $0x1d0] sm:$0xff]
    %v6022 = vld [vmem:[#allocation3 + $0x1d8] sm:$0xff]
    %v6023 = vld [vmem:[#allocation3 + $0x1e0] sm:$0xff]
    %v6024 = vld [vmem:[#allocation3 + $0x1e8] sm:$0xff]
    %v6025 = vld [vmem:[#allocation3 + $0x1f0] sm:$0xff]
    %v6026 = vld [vmem:[#allocation3 + $0x1f8] sm:$0xff]
    %v6027 = vld [vmem:[#allocation3 + $0x200] sm:$0xff]
    %v6028 = vld [vmem:[#allocation3 + $0x208] sm:$0xff]
    %v6029 = vld [vmem:[#allocation3 + $0x210] sm:$0xff]
    %v6030 = vld [vmem:[#allocation3 + $0x218] sm:$0xff]
    %v6031 = vld [vmem:[#allocation3 + $0x220] sm:$0xff]
    %v6032 = vld [vmem:[#allocation3 + $0x228] sm:$0xff]
    %v6033 = vld [vmem:[#allocation3 + $0x230] sm:$0xff]
    %v6034 = vld [vmem:[#allocation3 + $0x238] sm:$0xff]
    %v6035 = vld [vmem:[#allocation3 + $0x240] sm:$0xff]
    %v6036 = vld [vmem:[#allocation3 + $0x248] sm:$0xff]
    %v6037 = vld [vmem:[#allocation3 + $0x250] sm:$0xff]
    %v6038 = vld [vmem:[#allocation3 + $0x258] sm:$0xff]
    %v6039 = vld [vmem:[#allocation3 + $0x260] sm:$0xff]
    %v6040 = vld [vmem:[#allocation3 + $0x268] sm:$0xff]
    %v6041 = vld [vmem:[#allocation3 + $0x270] sm:$0xff]
    %v6042 = vld [vmem:[#allocation3 + $0x278] sm:$0xff]
    %s6043 = scalar_lea.vmem [#allocation3], 160
    %v6044 = vld [vmem:[%s6043] ss:$8 sm:$0x3]
    %v6046 = vlaneseq
    %v6047 = vshrl.u32 %v6046, 7
    %v6048 = vsub.s32 0, %v6047
    %v6049 = vrot.slane %v6044, %v6048
    %v6050 = vlaneseq
    %v6051 = vshrl.u32 %v6050, 7
    %v6052 = vsub.s32 1, %v6051
    %v6053 = vrot.slane %v6044, %v6052
    %v6057 = vsel %vm1975, %v5994, 0
    %6059 = vmatprep.subr.mxu0 %v6026
    %6060 = vmatpush1.msra.mxu0 %v6025
    %6061 = vmatprep.subr.mxu0 %v6024
    %6062 = vmatpush1.msra.mxu0 %v6023
    %6063 = vmatprep.subr.mxu0 %v6022
    %6064 = vmatpush1.msra.mxu0 %v6021
    %6065 = vmatprep.subr.mxu0 %v6020
    %6066 = vmatpush1.msra.mxu0 %v6019
    %6067 = vmatprep.subr.mxu0 %v6018
    %6068 = vmatpush1.msra.mxu0 %v6017
    %6069 = vmatprep.subr.mxu0 %v6016
    %6070 = vmatpush1.msra.mxu0 %v6015
    %6071 = vmatprep.subr.mxu0 %v6014
    %6072 = vmatpush1.msra.mxu0 %v6013
    %6073 = vmatprep.subr.mxu0 %v6012
    %6074 = vmatpush1.msra.mxu0 %v6011
    %6075 = vmatprep.subr.mxu0 %v6010
    %6076 = vmatpush1.msra.mxu0 %v6009
    %6077 = vmatprep.subr.mxu0 %v6008
    %6078 = vmatpush1.msra.mxu0 %v6007
    %6079 = vmatprep.subr.mxu0 %v6006
    %6080 = vmatpush1.msra.mxu0 %v6005
    %6081 = vmatprep.subr.mxu0 %v6004
    %6082 = vmatpush1.msra.mxu0 %v6003
    %6083 = vmatprep.subr.mxu0 %v6002
    %6084 = vmatpush1.msra.mxu0 %v6001
    %6085 = vmatprep.subr.mxu0 %v6000
    %6086 = vmatpush1.msra.mxu0 %v5999
    %6087 = vmatprep.subr.mxu0 %v5998
    %6088 = vmatpush1.msra.mxu0 %v5997
    %6089 = vmatprep.subr.mxu0 %v5996
    %6090 = vmatpush1.msra.mxu0 %v5995
    %6091 = vmatprep.subr.mxu0 0.0
    %6092 = vmatpush2.msra.mxu0 0.0
    %6093 = vmatprep.subr.mxu0 0.0
    %6094 = vmatpush2.msra.mxu0 0.0
    %6095 = vmatprep.subr.mxu0 0.0
    %6096 = vmatpush2.msra.mxu0 0.0
    %6097 = vmatprep.subr.mxu0 0.0
    %6098 = vmatpush2.msra.mxu0 0.0
    %6099 = vmatprep.subr.mxu0 0.0
    %6100 = vmatpush2.msra.mxu0 0.0
    %6101 = vmatprep.subr.mxu0 0.0
    %6102 = vmatpush2.msra.mxu0 0.0
    %6103 = vmatprep.subr.mxu0 0.0
    %6104 = vmatpush2.msra.mxu0 0.0
    %6105 = vmatprep.subr.mxu0 0.0
    %6106 = vmatpush2.msra.mxu0 0.0
    %6107 = vmatprep.subr.mxu0 %v6042
    %6108 = vmatpush2.msra.mxu0 %v6041
    %6109 = vmatprep.subr.mxu0 %v6040
    %6110 = vmatpush2.msra.mxu0 %v6039
    %6111 = vmatprep.subr.mxu0 %v6038
    %6112 = vmatpush2.msra.mxu0 %v6037
    %6113 = vmatprep.subr.mxu0 %v6036
    %6114 = vmatpush2.msra.mxu0 %v6035
    %6115 = vmatprep.subr.mxu0 %v6034
    %6116 = vmatpush2.msra.mxu0 %v6033
    %6117 = vmatprep.subr.mxu0 %v6032
    %6118 = vmatpush2.msra.mxu0 %v6031
    %6119 = vmatprep.subr.mxu0 %v6030
    %6120 = vmatpush2.msra.mxu0 %v6029
    %6121 = vmatprep.subr.mxu0 %v6028
    %6122 = vmatpush2.msra.mxu0 %v6027
    %6123 = vmatprep.mubr.f32.mxu0 %v6057
    %6124 = vmatmul.mubr.f32.gmra.mxu0 %v5993
    %v6125 = vpop.f32.mrf.mxu0
    %v6126 = vadd.f32 %v6049, %v6125
    %v6127 = vpop.f32.mrf.mxu0
    %v6128 = vadd.f32 %v6053, %v6127
    %6129 = vdwg.mxu0
    %v6130 = vmax.f32 %v6126, 0.0
    %v6131 = vmax.f32 %v6128, 0.0
    %v6132 = vld [vmem:[#allocation3 + $0x280] sm:$0xff]
    %v6133 = vld [vmem:[#allocation3 + $0x290] sm:$0xff]
    %v6134 = vld [vmem:[#allocation3 + $0x2a0] sm:$0xff]
    %v6135 = vld [vmem:[#allocation3 + $0x2b0] sm:$0xff]
    %v6136 = vld [vmem:[#allocation3 + $0x2c0] sm:$0xff]
    %v6137 = vld [vmem:[#allocation3 + $0x2d0] sm:$0xff]
    %v6138 = vld [vmem:[#allocation3 + $0x2e0] sm:$0xff]
    %v6139 = vld [vmem:[#allocation3 + $0x2f0] sm:$0xff]
    %v6140 = vld [vmem:[#allocation3 + $0x300] sm:$0xff]
    %v6141 = vld [vmem:[#allocation3 + $0x310] sm:$0xff]
    %v6142 = vld [vmem:[#allocation3 + $0x320] sm:$0xff]
    %v6143 = vld [vmem:[#allocation3 + $0x330] sm:$0xff]
    %v6144 = vld [vmem:[#allocation3 + $0x340] sm:$0xff]
    %v6145 = vld [vmem:[#allocation3 + $0x350] sm:$0xff]
    %v6146 = vld [vmem:[#allocation3 + $0x360] sm:$0xff]
    %v6147 = vld [vmem:[#allocation3 + $0x370] sm:$0xff]
    %v6148 = vld [vmem:[#allocation3 + $0x380] sm:$0xff]
    %v6149 = vld [vmem:[#allocation3 + $0x390] sm:$0xff]
    %v6150 = vld [vmem:[#allocation3 + $0x3a0] sm:$0xff]
    %v6151 = vld [vmem:[#allocation3 + $0x3b0] sm:$0xff]
    %v6152 = vld [vmem:[#allocation3 + $0x3c0] sm:$0xff]
    %v6153 = vld [vmem:[#allocation3 + $0x3d0] sm:$0xff]
    %v6154 = vld [vmem:[#allocation3 + $0x3e0] sm:$0xff]
    %v6155 = vld [vmem:[#allocation3 + $0x3f0] sm:$0xff]
    %v6156 = vld [vmem:[#allocation3 + $0xb0] ss:$0 sm:$0xff]
    %v6158 = vsel %vm1975, %v6131, 0
    %6160 = vmatprep.subr.mxu0 0.0
    %6161 = vmatpush1.msra.mxu0 %v6147
    %6162 = vmatprep.subr.mxu0 0.0
    %6163 = vmatpush1.msra.mxu0 %v6146
    %6164 = vmatprep.subr.mxu0 0.0
    %6165 = vmatpush1.msra.mxu0 %v6145
    %6166 = vmatprep.subr.mxu0 0.0
    %6167 = vmatpush1.msra.mxu0 %v6144
    %6168 = vmatprep.subr.mxu0 0.0
    %6169 = vmatpush1.msra.mxu0 %v6143
    %6170 = vmatprep.subr.mxu0 0.0
    %6171 = vmatpush1.msra.mxu0 %v6142
    %6172 = vmatprep.subr.mxu0 0.0
    %6173 = vmatpush1.msra.mxu0 %v6141
    %6174 = vmatprep.subr.mxu0 0.0
    %6175 = vmatpush1.msra.mxu0 %v6140
    %6176 = vmatprep.subr.mxu0 0.0
    %6177 = vmatpush1.msra.mxu0 %v6139
    %6178 = vmatprep.subr.mxu0 0.0
    %6179 = vmatpush1.msra.mxu0 %v6138
    %6180 = vmatprep.subr.mxu0 0.0
    %6181 = vmatpush1.msra.mxu0 %v6137
    %6182 = vmatprep.subr.mxu0 0.0
    %6183 = vmatpush1.msra.mxu0 %v6136
    %6184 = vmatprep.subr.mxu0 0.0
    %6185 = vmatpush1.msra.mxu0 %v6135
    %6186 = vmatprep.subr.mxu0 0.0
    %6187 = vmatpush1.msra.mxu0 %v6134
    %6188 = vmatprep.subr.mxu0 0.0
    %6189 = vmatpush1.msra.mxu0 %v6133
    %6190 = vmatprep.subr.mxu0 0.0
    %6191 = vmatpush1.msra.mxu0 %v6132
    %6192 = vmatprep.subr.mxu0 0.0
    %6193 = vmatpush2.msra.mxu0 0.0
    %6194 = vmatprep.subr.mxu0 0.0
    %6195 = vmatpush2.msra.mxu0 0.0
    %6196 = vmatprep.subr.mxu0 0.0
    %6197 = vmatpush2.msra.mxu0 0.0
    %6198 = vmatprep.subr.mxu0 0.0
    %6199 = vmatpush2.msra.mxu0 0.0
    %6200 = vmatprep.subr.mxu0 0.0
    %6201 = vmatpush2.msra.mxu0 0.0
    %6202 = vmatprep.subr.mxu0 0.0
    %6203 = vmatpush2.msra.mxu0 0.0
    %6204 = vmatprep.subr.mxu0 0.0
    %6205 = vmatpush2.msra.mxu0 0.0
    %6206 = vmatprep.subr.mxu0 0.0
    %6207 = vmatpush2.msra.mxu0 0.0
    %6208 = vmatprep.subr.mxu0 0.0
    %6209 = vmatpush2.msra.mxu0 %v6155
    %6210 = vmatprep.subr.mxu0 0.0
    %6211 = vmatpush2.msra.mxu0 %v6154
    %6212 = vmatprep.subr.mxu0 0.0
    %6213 = vmatpush2.msra.mxu0 %v6153
    %6214 = vmatprep.subr.mxu0 0.0
    %6215 = vmatpush2.msra.mxu0 %v6152
    %6216 = vmatprep.subr.mxu0 0.0
    %6217 = vmatpush2.msra.mxu0 %v6151
    %6218 = vmatprep.subr.mxu0 0.0
    %6219 = vmatpush2.msra.mxu0 %v6150
    %6220 = vmatprep.subr.mxu0 0.0
    %6221 = vmatpush2.msra.mxu0 %v6149
    %6222 = vmatprep.subr.mxu0 0.0
    %6223 = vmatpush2.msra.mxu0 %v6148
    %6224 = vmatprep.mubr.f32.mxu0 %v6158
    %6225 = vmatmul.mubr.f32.gmra.mxu0 %v6130
    %v6226 = vpop.f32.mrf.mxu0
    %v6227 = vadd.f32 %v6156, %v6226
    %v6228 = vpop.f32.mrf.mxu0
    %6229 = vdwg.mxu0
    %v6230 = vld [vmem:[#allocation3 + $0x400] sm:$0xf]
    %v6232 = vrot.slane %v6230, 7
    %6233 = vrot.lane.b32.xlu0 %v6232, 4
    %v6234 = vpop.permute.xlu0 %6233
    %v6236 = vmul.f32 %v6227, %v6234
    %6238 = vrot.lane.b32.xlu0 %v6236, 124
    %v6239 = vpop.permute.xlu0 %6238
    %v6241 = vadd.f32 %v6236, %v6239
    %6242 = vrot.lane.b32.xlu0 %v6236, 120
    %v6243 = vpop.permute.xlu0 %6242
    %v6245 = vadd.f32 %v6241, %v6243
    %6246 = vrot.lane.b32.xlu0 %v6236, 116
    %v6247 = vpop.permute.xlu0 %6246
    %v6249 = vadd.f32 %v6245, %v6247
    %v6250 = vld [vmem:[#allocation3 + $0xa60] sm:$0xff]
    %v6251 = vld [vmem:[#allocation3 + $0xa70] sm:$0xff]
    %v6252 = vld [vmem:[#allocation3 + $0xa80] sm:$0xff]
    %v6253 = vld [vmem:[#allocation3 + $0xa90] sm:$0xff]
    %v6254 = vld [vmem:[#allocation3 + $0xa50] ss:$0 sm:$0xff]
    %6255 = vmatprep.subr.mxu0 0.0
    %6256 = vmatpush1.msra.mxu0 0.0
    %6257 = vmatprep.subr.mxu0 0.0
    %6258 = vmatpush1.msra.mxu0 0.0
    %6259 = vmatprep.subr.mxu0 0.0
    %6260 = vmatpush1.msra.mxu0 0.0
    %6261 = vmatprep.subr.mxu0 0.0
    %6262 = vmatpush1.msra.mxu0 0.0
    %6263 = vmatprep.subr.mxu0 0.0
    %6264 = vmatpush1.msra.mxu0 0.0
    %6265 = vmatprep.subr.mxu0 0.0
    %6266 = vmatpush1.msra.mxu0 0.0
    %6267 = vmatprep.subr.mxu0 0.0
    %6268 = vmatpush1.msra.mxu0 0.0
    %6269 = vmatprep.subr.mxu0 0.0
    %6270 = vmatpush1.msra.mxu0 0.0
    %6271 = vmatprep.subr.mxu0 0.0
    %6272 = vmatpush1.msra.mxu0 0.0
    %6273 = vmatprep.subr.mxu0 0.0
    %6274 = vmatpush1.msra.mxu0 0.0
    %6275 = vmatprep.subr.mxu0 0.0
    %6276 = vmatpush1.msra.mxu0 0.0
    %6277 = vmatprep.subr.mxu0 0.0
    %6278 = vmatpush1.msra.mxu0 0.0
    %6279 = vmatprep.subr.mxu0 0.0
    %6280 = vmatpush1.msra.mxu0 %v6253
    %6281 = vmatprep.subr.mxu0 0.0
    %6282 = vmatpush1.msra.mxu0 %v6252
    %6283 = vmatprep.subr.mxu0 0.0
    %6284 = vmatpush1.msra.mxu0 %v6251
    %6285 = vmatprep.subr.mxu0 0.0
    %6286 = vmatpush1.msra.mxu0 %v6250
    %6287 = vmatprep.subr.mxu0 0.0
    %6288 = vmatpush2.msra.mxu0 0.0
    %6289 = vmatprep.subr.mxu0 0.0
    %6290 = vmatpush2.msra.mxu0 0.0
    %6291 = vmatprep.subr.mxu0 0.0
    %6292 = vmatpush2.msra.mxu0 0.0
    %6293 = vmatprep.subr.mxu0 0.0
    %6294 = vmatpush2.msra.mxu0 0.0
    %6295 = vmatprep.subr.mxu0 0.0
    %6296 = vmatpush2.msra.mxu0 0.0
    %6297 = vmatprep.subr.mxu0 0.0
    %6298 = vmatpush2.msra.mxu0 0.0
    %6299 = vmatprep.subr.mxu0 0.0
    %6300 = vmatpush2.msra.mxu0 0.0
    %6301 = vmatprep.subr.mxu0 0.0
    %6302 = vmatpush2.msra.mxu0 0.0
    %6303 = vmatprep.subr.mxu0 0.0
    %6304 = vmatpush2.msra.mxu0 0.0
    %6305 = vmatprep.subr.mxu0 0.0
    %6306 = vmatpush2.msra.mxu0 0.0
    %6307 = vmatprep.subr.mxu0 0.0
    %6308 = vmatpush2.msra.mxu0 0.0
    %6309 = vmatprep.subr.mxu0 0.0
    %6310 = vmatpush2.msra.mxu0 0.0
    %6311 = vmatprep.subr.mxu0 0.0
    %6312 = vmatpush2.msra.mxu0 0.0
    %6313 = vmatprep.subr.mxu0 0.0
    %6314 = vmatpush2.msra.mxu0 0.0
    %6315 = vmatprep.subr.mxu0 0.0
    %6316 = vmatpush2.msra.mxu0 0.0
    %6317 = vmatprep.subr.mxu0 0.0
    %6318 = vmatpush2.msra.mxu0 0.0
    %6319 = vmatprep.mubr.f32.mxu0 0.0
    %6320 = vmatmul.mubr.f32.gmra.mxu0 %v5382
    %v6321 = vpop.f32.mrf.mxu0
    %v6322 = vadd.f32 %v6254, %v6321
    %v6323 = vpop.f32.mrf.mxu0
    %6324 = vmatprep.mubr.f32.mxu0 0.0
    %6325 = vmatmul.mubr.f32.gmra.mxu0 %v5385
    %v6326 = vpop.f32.mrf.mxu0
    %v6327 = vadd.f32 %v6254, %v6326
    %v6328 = vpop.f32.mrf.mxu0
    %6329 = vdwg.mxu0
    %v6330 = vsel %vm1449, %v6322, 0.0
    %6331 = vadd.xlane.f32.xlu0 %v6330
    %v6332 = vpop.xlane.xlu0 %6331
    %v6333 = vsel %vm1449, %v6327, 0.0
    %6334 = vadd.xlane.f32.xlu0 %v6333
    %v6335 = vpop.xlane.xlu0 %6334
    %v6336 = vrcp.pop 8.0
    %v6337 = vmul.f32 %v6332, %v6336
    %v6338 = vmul.f32 %v6335, %v6336
    %v6339 = vsub.f32 %v6322, %v6337
    %v6340 = vsub.f32 %v6327, %v6338
    %v6341 = vmul.f32 %v6339, %v6339
    %v6342 = vmul.f32 %v6340, %v6340
    %v6343 = vsel %vm1449, %v6341, 0.0
    %6344 = vadd.xlane.f32.xlu0 %v6343
    %v6345 = vpop.xlane.xlu0 %6344
    %v6346 = vsel %vm1449, %v6342, 0.0
    %6347 = vadd.xlane.f32.xlu0 %v6346
    %v6348 = vpop.xlane.xlu0 %6347
    %v6349 = vmul.f32 %v6345, %v6336
    %v6350 = vmul.f32 %v6348, %v6336
    %v6351 = vadd.f32 %v6349, 1e-06
    %v6352 = vadd.f32 %v6350, 1e-06
    %v6353 = vrsqrt.pop %v6351
    %v6354 = vrsqrt.pop %v6352
    %v6355 = vmul.f32 %v6339, %v6353
    %v6356 = vmul.f32 %v6340, %v6354
    %v6357 = vld [vmem:[#allocation3 + $0xad0] ss:$0 sm:$0xff]
    %v6358 = vmul.f32 %v6355, %v6357
    %v6359 = vmul.f32 %v6356, %v6357
    %v6360 = vld [vmem:[#allocation3 + $0xac0] ss:$0 sm:$0xff]
    %v6361 = vadd.f32 %v6358, %v6360
    %v6362 = vadd.f32 %v6359, %v6360
    %v6363 = vmul.f32 %v6361, %v6361
    %v6364 = vmul.f32 %v6362, %v6362
    %v6365 = vmul.f32 %v6361, %v6363
    %v6366 = vmul.f32 %v6362, %v6364
    %v6367 = vmul.f32 %v6365, 0.044715
    %v6368 = vmul.f32 %v6366, 0.044715
    %v6369 = vadd.f32 %v6361, %v6367
    %v6370 = vadd.f32 %v6362, %v6368
    %v6371 = vmul.f32 %v6369, 0.7978846
    %v6372 = vmul.f32 %v6370, 0.7978846
    %v6373 = vtanh.pop %v6371
    %v6374 = vtanh.pop %v6372
    %v6375 = vadd.f32 %v6373, 1.0
    %v6376 = vadd.f32 %v6374, 1.0
    %v6377 = vmul.f32 %v6375, 0.5
    %v6378 = vmul.f32 %v6376, 0.5
    %v6379 = vmul.f32 %v6361, %v6377
    %v6380 = vmul.f32 %v6362, %v6378
    %v6381 = vld [vmem:[#allocation3 + $0xab0] sm:$0xff]
    %v6382 = vld [vmem:[#allocation3 + $0xaa0] ss:$0 sm:$0xff]
    %v6384 = vsel %vm1449, %v6379, 0
    %v6387 = vsel %vm1449, %v6380, 0
    %6389 = vmatprep.subr.mxu0 0.0
    %6390 = vmatpush1.msra.mxu0 0.0
    %6391 = vmatprep.subr.mxu0 0.0
    %6392 = vmatpush1.msra.mxu0 0.0
    %6393 = vmatprep.subr.mxu0 0.0
    %6394 = vmatpush1.msra.mxu0 0.0
    %6395 = vmatprep.subr.mxu0 0.0
    %6396 = vmatpush1.msra.mxu0 0.0
    %6397 = vmatprep.subr.mxu0 0.0
    %6398 = vmatpush1.msra.mxu0 0.0
    %6399 = vmatprep.subr.mxu0 0.0
    %6400 = vmatpush1.msra.mxu0 0.0
    %6401 = vmatprep.subr.mxu0 0.0
    %6402 = vmatpush1.msra.mxu0 0.0
    %6403 = vmatprep.subr.mxu0 0.0
    %6404 = vmatpush1.msra.mxu0 0.0
    %6405 = vmatprep.subr.mxu0 0.0
    %6406 = vmatpush1.msra.mxu0 0.0
    %6407 = vmatprep.subr.mxu0 0.0
    %6408 = vmatpush1.msra.mxu0 0.0
    %6409 = vmatprep.subr.mxu0 0.0
    %6410 = vmatpush1.msra.mxu0 0.0
    %6411 = vmatprep.subr.mxu0 0.0
    %6412 = vmatpush1.msra.mxu0 0.0
    %6413 = vmatprep.subr.mxu0 0.0
    %6414 = vmatpush1.msra.mxu0 0.0
    %6415 = vmatprep.subr.mxu0 0.0
    %6416 = vmatpush1.msra.mxu0 0.0
    %6417 = vmatprep.subr.mxu0 0.0
    %6418 = vmatpush1.msra.mxu0 0.0
    %6419 = vmatprep.subr.mxu0 0.0
    %6420 = vmatpush1.msra.mxu0 %v6381
    %6421 = vmatprep.subr.mxu0 0.0
    %6422 = vmatpush2.msra.mxu0 0.0
    %6423 = vmatprep.subr.mxu0 0.0
    %6424 = vmatpush2.msra.mxu0 0.0
    %6425 = vmatprep.subr.mxu0 0.0
    %6426 = vmatpush2.msra.mxu0 0.0
    %6427 = vmatprep.subr.mxu0 0.0
    %6428 = vmatpush2.msra.mxu0 0.0
    %6429 = vmatprep.subr.mxu0 0.0
    %6430 = vmatpush2.msra.mxu0 0.0
    %6431 = vmatprep.subr.mxu0 0.0
    %6432 = vmatpush2.msra.mxu0 0.0
    %6433 = vmatprep.subr.mxu0 0.0
    %6434 = vmatpush2.msra.mxu0 0.0
    %6435 = vmatprep.subr.mxu0 0.0
    %6436 = vmatpush2.msra.mxu0 0.0
    %6437 = vmatprep.subr.mxu0 0.0
    %6438 = vmatpush2.msra.mxu0 0.0
    %6439 = vmatprep.subr.mxu0 0.0
    %6440 = vmatpush2.msra.mxu0 0.0
    %6441 = vmatprep.subr.mxu0 0.0
    %6442 = vmatpush2.msra.mxu0 0.0
    %6443 = vmatprep.subr.mxu0 0.0
    %6444 = vmatpush2.msra.mxu0 0.0
    %6445 = vmatprep.subr.mxu0 0.0
    %6446 = vmatpush2.msra.mxu0 0.0
    %6447 = vmatprep.subr.mxu0 0.0
    %6448 = vmatpush2.msra.mxu0 0.0
    %6449 = vmatprep.subr.mxu0 0.0
    %6450 = vmatpush2.msra.mxu0 0.0
    %6451 = vmatprep.subr.mxu0 0.0
    %6452 = vmatpush2.msra.mxu0 0.0
    %6453 = vmatprep.mubr.f32.mxu0 0.0
    %6454 = vmatmul.mubr.f32.gmra.mxu0 %v6384
    %v6455 = vpop.f32.mrf.mxu0
    %v6456 = vadd.f32 %v6382, %v6455
    %v6457 = vpop.f32.mrf.mxu0
    %6458 = vmatprep.mubr.f32.mxu0 0.0
    %6459 = vmatmul.mubr.f32.gmra.mxu0 %v6387
    %v6460 = vpop.f32.mrf.mxu0
    %v6461 = vadd.f32 %v6382, %v6460
    %v6462 = vpop.f32.mrf.mxu0
    %6463 = vdwg.mxu0
    %v6464 = vmul.f32 %v6456, %v6456
    %v6465 = vmul.f32 %v6461, %v6461
    %v6466 = vmul.f32 %v6456, %v6464
    %v6467 = vmul.f32 %v6461, %v6465
    %v6468 = vmul.f32 %v6466, 0.044715
    %v6469 = vmul.f32 %v6467, 0.044715
    %v6470 = vadd.f32 %v6456, %v6468
    %v6471 = vadd.f32 %v6461, %v6469
    %v6472 = vmul.f32 %v6470, 0.7978846
    %v6473 = vmul.f32 %v6471, 0.7978846
    %v6474 = vtanh.pop %v6472
    %v6475 = vtanh.pop %v6473
    %v6476 = vadd.f32 %v6474, 1.0
    %v6477 = vadd.f32 %v6475, 1.0
    %v6478 = vmul.f32 %v6476, 0.5
    %v6479 = vmul.f32 %v6477, 0.5
    %v6480 = vmul.f32 %v6456, %v6478
    %v6481 = vmul.f32 %v6461, %v6479
    %v6483 = vrot.slane %v6249, 1
    %6484 = vrot.lane.b32.xlu0 %v6483, 124
    %v6485 = vpop.permute.xlu0 %6484
    %vm6486 = vcmask 31744
    %v6487 = vsel %vm6486, %v6485, 0
    %v6490 = vsel %vm6486, %v6480, 0
    %v6493 = vsel %vm6486, %v6481, 0
    %6495 = vmatprep.subr.mxu0 0.0
    %6496 = vmatpush1.xpose.msra.mxu0 0.0
    %6497 = vmatprep.subr.mxu0 0.0
    %6498 = vmatpush1.xpose.msra.mxu0 0.0
    %6499 = vmatprep.subr.mxu0 0.0
    %6500 = vmatpush1.xpose.msra.mxu0 0.0
    %6501 = vmatprep.subr.mxu0 0.0
    %6502 = vmatpush1.xpose.msra.mxu0 0.0
    %6503 = vmatprep.subr.mxu0 0.0
    %6504 = vmatpush1.xpose.msra.mxu0 0.0
    %6505 = vmatprep.subr.mxu0 0.0
    %6506 = vmatpush1.xpose.msra.mxu0 0.0
    %6507 = vmatprep.subr.mxu0 0.0
    %6508 = vmatpush1.xpose.msra.mxu0 0.0
    %6509 = vmatprep.subr.mxu0 0.0
    %6510 = vmatpush1.xpose.msra.mxu0 0.0
    %6511 = vmatprep.subr.mxu0 0.0
    %6512 = vmatpush1.xpose.msra.mxu0 0.0
    %6513 = vmatprep.subr.mxu0 0.0
    %6514 = vmatpush1.xpose.msra.mxu0 0.0
    %6515 = vmatprep.subr.mxu0 0.0
    %6516 = vmatpush1.xpose.msra.mxu0 0.0
    %6517 = vmatprep.subr.mxu0 0.0
    %6518 = vmatpush1.xpose.msra.mxu0 0.0
    %6519 = vmatprep.subr.mxu0 0.0
    %6520 = vmatpush1.xpose.msra.mxu0 0.0
    %6521 = vmatprep.subr.mxu0 0.0
    %6522 = vmatpush1.xpose.msra.mxu0 0.0
    %6523 = vmatprep.subr.mxu0 0.0
    %6524 = vmatpush1.xpose.msra.mxu0 %v6493
    %6525 = vmatprep.subr.mxu0 0.0
    %6526 = vmatpush1.xpose.msra.mxu0 %v6490
    %6527 = vmatprep.subr.mxu0 0.0
    %6528 = vmatpush2.xpose.msra.mxu0 0.0
    %6529 = vmatprep.subr.mxu0 0.0
    %6530 = vmatpush2.xpose.msra.mxu0 0.0
    %6531 = vmatprep.subr.mxu0 0.0
    %6532 = vmatpush2.xpose.msra.mxu0 0.0
    %6533 = vmatprep.subr.mxu0 0.0
    %6534 = vmatpush2.xpose.msra.mxu0 0.0
    %6535 = vmatprep.subr.mxu0 0.0
    %6536 = vmatpush2.xpose.msra.mxu0 0.0
    %6537 = vmatprep.subr.mxu0 0.0
    %6538 = vmatpush2.xpose.msra.mxu0 0.0
    %6539 = vmatprep.subr.mxu0 0.0
    %6540 = vmatpush2.xpose.msra.mxu0 0.0
    %6541 = vmatprep.subr.mxu0 0.0
    %6542 = vmatpush2.xpose.msra.mxu0 0.0
    %6543 = vmatprep.subr.mxu0 0.0
    %6544 = vmatpush2.xpose.msra.mxu0 0.0
    %6545 = vmatprep.subr.mxu0 0.0
    %6546 = vmatpush2.xpose.msra.mxu0 0.0
    %6547 = vmatprep.subr.mxu0 0.0
    %6548 = vmatpush2.xpose.msra.mxu0 0.0
    %6549 = vmatprep.subr.mxu0 0.0
    %6550 = vmatpush2.xpose.msra.mxu0 0.0
    %6551 = vmatprep.subr.mxu0 0.0
    %6552 = vmatpush2.xpose.msra.mxu0 0.0
    %6553 = vmatprep.subr.mxu0 0.0
    %6554 = vmatpush2.xpose.msra.mxu0 0.0
    %6555 = vmatprep.subr.mxu0 0.0
    %6556 = vmatpush2.xpose.msra.mxu0 0.0
    %6557 = vmatprep.subr.mxu0 0.0
    %6558 = vmatpush2.xpose.msra.mxu0 0.0
    %6559 = vmatprep.mubr.f32.mxu0 0.0
    %6560 = vmatmul.mubr.f32.gmra.mxu0 %v6487
    %v6561 = vpop.f32.mrf.mxu0
    %v6562 = vadd.f32 0.0, %v6561
    %v6563 = vpop.f32.mrf.mxu0
    %6564 = vdwg.mxu0
    %6565 = vrot.lane.b32.xlu0 %v6480, 124
    %v6566 = vpop.permute.xlu0 %6565
    %6567 = vrot.lane.b32.xlu0 %v6481, 124
    %v6568 = vpop.permute.xlu0 %6567
    %v6569 = vsel %vm6486, %v6566, 0
    %v6571 = vsel %vm6486, %v6568, 0
    %6573 = vmatprep.subr.mxu0 0.0
    %6574 = vmatpush1.xpose.msra.mxu0 0.0
    %6575 = vmatprep.subr.mxu0 0.0
    %6576 = vmatpush1.xpose.msra.mxu0 0.0
    %6577 = vmatprep.subr.mxu0 0.0
    %6578 = vmatpush1.xpose.msra.mxu0 0.0
    %6579 = vmatprep.subr.mxu0 0.0
    %6580 = vmatpush1.xpose.msra.mxu0 0.0
    %6581 = vmatprep.subr.mxu0 0.0
    %6582 = vmatpush1.xpose.msra.mxu0 0.0
    %6583 = vmatprep.subr.mxu0 0.0
    %6584 = vmatpush1.xpose.msra.mxu0 0.0
    %6585 = vmatprep.subr.mxu0 0.0
    %6586 = vmatpush1.xpose.msra.mxu0 0.0
    %6587 = vmatprep.subr.mxu0 0.0
    %6588 = vmatpush1.xpose.msra.mxu0 0.0
    %6589 = vmatprep.subr.mxu0 0.0
    %6590 = vmatpush1.xpose.msra.mxu0 0.0
    %6591 = vmatprep.subr.mxu0 0.0
    %6592 = vmatpush1.xpose.msra.mxu0 0.0
    %6593 = vmatprep.subr.mxu0 0.0
    %6594 = vmatpush1.xpose.msra.mxu0 0.0
    %6595 = vmatprep.subr.mxu0 0.0
    %6596 = vmatpush1.xpose.msra.mxu0 0.0
    %6597 = vmatprep.subr.mxu0 0.0
    %6598 = vmatpush1.xpose.msra.mxu0 0.0
    %6599 = vmatprep.subr.mxu0 0.0
    %6600 = vmatpush1.xpose.msra.mxu0 0.0
    %6601 = vmatprep.subr.mxu0 0.0
    %6602 = vmatpush1.xpose.msra.mxu0 %v6571
    %6603 = vmatprep.subr.mxu0 0.0
    %6604 = vmatpush1.xpose.msra.mxu0 %v6569
    %6605 = vmatprep.subr.mxu0 0.0
    %6606 = vmatpush2.xpose.msra.mxu0 0.0
    %6607 = vmatprep.subr.mxu0 0.0
    %6608 = vmatpush2.xpose.msra.mxu0 0.0
    %6609 = vmatprep.subr.mxu0 0.0
    %6610 = vmatpush2.xpose.msra.mxu0 0.0
    %6611 = vmatprep.subr.mxu0 0.0
    %6612 = vmatpush2.xpose.msra.mxu0 0.0
    %6613 = vmatprep.subr.mxu0 0.0
    %6614 = vmatpush2.xpose.msra.mxu0 0.0
    %6615 = vmatprep.subr.mxu0 0.0
    %6616 = vmatpush2.xpose.msra.mxu0 0.0
    %6617 = vmatprep.subr.mxu0 0.0
    %6618 = vmatpush2.xpose.msra.mxu0 0.0
    %6619 = vmatprep.subr.mxu0 0.0
    %6620 = vmatpush2.xpose.msra.mxu0 0.0
    %6621 = vmatprep.subr.mxu0 0.0
    %6622 = vmatpush2.xpose.msra.mxu0 0.0
    %6623 = vmatprep.subr.mxu0 0.0
    %6624 = vmatpush2.xpose.msra.mxu0 0.0
    %6625 = vmatprep.subr.mxu0 0.0
    %6626 = vmatpush2.xpose.msra.mxu0 0.0
    %6627 = vmatprep.subr.mxu0 0.0
    %6628 = vmatpush2.xpose.msra.mxu0 0.0
    %6629 = vmatprep.subr.mxu0 0.0
    %6630 = vmatpush2.xpose.msra.mxu0 0.0
    %6631 = vmatprep.subr.mxu0 0.0
    %6632 = vmatpush2.xpose.msra.mxu0 0.0
    %6633 = vmatprep.subr.mxu0 0.0
    %6634 = vmatpush2.xpose.msra.mxu0 0.0
    %6635 = vmatprep.subr.mxu0 0.0
    %6636 = vmatpush2.xpose.msra.mxu0 0.0
    %6637 = vmatprep.mubr.f32.mxu0 0.0
    %6638 = vmatmul.mubr.f32.gmra.mxu0 %v6487
    %v6639 = vpop.f32.mrf.mxu0
    %v6640 = vadd.f32 0.0, %v6639
    %v6641 = vpop.f32.mrf.mxu0
    %6642 = vdwg.mxu0
    %6643 = vrot.lane.b32.xlu0 %v6480, 120
    %v6644 = vpop.permute.xlu0 %6643
    %6645 = vrot.lane.b32.xlu0 %v6481, 120
    %v6646 = vpop.permute.xlu0 %6645
    %v6647 = vsel %vm6486, %v6644, 0
    %v6649 = vsel %vm6486, %v6646, 0
    %6651 = vmatprep.subr.mxu0 0.0
    %6652 = vmatpush1.xpose.msra.mxu0 0.0
    %6653 = vmatprep.subr.mxu0 0.0
    %6654 = vmatpush1.xpose.msra.mxu0 0.0
    %6655 = vmatprep.subr.mxu0 0.0
    %6656 = vmatpush1.xpose.msra.mxu0 0.0
    %6657 = vmatprep.subr.mxu0 0.0
    %6658 = vmatpush1.xpose.msra.mxu0 0.0
    %6659 = vmatprep.subr.mxu0 0.0
    %6660 = vmatpush1.xpose.msra.mxu0 0.0
    %6661 = vmatprep.subr.mxu0 0.0
    %6662 = vmatpush1.xpose.msra.mxu0 0.0
    %6663 = vmatprep.subr.mxu0 0.0
    %6664 = vmatpush1.xpose.msra.mxu0 0.0
    %6665 = vmatprep.subr.mxu0 0.0
    %6666 = vmatpush1.xpose.msra.mxu0 0.0
    %6667 = vmatprep.subr.mxu0 0.0
    %6668 = vmatpush1.xpose.msra.mxu0 0.0
    %6669 = vmatprep.subr.mxu0 0.0
    %6670 = vmatpush1.xpose.msra.mxu0 0.0
    %6671 = vmatprep.subr.mxu0 0.0
    %6672 = vmatpush1.xpose.msra.mxu0 0.0
    %6673 = vmatprep.subr.mxu0 0.0
    %6674 = vmatpush1.xpose.msra.mxu0 0.0
    %6675 = vmatprep.subr.mxu0 0.0
    %6676 = vmatpush1.xpose.msra.mxu0 0.0
    %6677 = vmatprep.subr.mxu0 0.0
    %6678 = vmatpush1.xpose.msra.mxu0 0.0
    %6679 = vmatprep.subr.mxu0 0.0
    %6680 = vmatpush1.xpose.msra.mxu0 %v6649
    %6681 = vmatprep.subr.mxu0 0.0
    %6682 = vmatpush1.xpose.msra.mxu0 %v6647
    %6683 = vmatprep.subr.mxu0 0.0
    %6684 = vmatpush2.xpose.msra.mxu0 0.0
    %6685 = vmatprep.subr.mxu0 0.0
    %6686 = vmatpush2.xpose.msra.mxu0 0.0
    %6687 = vmatprep.subr.mxu0 0.0
    %6688 = vmatpush2.xpose.msra.mxu0 0.0
    %6689 = vmatprep.subr.mxu0 0.0
    %6690 = vmatpush2.xpose.msra.mxu0 0.0
    %6691 = vmatprep.subr.mxu0 0.0
    %6692 = vmatpush2.xpose.msra.mxu0 0.0
    %6693 = vmatprep.subr.mxu0 0.0
    %6694 = vmatpush2.xpose.msra.mxu0 0.0
    %6695 = vmatprep.subr.mxu0 0.0
    %6696 = vmatpush2.xpose.msra.mxu0 0.0
    %6697 = vmatprep.subr.mxu0 0.0
    %6698 = vmatpush2.xpose.msra.mxu0 0.0
    %6699 = vmatprep.subr.mxu0 0.0
    %6700 = vmatpush2.xpose.msra.mxu0 0.0
    %6701 = vmatprep.subr.mxu0 0.0
    %6702 = vmatpush2.xpose.msra.mxu0 0.0
    %6703 = vmatprep.subr.mxu0 0.0
    %6704 = vmatpush2.xpose.msra.mxu0 0.0
    %6705 = vmatprep.subr.mxu0 0.0
    %6706 = vmatpush2.xpose.msra.mxu0 0.0
    %6707 = vmatprep.subr.mxu0 0.0
    %6708 = vmatpush2.xpose.msra.mxu0 0.0
    %6709 = vmatprep.subr.mxu0 0.0
    %6710 = vmatpush2.xpose.msra.mxu0 0.0
    %6711 = vmatprep.subr.mxu0 0.0
    %6712 = vmatpush2.xpose.msra.mxu0 0.0
    %6713 = vmatprep.subr.mxu0 0.0
    %6714 = vmatpush2.xpose.msra.mxu0 0.0
    %6715 = vmatprep.mubr.f32.mxu0 0.0
    %6716 = vmatmul.mubr.f32.gmra.mxu0 %v6487
    %v6717 = vpop.f32.mrf.mxu0
    %v6718 = vadd.f32 0.0, %v6717
    %v6719 = vpop.f32.mrf.mxu0
    %6720 = vdwg.mxu0
    %6721 = vrot.lane.b32.xlu0 %v6480, 116
    %v6722 = vpop.permute.xlu0 %6721
    %6723 = vrot.lane.b32.xlu0 %v6481, 116
    %v6724 = vpop.permute.xlu0 %6723
    %v6725 = vsel %vm6486, %v6722, 0
    %v6727 = vsel %vm6486, %v6724, 0
    %6729 = vmatprep.subr.mxu0 0.0
    %6730 = vmatpush1.xpose.msra.mxu0 0.0
    %6731 = vmatprep.subr.mxu0 0.0
    %6732 = vmatpush1.xpose.msra.mxu0 0.0
    %6733 = vmatprep.subr.mxu0 0.0
    %6734 = vmatpush1.xpose.msra.mxu0 0.0
    %6735 = vmatprep.subr.mxu0 0.0
    %6736 = vmatpush1.xpose.msra.mxu0 0.0
    %6737 = vmatprep.subr.mxu0 0.0
    %6738 = vmatpush1.xpose.msra.mxu0 0.0
    %6739 = vmatprep.subr.mxu0 0.0
    %6740 = vmatpush1.xpose.msra.mxu0 0.0
    %6741 = vmatprep.subr.mxu0 0.0
    %6742 = vmatpush1.xpose.msra.mxu0 0.0
    %6743 = vmatprep.subr.mxu0 0.0
    %6744 = vmatpush1.xpose.msra.mxu0 0.0
    %6745 = vmatprep.subr.mxu0 0.0
    %6746 = vmatpush1.xpose.msra.mxu0 0.0
    %6747 = vmatprep.subr.mxu0 0.0
    %6748 = vmatpush1.xpose.msra.mxu0 0.0
    %6749 = vmatprep.subr.mxu0 0.0
    %6750 = vmatpush1.xpose.msra.mxu0 0.0
    %6751 = vmatprep.subr.mxu0 0.0
    %6752 = vmatpush1.xpose.msra.mxu0 0.0
    %6753 = vmatprep.subr.mxu0 0.0
    %6754 = vmatpush1.xpose.msra.mxu0 0.0
    %6755 = vmatprep.subr.mxu0 0.0
    %6756 = vmatpush1.xpose.msra.mxu0 0.0
    %6757 = vmatprep.subr.mxu0 0.0
    %6758 = vmatpush1.xpose.msra.mxu0 %v6727
    %6759 = vmatprep.subr.mxu0 0.0
    %6760 = vmatpush1.xpose.msra.mxu0 %v6725
    %6761 = vmatprep.subr.mxu0 0.0
    %6762 = vmatpush2.xpose.msra.mxu0 0.0
    %6763 = vmatprep.subr.mxu0 0.0
    %6764 = vmatpush2.xpose.msra.mxu0 0.0
    %6765 = vmatprep.subr.mxu0 0.0
    %6766 = vmatpush2.xpose.msra.mxu0 0.0
    %6767 = vmatprep.subr.mxu0 0.0
    %6768 = vmatpush2.xpose.msra.mxu0 0.0
    %6769 = vmatprep.subr.mxu0 0.0
    %6770 = vmatpush2.xpose.msra.mxu0 0.0
    %6771 = vmatprep.subr.mxu0 0.0
    %6772 = vmatpush2.xpose.msra.mxu0 0.0
    %6773 = vmatprep.subr.mxu0 0.0
    %6774 = vmatpush2.xpose.msra.mxu0 0.0
    %6775 = vmatprep.subr.mxu0 0.0
    %6776 = vmatpush2.xpose.msra.mxu0 0.0
    %6777 = vmatprep.subr.mxu0 0.0
    %6778 = vmatpush2.xpose.msra.mxu0 0.0
    %6779 = vmatprep.subr.mxu0 0.0
    %6780 = vmatpush2.xpose.msra.mxu0 0.0
    %6781 = vmatprep.subr.mxu0 0.0
    %6782 = vmatpush2.xpose.msra.mxu0 0.0
    %6783 = vmatprep.subr.mxu0 0.0
    %6784 = vmatpush2.xpose.msra.mxu0 0.0
    %6785 = vmatprep.subr.mxu0 0.0
    %6786 = vmatpush2.xpose.msra.mxu0 0.0
    %6787 = vmatprep.subr.mxu0 0.0
    %6788 = vmatpush2.xpose.msra.mxu0 0.0
    %6789 = vmatprep.subr.mxu0 0.0
    %6790 = vmatpush2.xpose.msra.mxu0 0.0
    %6791 = vmatprep.subr.mxu0 0.0
    %6792 = vmatpush2.xpose.msra.mxu0 0.0
    %6793 = vmatprep.mubr.f32.mxu0 0.0
    %6794 = vmatmul.mubr.f32.gmra.mxu0 %v6487
    %v6795 = vpop.f32.mrf.mxu0
    %v6796 = vadd.f32 0.0, %v6795
    %v6797 = vpop.f32.mrf.mxu0
    %6798 = vdwg.mxu0
    %6801 = vrot.lane.b32.xlu0 %v6322, 120
    %v6802 = vpop.permute.xlu0 %6801
    %6803 = vrot.lane.b32.xlu0 %v6327, 120
    %v6804 = vpop.permute.xlu0 %6803
    %v6807 = vsel %vm1449, %v6802, 0.0
    %6808 = vadd.xlane.f32.xlu0 %v6807
    %v6809 = vpop.xlane.xlu0 %6808
    %v6810 = vsel %vm1449, %v6804, 0.0
    %6811 = vadd.xlane.f32.xlu0 %v6810
    %v6812 = vpop.xlane.xlu0 %6811
    %v6813 = vmul.f32 %v6809, %v6336
    %v6814 = vmul.f32 %v6812, %v6336
    %v6815 = vsub.f32 %v6322, %v6813
    %v6816 = vsub.f32 %v6327, %v6814
    %v6817 = vmul.f32 %v6815, %v6815
    %v6818 = vmul.f32 %v6816, %v6816
    %6821 = vrot.lane.b32.xlu0 %v6817, 120
    %v6822 = vpop.permute.xlu0 %6821
    %6823 = vrot.lane.b32.xlu0 %v6818, 120
    %v6824 = vpop.permute.xlu0 %6823
    %v6827 = vsel %vm1449, %v6822, 0.0
    %6828 = vadd.xlane.f32.xlu0 %v6827
    %v6829 = vpop.xlane.xlu0 %6828
    %v6830 = vsel %vm1449, %v6824, 0.0
    %6831 = vadd.xlane.f32.xlu0 %v6830
    %v6832 = vpop.xlane.xlu0 %6831
    %v6833 = vmul.f32 %v6829, %v6336
    %v6834 = vmul.f32 %v6832, %v6336
    %v6835 = vadd.f32 %v6833, 1e-06
    %v6836 = vadd.f32 %v6834, 1e-06
    %v6837 = vrsqrt.pop %v6835
    %v6838 = vrsqrt.pop %v6836
    %v6839 = vmul.f32 %v6815, %v6837
    %v6840 = vmul.f32 %v6816, %v6838
    %v6841 = vld [vmem:[#allocation3 + $0xad0] ss:$0 sm:$0xff]
    %6843 = vrot.lane.b32.xlu0 %v6841, 8
    %v6844 = vpop.permute.xlu0 %6843
    %v6846 = vmul.f32 %v6839, %v6844
    %v6847 = vmul.f32 %v6840, %v6844
    %v6848 = vld [vmem:[#allocation3 + $0xac0] ss:$0 sm:$0xff]
    %6850 = vrot.lane.b32.xlu0 %v6848, 8
    %v6851 = vpop.permute.xlu0 %6850
    %v6853 = vadd.f32 %v6846, %v6851
    %v6854 = vadd.f32 %v6847, %v6851
    %v6855 = vmul.f32 %v6853, %v6853
    %v6856 = vmul.f32 %v6854, %v6854
    %v6857 = vmul.f32 %v6853, %v6855
    %v6858 = vmul.f32 %v6854, %v6856
    %v6859 = vmul.f32 %v6857, 0.044715
    %v6860 = vmul.f32 %v6858, 0.044715
    %v6861 = vadd.f32 %v6853, %v6859
    %v6862 = vadd.f32 %v6854, %v6860
    %v6863 = vmul.f32 %v6861, 0.7978846
    %v6864 = vmul.f32 %v6862, 0.7978846
    %v6865 = vtanh.pop %v6863
    %v6866 = vtanh.pop %v6864
    %v6867 = vadd.f32 %v6865, 1.0
    %v6868 = vadd.f32 %v6866, 1.0
    %v6869 = vmul.f32 %v6867, 0.5
    %v6870 = vmul.f32 %v6868, 0.5
    %v6871 = vmul.f32 %v6853, %v6869
    %v6872 = vmul.f32 %v6854, %v6870
    %v6873 = vld [vmem:[#allocation3 + $0xab0] sm:$0xff]
    %v6874 = vld [vmem:[#allocation3 + $0xaa0] ss:$0 sm:$0xff]
    %6877 = vrot.lane.b32.xlu0 %v6871, 120
    %v6878 = vpop.permute.xlu0 %6877
    %6879 = vrot.lane.b32.xlu0 %v6872, 120
    %v6880 = vpop.permute.xlu0 %6879
    %v6881 = vsel %vm1449, %v6878, 0
    %v6883 = vsel %vm1449, %v6880, 0
    %6885 = vmatprep.subr.mxu0 0.0
    %6886 = vmatpush1.msra.mxu0 0.0
    %6887 = vmatprep.subr.mxu0 0.0
    %6888 = vmatpush1.msra.mxu0 0.0
    %6889 = vmatprep.subr.mxu0 0.0
    %6890 = vmatpush1.msra.mxu0 0.0
    %6891 = vmatprep.subr.mxu0 0.0
    %6892 = vmatpush1.msra.mxu0 0.0
    %6893 = vmatprep.subr.mxu0 0.0
    %6894 = vmatpush1.msra.mxu0 0.0
    %6895 = vmatprep.subr.mxu0 0.0
    %6896 = vmatpush1.msra.mxu0 0.0
    %6897 = vmatprep.subr.mxu0 0.0
    %6898 = vmatpush1.msra.mxu0 0.0
    %6899 = vmatprep.subr.mxu0 0.0
    %6900 = vmatpush1.msra.mxu0 0.0
    %6901 = vmatprep.subr.mxu0 0.0
    %6902 = vmatpush1.msra.mxu0 0.0
    %6903 = vmatprep.subr.mxu0 0.0
    %6904 = vmatpush1.msra.mxu0 0.0
    %6905 = vmatprep.subr.mxu0 0.0
    %6906 = vmatpush1.msra.mxu0 0.0
    %6907 = vmatprep.subr.mxu0 0.0
    %6908 = vmatpush1.msra.mxu0 0.0
    %6909 = vmatprep.subr.mxu0 0.0
    %6910 = vmatpush1.msra.mxu0 0.0
    %6911 = vmatprep.subr.mxu0 0.0
    %6912 = vmatpush1.msra.mxu0 0.0
    %6913 = vmatprep.subr.mxu0 0.0
    %6914 = vmatpush1.msra.mxu0 0.0
    %6915 = vmatprep.subr.mxu0 0.0
    %6916 = vmatpush1.msra.mxu0 %v6873
    %6917 = vmatprep.subr.mxu0 0.0
    %6918 = vmatpush2.msra.mxu0 0.0
    %6919 = vmatprep.subr.mxu0 0.0
    %6920 = vmatpush2.msra.mxu0 0.0
    %6921 = vmatprep.subr.mxu0 0.0
    %6922 = vmatpush2.msra.mxu0 0.0
    %6923 = vmatprep.subr.mxu0 0.0
    %6924 = vmatpush2.msra.mxu0 0.0
    %6925 = vmatprep.subr.mxu0 0.0
    %6926 = vmatpush2.msra.mxu0 0.0
    %6927 = vmatprep.subr.mxu0 0.0
    %6928 = vmatpush2.msra.mxu0 0.0
    %6929 = vmatprep.subr.mxu0 0.0
    %6930 = vmatpush2.msra.mxu0 0.0
    %6931 = vmatprep.subr.mxu0 0.0
    %6932 = vmatpush2.msra.mxu0 0.0
    %6933 = vmatprep.subr.mxu0 0.0
    %6934 = vmatpush2.msra.mxu0 0.0
    %6935 = vmatprep.subr.mxu0 0.0
    %6936 = vmatpush2.msra.mxu0 0.0
    %6937 = vmatprep.subr.mxu0 0.0
    %6938 = vmatpush2.msra.mxu0 0.0
    %6939 = vmatprep.subr.mxu0 0.0
    %6940 = vmatpush2.msra.mxu0 0.0
    %6941 = vmatprep.subr.mxu0 0.0
    %6942 = vmatpush2.msra.mxu0 0.0
    %6943 = vmatprep.subr.mxu0 0.0
    %6944 = vmatpush2.msra.mxu0 0.0
    %6945 = vmatprep.subr.mxu0 0.0
    %6946 = vmatpush2.msra.mxu0 0.0
    %6947 = vmatprep.subr.mxu0 0.0
    %6948 = vmatpush2.msra.mxu0 0.0
    %6949 = vmatprep.mubr.f32.mxu0 0.0
    %6950 = vmatmul.mubr.f32.gmra.mxu0 %v6881
    %v6951 = vpop.f32.mrf.mxu0
    %v6952 = vadd.f32 %v6874, %v6951
    %v6953 = vpop.f32.mrf.mxu0
    %6954 = vmatprep.mubr.f32.mxu0 0.0
    %6955 = vmatmul.mubr.f32.gmra.mxu0 %v6883
    %v6956 = vpop.f32.mrf.mxu0
    %v6957 = vadd.f32 %v6874, %v6956
    %v6958 = vpop.f32.mrf.mxu0
    %6959 = vdwg.mxu0
    %v6960 = vmul.f32 %v6952, %v6952
    %v6961 = vmul.f32 %v6957, %v6957
    %v6962 = vmul.f32 %v6952, %v6960
    %v6963 = vmul.f32 %v6957, %v6961
    %v6964 = vmul.f32 %v6962, 0.044715
    %v6965 = vmul.f32 %v6963, 0.044715
    %v6966 = vadd.f32 %v6952, %v6964
    %v6967 = vadd.f32 %v6957, %v6965
    %v6968 = vmul.f32 %v6966, 0.7978846
    %v6969 = vmul.f32 %v6967, 0.7978846
    %v6970 = vtanh.pop %v6968
    %v6971 = vtanh.pop %v6969
    %v6972 = vadd.f32 %v6970, 1.0
    %v6973 = vadd.f32 %v6971, 1.0
    %v6974 = vmul.f32 %v6972, 0.5
    %v6975 = vmul.f32 %v6973, 0.5
    %v6976 = vmul.f32 %v6952, %v6974
    %v6977 = vmul.f32 %v6957, %v6975
    %v6979 = vsel %vm6486, %v6976, 0
    %v6982 = vsel %vm6486, %v6977, 0
    %6984 = vmatprep.subr.mxu0 0.0
    %6985 = vmatpush1.xpose.msra.mxu0 0.0
    %6986 = vmatprep.subr.mxu0 0.0
    %6987 = vmatpush1.xpose.msra.mxu0 0.0
    %6988 = vmatprep.subr.mxu0 0.0
    %6989 = vmatpush1.xpose.msra.mxu0 0.0
    %6990 = vmatprep.subr.mxu0 0.0
    %6991 = vmatpush1.xpose.msra.mxu0 0.0
    %6992 = vmatprep.subr.mxu0 0.0
    %6993 = vmatpush1.xpose.msra.mxu0 0.0
    %6994 = vmatprep.subr.mxu0 0.0
    %6995 = vmatpush1.xpose.msra.mxu0 0.0
    %6996 = vmatprep.subr.mxu0 0.0
    %6997 = vmatpush1.xpose.msra.mxu0 0.0
    %6998 = vmatprep.subr.mxu0 0.0
    %6999 = vmatpush1.xpose.msra.mxu0 0.0
    %7000 = vmatprep.subr.mxu0 0.0
    %7001 = vmatpush1.xpose.msra.mxu0 0.0
    %7002 = vmatprep.subr.mxu0 0.0
    %7003 = vmatpush1.xpose.msra.mxu0 0.0
    %7004 = vmatprep.subr.mxu0 0.0
    %7005 = vmatpush1.xpose.msra.mxu0 0.0
    %7006 = vmatprep.subr.mxu0 0.0
    %7007 = vmatpush1.xpose.msra.mxu0 0.0
    %7008 = vmatprep.subr.mxu0 0.0
    %7009 = vmatpush1.xpose.msra.mxu0 0.0
    %7010 = vmatprep.subr.mxu0 0.0
    %7011 = vmatpush1.xpose.msra.mxu0 0.0
    %7012 = vmatprep.subr.mxu0 0.0
    %7013 = vmatpush1.xpose.msra.mxu0 %v6982
    %7014 = vmatprep.subr.mxu0 0.0
    %7015 = vmatpush1.xpose.msra.mxu0 %v6979
    %7016 = vmatprep.subr.mxu0 0.0
    %7017 = vmatpush2.xpose.msra.mxu0 0.0
    %7018 = vmatprep.subr.mxu0 0.0
    %7019 = vmatpush2.xpose.msra.mxu0 0.0
    %7020 = vmatprep.subr.mxu0 0.0
    %7021 = vmatpush2.xpose.msra.mxu0 0.0
    %7022 = vmatprep.subr.mxu0 0.0
    %7023 = vmatpush2.xpose.msra.mxu0 0.0
    %7024 = vmatprep.subr.mxu0 0.0
    %7025 = vmatpush2.xpose.msra.mxu0 0.0
    %7026 = vmatprep.subr.mxu0 0.0
    %7027 = vmatpush2.xpose.msra.mxu0 0.0
    %7028 = vmatprep.subr.mxu0 0.0
    %7029 = vmatpush2.xpose.msra.mxu0 0.0
    %7030 = vmatprep.subr.mxu0 0.0
    %7031 = vmatpush2.xpose.msra.mxu0 0.0
    %7032 = vmatprep.subr.mxu0 0.0
    %7033 = vmatpush2.xpose.msra.mxu0 0.0
    %7034 = vmatprep.subr.mxu0 0.0
    %7035 = vmatpush2.xpose.msra.mxu0 0.0
    %7036 = vmatprep.subr.mxu0 0.0
    %7037 = vmatpush2.xpose.msra.mxu0 0.0
    %7038 = vmatprep.subr.mxu0 0.0
    %7039 = vmatpush2.xpose.msra.mxu0 0.0
    %7040 = vmatprep.subr.mxu0 0.0
    %7041 = vmatpush2.xpose.msra.mxu0 0.0
    %7042 = vmatprep.subr.mxu0 0.0
    %7043 = vmatpush2.xpose.msra.mxu0 0.0
    %7044 = vmatprep.subr.mxu0 0.0
    %7045 = vmatpush2.xpose.msra.mxu0 0.0
    %7046 = vmatprep.subr.mxu0 0.0
    %7047 = vmatpush2.xpose.msra.mxu0 0.0
    %7048 = vmatprep.mubr.f32.mxu0 0.0
    %7049 = vmatmul.mubr.f32.gmra.mxu0 %v6487
    %v7050 = vpop.f32.mrf.mxu0
    %v7051 = vadd.f32 0.0, %v7050
    %v7052 = vpop.f32.mrf.mxu0
    %7053 = vdwg.mxu0
    %7054 = vrot.lane.b32.xlu0 %v6976, 124
    %v7055 = vpop.permute.xlu0 %7054
    %7056 = vrot.lane.b32.xlu0 %v6977, 124
    %v7057 = vpop.permute.xlu0 %7056
    %v7058 = vsel %vm6486, %v7055, 0
    %v7060 = vsel %vm6486, %v7057, 0
    %7062 = vmatprep.subr.mxu0 0.0
    %7063 = vmatpush1.xpose.msra.mxu0 0.0
    %7064 = vmatprep.subr.mxu0 0.0
    %7065 = vmatpush1.xpose.msra.mxu0 0.0
    %7066 = vmatprep.subr.mxu0 0.0
    %7067 = vmatpush1.xpose.msra.mxu0 0.0
    %7068 = vmatprep.subr.mxu0 0.0
    %7069 = vmatpush1.xpose.msra.mxu0 0.0
    %7070 = vmatprep.subr.mxu0 0.0
    %7071 = vmatpush1.xpose.msra.mxu0 0.0
    %7072 = vmatprep.subr.mxu0 0.0
    %7073 = vmatpush1.xpose.msra.mxu0 0.0
    %7074 = vmatprep.subr.mxu0 0.0
    %7075 = vmatpush1.xpose.msra.mxu0 0.0
    %7076 = vmatprep.subr.mxu0 0.0
    %7077 = vmatpush1.xpose.msra.mxu0 0.0
    %7078 = vmatprep.subr.mxu0 0.0
    %7079 = vmatpush1.xpose.msra.mxu0 0.0
    %7080 = vmatprep.subr.mxu0 0.0
    %7081 = vmatpush1.xpose.msra.mxu0 0.0
    %7082 = vmatprep.subr.mxu0 0.0
    %7083 = vmatpush1.xpose.msra.mxu0 0.0
    %7084 = vmatprep.subr.mxu0 0.0
    %7085 = vmatpush1.xpose.msra.mxu0 0.0
    %7086 = vmatprep.subr.mxu0 0.0
    %7087 = vmatpush1.xpose.msra.mxu0 0.0
    %7088 = vmatprep.subr.mxu0 0.0
    %7089 = vmatpush1.xpose.msra.mxu0 0.0
    %7090 = vmatprep.subr.mxu0 0.0
    %7091 = vmatpush1.xpose.msra.mxu0 %v7060
    %7092 = vmatprep.subr.mxu0 0.0
    %7093 = vmatpush1.xpose.msra.mxu0 %v7058
    %7094 = vmatprep.subr.mxu0 0.0
    %7095 = vmatpush2.xpose.msra.mxu0 0.0
    %7096 = vmatprep.subr.mxu0 0.0
    %7097 = vmatpush2.xpose.msra.mxu0 0.0
    %7098 = vmatprep.subr.mxu0 0.0
    %7099 = vmatpush2.xpose.msra.mxu0 0.0
    %7100 = vmatprep.subr.mxu0 0.0
    %7101 = vmatpush2.xpose.msra.mxu0 0.0
    %7102 = vmatprep.subr.mxu0 0.0
    %7103 = vmatpush2.xpose.msra.mxu0 0.0
    %7104 = vmatprep.subr.mxu0 0.0
    %7105 = vmatpush2.xpose.msra.mxu0 0.0
    %7106 = vmatprep.subr.mxu0 0.0
    %7107 = vmatpush2.xpose.msra.mxu0 0.0
    %7108 = vmatprep.subr.mxu0 0.0
    %7109 = vmatpush2.xpose.msra.mxu0 0.0
    %7110 = vmatprep.subr.mxu0 0.0
    %7111 = vmatpush2.xpose.msra.mxu0 0.0
    %7112 = vmatprep.subr.mxu0 0.0
    %7113 = vmatpush2.xpose.msra.mxu0 0.0
    %7114 = vmatprep.subr.mxu0 0.0
    %7115 = vmatpush2.xpose.msra.mxu0 0.0
    %7116 = vmatprep.subr.mxu0 0.0
    %7117 = vmatpush2.xpose.msra.mxu0 0.0
    %7118 = vmatprep.subr.mxu0 0.0
    %7119 = vmatpush2.xpose.msra.mxu0 0.0
    %7120 = vmatprep.subr.mxu0 0.0
    %7121 = vmatpush2.xpose.msra.mxu0 0.0
    %7122 = vmatprep.subr.mxu0 0.0
    %7123 = vmatpush2.xpose.msra.mxu0 0.0
    %7124 = vmatprep.subr.mxu0 0.0
    %7125 = vmatpush2.xpose.msra.mxu0 0.0
    %7126 = vmatprep.mubr.f32.mxu0 0.0
    %7127 = vmatmul.mubr.f32.gmra.mxu0 %v6487
    %v7128 = vpop.f32.mrf.mxu0
    %v7129 = vadd.f32 0.0, %v7128
    %v7130 = vpop.f32.mrf.mxu0
    %7131 = vdwg.mxu0
    %7132 = vrot.lane.b32.xlu0 %v6976, 120
    %v7133 = vpop.permute.xlu0 %7132
    %7134 = vrot.lane.b32.xlu0 %v6977, 120
    %v7135 = vpop.permute.xlu0 %7134
    %v7136 = vsel %vm6486, %v7133, 0
    %v7138 = vsel %vm6486, %v7135, 0
    %7140 = vmatprep.subr.mxu0 0.0
    %7141 = vmatpush1.xpose.msra.mxu0 0.0
    %7142 = vmatprep.subr.mxu0 0.0
    %7143 = vmatpush1.xpose.msra.mxu0 0.0
    %7144 = vmatprep.subr.mxu0 0.0
    %7145 = vmatpush1.xpose.msra.mxu0 0.0
    %7146 = vmatprep.subr.mxu0 0.0
    %7147 = vmatpush1.xpose.msra.mxu0 0.0
    %7148 = vmatprep.subr.mxu0 0.0
    %7149 = vmatpush1.xpose.msra.mxu0 0.0
    %7150 = vmatprep.subr.mxu0 0.0
    %7151 = vmatpush1.xpose.msra.mxu0 0.0
    %7152 = vmatprep.subr.mxu0 0.0
    %7153 = vmatpush1.xpose.msra.mxu0 0.0
    %7154 = vmatprep.subr.mxu0 0.0
    %7155 = vmatpush1.xpose.msra.mxu0 0.0
    %7156 = vmatprep.subr.mxu0 0.0
    %7157 = vmatpush1.xpose.msra.mxu0 0.0
    %7158 = vmatprep.subr.mxu0 0.0
    %7159 = vmatpush1.xpose.msra.mxu0 0.0
    %7160 = vmatprep.subr.mxu0 0.0
    %7161 = vmatpush1.xpose.msra.mxu0 0.0
    %7162 = vmatprep.subr.mxu0 0.0
    %7163 = vmatpush1.xpose.msra.mxu0 0.0
    %7164 = vmatprep.subr.mxu0 0.0
    %7165 = vmatpush1.xpose.msra.mxu0 0.0
    %7166 = vmatprep.subr.mxu0 0.0
    %7167 = vmatpush1.xpose.msra.mxu0 0.0
    %7168 = vmatprep.subr.mxu0 0.0
    %7169 = vmatpush1.xpose.msra.mxu0 %v7138
    %7170 = vmatprep.subr.mxu0 0.0
    %7171 = vmatpush1.xpose.msra.mxu0 %v7136
    %7172 = vmatprep.subr.mxu0 0.0
    %7173 = vmatpush2.xpose.msra.mxu0 0.0
    %7174 = vmatprep.subr.mxu0 0.0
    %7175 = vmatpush2.xpose.msra.mxu0 0.0
    %7176 = vmatprep.subr.mxu0 0.0
    %7177 = vmatpush2.xpose.msra.mxu0 0.0
    %7178 = vmatprep.subr.mxu0 0.0
    %7179 = vmatpush2.xpose.msra.mxu0 0.0
    %7180 = vmatprep.subr.mxu0 0.0
    %7181 = vmatpush2.xpose.msra.mxu0 0.0
    %7182 = vmatprep.subr.mxu0 0.0
    %7183 = vmatpush2.xpose.msra.mxu0 0.0
    %7184 = vmatprep.subr.mxu0 0.0
    %7185 = vmatpush2.xpose.msra.mxu0 0.0
    %7186 = vmatprep.subr.mxu0 0.0
    %7187 = vmatpush2.xpose.msra.mxu0 0.0
    %7188 = vmatprep.subr.mxu0 0.0
    %7189 = vmatpush2.xpose.msra.mxu0 0.0
    %7190 = vmatprep.subr.mxu0 0.0
    %7191 = vmatpush2.xpose.msra.mxu0 0.0
    %7192 = vmatprep.subr.mxu0 0.0
    %7193 = vmatpush2.xpose.msra.mxu0 0.0
    %7194 = vmatprep.subr.mxu0 0.0
    %7195 = vmatpush2.xpose.msra.mxu0 0.0
    %7196 = vmatprep.subr.mxu0 0.0
    %7197 = vmatpush2.xpose.msra.mxu0 0.0
    %7198 = vmatprep.subr.mxu0 0.0
    %7199 = vmatpush2.xpose.msra.mxu0 0.0
    %7200 = vmatprep.subr.mxu0 0.0
    %7201 = vmatpush2.xpose.msra.mxu0 0.0
    %7202 = vmatprep.subr.mxu0 0.0
    %7203 = vmatpush2.xpose.msra.mxu0 0.0
    %7204 = vmatprep.mubr.f32.mxu0 0.0
    %7205 = vmatmul.mubr.f32.gmra.mxu0 %v6487
    %v7206 = vpop.f32.mrf.mxu0
    %v7207 = vadd.f32 0.0, %v7206
    %v7208 = vpop.f32.mrf.mxu0
    %7209 = vdwg.mxu0
    %7210 = vrot.lane.b32.xlu0 %v6976, 116
    %v7211 = vpop.permute.xlu0 %7210
    %7212 = vrot.lane.b32.xlu0 %v6977, 116
    %v7213 = vpop.permute.xlu0 %7212
    %v7214 = vsel %vm6486, %v7211, 0
    %v7216 = vsel %vm6486, %v7213, 0
    %7218 = vmatprep.subr.mxu0 0.0
    %7219 = vmatpush1.xpose.msra.mxu0 0.0
    %7220 = vmatprep.subr.mxu0 0.0
    %7221 = vmatpush1.xpose.msra.mxu0 0.0
    %7222 = vmatprep.subr.mxu0 0.0
    %7223 = vmatpush1.xpose.msra.mxu0 0.0
    %7224 = vmatprep.subr.mxu0 0.0
    %7225 = vmatpush1.xpose.msra.mxu0 0.0
    %7226 = vmatprep.subr.mxu0 0.0
    %7227 = vmatpush1.xpose.msra.mxu0 0.0
    %7228 = vmatprep.subr.mxu0 0.0
    %7229 = vmatpush1.xpose.msra.mxu0 0.0
    %7230 = vmatprep.subr.mxu0 0.0
    %7231 = vmatpush1.xpose.msra.mxu0 0.0
    %7232 = vmatprep.subr.mxu0 0.0
    %7233 = vmatpush1.xpose.msra.mxu0 0.0
    %7234 = vmatprep.subr.mxu0 0.0
    %7235 = vmatpush1.xpose.msra.mxu0 0.0
    %7236 = vmatprep.subr.mxu0 0.0
    %7237 = vmatpush1.xpose.msra.mxu0 0.0
    %7238 = vmatprep.subr.mxu0 0.0
    %7239 = vmatpush1.xpose.msra.mxu0 0.0
    %7240 = vmatprep.subr.mxu0 0.0
    %7241 = vmatpush1.xpose.msra.mxu0 0.0
    %7242 = vmatprep.subr.mxu0 0.0
    %7243 = vmatpush1.xpose.msra.mxu0 0.0
    %7244 = vmatprep.subr.mxu0 0.0
    %7245 = vmatpush1.xpose.msra.mxu0 0.0
    %7246 = vmatprep.subr.mxu0 0.0
    %7247 = vmatpush1.xpose.msra.mxu0 %v7216
    %7248 = vmatprep.subr.mxu0 0.0
    %7249 = vmatpush1.xpose.msra.mxu0 %v7214
    %7250 = vmatprep.subr.mxu0 0.0
    %7251 = vmatpush2.xpose.msra.mxu0 0.0
    %7252 = vmatprep.subr.mxu0 0.0
    %7253 = vmatpush2.xpose.msra.mxu0 0.0
    %7254 = vmatprep.subr.mxu0 0.0
    %7255 = vmatpush2.xpose.msra.mxu0 0.0
    %7256 = vmatprep.subr.mxu0 0.0
    %7257 = vmatpush2.xpose.msra.mxu0 0.0
    %7258 = vmatprep.subr.mxu0 0.0
    %7259 = vmatpush2.xpose.msra.mxu0 0.0
    %7260 = vmatprep.subr.mxu0 0.0
    %7261 = vmatpush2.xpose.msra.mxu0 0.0
    %7262 = vmatprep.subr.mxu0 0.0
    %7263 = vmatpush2.xpose.msra.mxu0 0.0
    %7264 = vmatprep.subr.mxu0 0.0
    %7265 = vmatpush2.xpose.msra.mxu0 0.0
    %7266 = vmatprep.subr.mxu0 0.0
    %7267 = vmatpush2.xpose.msra.mxu0 0.0
    %7268 = vmatprep.subr.mxu0 0.0
    %7269 = vmatpush2.xpose.msra.mxu0 0.0
    %7270 = vmatprep.subr.mxu0 0.0
    %7271 = vmatpush2.xpose.msra.mxu0 0.0
    %7272 = vmatprep.subr.mxu0 0.0
    %7273 = vmatpush2.xpose.msra.mxu0 0.0
    %7274 = vmatprep.subr.mxu0 0.0
    %7275 = vmatpush2.xpose.msra.mxu0 0.0
    %7276 = vmatprep.subr.mxu0 0.0
    %7277 = vmatpush2.xpose.msra.mxu0 0.0
    %7278 = vmatprep.subr.mxu0 0.0
    %7279 = vmatpush2.xpose.msra.mxu0 0.0
    %7280 = vmatprep.subr.mxu0 0.0
    %7281 = vmatpush2.xpose.msra.mxu0 0.0
    %7282 = vmatprep.mubr.f32.mxu0 0.0
    %7283 = vmatmul.mubr.f32.gmra.mxu0 %v6487
    %v7284 = vpop.f32.mrf.mxu0
    %v7285 = vadd.f32 0.0, %v7284
    %v7286 = vpop.f32.mrf.mxu0
    %7287 = vdwg.mxu0
    %7288 = vrot.lane.b32.xlu0 %v6322, 112
    %v7289 = vpop.permute.xlu0 %7288
    %7290 = vrot.lane.b32.xlu0 %v6327, 112
    %v7291 = vpop.permute.xlu0 %7290
    %v7294 = vsel %vm1449, %v7289, 0.0
    %7295 = vadd.xlane.f32.xlu0 %v7294
    %v7296 = vpop.xlane.xlu0 %7295
    %v7297 = vsel %vm1449, %v7291, 0.0
    %7298 = vadd.xlane.f32.xlu0 %v7297
    %v7299 = vpop.xlane.xlu0 %7298
    %v7300 = vmul.f32 %v7296, %v6336
    %v7301 = vmul.f32 %v7299, %v6336
    %v7302 = vsub.f32 %v6322, %v7300
    %v7303 = vsub.f32 %v6327, %v7301
    %v7304 = vmul.f32 %v7302, %v7302
    %v7305 = vmul.f32 %v7303, %v7303
    %7308 = vrot.lane.b32.xlu0 %v7304, 112
    %v7309 = vpop.permute.xlu0 %7308
    %7310 = vrot.lane.b32.xlu0 %v7305, 112
    %v7311 = vpop.permute.xlu0 %7310
    %v7314 = vsel %vm1449, %v7309, 0.0
    %7315 = vadd.xlane.f32.xlu0 %v7314
    %v7316 = vpop.xlane.xlu0 %7315
    %v7317 = vsel %vm1449, %v7311, 0.0
    %7318 = vadd.xlane.f32.xlu0 %v7317
    %v7319 = vpop.xlane.xlu0 %7318
    %v7320 = vmul.f32 %v7316, %v6336
    %v7321 = vmul.f32 %v7319, %v6336
    %v7322 = vadd.f32 %v7320, 1e-06
    %v7323 = vadd.f32 %v7321, 1e-06
    %v7324 = vrsqrt.pop %v7322
    %v7325 = vrsqrt.pop %v7323
    %v7326 = vmul.f32 %v7302, %v7324
    %v7327 = vmul.f32 %v7303, %v7325
    %v7328 = vld [vmem:[#allocation3 + $0xad0] ss:$0 sm:$0xff]
    %7330 = vrot.lane.b32.xlu0 %v7328, 16
    %v7331 = vpop.permute.xlu0 %7330
    %v7333 = vmul.f32 %v7326, %v7331
    %v7334 = vmul.f32 %v7327, %v7331
    %v7335 = vld [vmem:[#allocation3 + $0xac0] ss:$0 sm:$0xff]
    %7337 = vrot.lane.b32.xlu0 %v7335, 16
    %v7338 = vpop.permute.xlu0 %7337
    %v7340 = vadd.f32 %v7333, %v7338
    %v7341 = vadd.f32 %v7334, %v7338
    %v7342 = vmul.f32 %v7340, %v7340
    %v7343 = vmul.f32 %v7341, %v7341
    %v7344 = vmul.f32 %v7340, %v7342
    %v7345 = vmul.f32 %v7341, %v7343
    %v7346 = vmul.f32 %v7344, 0.044715
    %v7347 = vmul.f32 %v7345, 0.044715
    %v7348 = vadd.f32 %v7340, %v7346
    %v7349 = vadd.f32 %v7341, %v7347
    %v7350 = vmul.f32 %v7348, 0.7978846
    %v7351 = vmul.f32 %v7349, 0.7978846
    %v7352 = vtanh.pop %v7350
    %v7353 = vtanh.pop %v7351
    %v7354 = vadd.f32 %v7352, 1.0
    %v7355 = vadd.f32 %v7353, 1.0
    %v7356 = vmul.f32 %v7354, 0.5
    %v7357 = vmul.f32 %v7355, 0.5
    %v7358 = vmul.f32 %v7340, %v7356
    %v7359 = vmul.f32 %v7341, %v7357
    %v7360 = vld [vmem:[#allocation3 + $0xab0] sm:$0xff]
    %v7361 = vld [vmem:[#allocation3 + $0xaa0] ss:$0 sm:$0xff]
    %7364 = vrot.lane.b32.xlu0 %v7358, 112
    %v7365 = vpop.permute.xlu0 %7364
    %7366 = vrot.lane.b32.xlu0 %v7359, 112
    %v7367 = vpop.permute.xlu0 %7366
    %v7368 = vsel %vm1449, %v7365, 0
    %v7370 = vsel %vm1449, %v7367, 0
    %7372 = vmatprep.subr.mxu0 0.0
    %7373 = vmatpush1.msra.mxu0 0.0
    %7374 = vmatprep.subr.mxu0 0.0
    %7375 = vmatpush1.msra.mxu0 0.0
    %7376 = vmatprep.subr.mxu0 0.0
    %7377 = vmatpush1.msra.mxu0 0.0
    %7378 = vmatprep.subr.mxu0 0.0
    %7379 = vmatpush1.msra.mxu0 0.0
    %7380 = vmatprep.subr.mxu0 0.0
    %7381 = vmatpush1.msra.mxu0 0.0
    %7382 = vmatprep.subr.mxu0 0.0
    %7383 = vmatpush1.msra.mxu0 0.0
    %7384 = vmatprep.subr.mxu0 0.0
    %7385 = vmatpush1.msra.mxu0 0.0
    %7386 = vmatprep.subr.mxu0 0.0
    %7387 = vmatpush1.msra.mxu0 0.0
    %7388 = vmatprep.subr.mxu0 0.0
    %7389 = vmatpush1.msra.mxu0 0.0
    %7390 = vmatprep.subr.mxu0 0.0
    %7391 = vmatpush1.msra.mxu0 0.0
    %7392 = vmatprep.subr.mxu0 0.0
    %7393 = vmatpush1.msra.mxu0 0.0
    %7394 = vmatprep.subr.mxu0 0.0
    %7395 = vmatpush1.msra.mxu0 0.0
    %7396 = vmatprep.subr.mxu0 0.0
    %7397 = vmatpush1.msra.mxu0 0.0
    %7398 = vmatprep.subr.mxu0 0.0
    %7399 = vmatpush1.msra.mxu0 0.0
    %7400 = vmatprep.subr.mxu0 0.0
    %7401 = vmatpush1.msra.mxu0 0.0
    %7402 = vmatprep.subr.mxu0 0.0
    %7403 = vmatpush1.msra.mxu0 %v7360
    %7404 = vmatprep.subr.mxu0 0.0
    %7405 = vmatpush2.msra.mxu0 0.0
    %7406 = vmatprep.subr.mxu0 0.0
    %7407 = vmatpush2.msra.mxu0 0.0
    %7408 = vmatprep.subr.mxu0 0.0
    %7409 = vmatpush2.msra.mxu0 0.0
    %7410 = vmatprep.subr.mxu0 0.0
    %7411 = vmatpush2.msra.mxu0 0.0
    %7412 = vmatprep.subr.mxu0 0.0
    %7413 = vmatpush2.msra.mxu0 0.0
    %7414 = vmatprep.subr.mxu0 0.0
    %7415 = vmatpush2.msra.mxu0 0.0
    %7416 = vmatprep.subr.mxu0 0.0
    %7417 = vmatpush2.msra.mxu0 0.0
    %7418 = vmatprep.subr.mxu0 0.0
    %7419 = vmatpush2.msra.mxu0 0.0
    %7420 = vmatprep.subr.mxu0 0.0
    %7421 = vmatpush2.msra.mxu0 0.0
    %7422 = vmatprep.subr.mxu0 0.0
    %7423 = vmatpush2.msra.mxu0 0.0
    %7424 = vmatprep.subr.mxu0 0.0
    %7425 = vmatpush2.msra.mxu0 0.0
    %7426 = vmatprep.subr.mxu0 0.0
    %7427 = vmatpush2.msra.mxu0 0.0
    %7428 = vmatprep.subr.mxu0 0.0
    %7429 = vmatpush2.msra.mxu0 0.0
    %7430 = vmatprep.subr.mxu0 0.0
    %7431 = vmatpush2.msra.mxu0 0.0
    %7432 = vmatprep.subr.mxu0 0.0
    %7433 = vmatpush2.msra.mxu0 0.0
    %7434 = vmatprep.subr.mxu0 0.0
    %7435 = vmatpush2.msra.mxu0 0.0
    %7436 = vmatprep.mubr.f32.mxu0 0.0
    %7437 = vmatmul.mubr.f32.gmra.mxu0 %v7368
    %v7438 = vpop.f32.mrf.mxu0
    %v7439 = vadd.f32 %v7361, %v7438
    %v7440 = vpop.f32.mrf.mxu0
    %7441 = vmatprep.mubr.f32.mxu0 0.0
    %7442 = vmatmul.mubr.f32.gmra.mxu0 %v7370
    %v7443 = vpop.f32.mrf.mxu0
    %v7444 = vadd.f32 %v7361, %v7443
    %v7445 = vpop.f32.mrf.mxu0
    %7446 = vdwg.mxu0
    %v7447 = vmul.f32 %v7439, %v7439
    %v7448 = vmul.f32 %v7444, %v7444
    %v7449 = vmul.f32 %v7439, %v7447
    %v7450 = vmul.f32 %v7444, %v7448
    %v7451 = vmul.f32 %v7449, 0.044715
    %v7452 = vmul.f32 %v7450, 0.044715
    %v7453 = vadd.f32 %v7439, %v7451
    %v7454 = vadd.f32 %v7444, %v7452
    %v7455 = vmul.f32 %v7453, 0.7978846
    %v7456 = vmul.f32 %v7454, 0.7978846
    %v7457 = vtanh.pop %v7455
    %v7458 = vtanh.pop %v7456
    %v7459 = vadd.f32 %v7457, 1.0
    %v7460 = vadd.f32 %v7458, 1.0
    %v7461 = vmul.f32 %v7459, 0.5
    %v7462 = vmul.f32 %v7460, 0.5
    %v7463 = vmul.f32 %v7439, %v7461
    %v7464 = vmul.f32 %v7444, %v7462
    %v7466 = vsel %vm6486, %v7463, 0
    %v7469 = vsel %vm6486, %v7464, 0
    %7471 = vmatprep.subr.mxu0 0.0
    %7472 = vmatpush1.xpose.msra.mxu0 0.0
    %7473 = vmatprep.subr.mxu0 0.0
    %7474 = vmatpush1.xpose.msra.mxu0 0.0
    %7475 = vmatprep.subr.mxu0 0.0
    %7476 = vmatpush1.xpose.msra.mxu0 0.0
    %7477 = vmatprep.subr.mxu0 0.0
    %7478 = vmatpush1.xpose.msra.mxu0 0.0
    %7479 = vmatprep.subr.mxu0 0.0
    %7480 = vmatpush1.xpose.msra.mxu0 0.0
    %7481 = vmatprep.subr.mxu0 0.0
    %7482 = vmatpush1.xpose.msra.mxu0 0.0
    %7483 = vmatprep.subr.mxu0 0.0
    %7484 = vmatpush1.xpose.msra.mxu0 0.0
    %7485 = vmatprep.subr.mxu0 0.0
    %7486 = vmatpush1.xpose.msra.mxu0 0.0
    %7487 = vmatprep.subr.mxu0 0.0
    %7488 = vmatpush1.xpose.msra.mxu0 0.0
    %7489 = vmatprep.subr.mxu0 0.0
    %7490 = vmatpush1.xpose.msra.mxu0 0.0
    %7491 = vmatprep.subr.mxu0 0.0
    %7492 = vmatpush1.xpose.msra.mxu0 0.0
    %7493 = vmatprep.subr.mxu0 0.0
    %7494 = vmatpush1.xpose.msra.mxu0 0.0
    %7495 = vmatprep.subr.mxu0 0.0
    %7496 = vmatpush1.xpose.msra.mxu0 0.0
    %7497 = vmatprep.subr.mxu0 0.0
    %7498 = vmatpush1.xpose.msra.mxu0 0.0
    %7499 = vmatprep.subr.mxu0 0.0
    %7500 = vmatpush1.xpose.msra.mxu0 %v7469
    %7501 = vmatprep.subr.mxu0 0.0
    %7502 = vmatpush1.xpose.msra.mxu0 %v7466
    %7503 = vmatprep.subr.mxu0 0.0
    %7504 = vmatpush2.xpose.msra.mxu0 0.0
    %7505 = vmatprep.subr.mxu0 0.0
    %7506 = vmatpush2.xpose.msra.mxu0 0.0
    %7507 = vmatprep.subr.mxu0 0.0
    %7508 = vmatpush2.xpose.msra.mxu0 0.0
    %7509 = vmatprep.subr.mxu0 0.0
    %7510 = vmatpush2.xpose.msra.mxu0 0.0
    %7511 = vmatprep.subr.mxu0 0.0
    %7512 = vmatpush2.xpose.msra.mxu0 0.0
    %7513 = vmatprep.subr.mxu0 0.0
    %7514 = vmatpush2.xpose.msra.mxu0 0.0
    %7515 = vmatprep.subr.mxu0 0.0
    %7516 = vmatpush2.xpose.msra.mxu0 0.0
    %7517 = vmatprep.subr.mxu0 0.0
    %7518 = vmatpush2.xpose.msra.mxu0 0.0
    %7519 = vmatprep.subr.mxu0 0.0
    %7520 = vmatpush2.xpose.msra.mxu0 0.0
    %7521 = vmatprep.subr.mxu0 0.0
    %7522 = vmatpush2.xpose.msra.mxu0 0.0
    %7523 = vmatprep.subr.mxu0 0.0
    %7524 = vmatpush2.xpose.msra.mxu0 0.0
    %7525 = vmatprep.subr.mxu0 0.0
    %7526 = vmatpush2.xpose.msra.mxu0 0.0
    %7527 = vmatprep.subr.mxu0 0.0
    %7528 = vmatpush2.xpose.msra.mxu0 0.0
    %7529 = vmatprep.subr.mxu0 0.0
    %7530 = vmatpush2.xpose.msra.mxu0 0.0
    %7531 = vmatprep.subr.mxu0 0.0
    %7532 = vmatpush2.xpose.msra.mxu0 0.0
    %7533 = vmatprep.subr.mxu0 0.0
    %7534 = vmatpush2.xpose.msra.mxu0 0.0
    %7535 = vmatprep.mubr.f32.mxu0 0.0
    %7536 = vmatmul.mubr.f32.gmra.mxu0 %v6487
    %v7537 = vpop.f32.mrf.mxu0
    %v7538 = vadd.f32 0.0, %v7537
    %v7539 = vpop.f32.mrf.mxu0
    %7540 = vdwg.mxu0
    %7541 = vrot.lane.b32.xlu0 %v7463, 124
    %v7542 = vpop.permute.xlu0 %7541
    %7543 = vrot.lane.b32.xlu0 %v7464, 124
    %v7544 = vpop.permute.xlu0 %7543
    %v7545 = vsel %vm6486, %v7542, 0
    %v7547 = vsel %vm6486, %v7544, 0
    %7549 = vmatprep.subr.mxu0 0.0
    %7550 = vmatpush1.xpose.msra.mxu0 0.0
    %7551 = vmatprep.subr.mxu0 0.0
    %7552 = vmatpush1.xpose.msra.mxu0 0.0
    %7553 = vmatprep.subr.mxu0 0.0
    %7554 = vmatpush1.xpose.msra.mxu0 0.0
    %7555 = vmatprep.subr.mxu0 0.0
    %7556 = vmatpush1.xpose.msra.mxu0 0.0
    %7557 = vmatprep.subr.mxu0 0.0
    %7558 = vmatpush1.xpose.msra.mxu0 0.0
    %7559 = vmatprep.subr.mxu0 0.0
    %7560 = vmatpush1.xpose.msra.mxu0 0.0
    %7561 = vmatprep.subr.mxu0 0.0
    %7562 = vmatpush1.xpose.msra.mxu0 0.0
    %7563 = vmatprep.subr.mxu0 0.0
    %7564 = vmatpush1.xpose.msra.mxu0 0.0
    %7565 = vmatprep.subr.mxu0 0.0
    %7566 = vmatpush1.xpose.msra.mxu0 0.0
    %7567 = vmatprep.subr.mxu0 0.0
    %7568 = vmatpush1.xpose.msra.mxu0 0.0
    %7569 = vmatprep.subr.mxu0 0.0
    %7570 = vmatpush1.xpose.msra.mxu0 0.0
    %7571 = vmatprep.subr.mxu0 0.0
    %7572 = vmatpush1.xpose.msra.mxu0 0.0
    %7573 = vmatprep.subr.mxu0 0.0
    %7574 = vmatpush1.xpose.msra.mxu0 0.0
    %7575 = vmatprep.subr.mxu0 0.0
    %7576 = vmatpush1.xpose.msra.mxu0 0.0
    %7577 = vmatprep.subr.mxu0 0.0
    %7578 = vmatpush1.xpose.msra.mxu0 %v7547
    %7579 = vmatprep.subr.mxu0 0.0
    %7580 = vmatpush1.xpose.msra.mxu0 %v7545
    %7581 = vmatprep.subr.mxu0 0.0
    %7582 = vmatpush2.xpose.msra.mxu0 0.0
    %7583 = vmatprep.subr.mxu0 0.0
    %7584 = vmatpush2.xpose.msra.mxu0 0.0
    %7585 = vmatprep.subr.mxu0 0.0
    %7586 = vmatpush2.xpose.msra.mxu0 0.0
    %7587 = vmatprep.subr.mxu0 0.0
    %7588 = vmatpush2.xpose.msra.mxu0 0.0
    %7589 = vmatprep.subr.mxu0 0.0
    %7590 = vmatpush2.xpose.msra.mxu0 0.0
    %7591 = vmatprep.subr.mxu0 0.0
    %7592 = vmatpush2.xpose.msra.mxu0 0.0
    %7593 = vmatprep.subr.mxu0 0.0
    %7594 = vmatpush2.xpose.msra.mxu0 0.0
    %7595 = vmatprep.subr.mxu0 0.0
    %7596 = vmatpush2.xpose.msra.mxu0 0.0
    %7597 = vmatprep.subr.mxu0 0.0
    %7598 = vmatpush2.xpose.msra.mxu0 0.0
    %7599 = vmatprep.subr.mxu0 0.0
    %7600 = vmatpush2.xpose.msra.mxu0 0.0
    %7601 = vmatprep.subr.mxu0 0.0
    %7602 = vmatpush2.xpose.msra.mxu0 0.0
    %7603 = vmatprep.subr.mxu0 0.0
    %7604 = vmatpush2.xpose.msra.mxu0 0.0
    %7605 = vmatprep.subr.mxu0 0.0
    %7606 = vmatpush2.xpose.msra.mxu0 0.0
    %7607 = vmatprep.subr.mxu0 0.0
    %7608 = vmatpush2.xpose.msra.mxu0 0.0
    %7609 = vmatprep.subr.mxu0 0.0
    %7610 = vmatpush2.xpose.msra.mxu0 0.0
    %7611 = vmatprep.subr.mxu0 0.0
    %7612 = vmatpush2.xpose.msra.mxu0 0.0
    %7613 = vmatprep.mubr.f32.mxu0 0.0
    %7614 = vmatmul.mubr.f32.gmra.mxu0 %v6487
    %v7615 = vpop.f32.mrf.mxu0
    %v7616 = vadd.f32 0.0, %v7615
    %v7617 = vpop.f32.mrf.mxu0
    %7618 = vdwg.mxu0
    %7619 = vrot.lane.b32.xlu0 %v7463, 120
    %v7620 = vpop.permute.xlu0 %7619
    %7621 = vrot.lane.b32.xlu0 %v7464, 120
    %v7622 = vpop.permute.xlu0 %7621
    %v7623 = vsel %vm6486, %v7620, 0
    %v7625 = vsel %vm6486, %v7622, 0
    %7627 = vmatprep.subr.mxu0 0.0
    %7628 = vmatpush1.xpose.msra.mxu0 0.0
    %7629 = vmatprep.subr.mxu0 0.0
    %7630 = vmatpush1.xpose.msra.mxu0 0.0
    %7631 = vmatprep.subr.mxu0 0.0
    %7632 = vmatpush1.xpose.msra.mxu0 0.0
    %7633 = vmatprep.subr.mxu0 0.0
    %7634 = vmatpush1.xpose.msra.mxu0 0.0
    %7635 = vmatprep.subr.mxu0 0.0
    %7636 = vmatpush1.xpose.msra.mxu0 0.0
    %7637 = vmatprep.subr.mxu0 0.0
    %7638 = vmatpush1.xpose.msra.mxu0 0.0
    %7639 = vmatprep.subr.mxu0 0.0
    %7640 = vmatpush1.xpose.msra.mxu0 0.0
    %7641 = vmatprep.subr.mxu0 0.0
    %7642 = vmatpush1.xpose.msra.mxu0 0.0
    %7643 = vmatprep.subr.mxu0 0.0
    %7644 = vmatpush1.xpose.msra.mxu0 0.0
    %7645 = vmatprep.subr.mxu0 0.0
    %7646 = vmatpush1.xpose.msra.mxu0 0.0
    %7647 = vmatprep.subr.mxu0 0.0
    %7648 = vmatpush1.xpose.msra.mxu0 0.0
    %7649 = vmatprep.subr.mxu0 0.0
    %7650 = vmatpush1.xpose.msra.mxu0 0.0
    %7651 = vmatprep.subr.mxu0 0.0
    %7652 = vmatpush1.xpose.msra.mxu0 0.0
    %7653 = vmatprep.subr.mxu0 0.0
    %7654 = vmatpush1.xpose.msra.mxu0 0.0
    %7655 = vmatprep.subr.mxu0 0.0
    %7656 = vmatpush1.xpose.msra.mxu0 %v7625
    %7657 = vmatprep.subr.mxu0 0.0
    %7658 = vmatpush1.xpose.msra.mxu0 %v7623
    %7659 = vmatprep.subr.mxu0 0.0
    %7660 = vmatpush2.xpose.msra.mxu0 0.0
    %7661 = vmatprep.subr.mxu0 0.0
    %7662 = vmatpush2.xpose.msra.mxu0 0.0
    %7663 = vmatprep.subr.mxu0 0.0
    %7664 = vmatpush2.xpose.msra.mxu0 0.0
    %7665 = vmatprep.subr.mxu0 0.0
    %7666 = vmatpush2.xpose.msra.mxu0 0.0
    %7667 = vmatprep.subr.mxu0 0.0
    %7668 = vmatpush2.xpose.msra.mxu0 0.0
    %7669 = vmatprep.subr.mxu0 0.0
    %7670 = vmatpush2.xpose.msra.mxu0 0.0
    %7671 = vmatprep.subr.mxu0 0.0
    %7672 = vmatpush2.xpose.msra.mxu0 0.0
    %7673 = vmatprep.subr.mxu0 0.0
    %7674 = vmatpush2.xpose.msra.mxu0 0.0
    %7675 = vmatprep.subr.mxu0 0.0
    %7676 = vmatpush2.xpose.msra.mxu0 0.0
    %7677 = vmatprep.subr.mxu0 0.0
    %7678 = vmatpush2.xpose.msra.mxu0 0.0
    %7679 = vmatprep.subr.mxu0 0.0
    %7680 = vmatpush2.xpose.msra.mxu0 0.0
    %7681 = vmatprep.subr.mxu0 0.0
    %7682 = vmatpush2.xpose.msra.mxu0 0.0
    %7683 = vmatprep.subr.mxu0 0.0
    %7684 = vmatpush2.xpose.msra.mxu0 0.0
    %7685 = vmatprep.subr.mxu0 0.0
    %7686 = vmatpush2.xpose.msra.mxu0 0.0
    %7687 = vmatprep.subr.mxu0 0.0
    %7688 = vmatpush2.xpose.msra.mxu0 0.0
    %7689 = vmatprep.subr.mxu0 0.0
    %7690 = vmatpush2.xpose.msra.mxu0 0.0
    %7691 = vmatprep.mubr.f32.mxu0 0.0
    %7692 = vmatmul.mubr.f32.gmra.mxu0 %v6487
    %v7693 = vpop.f32.mrf.mxu0
    %v7694 = vadd.f32 0.0, %v7693
    %v7695 = vpop.f32.mrf.mxu0
    %7696 = vdwg.mxu0
    %7697 = vrot.lane.b32.xlu0 %v7463, 116
    %v7698 = vpop.permute.xlu0 %7697
    %7699 = vrot.lane.b32.xlu0 %v7464, 116
    %v7700 = vpop.permute.xlu0 %7699
    %v7701 = vsel %vm6486, %v7698, 0
    %v7703 = vsel %vm6486, %v7700, 0
    %7705 = vmatprep.subr.mxu0 0.0
    %7706 = vmatpush1.xpose.msra.mxu0 0.0
    %7707 = vmatprep.subr.mxu0 0.0
    %7708 = vmatpush1.xpose.msra.mxu0 0.0
    %7709 = vmatprep.subr.mxu0 0.0
    %7710 = vmatpush1.xpose.msra.mxu0 0.0
    %7711 = vmatprep.subr.mxu0 0.0
    %7712 = vmatpush1.xpose.msra.mxu0 0.0
    %7713 = vmatprep.subr.mxu0 0.0
    %7714 = vmatpush1.xpose.msra.mxu0 0.0
    %7715 = vmatprep.subr.mxu0 0.0
    %7716 = vmatpush1.xpose.msra.mxu0 0.0
    %7717 = vmatprep.subr.mxu0 0.0
    %7718 = vmatpush1.xpose.msra.mxu0 0.0
    %7719 = vmatprep.subr.mxu0 0.0
    %7720 = vmatpush1.xpose.msra.mxu0 0.0
    %7721 = vmatprep.subr.mxu0 0.0
    %7722 = vmatpush1.xpose.msra.mxu0 0.0
    %7723 = vmatprep.subr.mxu0 0.0
    %7724 = vmatpush1.xpose.msra.mxu0 0.0
    %7725 = vmatprep.subr.mxu0 0.0
    %7726 = vmatpush1.xpose.msra.mxu0 0.0
    %7727 = vmatprep.subr.mxu0 0.0
    %7728 = vmatpush1.xpose.msra.mxu0 0.0
    %7729 = vmatprep.subr.mxu0 0.0
    %7730 = vmatpush1.xpose.msra.mxu0 0.0
    %7731 = vmatprep.subr.mxu0 0.0
    %7732 = vmatpush1.xpose.msra.mxu0 0.0
    %7733 = vmatprep.subr.mxu0 0.0
    %7734 = vmatpush1.xpose.msra.mxu0 %v7703
    %7735 = vmatprep.subr.mxu0 0.0
    %7736 = vmatpush1.xpose.msra.mxu0 %v7701
    %7737 = vmatprep.subr.mxu0 0.0
    %7738 = vmatpush2.xpose.msra.mxu0 0.0
    %7739 = vmatprep.subr.mxu0 0.0
    %7740 = vmatpush2.xpose.msra.mxu0 0.0
    %7741 = vmatprep.subr.mxu0 0.0
    %7742 = vmatpush2.xpose.msra.mxu0 0.0
    %7743 = vmatprep.subr.mxu0 0.0
    %7744 = vmatpush2.xpose.msra.mxu0 0.0
    %7745 = vmatprep.subr.mxu0 0.0
    %7746 = vmatpush2.xpose.msra.mxu0 0.0
    %7747 = vmatprep.subr.mxu0 0.0
    %7748 = vmatpush2.xpose.msra.mxu0 0.0
    %7749 = vmatprep.subr.mxu0 0.0
    %7750 = vmatpush2.xpose.msra.mxu0 0.0
    %7751 = vmatprep.subr.mxu0 0.0
    %7752 = vmatpush2.xpose.msra.mxu0 0.0
    %7753 = vmatprep.subr.mxu0 0.0
    %7754 = vmatpush2.xpose.msra.mxu0 0.0
    %7755 = vmatprep.subr.mxu0 0.0
    %7756 = vmatpush2.xpose.msra.mxu0 0.0
    %7757 = vmatprep.subr.mxu0 0.0
    %7758 = vmatpush2.xpose.msra.mxu0 0.0
    %7759 = vmatprep.subr.mxu0 0.0
    %7760 = vmatpush2.xpose.msra.mxu0 0.0
    %7761 = vmatprep.subr.mxu0 0.0
    %7762 = vmatpush2.xpose.msra.mxu0 0.0
    %7763 = vmatprep.subr.mxu0 0.0
    %7764 = vmatpush2.xpose.msra.mxu0 0.0
    %7765 = vmatprep.subr.mxu0 0.0
    %7766 = vmatpush2.xpose.msra.mxu0 0.0
    %7767 = vmatprep.subr.mxu0 0.0
    %7768 = vmatpush2.xpose.msra.mxu0 0.0
    %7769 = vmatprep.mubr.f32.mxu0 0.0
    %7770 = vmatmul.mubr.f32.gmra.mxu0 %v6487
    %v7771 = vpop.f32.mrf.mxu0
    %v7772 = vadd.f32 0.0, %v7771
    %v7773 = vpop.f32.mrf.mxu0
    %7774 = vdwg.mxu0
    %7775 = vrot.lane.b32.xlu0 %v6322, 104
    %v7776 = vpop.permute.xlu0 %7775
    %7777 = vrot.lane.b32.xlu0 %v6327, 104
    %v7778 = vpop.permute.xlu0 %7777
    %v7781 = vsel %vm1449, %v7776, 0.0
    %7782 = vadd.xlane.f32.xlu0 %v7781
    %v7783 = vpop.xlane.xlu0 %7782
    %v7784 = vsel %vm1449, %v7778, 0.0
    %7785 = vadd.xlane.f32.xlu0 %v7784
    %v7786 = vpop.xlane.xlu0 %7785
    %v7787 = vmul.f32 %v7783, %v6336
    %v7788 = vmul.f32 %v7786, %v6336
    %v7789 = vsub.f32 %v6322, %v7787
    %v7790 = vsub.f32 %v6327, %v7788
    %v7791 = vmul.f32 %v7789, %v7789
    %v7792 = vmul.f32 %v7790, %v7790
    %7795 = vrot.lane.b32.xlu0 %v7791, 104
    %v7796 = vpop.permute.xlu0 %7795
    %7797 = vrot.lane.b32.xlu0 %v7792, 104
    %v7798 = vpop.permute.xlu0 %7797
    %v7801 = vsel %vm1449, %v7796, 0.0
    %7802 = vadd.xlane.f32.xlu0 %v7801
    %v7803 = vpop.xlane.xlu0 %7802
    %v7804 = vsel %vm1449, %v7798, 0.0
    %7805 = vadd.xlane.f32.xlu0 %v7804
    %v7806 = vpop.xlane.xlu0 %7805
    %v7807 = vmul.f32 %v7803, %v6336
    %v7808 = vmul.f32 %v7806, %v6336
    %v7809 = vadd.f32 %v7807, 1e-06
    %v7810 = vadd.f32 %v7808, 1e-06
    %v7811 = vrsqrt.pop %v7809
    %v7812 = vrsqrt.pop %v7810
    %v7813 = vmul.f32 %v7789, %v7811
    %v7814 = vmul.f32 %v7790, %v7812
    %v7815 = vld [vmem:[#allocation3 + $0xad0] ss:$0 sm:$0xff]
    %7817 = vrot.lane.b32.xlu0 %v7815, 24
    %v7818 = vpop.permute.xlu0 %7817
    %v7820 = vmul.f32 %v7813, %v7818
    %v7821 = vmul.f32 %v7814, %v7818
    %v7822 = vld [vmem:[#allocation3 + $0xac0] ss:$0 sm:$0xff]
    %7824 = vrot.lane.b32.xlu0 %v7822, 24
    %v7825 = vpop.permute.xlu0 %7824
    %v7827 = vadd.f32 %v7820, %v7825
    %v7828 = vadd.f32 %v7821, %v7825
    %v7829 = vmul.f32 %v7827, %v7827
    %v7830 = vmul.f32 %v7828, %v7828
    %v7831 = vmul.f32 %v7827, %v7829
    %v7832 = vmul.f32 %v7828, %v7830
    %v7833 = vmul.f32 %v7831, 0.044715
    %v7834 = vmul.f32 %v7832, 0.044715
    %v7835 = vadd.f32 %v7827, %v7833
    %v7836 = vadd.f32 %v7828, %v7834
    %v7837 = vmul.f32 %v7835, 0.7978846
    %v7838 = vmul.f32 %v7836, 0.7978846
    %v7839 = vtanh.pop %v7837
    %v7840 = vtanh.pop %v7838
    %v7841 = vadd.f32 %v7839, 1.0
    %v7842 = vadd.f32 %v7840, 1.0
    %v7843 = vmul.f32 %v7841, 0.5
    %v7844 = vmul.f32 %v7842, 0.5
    %v7845 = vmul.f32 %v7827, %v7843
    %v7846 = vmul.f32 %v7828, %v7844
    %v7847 = vld [vmem:[#allocation3 + $0xab0] sm:$0xff]
    %v7848 = vld [vmem:[#allocation3 + $0xaa0] ss:$0 sm:$0xff]
    %7851 = vrot.lane.b32.xlu0 %v7845, 104
    %v7852 = vpop.permute.xlu0 %7851
    %7853 = vrot.lane.b32.xlu0 %v7846, 104
    %v7854 = vpop.permute.xlu0 %7853
    %v7855 = vsel %vm1449, %v7852, 0
    %v7857 = vsel %vm1449, %v7854, 0
    %7859 = vmatprep.subr.mxu0 0.0
    %7860 = vmatpush1.msra.mxu0 0.0
    %7861 = vmatprep.subr.mxu0 0.0
    %7862 = vmatpush1.msra.mxu0 0.0
    %7863 = vmatprep.subr.mxu0 0.0
    %7864 = vmatpush1.msra.mxu0 0.0
    %7865 = vmatprep.subr.mxu0 0.0
    %7866 = vmatpush1.msra.mxu0 0.0
    %7867 = vmatprep.subr.mxu0 0.0
    %7868 = vmatpush1.msra.mxu0 0.0
    %7869 = vmatprep.subr.mxu0 0.0
    %7870 = vmatpush1.msra.mxu0 0.0
    %7871 = vmatprep.subr.mxu0 0.0
    %7872 = vmatpush1.msra.mxu0 0.0
    %7873 = vmatprep.subr.mxu0 0.0
    %7874 = vmatpush1.msra.mxu0 0.0
    %7875 = vmatprep.subr.mxu0 0.0
    %7876 = vmatpush1.msra.mxu0 0.0
    %7877 = vmatprep.subr.mxu0 0.0
    %7878 = vmatpush1.msra.mxu0 0.0
    %7879 = vmatprep.subr.mxu0 0.0
    %7880 = vmatpush1.msra.mxu0 0.0
    %7881 = vmatprep.subr.mxu0 0.0
    %7882 = vmatpush1.msra.mxu0 0.0
    %7883 = vmatprep.subr.mxu0 0.0
    %7884 = vmatpush1.msra.mxu0 0.0
    %7885 = vmatprep.subr.mxu0 0.0
    %7886 = vmatpush1.msra.mxu0 0.0
    %7887 = vmatprep.subr.mxu0 0.0
    %7888 = vmatpush1.msra.mxu0 0.0
    %7889 = vmatprep.subr.mxu0 0.0
    %7890 = vmatpush1.msra.mxu0 %v7847
    %7891 = vmatprep.subr.mxu0 0.0
    %7892 = vmatpush2.msra.mxu0 0.0
    %7893 = vmatprep.subr.mxu0 0.0
    %7894 = vmatpush2.msra.mxu0 0.0
    %7895 = vmatprep.subr.mxu0 0.0
    %7896 = vmatpush2.msra.mxu0 0.0
    %7897 = vmatprep.subr.mxu0 0.0
    %7898 = vmatpush2.msra.mxu0 0.0
    %7899 = vmatprep.subr.mxu0 0.0
    %7900 = vmatpush2.msra.mxu0 0.0
    %7901 = vmatprep.subr.mxu0 0.0
    %7902 = vmatpush2.msra.mxu0 0.0
    %7903 = vmatprep.subr.mxu0 0.0
    %7904 = vmatpush2.msra.mxu0 0.0
    %7905 = vmatprep.subr.mxu0 0.0
    %7906 = vmatpush2.msra.mxu0 0.0
    %7907 = vmatprep.subr.mxu0 0.0
    %7908 = vmatpush2.msra.mxu0 0.0
    %7909 = vmatprep.subr.mxu0 0.0
    %7910 = vmatpush2.msra.mxu0 0.0
    %7911 = vmatprep.subr.mxu0 0.0
    %7912 = vmatpush2.msra.mxu0 0.0
    %7913 = vmatprep.subr.mxu0 0.0
    %7914 = vmatpush2.msra.mxu0 0.0
    %7915 = vmatprep.subr.mxu0 0.0
    %7916 = vmatpush2.msra.mxu0 0.0
    %7917 = vmatprep.subr.mxu0 0.0
    %7918 = vmatpush2.msra.mxu0 0.0
    %7919 = vmatprep.subr.mxu0 0.0
    %7920 = vmatpush2.msra.mxu0 0.0
    %7921 = vmatprep.subr.mxu0 0.0
    %7922 = vmatpush2.msra.mxu0 0.0
    %7923 = vmatprep.mubr.f32.mxu0 0.0
    %7924 = vmatmul.mubr.f32.gmra.mxu0 %v7855
    %v7925 = vpop.f32.mrf.mxu0
    %v7926 = vadd.f32 %v7848, %v7925
    %v7927 = vpop.f32.mrf.mxu0
    %7928 = vmatprep.mubr.f32.mxu0 0.0
    %7929 = vmatmul.mubr.f32.gmra.mxu0 %v7857
    %v7930 = vpop.f32.mrf.mxu0
    %v7931 = vadd.f32 %v7848, %v7930
    %v7932 = vpop.f32.mrf.mxu0
    %7933 = vdwg.mxu0
    %v7934 = vmul.f32 %v7926, %v7926
    %v7935 = vmul.f32 %v7931, %v7931
    %v7936 = vmul.f32 %v7926, %v7934
    %v7937 = vmul.f32 %v7931, %v7935
    %v7938 = vmul.f32 %v7936, 0.044715
    %v7939 = vmul.f32 %v7937, 0.044715
    %v7940 = vadd.f32 %v7926, %v7938
    %v7941 = vadd.f32 %v7931, %v7939
    %v7942 = vmul.f32 %v7940, 0.7978846
    %v7943 = vmul.f32 %v7941, 0.7978846
    %v7944 = vtanh.pop %v7942
    %v7945 = vtanh.pop %v7943
    %v7946 = vadd.f32 %v7944, 1.0
    %v7947 = vadd.f32 %v7945, 1.0
    %v7948 = vmul.f32 %v7946, 0.5
    %v7949 = vmul.f32 %v7947, 0.5
    %v7950 = vmul.f32 %v7926, %v7948
    %v7951 = vmul.f32 %v7931, %v7949
    %v7953 = vsel %vm6486, %v7950, 0
    %v7956 = vsel %vm6486, %v7951, 0
    %7958 = vmatprep.subr.mxu0 0.0
    %7959 = vmatpush1.xpose.msra.mxu0 0.0
    %7960 = vmatprep.subr.mxu0 0.0
    %7961 = vmatpush1.xpose.msra.mxu0 0.0
    %7962 = vmatprep.subr.mxu0 0.0
    %7963 = vmatpush1.xpose.msra.mxu0 0.0
    %7964 = vmatprep.subr.mxu0 0.0
    %7965 = vmatpush1.xpose.msra.mxu0 0.0
    %7966 = vmatprep.subr.mxu0 0.0
    %7967 = vmatpush1.xpose.msra.mxu0 0.0
    %7968 = vmatprep.subr.mxu0 0.0
    %7969 = vmatpush1.xpose.msra.mxu0 0.0
    %7970 = vmatprep.subr.mxu0 0.0
    %7971 = vmatpush1.xpose.msra.mxu0 0.0
    %7972 = vmatprep.subr.mxu0 0.0
    %7973 = vmatpush1.xpose.msra.mxu0 0.0
    %7974 = vmatprep.subr.mxu0 0.0
    %7975 = vmatpush1.xpose.msra.mxu0 0.0
    %7976 = vmatprep.subr.mxu0 0.0
    %7977 = vmatpush1.xpose.msra.mxu0 0.0
    %7978 = vmatprep.subr.mxu0 0.0
    %7979 = vmatpush1.xpose.msra.mxu0 0.0
    %7980 = vmatprep.subr.mxu0 0.0
    %7981 = vmatpush1.xpose.msra.mxu0 0.0
    %7982 = vmatprep.subr.mxu0 0.0
    %7983 = vmatpush1.xpose.msra.mxu0 0.0
    %7984 = vmatprep.subr.mxu0 0.0
    %7985 = vmatpush1.xpose.msra.mxu0 0.0
    %7986 = vmatprep.subr.mxu0 0.0
    %7987 = vmatpush1.xpose.msra.mxu0 %v7956
    %7988 = vmatprep.subr.mxu0 0.0
    %7989 = vmatpush1.xpose.msra.mxu0 %v7953
    %7990 = vmatprep.subr.mxu0 0.0
    %7991 = vmatpush2.xpose.msra.mxu0 0.0
    %7992 = vmatprep.subr.mxu0 0.0
    %7993 = vmatpush2.xpose.msra.mxu0 0.0
    %7994 = vmatprep.subr.mxu0 0.0
    %7995 = vmatpush2.xpose.msra.mxu0 0.0
    %7996 = vmatprep.subr.mxu0 0.0
    %7997 = vmatpush2.xpose.msra.mxu0 0.0
    %7998 = vmatprep.subr.mxu0 0.0
    %7999 = vmatpush2.xpose.msra.mxu0 0.0
    %8000 = vmatprep.subr.mxu0 0.0
    %8001 = vmatpush2.xpose.msra.mxu0 0.0
    %8002 = vmatprep.subr.mxu0 0.0
    %8003 = vmatpush2.xpose.msra.mxu0 0.0
    %8004 = vmatprep.subr.mxu0 0.0
    %8005 = vmatpush2.xpose.msra.mxu0 0.0
    %8006 = vmatprep.subr.mxu0 0.0
    %8007 = vmatpush2.xpose.msra.mxu0 0.0
    %8008 = vmatprep.subr.mxu0 0.0
    %8009 = vmatpush2.xpose.msra.mxu0 0.0
    %8010 = vmatprep.subr.mxu0 0.0
    %8011 = vmatpush2.xpose.msra.mxu0 0.0
    %8012 = vmatprep.subr.mxu0 0.0
    %8013 = vmatpush2.xpose.msra.mxu0 0.0
    %8014 = vmatprep.subr.mxu0 0.0
    %8015 = vmatpush2.xpose.msra.mxu0 0.0
    %8016 = vmatprep.subr.mxu0 0.0
    %8017 = vmatpush2.xpose.msra.mxu0 0.0
    %8018 = vmatprep.subr.mxu0 0.0
    %8019 = vmatpush2.xpose.msra.mxu0 0.0
    %8020 = vmatprep.subr.mxu0 0.0
    %8021 = vmatpush2.xpose.msra.mxu0 0.0
    %8022 = vmatprep.mubr.f32.mxu0 0.0
    %8023 = vmatmul.mubr.f32.gmra.mxu0 %v6487
    %v8024 = vpop.f32.mrf.mxu0
    %v8025 = vadd.f32 0.0, %v8024
    %v8026 = vpop.f32.mrf.mxu0
    %8027 = vdwg.mxu0
    %8028 = vrot.lane.b32.xlu0 %v7950, 124
    %v8029 = vpop.permute.xlu0 %8028
    %8030 = vrot.lane.b32.xlu0 %v7951, 124
    %v8031 = vpop.permute.xlu0 %8030
    %v8032 = vsel %vm6486, %v8029, 0
    %v8034 = vsel %vm6486, %v8031, 0
    %8036 = vmatprep.subr.mxu0 0.0
    %8037 = vmatpush1.xpose.msra.mxu0 0.0
    %8038 = vmatprep.subr.mxu0 0.0
    %8039 = vmatpush1.xpose.msra.mxu0 0.0
    %8040 = vmatprep.subr.mxu0 0.0
    %8041 = vmatpush1.xpose.msra.mxu0 0.0
    %8042 = vmatprep.subr.mxu0 0.0
    %8043 = vmatpush1.xpose.msra.mxu0 0.0
    %8044 = vmatprep.subr.mxu0 0.0
    %8045 = vmatpush1.xpose.msra.mxu0 0.0
    %8046 = vmatprep.subr.mxu0 0.0
    %8047 = vmatpush1.xpose.msra.mxu0 0.0
    %8048 = vmatprep.subr.mxu0 0.0
    %8049 = vmatpush1.xpose.msra.mxu0 0.0
    %8050 = vmatprep.subr.mxu0 0.0
    %8051 = vmatpush1.xpose.msra.mxu0 0.0
    %8052 = vmatprep.subr.mxu0 0.0
    %8053 = vmatpush1.xpose.msra.mxu0 0.0
    %8054 = vmatprep.subr.mxu0 0.0
    %8055 = vmatpush1.xpose.msra.mxu0 0.0
    %8056 = vmatprep.subr.mxu0 0.0
    %8057 = vmatpush1.xpose.msra.mxu0 0.0
    %8058 = vmatprep.subr.mxu0 0.0
    %8059 = vmatpush1.xpose.msra.mxu0 0.0
    %8060 = vmatprep.subr.mxu0 0.0
    %8061 = vmatpush1.xpose.msra.mxu0 0.0
    %8062 = vmatprep.subr.mxu0 0.0
    %8063 = vmatpush1.xpose.msra.mxu0 0.0
    %8064 = vmatprep.subr.mxu0 0.0
    %8065 = vmatpush1.xpose.msra.mxu0 %v8034
    %8066 = vmatprep.subr.mxu0 0.0
    %8067 = vmatpush1.xpose.msra.mxu0 %v8032
    %8068 = vmatprep.subr.mxu0 0.0
    %8069 = vmatpush2.xpose.msra.mxu0 0.0
    %8070 = vmatprep.subr.mxu0 0.0
    %8071 = vmatpush2.xpose.msra.mxu0 0.0
    %8072 = vmatprep.subr.mxu0 0.0
    %8073 = vmatpush2.xpose.msra.mxu0 0.0
    %8074 = vmatprep.subr.mxu0 0.0
    %8075 = vmatpush2.xpose.msra.mxu0 0.0
    %8076 = vmatprep.subr.mxu0 0.0
    %8077 = vmatpush2.xpose.msra.mxu0 0.0
    %8078 = vmatprep.subr.mxu0 0.0
    %8079 = vmatpush2.xpose.msra.mxu0 0.0
    %8080 = vmatprep.subr.mxu0 0.0
    %8081 = vmatpush2.xpose.msra.mxu0 0.0
    %8082 = vmatprep.subr.mxu0 0.0
    %8083 = vmatpush2.xpose.msra.mxu0 0.0
    %8084 = vmatprep.subr.mxu0 0.0
    %8085 = vmatpush2.xpose.msra.mxu0 0.0
    %8086 = vmatprep.subr.mxu0 0.0
    %8087 = vmatpush2.xpose.msra.mxu0 0.0
    %8088 = vmatprep.subr.mxu0 0.0
    %8089 = vmatpush2.xpose.msra.mxu0 0.0
    %8090 = vmatprep.subr.mxu0 0.0
    %8091 = vmatpush2.xpose.msra.mxu0 0.0
    %8092 = vmatprep.subr.mxu0 0.0
    %8093 = vmatpush2.xpose.msra.mxu0 0.0
    %8094 = vmatprep.subr.mxu0 0.0
    %8095 = vmatpush2.xpose.msra.mxu0 0.0
    %8096 = vmatprep.subr.mxu0 0.0
    %8097 = vmatpush2.xpose.msra.mxu0 0.0
    %8098 = vmatprep.subr.mxu0 0.0
    %8099 = vmatpush2.xpose.msra.mxu0 0.0
    %8100 = vmatprep.mubr.f32.mxu0 0.0
    %8101 = vmatmul.mubr.f32.gmra.mxu0 %v6487
    %v8102 = vpop.f32.mrf.mxu0
    %v8103 = vadd.f32 0.0, %v8102
    %v8104 = vpop.f32.mrf.mxu0
    %8105 = vdwg.mxu0
    %8106 = vrot.lane.b32.xlu0 %v7950, 120
    %v8107 = vpop.permute.xlu0 %8106
    %8108 = vrot.lane.b32.xlu0 %v7951, 120
    %v8109 = vpop.permute.xlu0 %8108
    %v8110 = vsel %vm6486, %v8107, 0
    %v8112 = vsel %vm6486, %v8109, 0
    %8114 = vmatprep.subr.mxu0 0.0
    %8115 = vmatpush1.xpose.msra.mxu0 0.0
    %8116 = vmatprep.subr.mxu0 0.0
    %8117 = vmatpush1.xpose.msra.mxu0 0.0
    %8118 = vmatprep.subr.mxu0 0.0
    %8119 = vmatpush1.xpose.msra.mxu0 0.0
    %8120 = vmatprep.subr.mxu0 0.0
    %8121 = vmatpush1.xpose.msra.mxu0 0.0
    %8122 = vmatprep.subr.mxu0 0.0
    %8123 = vmatpush1.xpose.msra.mxu0 0.0
    %8124 = vmatprep.subr.mxu0 0.0
    %8125 = vmatpush1.xpose.msra.mxu0 0.0
    %8126 = vmatprep.subr.mxu0 0.0
    %8127 = vmatpush1.xpose.msra.mxu0 0.0
    %8128 = vmatprep.subr.mxu0 0.0
    %8129 = vmatpush1.xpose.msra.mxu0 0.0
    %8130 = vmatprep.subr.mxu0 0.0
    %8131 = vmatpush1.xpose.msra.mxu0 0.0
    %8132 = vmatprep.subr.mxu0 0.0
    %8133 = vmatpush1.xpose.msra.mxu0 0.0
    %8134 = vmatprep.subr.mxu0 0.0
    %8135 = vmatpush1.xpose.msra.mxu0 0.0
    %8136 = vmatprep.subr.mxu0 0.0
    %8137 = vmatpush1.xpose.msra.mxu0 0.0
    %8138 = vmatprep.subr.mxu0 0.0
    %8139 = vmatpush1.xpose.msra.mxu0 0.0
    %8140 = vmatprep.subr.mxu0 0.0
    %8141 = vmatpush1.xpose.msra.mxu0 0.0
    %8142 = vmatprep.subr.mxu0 0.0
    %8143 = vmatpush1.xpose.msra.mxu0 %v8112
    %8144 = vmatprep.subr.mxu0 0.0
    %8145 = vmatpush1.xpose.msra.mxu0 %v8110
    %8146 = vmatprep.subr.mxu0 0.0
    %8147 = vmatpush2.xpose.msra.mxu0 0.0
    %8148 = vmatprep.subr.mxu0 0.0
    %8149 = vmatpush2.xpose.msra.mxu0 0.0
    %8150 = vmatprep.subr.mxu0 0.0
    %8151 = vmatpush2.xpose.msra.mxu0 0.0
    %8152 = vmatprep.subr.mxu0 0.0
    %8153 = vmatpush2.xpose.msra.mxu0 0.0
    %8154 = vmatprep.subr.mxu0 0.0
    %8155 = vmatpush2.xpose.msra.mxu0 0.0
    %8156 = vmatprep.subr.mxu0 0.0
    %8157 = vmatpush2.xpose.msra.mxu0 0.0
    %8158 = vmatprep.subr.mxu0 0.0
    %8159 = vmatpush2.xpose.msra.mxu0 0.0
    %8160 = vmatprep.subr.mxu0 0.0
    %8161 = vmatpush2.xpose.msra.mxu0 0.0
    %8162 = vmatprep.subr.mxu0 0.0
    %8163 = vmatpush2.xpose.msra.mxu0 0.0
    %8164 = vmatprep.subr.mxu0 0.0
    %8165 = vmatpush2.xpose.msra.mxu0 0.0
    %8166 = vmatprep.subr.mxu0 0.0
    %8167 = vmatpush2.xpose.msra.mxu0 0.0
    %8168 = vmatprep.subr.mxu0 0.0
    %8169 = vmatpush2.xpose.msra.mxu0 0.0
    %8170 = vmatprep.subr.mxu0 0.0
    %8171 = vmatpush2.xpose.msra.mxu0 0.0
    %8172 = vmatprep.subr.mxu0 0.0
    %8173 = vmatpush2.xpose.msra.mxu0 0.0
    %8174 = vmatprep.subr.mxu0 0.0
    %8175 = vmatpush2.xpose.msra.mxu0 0.0
    %8176 = vmatprep.subr.mxu0 0.0
    %8177 = vmatpush2.xpose.msra.mxu0 0.0
    %8178 = vmatprep.mubr.f32.mxu0 0.0
    %8179 = vmatmul.mubr.f32.gmra.mxu0 %v6487
    %v8180 = vpop.f32.mrf.mxu0
    %v8181 = vadd.f32 0.0, %v8180
    %v8182 = vpop.f32.mrf.mxu0
    %8183 = vdwg.mxu0
    %8184 = vrot.lane.b32.xlu0 %v7950, 116
    %v8185 = vpop.permute.xlu0 %8184
    %8186 = vrot.lane.b32.xlu0 %v7951, 116
    %v8187 = vpop.permute.xlu0 %8186
    %v8188 = vsel %vm6486, %v8185, 0
    %v8190 = vsel %vm6486, %v8187, 0
    %8192 = vmatprep.subr.mxu0 0.0
    %8193 = vmatpush1.xpose.msra.mxu0 0.0
    %8194 = vmatprep.subr.mxu0 0.0
    %8195 = vmatpush1.xpose.msra.mxu0 0.0
    %8196 = vmatprep.subr.mxu0 0.0
    %8197 = vmatpush1.xpose.msra.mxu0 0.0
    %8198 = vmatprep.subr.mxu0 0.0
    %8199 = vmatpush1.xpose.msra.mxu0 0.0
    %8200 = vmatprep.subr.mxu0 0.0
    %8201 = vmatpush1.xpose.msra.mxu0 0.0
    %8202 = vmatprep.subr.mxu0 0.0
    %8203 = vmatpush1.xpose.msra.mxu0 0.0
    %8204 = vmatprep.subr.mxu0 0.0
    %8205 = vmatpush1.xpose.msra.mxu0 0.0
    %8206 = vmatprep.subr.mxu0 0.0
    %8207 = vmatpush1.xpose.msra.mxu0 0.0
    %8208 = vmatprep.subr.mxu0 0.0
    %8209 = vmatpush1.xpose.msra.mxu0 0.0
    %8210 = vmatprep.subr.mxu0 0.0
    %8211 = vmatpush1.xpose.msra.mxu0 0.0
    %8212 = vmatprep.subr.mxu0 0.0
    %8213 = vmatpush1.xpose.msra.mxu0 0.0
    %8214 = vmatprep.subr.mxu0 0.0
    %8215 = vmatpush1.xpose.msra.mxu0 0.0
    %8216 = vmatprep.subr.mxu0 0.0
    %8217 = vmatpush1.xpose.msra.mxu0 0.0
    %8218 = vmatprep.subr.mxu0 0.0
    %8219 = vmatpush1.xpose.msra.mxu0 0.0
    %8220 = vmatprep.subr.mxu0 0.0
    %8221 = vmatpush1.xpose.msra.mxu0 %v8190
    %8222 = vmatprep.subr.mxu0 0.0
    %8223 = vmatpush1.xpose.msra.mxu0 %v8188
    %8224 = vmatprep.subr.mxu0 0.0
    %8225 = vmatpush2.xpose.msra.mxu0 0.0
    %8226 = vmatprep.subr.mxu0 0.0
    %8227 = vmatpush2.xpose.msra.mxu0 0.0
    %8228 = vmatprep.subr.mxu0 0.0
    %8229 = vmatpush2.xpose.msra.mxu0 0.0
    %8230 = vmatprep.subr.mxu0 0.0
    %8231 = vmatpush2.xpose.msra.mxu0 0.0
    %8232 = vmatprep.subr.mxu0 0.0
    %8233 = vmatpush2.xpose.msra.mxu0 0.0
    %8234 = vmatprep.subr.mxu0 0.0
    %8235 = vmatpush2.xpose.msra.mxu0 0.0
    %8236 = vmatprep.subr.mxu0 0.0
    %8237 = vmatpush2.xpose.msra.mxu0 0.0
    %8238 = vmatprep.subr.mxu0 0.0
    %8239 = vmatpush2.xpose.msra.mxu0 0.0
    %8240 = vmatprep.subr.mxu0 0.0
    %8241 = vmatpush2.xpose.msra.mxu0 0.0
    %8242 = vmatprep.subr.mxu0 0.0
    %8243 = vmatpush2.xpose.msra.mxu0 0.0
    %8244 = vmatprep.subr.mxu0 0.0
    %8245 = vmatpush2.xpose.msra.mxu0 0.0
    %8246 = vmatprep.subr.mxu0 0.0
    %8247 = vmatpush2.xpose.msra.mxu0 0.0
    %8248 = vmatprep.subr.mxu0 0.0
    %8249 = vmatpush2.xpose.msra.mxu0 0.0
    %8250 = vmatprep.subr.mxu0 0.0
    %8251 = vmatpush2.xpose.msra.mxu0 0.0
    %8252 = vmatprep.subr.mxu0 0.0
    %8253 = vmatpush2.xpose.msra.mxu0 0.0
    %8254 = vmatprep.subr.mxu0 0.0
    %8255 = vmatpush2.xpose.msra.mxu0 0.0
    %8256 = vmatprep.mubr.f32.mxu0 0.0
    %8257 = vmatmul.mubr.f32.gmra.mxu0 %v6487
    %v8258 = vpop.f32.mrf.mxu0
    %v8259 = vadd.f32 0.0, %v8258
    %v8260 = vpop.f32.mrf.mxu0
    %8261 = vdwg.mxu0
    %8263 = vrot.lane.b32.xlu0 %v6640, 16
    %v8264 = vpop.permute.xlu0 %8263
    %8267 = vrot.lane.b32.xlu0 %v6718, 32
    %v8268 = vpop.permute.xlu0 %8267
    %8271 = vrot.lane.b32.xlu0 %v6796, 48
    %v8272 = vpop.permute.xlu0 %8271
    %8275 = vrot.lane.b32.xlu0 %v7051, 64
    %v8276 = vpop.permute.xlu0 %8275
    %8279 = vrot.lane.b32.xlu0 %v7129, 80
    %v8280 = vpop.permute.xlu0 %8279
    %8283 = vrot.lane.b32.xlu0 %v7207, 96
    %v8284 = vpop.permute.xlu0 %8283
    %8287 = vrot.lane.b32.xlu0 %v7285, 112
    %v8288 = vpop.permute.xlu0 %8287
    %8291 = vrot.lane.b32.xlu0 %v7616, 16
    %v8292 = vpop.permute.xlu0 %8291
    %8295 = vrot.lane.b32.xlu0 %v7694, 32
    %v8296 = vpop.permute.xlu0 %8295
    %8299 = vrot.lane.b32.xlu0 %v7772, 48
    %v8300 = vpop.permute.xlu0 %8299
    %8303 = vrot.lane.b32.xlu0 %v8025, 64
    %v8304 = vpop.permute.xlu0 %8303
    %8307 = vrot.lane.b32.xlu0 %v8103, 80
    %v8308 = vpop.permute.xlu0 %8307
    %8311 = vrot.lane.b32.xlu0 %v8181, 96
    %v8312 = vpop.permute.xlu0 %8311
    %8315 = vrot.lane.b32.xlu0 %v8259, 112
    %v8316 = vpop.permute.xlu0 %8315
    %v8318 = vsel %vm736, %v6562, %v8264
    %v8319 = vsel %vm487, %v8318, %v8268
    %vm8320 = vcmask 392192
    %v8321 = vsel %vm8320, %v8319, %v8272
    %v8322 = vsel %vm1975, %v8321, %v8276
    %vm8323 = vcmask 654336
    %v8324 = vsel %vm8323, %v8322, %v8280
    %vm8325 = vcmask 785408
    %v8326 = vsel %vm8325, %v8324, %v8284
    %vm8327 = vcmask 916480
    %v8328 = vsel %vm8327, %v8326, %v8288
    %v8329 = vsel %vm736, %v7538, %v8292
    %v8330 = vsel %vm487, %v8329, %v8296
    %v8331 = vsel %vm8320, %v8330, %v8300
    %v8332 = vsel %vm1975, %v8331, %v8304
    %v8333 = vsel %vm8323, %v8332, %v8308
    %v8334 = vsel %vm8325, %v8333, %v8312
    %v8335 = vsel %vm8327, %v8334, %v8316
    %v8336 = vsel %vm6486, %v6227, 0.0
    %v8339 = vrot.slane %v8336, 4
    %v8340 = vrot.slane 0.0, 4
    %vm8343 = vcmask 1043456
    %v8344 = vsel %vm8343, %v8328, %v8339
    %v8345 = vsel %vm8343, %v8335, %v8340
    %vm8346 = vcmask 1044480
    %v8347 = vsel %vm8346, %v8344, 0.0
    %v8348 = vsel %vm8346, %v8345, 0.0
    %8349 = vst [vmem:[%s3] sm:$0xff] %v8347
    %8350 = vst [vmem:[%s3 + $0x8] sm:$0xff] %v8348
    // Predicated region
    $region22: #{forward.1} parent=1 // pred_check
      _
    $region23: #{forward.1} parent=1 // pred_check_branch
      %8352 = sbr.rel (0) target = $region25
    $region24: #{forward.1} parent=1 // pred_region
      _
    $region25: #{forward.1} parent=1 // pred_fallthru
      _
    // Predicated region
    $region26: #{forward.1} parent=1 // pred_check
      _
    $region27: #{forward.1} parent=1 // pred_check_branch
      %8354 = sbr.rel (0) target = $region29
    $region28: #{forward.1} parent=1 // pred_region
      _
    $region29: #{forward.1} parent=1 // pred_fallthru
      _
    %8355 = vsyncpa [#allocation4], 1

</llo_original>
